<compile_context>
chip_gen: v6e
topology: v6e:2x2x1
jax: 0.10.0
libtpu: 0.0.40
codegen_flags: <defaults>
</compile_context>

<pallas_src>
import functools

import jax
import jax.numpy as jnp
import numpy as np
from jax import lax
from jax.experimental import pallas as pl
from jax.experimental.pallas import tpu as pltpu


# ----------------------------------------------------------------------------
# Fused kernel: conv1+relu+pool -> conv2+relu+pool -> flatten -> fc1+relu -> fc2
# ----------------------------------------------------------------------------
def _im2col_3x3(xp_ref, B, H, W, C):
    """Read the 9 taps off a padded (B, H+2, W+2, C) VMEM ref and build the
    (B*H*W, 9*C) im2col matrix. Column order = (dy, dx, cin), cin fastest,
    matching the host-side weight repack."""
    cols = []
    for dy in range(3):
        for dx in range(3):
            tap = xp_ref[:, dy:dy + H, dx:dx + W, :]          # (B, H, W, C)
            cols.append(tap.reshape(B * H * W, C))
    return jnp.concatenate(cols, axis=-1)                      # (B*H*W, 9*C)


def _pool2x2(y, B, H, W, C):
    """2x2 max pool, stride 2, on a (B*H*W, C) value -> (B, H//2, W//2, C)."""
    y = y.reshape(B, H, W, C)
    z = jnp.max(y.reshape(B, H // 2, 2, W, C), axis=2)
    return jnp.max(z.reshape(B, H // 2, W // 2, 2, C), axis=3)


def fused_cnn_kernel(x_ref, w1_ref, b1_ref, w2_ref, b2_ref,
                     wf1_ref, bf1_ref, wf2_ref, bf2_ref,
                     o_ref, xp1_ref, xp2_ref):
    B, H, W, Cin = x_ref.shape
    C1 = w1_ref.shape[-1]
    C2 = w2_ref.shape[-1]
    H2, W2 = H // 2, W // 2
    H4, W4 = H // 4, W // 4

    # ---- stage 1: conv3x3(pad=1) + bias + ReLU + maxpool2 (one matmul, K=9*Cin)
    xp1_ref[...] = jnp.zeros_like(xp1_ref)                    # halo padding in-kernel
    xp1_ref[:, 1:H + 1, 1:W + 1, :] = x_ref[...]
    patches1 = _im2col_3x3(xp1_ref, B, H, W, Cin)             # (B*H*W, 9*Cin)
    h1 = jnp.dot(patches1, w1_ref[...], preferred_element_type=jnp.float32)
    h1 = jnp.maximum(h1 + b1_ref[...], 0.0)
    p1 = _pool2x2(h1, B, H, W, C1)                            # (B, H2, W2, C1)

    # ---- stage 2: conv3x3(pad=1) + bias + ReLU + maxpool2 (one matmul, K=9*C1)
    xp2_ref[...] = jnp.zeros_like(xp2_ref)
    xp2_ref[:, 1:H2 + 1, 1:W2 + 1, :] = p1
    patches2 = _im2col_3x3(xp2_ref, B, H2, W2, C1)            # (B*H2*W2, 9*C1)
    h2 = jnp.dot(patches2, w2_ref[...], preferred_element_type=jnp.float32)
    h2 = jnp.maximum(h2 + b2_ref[...], 0.0)
    p2 = _pool2x2(h2, B, H2, W2, C2)                          # (B, H4, W4, C2)

    # ---- flatten (NHWC order; wf1 rows were pre-permuted host-side to match
    #      torch's NCHW flatten semantics) -> lane-dense (B, H4*W4*C2) vector
    p2r = p2.reshape(B, H4 * W4, C2)
    flat = jnp.concatenate([p2r[:, s, :] for s in range(H4 * W4)], axis=-1)

    # ---- MLP head: Linear -> ReLU -> Linear
    h = jnp.dot(flat, wf1_ref[...], preferred_element_type=jnp.float32)
    h = jnp.maximum(h + bf1_ref[...], 0.0)
    o = jnp.dot(h, wf2_ref[...], preferred_element_type=jnp.float32) + bf2_ref[...]
    o_ref[...] = o


def initial_cnn_forward(x_nchw, kp):
    """x_nchw: (B, Cin, H, W) fp32; kp: kernel-layout params from prepare_params()."""
    B, Cin, H, W = x_nchw.shape
    assert H % 4 == 0 and W % 4 == 0, "two 2x2 pools require H, W divisible by 4"
    x = jnp.transpose(x_nchw, (0, 2, 3, 1))      # NCHW -> NHWC (tiny; only glue op)
    C1 = kp["w1"].shape[-1]
    n_out = kp["wf2"].shape[-1]
    vmem = functools.partial(pl.BlockSpec, memory_space=pltpu.MemorySpace.VMEM)
    return pl.pallas_call(
        fused_cnn_kernel,
        out_shape=jax.ShapeDtypeStruct((B, n_out), jnp.float32),
        in_specs=[vmem() for _ in range(9)],
        out_specs=vmem(),
        scratch_shapes=[
            pltpu.VMEM((B, H + 2, W + 2, Cin), jnp.float32),          # padded stage-1 input
            pltpu.VMEM((B, H // 2 + 2, W // 2 + 2, C1), jnp.float32),  # padded stage-2 input
        ],
    )(x, kp["w1"], kp["b1"], kp["w2"], kp["b2"],
      kp["wf1"], kp["bf1"], kp["wf2"], kp["bf2"])


# ----------------------------------------------------------------------------
# One-time host-side repack of PyTorch-layout params into kernel layouts
# ----------------------------------------------------------------------------
def prepare_params(p, H, W):
    def conv_w(w_oihw):
        # (O, I, 3, 3) -> (3, 3, I, O) -> (9*I, O); row order (dy, dx, cin), cin fastest
        return jnp.transpose(w_oihw, (2, 3, 1, 0)).reshape(-1, w_oihw.shape[0])

    C2 = p["w_c2"].shape[0]
    S = (H // 4) * (W // 4)
    hid = p["w_f1"].shape[-1]
    # Permute w_f1 rows from NCHW-flatten order (c*S + s) to NHWC-flatten order (s*C2 + c)
    # so the kernel never has to transpose the activation before flattening.
    wf1 = p["w_f1"].reshape(C2, S, hid).transpose(1, 0, 2).reshape(S * C2, hid)
    return {
        "w1": conv_w(p["w_c1"]), "b1": p["b_c1"].reshape(1, -1),
        "w2": conv_w(p["w_c2"]), "b2": p["b_c2"].reshape(1, -1),
        "wf1": wf1,              "bf1": p["b_f1"].reshape(1, -1),
        "wf2": p["w_f2"],        "bf2": p["b_f2"].reshape(1, -1),
    }


# ----------------------------------------------------------------------------
# Pure-JAX reference with PyTorch semantics (NCHW conv, NCHW flatten)
# ----------------------------------------------------------------------------
def _forward_ref(x, p):
    def conv_block(y, w, b):
        y = lax.conv_general_dilated(y, w, window_strides=(1, 1),
                                     padding=((1, 1), (1, 1)),
                                     dimension_numbers=("NCHW", "OIHW", "NCHW"))
        y = jnp.maximum(y + b[None, :, None, None], 0.0)
        B, C, H, W = y.shape
        return y.reshape(B, C, H // 2, 2, W // 2, 2).max(axis=(3, 5))

    y = conv_block(x, p["w_c1"], p["b_c1"])
    y = conv_block(y, p["w_c2"], p["b_c2"])
    y = y.reshape(y.shape[0], -1)                       # torch nn.Flatten on NCHW
    h = jnp.maximum(y @ p["w_f1"] + p["b_f1"], 0.0)
    return h @ p["w_f2"] + p["b_f2"]


if __name__ == "__main__":
    B, Cin, H, W = 2, 3, 16, 16          # small shapes; module op structure preserved
    C1, C2, HID, NOUT = 32, 64, 128, 2
    feat = C2 * (H // 4) * (W // 4)

    key = jax.random.PRNGKey(0)
    ks = jax.random.split(key, 9)
    params = {   # PyTorch layouts: conv OIHW, bias (C,), linear stored as (in, out)
        "w_c1": 0.1 * jax.random.normal(ks[0], (C1, Cin, 3, 3), jnp.float32),
        "b_c1": 0.1 * jax.random.normal(ks[1], (C1,), jnp.float32),
        "w_c2": 0.1 * jax.random.normal(ks[2], (C2, C1, 3, 3), jnp.float32),
        "b_c2": 0.1 * jax.random.normal(ks[3], (C2,), jnp.float32),
        "w_f1": 0.05 * jax.random.normal(ks[4], (feat, HID), jnp.float32),
        "b_f1": 0.05 * jax.random.normal(ks[5], (HID,), jnp.float32),
        "w_f2": 0.05 * jax.random.normal(ks[6], (HID, NOUT), jnp.float32),
        "b_f2": 0.05 * jax.random.normal(ks[7], (NOUT,), jnp.float32),
    }
    x = jax.random.normal(ks[8], (B, Cin, H, W), jnp.float32)   # NCHW, like PyTorch

    kparams = prepare_params(params, H, W)          # one-time host-side repack

    fwd = jax.jit(initial_cnn_forward)
    out = jax.block_until_ready(fwd(x, kparams))
    ref = jax.block_until_ready(_forward_ref(x, params))

    assert out.shape == (B, NOUT), out.shape
    np.testing.assert_allclose(np.asarray(out), np.asarray(ref), rtol=2e-3, atol=2e-3)
    print("KERNEL_OK")
</pallas_src>

<mosaic_0001>
module attributes {stable_mosaic.version = 11 : i64} {
  func.func @fused_cnn_kernel(%arg0: memref<2x16x16x3xf32, #tpu.memory_space<vmem>>, %arg1: memref<27x32xf32, #tpu.memory_space<vmem>>, %arg2: memref<1x32xf32, #tpu.memory_space<vmem>>, %arg3: memref<288x64xf32, #tpu.memory_space<vmem>>, %arg4: memref<1x64xf32, #tpu.memory_space<vmem>>, %arg5: memref<1024x128xf32, #tpu.memory_space<vmem>>, %arg6: memref<1x128xf32, #tpu.memory_space<vmem>>, %arg7: memref<128x2xf32, #tpu.memory_space<vmem>>, %arg8: memref<1x2xf32, #tpu.memory_space<vmem>>, %arg9: memref<2x2xf32, #tpu.memory_space<vmem>>, %arg10: memref<2x18x18x3xf32, #tpu.memory_space<vmem>>, %arg11: memref<2x10x10x32xf32, #tpu.memory_space<vmem>>) attributes {dimension_semantics = [], scalar_prefetch = 0 : i64, scratch_operands = 2 : i64, tpu.core_type = #tpu.core_type<tc>} {
    %cst = arith.constant 0.000000e+00 : f32
    %0 = vector.broadcast %cst : f32 to vector<2x18x18x3xf32>
    %c0 = arith.constant 0 : index
    %c0_0 = arith.constant 0 : index
    %c0_1 = arith.constant 0 : index
    %c0_2 = arith.constant 0 : index
    %1 = vector.load %arg10[%c0, %c0_0, %c0_1, %c0_2] : memref<2x18x18x3xf32, #tpu.memory_space<vmem>>, vector<2x18x18x3xf32>
    tpu.vector_store %arg10[%c0, %c0_0, %c0_1, %c0_2], %0 {strides = array<i32>} : memref<2x18x18x3xf32, #tpu.memory_space<vmem>>, vector<2x18x18x3xf32>,
    %c0_3 = arith.constant 0 : index
    %c0_4 = arith.constant 0 : index
    %c0_5 = arith.constant 0 : index
    %c0_6 = arith.constant 0 : index
    %2 = vector.load %arg0[%c0_3, %c0_4, %c0_5, %c0_6] : memref<2x16x16x3xf32, #tpu.memory_space<vmem>>, vector<2x16x16x3xf32>
    %c0_7 = arith.constant 0 : index
    %c1 = arith.constant 1 : index
    %c1_8 = arith.constant 1 : index
    %c0_9 = arith.constant 0 : index
    %3 = vector.load %arg10[%c0_7, %c1, %c1_8, %c0_9] : memref<2x18x18x3xf32, #tpu.memory_space<vmem>>, vector<2x16x16x3xf32>
    tpu.vector_store %arg10[%c0_7, %c1, %c1_8, %c0_9], %2 {strides = array<i32>} : memref<2x18x18x3xf32, #tpu.memory_space<vmem>>, vector<2x16x16x3xf32>,
    %c0_10 = arith.constant 0 : index
    %c0_11 = arith.constant 0 : index
    %c0_12 = arith.constant 0 : index
    %c0_13 = arith.constant 0 : index
    %4 = vector.load %arg10[%c0_10, %c0_11, %c0_12, %c0_13] : memref<2x18x18x3xf32, #tpu.memory_space<vmem>>, vector<2x16x16x3xf32>
    %5 = vector.shape_cast %4 : vector<2x16x16x3xf32> to vector<512x3xf32>
    %c0_14 = arith.constant 0 : index
    %c0_15 = arith.constant 0 : index
    %c1_16 = arith.constant 1 : index
    %c0_17 = arith.constant 0 : index
    %6 = vector.load %arg10[%c0_14, %c0_15, %c1_16, %c0_17] : memref<2x18x18x3xf32, #tpu.memory_space<vmem>>, vector<2x16x16x3xf32>
    %7 = vector.shape_cast %6 : vector<2x16x16x3xf32> to vector<512x3xf32>
    %c0_18 = arith.constant 0 : index
    %c0_19 = arith.constant 0 : index
    %c2 = arith.constant 2 : index
    %c0_20 = arith.constant 0 : index
    %8 = vector.load %arg10[%c0_18, %c0_19, %c2, %c0_20] : memref<2x18x18x3xf32, #tpu.memory_space<vmem>>, vector<2x16x16x3xf32>
    %9 = vector.shape_cast %8 : vector<2x16x16x3xf32> to vector<512x3xf32>
    %c0_21 = arith.constant 0 : index
    %c1_22 = arith.constant 1 : index
    %c0_23 = arith.constant 0 : index
    %c0_24 = arith.constant 0 : index
    %10 = vector.load %arg10[%c0_21, %c1_22, %c0_23, %c0_24] : memref<2x18x18x3xf32, #tpu.memory_space<vmem>>, vector<2x16x16x3xf32>
    %11 = vector.shape_cast %10 : vector<2x16x16x3xf32> to vector<512x3xf32>
    %c0_25 = arith.constant 0 : index
    %c1_26 = arith.constant 1 : index
    %c1_27 = arith.constant 1 : index
    %c0_28 = arith.constant 0 : index
    %12 = vector.load %arg10[%c0_25, %c1_26, %c1_27, %c0_28] : memref<2x18x18x3xf32, #tpu.memory_space<vmem>>, vector<2x16x16x3xf32>
    %13 = vector.shape_cast %12 : vector<2x16x16x3xf32> to vector<512x3xf32>
    %c0_29 = arith.constant 0 : index
    %c1_30 = arith.constant 1 : index
    %c2_31 = arith.constant 2 : index
    %c0_32 = arith.constant 0 : index
    %14 = vector.load %arg10[%c0_29, %c1_30, %c2_31, %c0_32] : memref<2x18x18x3xf32, #tpu.memory_space<vmem>>, vector<2x16x16x3xf32>
    %15 = vector.shape_cast %14 : vector<2x16x16x3xf32> to vector<512x3xf32>
    %c0_33 = arith.constant 0 : index
    %c2_34 = arith.constant 2 : index
    %c0_35 = arith.constant 0 : index
    %c0_36 = arith.constant 0 : index
    %16 = vector.load %arg10[%c0_33, %c2_34, %c0_35, %c0_36] : memref<2x18x18x3xf32, #tpu.memory_space<vmem>>, vector<2x16x16x3xf32>
    %17 = vector.shape_cast %16 : vector<2x16x16x3xf32> to vector<512x3xf32>
    %c0_37 = arith.constant 0 : index
    %c2_38 = arith.constant 2 : index
    %c1_39 = arith.constant 1 : index
    %c0_40 = arith.constant 0 : index
    %18 = vector.load %arg10[%c0_37, %c2_38, %c1_39, %c0_40] : memref<2x18x18x3xf32, #tpu.memory_space<vmem>>, vector<2x16x16x3xf32>
    %19 = vector.shape_cast %18 : vector<2x16x16x3xf32> to vector<512x3xf32>
    %c0_41 = arith.constant 0 : index
    %c2_42 = arith.constant 2 : index
    %c2_43 = arith.constant 2 : index
    %c0_44 = arith.constant 0 : index
    %20 = vector.load %arg10[%c0_41, %c2_42, %c2_43, %c0_44] : memref<2x18x18x3xf32, #tpu.memory_space<vmem>>, vector<2x16x16x3xf32>
    %21 = vector.shape_cast %20 : vector<2x16x16x3xf32> to vector<512x3xf32>
    %22 = tpu.concatenate %5, %7, %9, %11, %13, %15, %17, %19, %21 in 1 : vector<512x3xf32>, vector<512x3xf32>, vector<512x3xf32>, vector<512x3xf32>, vector<512x3xf32>, vector<512x3xf32>, vector<512x3xf32>, vector<512x3xf32>, vector<512x3xf32> -> vector<512x27xf32>
    %c0_45 = arith.constant 0 : index
    %c0_46 = arith.constant 0 : index
    %23 = vector.load %arg1[%c0_45, %c0_46] : memref<27x32xf32, #tpu.memory_space<vmem>>, vector<27x32xf32>
    %cst_47 = arith.constant dense<0.000000e+00> : vector<512x32xf32>
    %24 = tpu.matmul %22, %23, %cst_47 {dimension_numbers = #tpu.dot_dimension_numbers<[1], [0], [0], [1], [0, 0, 1, 1], [], []>} : vector<512x27xf32>, vector<27x32xf32>, vector<512x32xf32> -> vector<512x32xf32>
    %c0_48 = arith.constant 0 : index
    %c0_49 = arith.constant 0 : index
    %25 = vector.load %arg2[%c0_48, %c0_49] : memref<1x32xf32, #tpu.memory_space<vmem>>, vector<1x32xf32>
    %26 = vector.broadcast %25 : vector<1x32xf32> to vector<512x32xf32>
    %27 = arith.addf %24, %26 : vector<512x32xf32>
    %cst_50 = arith.constant 0.000000e+00 : f32
    %28 = vector.broadcast %cst_50 : f32 to vector<512x32xf32>
    %29 = arith.maximumf %27, %28 : vector<512x32xf32>
    %30 = vector.shape_cast %29 : vector<512x32xf32> to vector<2x16x16x32xf32>
    %31 = vector.shape_cast %30 : vector<2x16x16x32xf32> to vector<2x8x2x16x32xf32>
    %cst_51 = arith.constant dense<0xFF800000> : vector<2x8x16x32xf32>
    %32 = vector.multi_reduction <maximumf>, %31, %cst_51 [2] : vector<2x8x2x16x32xf32> to vector<2x8x16x32xf32>
    %33 = vector.shape_cast %32 : vector<2x8x16x32xf32> to vector<2x8x8x2x32xf32>
    %cst_52 = arith.constant dense<0xFF800000> : vector<2x8x8x32xf32>
    %34 = vector.multi_reduction <maximumf>, %33, %cst_52 [3] : vector<2x8x8x2x32xf32> to vector<2x8x8x32xf32>
    %cst_53 = arith.constant 0.000000e+00 : f32
    %35 = vector.broadcast %cst_53 : f32 to vector<2x10x10x32xf32>
    %c0_54 = arith.constant 0 : index
    %c0_55 = arith.constant 0 : index
    %c0_56 = arith.constant 0 : index
    %c0_57 = arith.constant 0 : index
    %36 = vector.load %arg11[%c0_54, %c0_55, %c0_56, %c0_57] : memref<2x10x10x32xf32, #tpu.memory_space<vmem>>, vector<2x10x10x32xf32>
    tpu.vector_store %arg11[%c0_54, %c0_55, %c0_56, %c0_57], %35 {strides = array<i32>} : memref<2x10x10x32xf32, #tpu.memory_space<vmem>>, vector<2x10x10x32xf32>,
    %c0_58 = arith.constant 0 : index
    %c1_59 = arith.constant 1 : index
    %c1_60 = arith.constant 1 : index
    %c0_61 = arith.constant 0 : index
    %37 = vector.load %arg11[%c0_58, %c1_59, %c1_60, %c0_61] : memref<2x10x10x32xf32, #tpu.memory_space<vmem>>, vector<2x8x8x32xf32>
    tpu.vector_store %arg11[%c0_58, %c1_59, %c1_60, %c0_61], %34 {strides = array<i32>} : memref<2x10x10x32xf32, #tpu.memory_space<vmem>>, vector<2x8x8x32xf32>,
    %c0_62 = arith.constant 0 : index
    %c0_63 = arith.constant 0 : index
    %c0_64 = arith.constant 0 : index
    %c0_65 = arith.constant 0 : index
    %38 = vector.load %arg11[%c0_62, %c0_63, %c0_64, %c0_65] : memref<2x10x10x32xf32, #tpu.memory_space<vmem>>, vector<2x8x8x32xf32>
    %39 = vector.shape_cast %38 : vector<2x8x8x32xf32> to vector<128x32xf32>
    %c0_66 = arith.constant 0 : index
    %c0_67 = arith.constant 0 : index
    %c1_68 = arith.constant 1 : index
    %c0_69 = arith.constant 0 : index
    %40 = vector.load %arg11[%c0_66, %c0_67, %c1_68, %c0_69] : memref<2x10x10x32xf32, #tpu.memory_space<vmem>>, vector<2x8x8x32xf32>
    %41 = vector.shape_cast %40 : vector<2x8x8x32xf32> to vector<128x32xf32>
    %c0_70 = arith.constant 0 : index
    %c0_71 = arith.constant 0 : index
    %c2_72 = arith.constant 2 : index
    %c0_73 = arith.constant 0 : index
    %42 = vector.load %arg11[%c0_70, %c0_71, %c2_72, %c0_73] : memref<2x10x10x32xf32, #tpu.memory_space<vmem>>, vector<2x8x8x32xf32>
    %43 = vector.shape_cast %42 : vector<2x8x8x32xf32> to vector<128x32xf32>
    %c0_74 = arith.constant 0 : index
    %c1_75 = arith.constant 1 : index
    %c0_76 = arith.constant 0 : index
    %c0_77 = arith.constant 0 : index
    %44 = vector.load %arg11[%c0_74, %c1_75, %c0_76, %c0_77] : memref<2x10x10x32xf32, #tpu.memory_space<vmem>>, vector<2x8x8x32xf32>
    %45 = vector.shape_cast %44 : vector<2x8x8x32xf32> to vector<128x32xf32>
    %c0_78 = arith.constant 0 : index
    %c1_79 = arith.constant 1 : index
    %c1_80 = arith.constant 1 : index
    %c0_81 = arith.constant 0 : index
    %46 = vector.load %arg11[%c0_78, %c1_79, %c1_80, %c0_81] : memref<2x10x10x32xf32, #tpu.memory_space<vmem>>, vector<2x8x8x32xf32>
    %47 = vector.shape_cast %46 : vector<2x8x8x32xf32> to vector<128x32xf32>
    %c0_82 = arith.constant 0 : index
    %c1_83 = arith.constant 1 : index
    %c2_84 = arith.constant 2 : index
    %c0_85 = arith.constant 0 : index
    %48 = vector.load %arg11[%c0_82, %c1_83, %c2_84, %c0_85] : memref<2x10x10x32xf32, #tpu.memory_space<vmem>>, vector<2x8x8x32xf32>
    %49 = vector.shape_cast %48 : vector<2x8x8x32xf32> to vector<128x32xf32>
    %c0_86 = arith.constant 0 : index
    %c2_87 = arith.constant 2 : index
    %c0_88 = arith.constant 0 : index
    %c0_89 = arith.constant 0 : index
    %50 = vector.load %arg11[%c0_86, %c2_87, %c0_88, %c0_89] : memref<2x10x10x32xf32, #tpu.memory_space<vmem>>, vector<2x8x8x32xf32>
    %51 = vector.shape_cast %50 : vector<2x8x8x32xf32> to vector<128x32xf32>
    %c0_90 = arith.constant 0 : index
    %c2_91 = arith.constant 2 : index
    %c1_92 = arith.constant 1 : index
    %c0_93 = arith.constant 0 : index
    %52 = vector.load %arg11[%c0_90, %c2_91, %c1_92, %c0_93] : memref<2x10x10x32xf32, #tpu.memory_space<vmem>>, vector<2x8x8x32xf32>
    %53 = vector.shape_cast %52 : vector<2x8x8x32xf32> to vector<128x32xf32>
    %c0_94 = arith.constant 0 : index
    %c2_95 = arith.constant 2 : index
    %c2_96 = arith.constant 2 : index
    %c0_97 = arith.constant 0 : index
    %54 = vector.load %arg11[%c0_94, %c2_95, %c2_96, %c0_97] : memref<2x10x10x32xf32, #tpu.memory_space<vmem>>, vector<2x8x8x32xf32>
    %55 = vector.shape_cast %54 : vector<2x8x8x32xf32> to vector<128x32xf32>
    %56 = tpu.concatenate %39, %41, %43, %45, %47, %49, %51, %53, %55 in 1 : vector<128x32xf32>, vector<128x32xf32>, vector<128x32xf32>, vector<128x32xf32>, vector<128x32xf32>, vector<128x32xf32>, vector<128x32xf32>, vector<128x32xf32>, vector<128x32xf32> -> vector<128x288xf32>
    %c0_98 = arith.constant 0 : index
    %c0_99 = arith.constant 0 : index
    %57 = vector.load %arg3[%c0_98, %c0_99] : memref<288x64xf32, #tpu.memory_space<vmem>>, vector<288x64xf32>
    %cst_100 = arith.constant dense<0.000000e+00> : vector<128x64xf32>
    %58 = tpu.matmul %56, %57, %cst_100 {dimension_numbers = #tpu.dot_dimension_numbers<[1], [0], [0], [1], [0, 0, 1, 1], [], []>} : vector<128x288xf32>, vector<288x64xf32>, vector<128x64xf32> -> vector<128x64xf32>
    %c0_101 = arith.constant 0 : index
    %c0_102 = arith.constant 0 : index
    %59 = vector.load %arg4[%c0_101, %c0_102] : memref<1x64xf32, #tpu.memory_space<vmem>>, vector<1x64xf32>
    %60 = vector.broadcast %59 : vector<1x64xf32> to vector<128x64xf32>
    %61 = arith.addf %58, %60 : vector<128x64xf32>
    %cst_103 = arith.constant 0.000000e+00 : f32
    %62 = vector.broadcast %cst_103 : f32 to vector<128x64xf32>
    %63 = arith.maximumf %61, %62 : vector<128x64xf32>
    %64 = vector.shape_cast %63 : vector<128x64xf32> to vector<2x8x8x64xf32>
    %65 = vector.shape_cast %64 : vector<2x8x8x64xf32> to vector<2x4x2x8x64xf32>
    %cst_104 = arith.constant dense<0xFF800000> : vector<2x4x8x64xf32>
    %66 = vector.multi_reduction <maximumf>, %65, %cst_104 [2] : vector<2x4x2x8x64xf32> to vector<2x4x8x64xf32>
    %67 = vector.shape_cast %66 : vector<2x4x8x64xf32> to vector<2x4x4x2x64xf32>
    %cst_105 = arith.constant dense<0xFF800000> : vector<2x4x4x64xf32>
    %68 = vector.multi_reduction <maximumf>, %67, %cst_105 [3] : vector<2x4x4x2x64xf32> to vector<2x4x4x64xf32>
    %69 = vector.shape_cast %68 : vector<2x4x4x64xf32> to vector<2x16x64xf32>
    %70 = vector.extract_strided_slice %69 {offsets = [0, 0, 0], sizes = [2, 1, 64], strides = [1, 1, 1]} : vector<2x16x64xf32> to vector<2x1x64xf32>
    %71 = vector.shape_cast %70 : vector<2x1x64xf32> to vector<2x64xf32>
    %72 = vector.extract_strided_slice %69 {offsets = [0, 1, 0], sizes = [2, 1, 64], strides = [1, 1, 1]} : vector<2x16x64xf32> to vector<2x1x64xf32>
    %73 = vector.shape_cast %72 : vector<2x1x64xf32> to vector<2x64xf32>
    %74 = vector.extract_strided_slice %69 {offsets = [0, 2, 0], sizes = [2, 1, 64], strides = [1, 1, 1]} : vector<2x16x64xf32> to vector<2x1x64xf32>
    %75 = vector.shape_cast %74 : vector<2x1x64xf32> to vector<2x64xf32>
    %76 = vector.extract_strided_slice %69 {offsets = [0, 3, 0], sizes = [2, 1, 64], strides = [1, 1, 1]} : vector<2x16x64xf32> to vector<2x1x64xf32>
    %77 = vector.shape_cast %76 : vector<2x1x64xf32> to vector<2x64xf32>
    %78 = vector.extract_strided_slice %69 {offsets = [0, 4, 0], sizes = [2, 1, 64], strides = [1, 1, 1]} : vector<2x16x64xf32> to vector<2x1x64xf32>
    %79 = vector.shape_cast %78 : vector<2x1x64xf32> to vector<2x64xf32>
    %80 = vector.extract_strided_slice %69 {offsets = [0, 5, 0], sizes = [2, 1, 64], strides = [1, 1, 1]} : vector<2x16x64xf32> to vector<2x1x64xf32>
    %81 = vector.shape_cast %80 : vector<2x1x64xf32> to vector<2x64xf32>
    %82 = vector.extract_strided_slice %69 {offsets = [0, 6, 0], sizes = [2, 1, 64], strides = [1, 1, 1]} : vector<2x16x64xf32> to vector<2x1x64xf32>
    %83 = vector.shape_cast %82 : vector<2x1x64xf32> to vector<2x64xf32>
    %84 = vector.extract_strided_slice %69 {offsets = [0, 7, 0], sizes = [2, 1, 64], strides = [1, 1, 1]} : vector<2x16x64xf32> to vector<2x1x64xf32>
    %85 = vector.shape_cast %84 : vector<2x1x64xf32> to vector<2x64xf32>
    %86 = vector.extract_strided_slice %69 {offsets = [0, 8, 0], sizes = [2, 1, 64], strides = [1, 1, 1]} : vector<2x16x64xf32> to vector<2x1x64xf32>
    %87 = vector.shape_cast %86 : vector<2x1x64xf32> to vector<2x64xf32>
    %88 = vector.extract_strided_slice %69 {offsets = [0, 9, 0], sizes = [2, 1, 64], strides = [1, 1, 1]} : vector<2x16x64xf32> to vector<2x1x64xf32>
    %89 = vector.shape_cast %88 : vector<2x1x64xf32> to vector<2x64xf32>
    %90 = vector.extract_strided_slice %69 {offsets = [0, 10, 0], sizes = [2, 1, 64], strides = [1, 1, 1]} : vector<2x16x64xf32> to vector<2x1x64xf32>
    %91 = vector.shape_cast %90 : vector<2x1x64xf32> to vector<2x64xf32>
    %92 = vector.extract_strided_slice %69 {offsets = [0, 11, 0], sizes = [2, 1, 64], strides = [1, 1, 1]} : vector<2x16x64xf32> to vector<2x1x64xf32>
    %93 = vector.shape_cast %92 : vector<2x1x64xf32> to vector<2x64xf32>
    %94 = vector.extract_strided_slice %69 {offsets = [0, 12, 0], sizes = [2, 1, 64], strides = [1, 1, 1]} : vector<2x16x64xf32> to vector<2x1x64xf32>
    %95 = vector.shape_cast %94 : vector<2x1x64xf32> to vector<2x64xf32>
    %96 = vector.extract_strided_slice %69 {offsets = [0, 13, 0], sizes = [2, 1, 64], strides = [1, 1, 1]} : vector<2x16x64xf32> to vector<2x1x64xf32>
    %97 = vector.shape_cast %96 : vector<2x1x64xf32> to vector<2x64xf32>
    %98 = vector.extract_strided_slice %69 {offsets = [0, 14, 0], sizes = [2, 1, 64], strides = [1, 1, 1]} : vector<2x16x64xf32> to vector<2x1x64xf32>
    %99 = vector.shape_cast %98 : vector<2x1x64xf32> to vector<2x64xf32>
    %100 = vector.extract_strided_slice %69 {offsets = [0, 15, 0], sizes = [2, 1, 64], strides = [1, 1, 1]} : vector<2x16x64xf32> to vector<2x1x64xf32>
    %101 = vector.shape_cast %100 : vector<2x1x64xf32> to vector<2x64xf32>
    %102 = tpu.concatenate %71, %73, %75, %77, %79, %81, %83, %85, %87, %89, %91, %93, %95, %97, %99, %101 in 1 : vector<2x64xf32>, vector<2x64xf32>, vector<2x64xf32>, vector<2x64xf32>, vector<2x64xf32>, vector<2x64xf32>, vector<2x64xf32>, vector<2x64xf32>, vector<2x64xf32>, vector<2x64xf32>, vector<2x64xf32>, vector<2x64xf32>, vector<2x64xf32>, vector<2x64xf32>, vector<2x64xf32>, vector<2x64xf32> -> vector<2x1024xf32>
    %c0_106 = arith.constant 0 : index
    %c0_107 = arith.constant 0 : index
    %103 = vector.load %arg5[%c0_106, %c0_107] : memref<1024x128xf32, #tpu.memory_space<vmem>>, vector<1024x128xf32>
    %cst_108 = arith.constant dense<0.000000e+00> : vector<2x128xf32>
    %104 = tpu.matmul %102, %103, %cst_108 {dimension_numbers = #tpu.dot_dimension_numbers<[1], [0], [0], [1], [0, 0, 1, 1], [], []>} : vector<2x1024xf32>, vector<1024x128xf32>, vector<2x128xf32> -> vector<2x128xf32>
    %c0_109 = arith.constant 0 : index
    %c0_110 = arith.constant 0 : index
    %105 = vector.load %arg6[%c0_109, %c0_110] : memref<1x128xf32, #tpu.memory_space<vmem>>, vector<1x128xf32>
    %106 = vector.broadcast %105 : vector<1x128xf32> to vector<2x128xf32>
    %107 = arith.addf %104, %106 : vector<2x128xf32>
    %cst_111 = arith.constant 0.000000e+00 : f32
    %108 = vector.broadcast %cst_111 : f32 to vector<2x128xf32>
    %109 = arith.maximumf %107, %108 : vector<2x128xf32>
    %c0_112 = arith.constant 0 : index
    %c0_113 = arith.constant 0 : index
    %110 = vector.load %arg7[%c0_112, %c0_113] : memref<128x2xf32, #tpu.memory_space<vmem>>, vector<128x2xf32>
    %cst_114 = arith.constant dense<0.000000e+00> : vector<2x2xf32>
    %111 = tpu.matmul %109, %110, %cst_114 {dimension_numbers = #tpu.dot_dimension_numbers<[1], [0], [0], [1], [0, 0, 1, 1], [], []>} : vector<2x128xf32>, vector<128x2xf32>, vector<2x2xf32> -> vector<2x2xf32>
    %c0_115 = arith.constant 0 : index
    %c0_116 = arith.constant 0 : index
    %112 = vector.load %arg8[%c0_115, %c0_116] : memref<1x2xf32, #tpu.memory_space<vmem>>, vector<1x2xf32>
    %113 = vector.broadcast %112 : vector<1x2xf32> to vector<2x2xf32>
    %114 = arith.addf %111, %113 : vector<2x2xf32>
    %c0_117 = arith.constant 0 : index
    %c0_118 = arith.constant 0 : index
    %115 = vector.load %arg9[%c0_117, %c0_118] : memref<2x2xf32, #tpu.memory_space<vmem>>, vector<2x2xf32>
    tpu.vector_store %arg9[%c0_117, %c0_118], %114 {strides = array<i32>} : memref<2x2xf32, #tpu.memory_space<vmem>>, vector<2x2xf32>,
    return
  }
}

</mosaic_0001>

<llo_original>
// kernel: initial_cnn_forward.1
$region0: #{initial_cnn_forward.1}
  #allocation0 [shape = 'u32[]', space=smem, size = 0x4, offset = 0x4, fixed_abs, tag = 'smem constant byte address 0x4 - core index']
  #allocation1 [shape = 'u32[144,128]{1,0:T(1,128)}', space=vmem, size = 0x12000, scoped, tag = 'internal scratch']
  #allocation2 [shape = 'f32[2,18,18,3]{3,2,1,0:T(8,128)}', space=vmem, size = 0x6c000, scoped, tag = 'scratch operand']
  #allocation3 [shape = 'f32[2,10,10,32]{3,2,1,0:T(8,128)}', space=vmem, size = 0x28000, scoped, tag = 'scratch operand']
  %s0 = inlined_call_operand.vmem [shape: f32[2,16,16,3], index: 0, kind: input, shape index: {}]
  %s1 = inlined_call_operand.vmem [shape: f32[27,32], index: 1, kind: input, shape index: {}]
  %s2 = inlined_call_operand.vmem [shape: f32[1,32], index: 2, kind: input, shape index: {}]
  %s3 = inlined_call_operand.vmem [shape: f32[288,64], index: 3, kind: input, shape index: {}]
  %s4 = inlined_call_operand.vmem [shape: f32[1,64], index: 4, kind: input, shape index: {}]
  %s5 = inlined_call_operand.vmem [shape: f32[1024,128], index: 5, kind: input, shape index: {}]
  %s6 = inlined_call_operand.vmem [shape: f32[1,128], index: 6, kind: input, shape index: {}]
  %s7 = inlined_call_operand.vmem [shape: f32[128,2], index: 7, kind: input, shape index: {}]
  %s8 = inlined_call_operand.vmem [shape: f32[1,2], index: 8, kind: input, shape index: {}]
  %s9 = inlined_call_operand.hbm [shape: f32[2,2], index: 9, kind: output, shape index: {}]
  %s10 = sld [smem:[#allocation0]]
  $region46: #{initial_cnn_forward.1} parent=0
    _
  %s12 = ssub.s32 1, %s10
  %s13 = scalar_select 0, %s12, %s10
  $region1: #{initial_cnn_forward.1} parent=0
    #allocation4 [shape = 'u8[1024]{0}', space=vmem, size = 0x400, scoped, tag = 'output window, operand 0, single buffered']
    #allocation5 [shape = 's32[1]{0}', space=sflag, size = 0x4, scoped, tag = 'scoped memory for initial_cnn_forward.1']
    %14 = vsyncpa [#allocation5], 0
    // Predicated region
    $region2: #{initial_cnn_forward.1} parent=1 // pred_check
      _
    $region3: #{initial_cnn_forward.1} parent=1 // pred_check_branch
      %16 = sbr.rel (0) target = $region5
    $region4: #{initial_cnn_forward.1} parent=1 // pred_region
      _
    $region5: #{initial_cnn_forward.1} parent=1 // pred_fallthru
      _
    // Predicated region
    $region6: #{initial_cnn_forward.1} parent=1 // pred_check
      _
    $region7: #{initial_cnn_forward.1} parent=1 // pred_check_branch
      %18 = sbr.rel (0) target = $region9
    $region8: #{initial_cnn_forward.1} parent=1 // pred_region
      _
    $region9: #{initial_cnn_forward.1} parent=1 // pred_fallthru
      _
    // Predicated region
    $region10: #{initial_cnn_forward.1} parent=1 // pred_check
      _
    $region11: #{initial_cnn_forward.1} parent=1 // pred_check_branch
      %20 = sbr.rel (0) target = $region13
    $region12: #{initial_cnn_forward.1} parent=1 // pred_region
      _
    $region13: #{initial_cnn_forward.1} parent=1 // pred_fallthru
      _
    // Predicated region
    $region14: #{initial_cnn_forward.1} parent=1 // pred_check
      _
    $region15: #{initial_cnn_forward.1} parent=1 // pred_check_branch
      %22 = sbr.rel (0) target = $region17
    $region16: #{initial_cnn_forward.1} parent=1 // pred_region
      _
    $region17: #{initial_cnn_forward.1} parent=1 // pred_fallthru
      _
    // Predicated region
    $region18: #{initial_cnn_forward.1} parent=1 // pred_check
      _
    $region19: #{initial_cnn_forward.1} parent=1 // pred_check_branch
      %24 = sbr.rel (0) target = $region21
    $region20: #{initial_cnn_forward.1} parent=1 // pred_region
      _
    $region21: #{initial_cnn_forward.1} parent=1 // pred_fallthru
      _
    // Predicated region
    $region22: #{initial_cnn_forward.1} parent=1 // pred_check
      _
    $region23: #{initial_cnn_forward.1} parent=1 // pred_check_branch
      %26 = sbr.rel (0) target = $region25
    $region24: #{initial_cnn_forward.1} parent=1 // pred_region
      _
    $region25: #{initial_cnn_forward.1} parent=1 // pred_fallthru
      _
    // Predicated region
    $region26: #{initial_cnn_forward.1} parent=1 // pred_check
      _
    $region27: #{initial_cnn_forward.1} parent=1 // pred_check_branch
      %28 = sbr.rel (0) target = $region29
    $region28: #{initial_cnn_forward.1} parent=1 // pred_region
      _
    $region29: #{initial_cnn_forward.1} parent=1 // pred_fallthru
      _
    // Predicated region
    $region30: #{initial_cnn_forward.1} parent=1 // pred_check
      _
    $region31: #{initial_cnn_forward.1} parent=1 // pred_check_branch
      %30 = sbr.rel (0) target = $region33
    $region32: #{initial_cnn_forward.1} parent=1 // pred_region
      _
    $region33: #{initial_cnn_forward.1} parent=1 // pred_fallthru
      _
    // Predicated region
    $region34: #{initial_cnn_forward.1} parent=1 // pred_check
      _
    $region35: #{initial_cnn_forward.1} parent=1 // pred_check_branch
      %32 = sbr.rel (0) target = $region37
    $region36: #{initial_cnn_forward.1} parent=1 // pred_region
      _
    $region37: #{initial_cnn_forward.1} parent=1 // pred_fallthru
      _
    %vm33 = vcmask 23552
    %34 = vst.msk [vmem:[#allocation2] sm:$0xff] %vm33, 0.0
    %35 = vst.msk [vmem:[#allocation2 + $0x8] sm:$0xff] %vm33, 0.0
    %vm36 = vcmask 17408
    %37 = vst.msk [vmem:[#allocation2 + $0x10] sm:$0x3] %vm36, 0.0
    %38 = vst.msk [vmem:[#allocation2 + $0x18] sm:$0xff] %vm33, 0.0
    %39 = vst.msk [vmem:[#allocation2 + $0x20] sm:$0xff] %vm33, 0.0
    %40 = vst.msk [vmem:[#allocation2 + $0x28] sm:$0x3] %vm36, 0.0
    %41 = vst.msk [vmem:[#allocation2 + $0x30] sm:$0xff] %vm33, 0.0
    %42 = vst.msk [vmem:[#allocation2 + $0x38] sm:$0xff] %vm33, 0.0
    %43 = vst.msk [vmem:[#allocation2 + $0x40] sm:$0x3] %vm36, 0.0
    %44 = vst.msk [vmem:[#allocation2 + $0x48] sm:$0xff] %vm33, 0.0
    %45 = vst.msk [vmem:[#allocation2 + $0x50] sm:$0xff] %vm33, 0.0
    %46 = vst.msk [vmem:[#allocation2 + $0x58] sm:$0x3] %vm36, 0.0
    %47 = vst.msk [vmem:[#allocation2 + $0x60] sm:$0xff] %vm33, 0.0
    %48 = vst.msk [vmem:[#allocation2 + $0x68] sm:$0xff] %vm33, 0.0
    %49 = vst.msk [vmem:[#allocation2 + $0x70] sm:$0x3] %vm36, 0.0
    %50 = vst.msk [vmem:[#allocation2 + $0x78] sm:$0xff] %vm33, 0.0
    %51 = vst.msk [vmem:[#allocation2 + $0x80] sm:$0xff] %vm33, 0.0
    %52 = vst.msk [vmem:[#allocation2 + $0x88] sm:$0x3] %vm36, 0.0
    %53 = vst.msk [vmem:[#allocation2 + $0x90] sm:$0xff] %vm33, 0.0
    %54 = vst.msk [vmem:[#allocation2 + $0x98] sm:$0xff] %vm33, 0.0
    %55 = vst.msk [vmem:[#allocation2 + $0xa0] sm:$0x3] %vm36, 0.0
    %56 = vst.msk [vmem:[#allocation2 + $0xa8] sm:$0xff] %vm33, 0.0
    %57 = vst.msk [vmem:[#allocation2 + $0xb0] sm:$0xff] %vm33, 0.0
    %58 = vst.msk [vmem:[#allocation2 + $0xb8] sm:$0x3] %vm36, 0.0
    %59 = vst.msk [vmem:[#allocation2 + $0xc0] sm:$0xff] %vm33, 0.0
    %60 = vst.msk [vmem:[#allocation2 + $0xc8] sm:$0xff] %vm33, 0.0
    %61 = vst.msk [vmem:[#allocation2 + $0xd0] sm:$0x3] %vm36, 0.0
    %62 = vst.msk [vmem:[#allocation2 + $0xd8] sm:$0xff] %vm33, 0.0
    %63 = vst.msk [vmem:[#allocation2 + $0xe0] sm:$0xff] %vm33, 0.0
    %64 = vst.msk [vmem:[#allocation2 + $0xe8] sm:$0x3] %vm36, 0.0
    %65 = vst.msk [vmem:[#allocation2 + $0xf0] sm:$0xff] %vm33, 0.0
    %66 = vst.msk [vmem:[#allocation2 + $0xf8] sm:$0xff] %vm33, 0.0
    %67 = vst.msk [vmem:[#allocation2 + $0x100] sm:$0x3] %vm36, 0.0
    %68 = vst.msk [vmem:[#allocation2 + $0x108] sm:$0xff] %vm33, 0.0
    %69 = vst.msk [vmem:[#allocation2 + $0x110] sm:$0xff] %vm33, 0.0
    %70 = vst.msk [vmem:[#allocation2 + $0x118] sm:$0x3] %vm36, 0.0
    %71 = vst.msk [vmem:[#allocation2 + $0x120] sm:$0xff] %vm33, 0.0
    %72 = vst.msk [vmem:[#allocation2 + $0x128] sm:$0xff] %vm33, 0.0
    %73 = vst.msk [vmem:[#allocation2 + $0x130] sm:$0x3] %vm36, 0.0
    %74 = vst.msk [vmem:[#allocation2 + $0x138] sm:$0xff] %vm33, 0.0
    %75 = vst.msk [vmem:[#allocation2 + $0x140] sm:$0xff] %vm33, 0.0
    %76 = vst.msk [vmem:[#allocation2 + $0x148] sm:$0x3] %vm36, 0.0
    %77 = vst.msk [vmem:[#allocation2 + $0x150] sm:$0xff] %vm33, 0.0
    %78 = vst.msk [vmem:[#allocation2 + $0x158] sm:$0xff] %vm33, 0.0
    %79 = vst.msk [vmem:[#allocation2 + $0x160] sm:$0x3] %vm36, 0.0
    %80 = vst.msk [vmem:[#allocation2 + $0x168] sm:$0xff] %vm33, 0.0
    %81 = vst.msk [vmem:[#allocation2 + $0x170] sm:$0xff] %vm33, 0.0
    %82 = vst.msk [vmem:[#allocation2 + $0x178] sm:$0x3] %vm36, 0.0
    %83 = vst.msk [vmem:[#allocation2 + $0x180] sm:$0xff] %vm33, 0.0
    %84 = vst.msk [vmem:[#allocation2 + $0x188] sm:$0xff] %vm33, 0.0
    %85 = vst.msk [vmem:[#allocation2 + $0x190] sm:$0x3] %vm36, 0.0
    %86 = vst.msk [vmem:[#allocation2 + $0x198] sm:$0xff] %vm33, 0.0
    %87 = vst.msk [vmem:[#allocation2 + $0x1a0] sm:$0xff] %vm33, 0.0
    %88 = vst.msk [vmem:[#allocation2 + $0x1a8] sm:$0x3] %vm36, 0.0
    %89 = vst.msk [vmem:[#allocation2 + $0x1b0] sm:$0xff] %vm33, 0.0
    %90 = vst.msk [vmem:[#allocation2 + $0x1b8] sm:$0xff] %vm33, 0.0
    %91 = vst.msk [vmem:[#allocation2 + $0x1c0] sm:$0x3] %vm36, 0.0
    %92 = vst.msk [vmem:[#allocation2 + $0x1c8] sm:$0xff] %vm33, 0.0
    %93 = vst.msk [vmem:[#allocation2 + $0x1d0] sm:$0xff] %vm33, 0.0
    %94 = vst.msk [vmem:[#allocation2 + $0x1d8] sm:$0x3] %vm36, 0.0
    %95 = vst.msk [vmem:[#allocation2 + $0x1e0] sm:$0xff] %vm33, 0.0
    %96 = vst.msk [vmem:[#allocation2 + $0x1e8] sm:$0xff] %vm33, 0.0
    %97 = vst.msk [vmem:[#allocation2 + $0x1f0] sm:$0x3] %vm36, 0.0
    %98 = vst.msk [vmem:[#allocation2 + $0x1f8] sm:$0xff] %vm33, 0.0
    %99 = vst.msk [vmem:[#allocation2 + $0x200] sm:$0xff] %vm33, 0.0
    %100 = vst.msk [vmem:[#allocation2 + $0x208] sm:$0x3] %vm36, 0.0
    %101 = vst.msk [vmem:[#allocation2 + $0x210] sm:$0xff] %vm33, 0.0
    %102 = vst.msk [vmem:[#allocation2 + $0x218] sm:$0xff] %vm33, 0.0
    %103 = vst.msk [vmem:[#allocation2 + $0x220] sm:$0x3] %vm36, 0.0
    %104 = vst.msk [vmem:[#allocation2 + $0x228] sm:$0xff] %vm33, 0.0
    %105 = vst.msk [vmem:[#allocation2 + $0x230] sm:$0xff] %vm33, 0.0
    %106 = vst.msk [vmem:[#allocation2 + $0x238] sm:$0x3] %vm36, 0.0
    %107 = vst.msk [vmem:[#allocation2 + $0x240] sm:$0xff] %vm33, 0.0
    %108 = vst.msk [vmem:[#allocation2 + $0x248] sm:$0xff] %vm33, 0.0
    %109 = vst.msk [vmem:[#allocation2 + $0x250] sm:$0x3] %vm36, 0.0
    %110 = vst.msk [vmem:[#allocation2 + $0x258] sm:$0xff] %vm33, 0.0
    %111 = vst.msk [vmem:[#allocation2 + $0x260] sm:$0xff] %vm33, 0.0
    %112 = vst.msk [vmem:[#allocation2 + $0x268] sm:$0x3] %vm36, 0.0
    %113 = vst.msk [vmem:[#allocation2 + $0x270] sm:$0xff] %vm33, 0.0
    %114 = vst.msk [vmem:[#allocation2 + $0x278] sm:$0xff] %vm33, 0.0
    %115 = vst.msk [vmem:[#allocation2 + $0x280] sm:$0x3] %vm36, 0.0
    %116 = vst.msk [vmem:[#allocation2 + $0x288] sm:$0xff] %vm33, 0.0
    %117 = vst.msk [vmem:[#allocation2 + $0x290] sm:$0xff] %vm33, 0.0
    %118 = vst.msk [vmem:[#allocation2 + $0x298] sm:$0x3] %vm36, 0.0
    %119 = vst.msk [vmem:[#allocation2 + $0x2a0] sm:$0xff] %vm33, 0.0
    %120 = vst.msk [vmem:[#allocation2 + $0x2a8] sm:$0xff] %vm33, 0.0
    %121 = vst.msk [vmem:[#allocation2 + $0x2b0] sm:$0x3] %vm36, 0.0
    %122 = vst.msk [vmem:[#allocation2 + $0x2b8] sm:$0xff] %vm33, 0.0
    %123 = vst.msk [vmem:[#allocation2 + $0x2c0] sm:$0xff] %vm33, 0.0
    %124 = vst.msk [vmem:[#allocation2 + $0x2c8] sm:$0x3] %vm36, 0.0
    %125 = vst.msk [vmem:[#allocation2 + $0x2d0] sm:$0xff] %vm33, 0.0
    %126 = vst.msk [vmem:[#allocation2 + $0x2d8] sm:$0xff] %vm33, 0.0
    %127 = vst.msk [vmem:[#allocation2 + $0x2e0] sm:$0x3] %vm36, 0.0
    %128 = vst.msk [vmem:[#allocation2 + $0x2e8] sm:$0xff] %vm33, 0.0
    %129 = vst.msk [vmem:[#allocation2 + $0x2f0] sm:$0xff] %vm33, 0.0
    %130 = vst.msk [vmem:[#allocation2 + $0x2f8] sm:$0x3] %vm36, 0.0
    %131 = vst.msk [vmem:[#allocation2 + $0x300] sm:$0xff] %vm33, 0.0
    %132 = vst.msk [vmem:[#allocation2 + $0x308] sm:$0xff] %vm33, 0.0
    %133 = vst.msk [vmem:[#allocation2 + $0x310] sm:$0x3] %vm36, 0.0
    %134 = vst.msk [vmem:[#allocation2 + $0x318] sm:$0xff] %vm33, 0.0
    %135 = vst.msk [vmem:[#allocation2 + $0x320] sm:$0xff] %vm33, 0.0
    %136 = vst.msk [vmem:[#allocation2 + $0x328] sm:$0x3] %vm36, 0.0
    %137 = vst.msk [vmem:[#allocation2 + $0x330] sm:$0xff] %vm33, 0.0
    %138 = vst.msk [vmem:[#allocation2 + $0x338] sm:$0xff] %vm33, 0.0
    %139 = vst.msk [vmem:[#allocation2 + $0x340] sm:$0x3] %vm36, 0.0
    %140 = vst.msk [vmem:[#allocation2 + $0x348] sm:$0xff] %vm33, 0.0
    %141 = vst.msk [vmem:[#allocation2 + $0x350] sm:$0xff] %vm33, 0.0
    %142 = vst.msk [vmem:[#allocation2 + $0x358] sm:$0x3] %vm36, 0.0
    %v143 = vld [vmem:[%s0] sm:$0xff]
    %v144 = vld [vmem:[%s0 + $0x8] sm:$0xff]
    %v145 = vld [vmem:[%s0 + $0x10] sm:$0xff]
    %v146 = vld [vmem:[%s0 + $0x18] sm:$0xff]
    %v147 = vld [vmem:[%s0 + $0x20] sm:$0xff]
    %v148 = vld [vmem:[%s0 + $0x28] sm:$0xff]
    %v149 = vld [vmem:[%s0 + $0x30] sm:$0xff]
    %v150 = vld [vmem:[%s0 + $0x38] sm:$0xff]
    %v151 = vld [vmem:[%s0 + $0x40] sm:$0xff]
    %v152 = vld [vmem:[%s0 + $0x48] sm:$0xff]
    %v153 = vld [vmem:[%s0 + $0x50] sm:$0xff]
    %v154 = vld [vmem:[%s0 + $0x58] sm:$0xff]
    %v155 = vld [vmem:[%s0 + $0x60] sm:$0xff]
    %v156 = vld [vmem:[%s0 + $0x68] sm:$0xff]
    %v157 = vld [vmem:[%s0 + $0x70] sm:$0xff]
    %v158 = vld [vmem:[%s0 + $0x78] sm:$0xff]
    %v159 = vld [vmem:[%s0 + $0x80] sm:$0xff]
    %v160 = vld [vmem:[%s0 + $0x88] sm:$0xff]
    %v161 = vld [vmem:[%s0 + $0x90] sm:$0xff]
    %v162 = vld [vmem:[%s0 + $0x98] sm:$0xff]
    %v163 = vld [vmem:[%s0 + $0xa0] sm:$0xff]
    %v164 = vld [vmem:[%s0 + $0xa8] sm:$0xff]
    %v165 = vld [vmem:[%s0 + $0xb0] sm:$0xff]
    %v166 = vld [vmem:[%s0 + $0xb8] sm:$0xff]
    %v167 = vld [vmem:[%s0 + $0xc0] sm:$0xff]
    %v168 = vld [vmem:[%s0 + $0xc8] sm:$0xff]
    %v169 = vld [vmem:[%s0 + $0xd0] sm:$0xff]
    %v170 = vld [vmem:[%s0 + $0xd8] sm:$0xff]
    %v171 = vld [vmem:[%s0 + $0xe0] sm:$0xff]
    %v172 = vld [vmem:[%s0 + $0xe8] sm:$0xff]
    %v173 = vld [vmem:[%s0 + $0xf0] sm:$0xff]
    %v174 = vld [vmem:[%s0 + $0xf8] sm:$0xff]
    %v175 = vld [vmem:[%s0 + $0x100] sm:$0xff]
    %v176 = vld [vmem:[%s0 + $0x108] sm:$0xff]
    %v177 = vld [vmem:[%s0 + $0x110] sm:$0xff]
    %v178 = vld [vmem:[%s0 + $0x118] sm:$0xff]
    %v179 = vld [vmem:[%s0 + $0x120] sm:$0xff]
    %v180 = vld [vmem:[%s0 + $0x128] sm:$0xff]
    %v181 = vld [vmem:[%s0 + $0x130] sm:$0xff]
    %v182 = vld [vmem:[%s0 + $0x138] sm:$0xff]
    %v183 = vld [vmem:[%s0 + $0x140] sm:$0xff]
    %v184 = vld [vmem:[%s0 + $0x148] sm:$0xff]
    %v185 = vld [vmem:[%s0 + $0x150] sm:$0xff]
    %v186 = vld [vmem:[%s0 + $0x158] sm:$0xff]
    %v187 = vld [vmem:[%s0 + $0x160] sm:$0xff]
    %v188 = vld [vmem:[%s0 + $0x168] sm:$0xff]
    %v189 = vld [vmem:[%s0 + $0x170] sm:$0xff]
    %v190 = vld [vmem:[%s0 + $0x178] sm:$0xff]
    %v191 = vld [vmem:[%s0 + $0x180] sm:$0xff]
    %v192 = vld [vmem:[%s0 + $0x188] sm:$0xff]
    %v193 = vld [vmem:[%s0 + $0x190] sm:$0xff]
    %v194 = vld [vmem:[%s0 + $0x198] sm:$0xff]
    %v195 = vld [vmem:[%s0 + $0x1a0] sm:$0xff]
    %v196 = vld [vmem:[%s0 + $0x1a8] sm:$0xff]
    %v197 = vld [vmem:[%s0 + $0x1b0] sm:$0xff]
    %v198 = vld [vmem:[%s0 + $0x1b8] sm:$0xff]
    %v199 = vld [vmem:[%s0 + $0x1c0] sm:$0xff]
    %v200 = vld [vmem:[%s0 + $0x1c8] sm:$0xff]
    %v201 = vld [vmem:[%s0 + $0x1d0] sm:$0xff]
    %v202 = vld [vmem:[%s0 + $0x1d8] sm:$0xff]
    %v203 = vld [vmem:[%s0 + $0x1e0] sm:$0xff]
    %v204 = vld [vmem:[%s0 + $0x1e8] sm:$0xff]
    %v205 = vld [vmem:[%s0 + $0x1f0] sm:$0xff]
    %v206 = vld [vmem:[%s0 + $0x1f8] sm:$0xff]
    %s207 = scalar_lea.vmem [#allocation2], 24
    %208 = vst.msk [vmem:[%s207 + $0x1] sm:$0xff] %vm33, %v143
    %209 = vst.msk [vmem:[%s207 + $0x9] sm:$0xff] %vm33, %v144
    %210 = vst.msk [vmem:[%s207 + $0x19] sm:$0xff] %vm33, %v145
    %211 = vst.msk [vmem:[%s207 + $0x21] sm:$0xff] %vm33, %v146
    %212 = vst.msk [vmem:[%s207 + $0x31] sm:$0xff] %vm33, %v147
    %213 = vst.msk [vmem:[%s207 + $0x39] sm:$0xff] %vm33, %v148
    %214 = vst.msk [vmem:[%s207 + $0x49] sm:$0xff] %vm33, %v149
    %215 = vst.msk [vmem:[%s207 + $0x51] sm:$0xff] %vm33, %v150
    %216 = vst.msk [vmem:[%s207 + $0x61] sm:$0xff] %vm33, %v151
    %217 = vst.msk [vmem:[%s207 + $0x69] sm:$0xff] %vm33, %v152
    %218 = vst.msk [vmem:[%s207 + $0x79] sm:$0xff] %vm33, %v153
    %219 = vst.msk [vmem:[%s207 + $0x81] sm:$0xff] %vm33, %v154
    %220 = vst.msk [vmem:[%s207 + $0x91] sm:$0xff] %vm33, %v155
    %221 = vst.msk [vmem:[%s207 + $0x99] sm:$0xff] %vm33, %v156
    %222 = vst.msk [vmem:[%s207 + $0xa9] sm:$0xff] %vm33, %v157
    %223 = vst.msk [vmem:[%s207 + $0xb1] sm:$0xff] %vm33, %v158
    %224 = vst.msk [vmem:[%s207 + $0xc1] sm:$0xff] %vm33, %v159
    %225 = vst.msk [vmem:[%s207 + $0xc9] sm:$0xff] %vm33, %v160
    %226 = vst.msk [vmem:[%s207 + $0xd9] sm:$0xff] %vm33, %v161
    %227 = vst.msk [vmem:[%s207 + $0xe1] sm:$0xff] %vm33, %v162
    %228 = vst.msk [vmem:[%s207 + $0xf1] sm:$0xff] %vm33, %v163
    %229 = vst.msk [vmem:[%s207 + $0xf9] sm:$0xff] %vm33, %v164
    %230 = vst.msk [vmem:[%s207 + $0x109] sm:$0xff] %vm33, %v165
    %231 = vst.msk [vmem:[%s207 + $0x111] sm:$0xff] %vm33, %v166
    %232 = vst.msk [vmem:[%s207 + $0x121] sm:$0xff] %vm33, %v167
    %233 = vst.msk [vmem:[%s207 + $0x129] sm:$0xff] %vm33, %v168
    %234 = vst.msk [vmem:[%s207 + $0x139] sm:$0xff] %vm33, %v169
    %235 = vst.msk [vmem:[%s207 + $0x141] sm:$0xff] %vm33, %v170
    %236 = vst.msk [vmem:[%s207 + $0x151] sm:$0xff] %vm33, %v171
    %237 = vst.msk [vmem:[%s207 + $0x159] sm:$0xff] %vm33, %v172
    %238 = vst.msk [vmem:[%s207 + $0x169] sm:$0xff] %vm33, %v173
    %239 = vst.msk [vmem:[%s207 + $0x171] sm:$0xff] %vm33, %v174
    %240 = vst.msk [vmem:[%s207 + $0x1b1] sm:$0xff] %vm33, %v175
    %241 = vst.msk [vmem:[%s207 + $0x1b9] sm:$0xff] %vm33, %v176
    %242 = vst.msk [vmem:[%s207 + $0x1c9] sm:$0xff] %vm33, %v177
    %243 = vst.msk [vmem:[%s207 + $0x1d1] sm:$0xff] %vm33, %v178
    %244 = vst.msk [vmem:[%s207 + $0x1e1] sm:$0xff] %vm33, %v179
    %245 = vst.msk [vmem:[%s207 + $0x1e9] sm:$0xff] %vm33, %v180
    %246 = vst.msk [vmem:[%s207 + $0x1f9] sm:$0xff] %vm33, %v181
    %247 = vst.msk [vmem:[%s207 + $0x201] sm:$0xff] %vm33, %v182
    %248 = vst.msk [vmem:[%s207 + $0x211] sm:$0xff] %vm33, %v183
    %249 = vst.msk [vmem:[%s207 + $0x219] sm:$0xff] %vm33, %v184
    %250 = vst.msk [vmem:[%s207 + $0x229] sm:$0xff] %vm33, %v185
    %251 = vst.msk [vmem:[%s207 + $0x231] sm:$0xff] %vm33, %v186
    %252 = vst.msk [vmem:[%s207 + $0x241] sm:$0xff] %vm33, %v187
    %253 = vst.msk [vmem:[%s207 + $0x249] sm:$0xff] %vm33, %v188
    %254 = vst.msk [vmem:[%s207 + $0x259] sm:$0xff] %vm33, %v189
    %255 = vst.msk [vmem:[%s207 + $0x261] sm:$0xff] %vm33, %v190
    %256 = vst.msk [vmem:[%s207 + $0x271] sm:$0xff] %vm33, %v191
    %257 = vst.msk [vmem:[%s207 + $0x279] sm:$0xff] %vm33, %v192
    %258 = vst.msk [vmem:[%s207 + $0x289] sm:$0xff] %vm33, %v193
    %259 = vst.msk [vmem:[%s207 + $0x291] sm:$0xff] %vm33, %v194
    %260 = vst.msk [vmem:[%s207 + $0x2a1] sm:$0xff] %vm33, %v195
    %261 = vst.msk [vmem:[%s207 + $0x2a9] sm:$0xff] %vm33, %v196
    %262 = vst.msk [vmem:[%s207 + $0x2b9] sm:$0xff] %vm33, %v197
    %263 = vst.msk [vmem:[%s207 + $0x2c1] sm:$0xff] %vm33, %v198
    %264 = vst.msk [vmem:[%s207 + $0x2d1] sm:$0xff] %vm33, %v199
    %265 = vst.msk [vmem:[%s207 + $0x2d9] sm:$0xff] %vm33, %v200
    %266 = vst.msk [vmem:[%s207 + $0x2e9] sm:$0xff] %vm33, %v201
    %267 = vst.msk [vmem:[%s207 + $0x2f1] sm:$0xff] %vm33, %v202
    %268 = vst.msk [vmem:[%s207 + $0x301] sm:$0xff] %vm33, %v203
    %269 = vst.msk [vmem:[%s207 + $0x309] sm:$0xff] %vm33, %v204
    %270 = vst.msk [vmem:[%s207 + $0x319] sm:$0xff] %vm33, %v205
    %271 = vst.msk [vmem:[%s207 + $0x321] sm:$0xff] %vm33, %v206
    %v272 = vld [vmem:[#allocation2] sm:$0xff]
    %v273 = vld [vmem:[#allocation2 + $0x8] sm:$0xff]
    %v274 = vld [vmem:[#allocation2 + $0x18] sm:$0xff]
    %v275 = vld [vmem:[#allocation2 + $0x20] sm:$0xff]
    %v276 = vld [vmem:[#allocation2 + $0x30] sm:$0xff]
    %v277 = vld [vmem:[#allocation2 + $0x38] sm:$0xff]
    %v278 = vld [vmem:[#allocation2 + $0x48] sm:$0xff]
    %v279 = vld [vmem:[#allocation2 + $0x50] sm:$0xff]
    %v280 = vld [vmem:[#allocation2 + $0x60] sm:$0xff]
    %v281 = vld [vmem:[#allocation2 + $0x68] sm:$0xff]
    %v282 = vld [vmem:[#allocation2 + $0x78] sm:$0xff]
    %v283 = vld [vmem:[#allocation2 + $0x80] sm:$0xff]
    %v284 = vld [vmem:[#allocation2 + $0x90] sm:$0xff]
    %v285 = vld [vmem:[#allocation2 + $0x98] sm:$0xff]
    %v286 = vld [vmem:[#allocation2 + $0xa8] sm:$0xff]
    %v287 = vld [vmem:[#allocation2 + $0xb0] sm:$0xff]
    %v288 = vld [vmem:[#allocation2 + $0xc0] sm:$0xff]
    %v289 = vld [vmem:[#allocation2 + $0xc8] sm:$0xff]
    %v290 = vld [vmem:[#allocation2 + $0xd8] sm:$0xff]
    %v291 = vld [vmem:[#allocation2 + $0xe0] sm:$0xff]
    %v292 = vld [vmem:[#allocation2 + $0xf0] sm:$0xff]
    %v293 = vld [vmem:[#allocation2 + $0xf8] sm:$0xff]
    %v294 = vld [vmem:[#allocation2 + $0x108] sm:$0xff]
    %v295 = vld [vmem:[#allocation2 + $0x110] sm:$0xff]
    %v296 = vld [vmem:[#allocation2 + $0x120] sm:$0xff]
    %v297 = vld [vmem:[#allocation2 + $0x128] sm:$0xff]
    %v298 = vld [vmem:[#allocation2 + $0x138] sm:$0xff]
    %v299 = vld [vmem:[#allocation2 + $0x140] sm:$0xff]
    %v300 = vld [vmem:[#allocation2 + $0x150] sm:$0xff]
    %v301 = vld [vmem:[#allocation2 + $0x158] sm:$0xff]
    %v302 = vld [vmem:[#allocation2 + $0x168] sm:$0xff]
    %v303 = vld [vmem:[#allocation2 + $0x170] sm:$0xff]
    %v304 = vld [vmem:[#allocation2 + $0x1b0] sm:$0xff]
    %v305 = vld [vmem:[#allocation2 + $0x1b8] sm:$0xff]
    %v306 = vld [vmem:[#allocation2 + $0x1c8] sm:$0xff]
    %v307 = vld [vmem:[#allocation2 + $0x1d0] sm:$0xff]
    %v308 = vld [vmem:[#allocation2 + $0x1e0] sm:$0xff]
    %v309 = vld [vmem:[#allocation2 + $0x1e8] sm:$0xff]
    %v310 = vld [vmem:[#allocation2 + $0x1f8] sm:$0xff]
    %v311 = vld [vmem:[#allocation2 + $0x200] sm:$0xff]
    %v312 = vld [vmem:[#allocation2 + $0x210] sm:$0xff]
    %v313 = vld [vmem:[#allocation2 + $0x218] sm:$0xff]
    %v314 = vld [vmem:[#allocation2 + $0x228] sm:$0xff]
    %v315 = vld [vmem:[#allocation2 + $0x230] sm:$0xff]
    %v316 = vld [vmem:[#allocation2 + $0x240] sm:$0xff]
    %v317 = vld [vmem:[#allocation2 + $0x248] sm:$0xff]
    %v318 = vld [vmem:[#allocation2 + $0x258] sm:$0xff]
    %v319 = vld [vmem:[#allocation2 + $0x260] sm:$0xff]
    %v320 = vld [vmem:[#allocation2 + $0x270] sm:$0xff]
    %v321 = vld [vmem:[#allocation2 + $0x278] sm:$0xff]
    %v322 = vld [vmem:[#allocation2 + $0x288] sm:$0xff]
    %v323 = vld [vmem:[#allocation2 + $0x290] sm:$0xff]
    %v324 = vld [vmem:[#allocation2 + $0x2a0] sm:$0xff]
    %v325 = vld [vmem:[#allocation2 + $0x2a8] sm:$0xff]
    %v326 = vld [vmem:[#allocation2 + $0x2b8] sm:$0xff]
    %v327 = vld [vmem:[#allocation2 + $0x2c0] sm:$0xff]
    %v328 = vld [vmem:[#allocation2 + $0x2d0] sm:$0xff]
    %v329 = vld [vmem:[#allocation2 + $0x2d8] sm:$0xff]
    %v330 = vld [vmem:[#allocation2 + $0x2e8] sm:$0xff]
    %v331 = vld [vmem:[#allocation2 + $0x2f0] sm:$0xff]
    %v332 = vld [vmem:[#allocation2 + $0x300] sm:$0xff]
    %v333 = vld [vmem:[#allocation2 + $0x308] sm:$0xff]
    %v334 = vld [vmem:[#allocation2 + $0x318] sm:$0xff]
    %v335 = vld [vmem:[#allocation2 + $0x320] sm:$0xff]
    %v336 = vld [vmem:[#allocation2 + $0x1] sm:$0xff]
    %v337 = vld [vmem:[#allocation2 + $0x9] sm:$0xff]
    %v338 = vld [vmem:[#allocation2 + $0x19] sm:$0xff]
    %v339 = vld [vmem:[#allocation2 + $0x21] sm:$0xff]
    %v340 = vld [vmem:[#allocation2 + $0x31] sm:$0xff]
    %v341 = vld [vmem:[#allocation2 + $0x39] sm:$0xff]
    %v342 = vld [vmem:[#allocation2 + $0x49] sm:$0xff]
    %v343 = vld [vmem:[#allocation2 + $0x51] sm:$0xff]
    %v344 = vld [vmem:[#allocation2 + $0x61] sm:$0xff]
    %v345 = vld [vmem:[#allocation2 + $0x69] sm:$0xff]
    %v346 = vld [vmem:[#allocation2 + $0x79] sm:$0xff]
    %v347 = vld [vmem:[#allocation2 + $0x81] sm:$0xff]
    %v348 = vld [vmem:[#allocation2 + $0x91] sm:$0xff]
    %v349 = vld [vmem:[#allocation2 + $0x99] sm:$0xff]
    %v350 = vld [vmem:[#allocation2 + $0xa9] sm:$0xff]
    %v351 = vld [vmem:[#allocation2 + $0xb1] sm:$0xff]
    %v352 = vld [vmem:[#allocation2 + $0xc1] sm:$0xff]
    %v353 = vld [vmem:[#allocation2 + $0xc9] sm:$0xff]
    %v354 = vld [vmem:[#allocation2 + $0xd9] sm:$0xff]
    %v355 = vld [vmem:[#allocation2 + $0xe1] sm:$0xff]
    %v356 = vld [vmem:[#allocation2 + $0xf1] sm:$0xff]
    %v357 = vld [vmem:[#allocation2 + $0xf9] sm:$0xff]
    %v358 = vld [vmem:[#allocation2 + $0x109] sm:$0xff]
    %v359 = vld [vmem:[#allocation2 + $0x111] sm:$0xff]
    %v360 = vld [vmem:[#allocation2 + $0x121] sm:$0xff]
    %v361 = vld [vmem:[#allocation2 + $0x129] sm:$0xff]
    %v362 = vld [vmem:[#allocation2 + $0x139] sm:$0xff]
    %v363 = vld [vmem:[#allocation2 + $0x141] sm:$0xff]
    %v364 = vld [vmem:[#allocation2 + $0x151] sm:$0xff]
    %v365 = vld [vmem:[#allocation2 + $0x159] sm:$0xff]
    %v366 = vld [vmem:[#allocation2 + $0x169] sm:$0xff]
    %v367 = vld [vmem:[#allocation2 + $0x171] sm:$0xff]
    %v368 = vld [vmem:[#allocation2 + $0x1b1] sm:$0xff]
    %v369 = vld [vmem:[#allocation2 + $0x1b9] sm:$0xff]
    %v370 = vld [vmem:[#allocation2 + $0x1c9] sm:$0xff]
    %v371 = vld [vmem:[#allocation2 + $0x1d1] sm:$0xff]
    %v372 = vld [vmem:[#allocation2 + $0x1e1] sm:$0xff]
    %v373 = vld [vmem:[#allocation2 + $0x1e9] sm:$0xff]
    %v374 = vld [vmem:[#allocation2 + $0x1f9] sm:$0xff]
    %v375 = vld [vmem:[#allocation2 + $0x201] sm:$0xff]
    %v376 = vld [vmem:[#allocation2 + $0x211] sm:$0xff]
    %v377 = vld [vmem:[#allocation2 + $0x219] sm:$0xff]
    %v378 = vld [vmem:[#allocation2 + $0x229] sm:$0xff]
    %v379 = vld [vmem:[#allocation2 + $0x231] sm:$0xff]
    %v380 = vld [vmem:[#allocation2 + $0x241] sm:$0xff]
    %v381 = vld [vmem:[#allocation2 + $0x249] sm:$0xff]
    %v382 = vld [vmem:[#allocation2 + $0x259] sm:$0xff]
    %v383 = vld [vmem:[#allocation2 + $0x261] sm:$0xff]
    %v384 = vld [vmem:[#allocation2 + $0x271] sm:$0xff]
    %v385 = vld [vmem:[#allocation2 + $0x279] sm:$0xff]
    %v386 = vld [vmem:[#allocation2 + $0x289] sm:$0xff]
    %v387 = vld [vmem:[#allocation2 + $0x291] sm:$0xff]
    %v388 = vld [vmem:[#allocation2 + $0x2a1] sm:$0xff]
    %v389 = vld [vmem:[#allocation2 + $0x2a9] sm:$0xff]
    %v390 = vld [vmem:[#allocation2 + $0x2b9] sm:$0xff]
    %v391 = vld [vmem:[#allocation2 + $0x2c1] sm:$0xff]
    %v392 = vld [vmem:[#allocation2 + $0x2d1] sm:$0xff]
    %v393 = vld [vmem:[#allocation2 + $0x2d9] sm:$0xff]
    %v394 = vld [vmem:[#allocation2 + $0x2e9] sm:$0xff]
    %v395 = vld [vmem:[#allocation2 + $0x2f1] sm:$0xff]
    %v396 = vld [vmem:[#allocation2 + $0x301] sm:$0xff]
    %v397 = vld [vmem:[#allocation2 + $0x309] sm:$0xff]
    %v398 = vld [vmem:[#allocation2 + $0x319] sm:$0xff]
    %v399 = vld [vmem:[#allocation2 + $0x321] sm:$0xff]
    %v400 = vld [vmem:[#allocation2 + $0x2] sm:$0xff]
    %v401 = vld [vmem:[#allocation2 + $0xa] sm:$0xff]
    %v402 = vld [vmem:[#allocation2 + $0x1a] sm:$0xff]
    %v403 = vld [vmem:[#allocation2 + $0x22] sm:$0xff]
    %v404 = vld [vmem:[#allocation2 + $0x32] sm:$0xff]
    %v405 = vld [vmem:[#allocation2 + $0x3a] sm:$0xff]
    %v406 = vld [vmem:[#allocation2 + $0x4a] sm:$0xff]
    %v407 = vld [vmem:[#allocation2 + $0x52] sm:$0xff]
    %v408 = vld [vmem:[#allocation2 + $0x62] sm:$0xff]
    %v409 = vld [vmem:[#allocation2 + $0x6a] sm:$0xff]
    %v410 = vld [vmem:[#allocation2 + $0x7a] sm:$0xff]
    %v411 = vld [vmem:[#allocation2 + $0x82] sm:$0xff]
    %v412 = vld [vmem:[#allocation2 + $0x92] sm:$0xff]
    %v413 = vld [vmem:[#allocation2 + $0x9a] sm:$0xff]
    %v414 = vld [vmem:[#allocation2 + $0xaa] sm:$0xff]
    %v415 = vld [vmem:[#allocation2 + $0xb2] sm:$0xff]
    %v416 = vld [vmem:[#allocation2 + $0xc2] sm:$0xff]
    %v417 = vld [vmem:[#allocation2 + $0xca] sm:$0xff]
    %v418 = vld [vmem:[#allocation2 + $0xda] sm:$0xff]
    %v419 = vld [vmem:[#allocation2 + $0xe2] sm:$0xff]
    %v420 = vld [vmem:[#allocation2 + $0xf2] sm:$0xff]
    %v421 = vld [vmem:[#allocation2 + $0xfa] sm:$0xff]
    %v422 = vld [vmem:[#allocation2 + $0x10a] sm:$0xff]
    %v423 = vld [vmem:[#allocation2 + $0x112] sm:$0xff]
    %v424 = vld [vmem:[#allocation2 + $0x122] sm:$0xff]
    %v425 = vld [vmem:[#allocation2 + $0x12a] sm:$0xff]
    %v426 = vld [vmem:[#allocation2 + $0x13a] sm:$0xff]
    %v427 = vld [vmem:[#allocation2 + $0x142] sm:$0xff]
    %v428 = vld [vmem:[#allocation2 + $0x152] sm:$0xff]
    %v429 = vld [vmem:[#allocation2 + $0x15a] sm:$0xff]
    %v430 = vld [vmem:[#allocation2 + $0x16a] sm:$0xff]
    %v431 = vld [vmem:[#allocation2 + $0x172] sm:$0xff]
    %v432 = vld [vmem:[#allocation2 + $0x1b2] sm:$0xff]
    %v433 = vld [vmem:[#allocation2 + $0x1ba] sm:$0xff]
    %v434 = vld [vmem:[#allocation2 + $0x1ca] sm:$0xff]
    %v435 = vld [vmem:[#allocation2 + $0x1d2] sm:$0xff]
    %v436 = vld [vmem:[#allocation2 + $0x1e2] sm:$0xff]
    %v437 = vld [vmem:[#allocation2 + $0x1ea] sm:$0xff]
    %v438 = vld [vmem:[#allocation2 + $0x1fa] sm:$0xff]
    %v439 = vld [vmem:[#allocation2 + $0x202] sm:$0xff]
    %v440 = vld [vmem:[#allocation2 + $0x212] sm:$0xff]
    %v441 = vld [vmem:[#allocation2 + $0x21a] sm:$0xff]
    %v442 = vld [vmem:[#allocation2 + $0x22a] sm:$0xff]
    %v443 = vld [vmem:[#allocation2 + $0x232] sm:$0xff]
    %v444 = vld [vmem:[#allocation2 + $0x242] sm:$0xff]
    %v445 = vld [vmem:[#allocation2 + $0x24a] sm:$0xff]
    %v446 = vld [vmem:[#allocation2 + $0x25a] sm:$0xff]
    %v447 = vld [vmem:[#allocation2 + $0x262] sm:$0xff]
    %v448 = vld [vmem:[#allocation2 + $0x272] sm:$0xff]
    %v449 = vld [vmem:[#allocation2 + $0x27a] sm:$0xff]
    %v450 = vld [vmem:[#allocation2 + $0x28a] sm:$0xff]
    %v451 = vld [vmem:[#allocation2 + $0x292] sm:$0xff]
    %v452 = vld [vmem:[#allocation2 + $0x2a2] sm:$0xff]
    %v453 = vld [vmem:[#allocation2 + $0x2aa] sm:$0xff]
    %v454 = vld [vmem:[#allocation2 + $0x2ba] sm:$0xff]
    %v455 = vld [vmem:[#allocation2 + $0x2c2] sm:$0xff]
    %v456 = vld [vmem:[#allocation2 + $0x2d2] sm:$0xff]
    %v457 = vld [vmem:[#allocation2 + $0x2da] sm:$0xff]
    %v458 = vld [vmem:[#allocation2 + $0x2ea] sm:$0xff]
    %v459 = vld [vmem:[#allocation2 + $0x2f2] sm:$0xff]
    %v460 = vld [vmem:[#allocation2 + $0x302] sm:$0xff]
    %v461 = vld [vmem:[#allocation2 + $0x30a] sm:$0xff]
    %v462 = vld [vmem:[#allocation2 + $0x31a] sm:$0xff]
    %v463 = vld [vmem:[#allocation2 + $0x322] sm:$0xff]
    %v464 = vld [vmem:[%s207] sm:$0xff]
    %v465 = vld [vmem:[%s207 + $0x8] sm:$0xff]
    %v466 = vld [vmem:[%s207 + $0x18] sm:$0xff]
    %v467 = vld [vmem:[%s207 + $0x20] sm:$0xff]
    %v468 = vld [vmem:[%s207 + $0x30] sm:$0xff]
    %v469 = vld [vmem:[%s207 + $0x38] sm:$0xff]
    %v470 = vld [vmem:[%s207 + $0x48] sm:$0xff]
    %v471 = vld [vmem:[%s207 + $0x50] sm:$0xff]
    %v472 = vld [vmem:[%s207 + $0x60] sm:$0xff]
    %v473 = vld [vmem:[%s207 + $0x68] sm:$0xff]
    %v474 = vld [vmem:[%s207 + $0x78] sm:$0xff]
    %v475 = vld [vmem:[%s207 + $0x80] sm:$0xff]
    %v476 = vld [vmem:[%s207 + $0x90] sm:$0xff]
    %v477 = vld [vmem:[%s207 + $0x98] sm:$0xff]
    %v478 = vld [vmem:[%s207 + $0xa8] sm:$0xff]
    %v479 = vld [vmem:[%s207 + $0xb0] sm:$0xff]
    %v480 = vld [vmem:[%s207 + $0xc0] sm:$0xff]
    %v481 = vld [vmem:[%s207 + $0xc8] sm:$0xff]
    %v482 = vld [vmem:[%s207 + $0xd8] sm:$0xff]
    %v483 = vld [vmem:[%s207 + $0xe0] sm:$0xff]
    %v484 = vld [vmem:[%s207 + $0xf0] sm:$0xff]
    %v485 = vld [vmem:[%s207 + $0xf8] sm:$0xff]
    %v486 = vld [vmem:[%s207 + $0x108] sm:$0xff]
    %v487 = vld [vmem:[%s207 + $0x110] sm:$0xff]
    %v488 = vld [vmem:[%s207 + $0x120] sm:$0xff]
    %v489 = vld [vmem:[%s207 + $0x128] sm:$0xff]
    %v490 = vld [vmem:[%s207 + $0x138] sm:$0xff]
    %v491 = vld [vmem:[%s207 + $0x140] sm:$0xff]
    %v492 = vld [vmem:[%s207 + $0x150] sm:$0xff]
    %v493 = vld [vmem:[%s207 + $0x158] sm:$0xff]
    %v494 = vld [vmem:[%s207 + $0x168] sm:$0xff]
    %v495 = vld [vmem:[%s207 + $0x170] sm:$0xff]
    %v496 = vld [vmem:[%s207 + $0x1b0] sm:$0xff]
    %v497 = vld [vmem:[%s207 + $0x1b8] sm:$0xff]
    %v498 = vld [vmem:[%s207 + $0x1c8] sm:$0xff]
    %v499 = vld [vmem:[%s207 + $0x1d0] sm:$0xff]
    %v500 = vld [vmem:[%s207 + $0x1e0] sm:$0xff]
    %v501 = vld [vmem:[%s207 + $0x1e8] sm:$0xff]
    %v502 = vld [vmem:[%s207 + $0x1f8] sm:$0xff]
    %v503 = vld [vmem:[%s207 + $0x200] sm:$0xff]
    %v504 = vld [vmem:[%s207 + $0x210] sm:$0xff]
    %v505 = vld [vmem:[%s207 + $0x218] sm:$0xff]
    %v506 = vld [vmem:[%s207 + $0x228] sm:$0xff]
    %v507 = vld [vmem:[%s207 + $0x230] sm:$0xff]
    %v508 = vld [vmem:[%s207 + $0x240] sm:$0xff]
    %v509 = vld [vmem:[%s207 + $0x248] sm:$0xff]
    %v510 = vld [vmem:[%s207 + $0x258] sm:$0xff]
    %v511 = vld [vmem:[%s207 + $0x260] sm:$0xff]
    %v512 = vld [vmem:[%s207 + $0x270] sm:$0xff]
    %v513 = vld [vmem:[%s207 + $0x278] sm:$0xff]
    %v514 = vld [vmem:[%s207 + $0x288] sm:$0xff]
    %v515 = vld [vmem:[%s207 + $0x290] sm:$0xff]
    %v516 = vld [vmem:[%s207 + $0x2a0] sm:$0xff]
    %v517 = vld [vmem:[%s207 + $0x2a8] sm:$0xff]
    %v518 = vld [vmem:[%s207 + $0x2b8] sm:$0xff]
    %v519 = vld [vmem:[%s207 + $0x2c0] sm:$0xff]
    %v520 = vld [vmem:[%s207 + $0x2d0] sm:$0xff]
    %v521 = vld [vmem:[%s207 + $0x2d8] sm:$0xff]
    %v522 = vld [vmem:[%s207 + $0x2e8] sm:$0xff]
    %v523 = vld [vmem:[%s207 + $0x2f0] sm:$0xff]
    %v524 = vld [vmem:[%s207 + $0x300] sm:$0xff]
    %v525 = vld [vmem:[%s207 + $0x308] sm:$0xff]
    %v526 = vld [vmem:[%s207 + $0x318] sm:$0xff]
    %v527 = vld [vmem:[%s207 + $0x320] sm:$0xff]
    %v528 = vld [vmem:[%s207 + $0x1] sm:$0xff]
    %v529 = vld [vmem:[%s207 + $0x9] sm:$0xff]
    %v530 = vld [vmem:[%s207 + $0x19] sm:$0xff]
    %v531 = vld [vmem:[%s207 + $0x21] sm:$0xff]
    %v532 = vld [vmem:[%s207 + $0x31] sm:$0xff]
    %v533 = vld [vmem:[%s207 + $0x39] sm:$0xff]
    %v534 = vld [vmem:[%s207 + $0x49] sm:$0xff]
    %v535 = vld [vmem:[%s207 + $0x51] sm:$0xff]
    %v536 = vld [vmem:[%s207 + $0x61] sm:$0xff]
    %v537 = vld [vmem:[%s207 + $0x69] sm:$0xff]
    %v538 = vld [vmem:[%s207 + $0x79] sm:$0xff]
    %v539 = vld [vmem:[%s207 + $0x81] sm:$0xff]
    %v540 = vld [vmem:[%s207 + $0x91] sm:$0xff]
    %v541 = vld [vmem:[%s207 + $0x99] sm:$0xff]
    %v542 = vld [vmem:[%s207 + $0xa9] sm:$0xff]
    %v543 = vld [vmem:[%s207 + $0xb1] sm:$0xff]
    %v544 = vld [vmem:[%s207 + $0xc1] sm:$0xff]
    %v545 = vld [vmem:[%s207 + $0xc9] sm:$0xff]
    %v546 = vld [vmem:[%s207 + $0xd9] sm:$0xff]
    %v547 = vld [vmem:[%s207 + $0xe1] sm:$0xff]
    %v548 = vld [vmem:[%s207 + $0xf1] sm:$0xff]
    %v549 = vld [vmem:[%s207 + $0xf9] sm:$0xff]
    %v550 = vld [vmem:[%s207 + $0x109] sm:$0xff]
    %v551 = vld [vmem:[%s207 + $0x111] sm:$0xff]
    %v552 = vld [vmem:[%s207 + $0x121] sm:$0xff]
    %v553 = vld [vmem:[%s207 + $0x129] sm:$0xff]
    %v554 = vld [vmem:[%s207 + $0x139] sm:$0xff]
    %v555 = vld [vmem:[%s207 + $0x141] sm:$0xff]
    %v556 = vld [vmem:[%s207 + $0x151] sm:$0xff]
    %v557 = vld [vmem:[%s207 + $0x159] sm:$0xff]
    %v558 = vld [vmem:[%s207 + $0x169] sm:$0xff]
    %v559 = vld [vmem:[%s207 + $0x171] sm:$0xff]
    %v560 = vld [vmem:[%s207 + $0x1b1] sm:$0xff]
    %v561 = vld [vmem:[%s207 + $0x1b9] sm:$0xff]
    %v562 = vld [vmem:[%s207 + $0x1c9] sm:$0xff]
    %v563 = vld [vmem:[%s207 + $0x1d1] sm:$0xff]
    %v564 = vld [vmem:[%s207 + $0x1e1] sm:$0xff]
    %v565 = vld [vmem:[%s207 + $0x1e9] sm:$0xff]
    %v566 = vld [vmem:[%s207 + $0x1f9] sm:$0xff]
    %v567 = vld [vmem:[%s207 + $0x201] sm:$0xff]
    %v568 = vld [vmem:[%s207 + $0x211] sm:$0xff]
    %v569 = vld [vmem:[%s207 + $0x219] sm:$0xff]
    %v570 = vld [vmem:[%s207 + $0x229] sm:$0xff]
    %v571 = vld [vmem:[%s207 + $0x231] sm:$0xff]
    %v572 = vld [vmem:[%s207 + $0x241] sm:$0xff]
    %v573 = vld [vmem:[%s207 + $0x249] sm:$0xff]
    %v574 = vld [vmem:[%s207 + $0x259] sm:$0xff]
    %v575 = vld [vmem:[%s207 + $0x261] sm:$0xff]
    %v576 = vld [vmem:[%s207 + $0x271] sm:$0xff]
    %v577 = vld [vmem:[%s207 + $0x279] sm:$0xff]
    %v578 = vld [vmem:[%s207 + $0x289] sm:$0xff]
    %v579 = vld [vmem:[%s207 + $0x291] sm:$0xff]
    %v580 = vld [vmem:[%s207 + $0x2a1] sm:$0xff]
    %v581 = vld [vmem:[%s207 + $0x2a9] sm:$0xff]
    %v582 = vld [vmem:[%s207 + $0x2b9] sm:$0xff]
    %v583 = vld [vmem:[%s207 + $0x2c1] sm:$0xff]
    %v584 = vld [vmem:[%s207 + $0x2d1] sm:$0xff]
    %v585 = vld [vmem:[%s207 + $0x2d9] sm:$0xff]
    %v586 = vld [vmem:[%s207 + $0x2e9] sm:$0xff]
    %v587 = vld [vmem:[%s207 + $0x2f1] sm:$0xff]
    %v588 = vld [vmem:[%s207 + $0x301] sm:$0xff]
    %v589 = vld [vmem:[%s207 + $0x309] sm:$0xff]
    %v590 = vld [vmem:[%s207 + $0x319] sm:$0xff]
    %v591 = vld [vmem:[%s207 + $0x321] sm:$0xff]
    %v592 = vld [vmem:[%s207 + $0x2] sm:$0xff]
    %v593 = vld [vmem:[%s207 + $0xa] sm:$0xff]
    %v594 = vld [vmem:[%s207 + $0x1a] sm:$0xff]
    %v595 = vld [vmem:[%s207 + $0x22] sm:$0xff]
    %v596 = vld [vmem:[%s207 + $0x32] sm:$0xff]
    %v597 = vld [vmem:[%s207 + $0x3a] sm:$0xff]
    %v598 = vld [vmem:[%s207 + $0x4a] sm:$0xff]
    %v599 = vld [vmem:[%s207 + $0x52] sm:$0xff]
    %v600 = vld [vmem:[%s207 + $0x62] sm:$0xff]
    %v601 = vld [vmem:[%s207 + $0x6a] sm:$0xff]
    %v602 = vld [vmem:[%s207 + $0x7a] sm:$0xff]
    %v603 = vld [vmem:[%s207 + $0x82] sm:$0xff]
    %v604 = vld [vmem:[%s207 + $0x92] sm:$0xff]
    %v605 = vld [vmem:[%s207 + $0x9a] sm:$0xff]
    %v606 = vld [vmem:[%s207 + $0xaa] sm:$0xff]
    %v607 = vld [vmem:[%s207 + $0xb2] sm:$0xff]
    %v608 = vld [vmem:[%s207 + $0xc2] sm:$0xff]
    %v609 = vld [vmem:[%s207 + $0xca] sm:$0xff]
    %v610 = vld [vmem:[%s207 + $0xda] sm:$0xff]
    %v611 = vld [vmem:[%s207 + $0xe2] sm:$0xff]
    %v612 = vld [vmem:[%s207 + $0xf2] sm:$0xff]
    %v613 = vld [vmem:[%s207 + $0xfa] sm:$0xff]
    %v614 = vld [vmem:[%s207 + $0x10a] sm:$0xff]
    %v615 = vld [vmem:[%s207 + $0x112] sm:$0xff]
    %v616 = vld [vmem:[%s207 + $0x122] sm:$0xff]
    %v617 = vld [vmem:[%s207 + $0x12a] sm:$0xff]
    %v618 = vld [vmem:[%s207 + $0x13a] sm:$0xff]
    %v619 = vld [vmem:[%s207 + $0x142] sm:$0xff]
    %v620 = vld [vmem:[%s207 + $0x152] sm:$0xff]
    %v621 = vld [vmem:[%s207 + $0x15a] sm:$0xff]
    %v622 = vld [vmem:[%s207 + $0x16a] sm:$0xff]
    %v623 = vld [vmem:[%s207 + $0x172] sm:$0xff]
    %v624 = vld [vmem:[%s207 + $0x1b2] sm:$0xff]
    %v625 = vld [vmem:[%s207 + $0x1ba] sm:$0xff]
    %v626 = vld [vmem:[%s207 + $0x1ca] sm:$0xff]
    %v627 = vld [vmem:[%s207 + $0x1d2] sm:$0xff]
    %v628 = vld [vmem:[%s207 + $0x1e2] sm:$0xff]
    %v629 = vld [vmem:[%s207 + $0x1ea] sm:$0xff]
    %v630 = vld [vmem:[%s207 + $0x1fa] sm:$0xff]
    %v631 = vld [vmem:[%s207 + $0x202] sm:$0xff]
    %v632 = vld [vmem:[%s207 + $0x212] sm:$0xff]
    %v633 = vld [vmem:[%s207 + $0x21a] sm:$0xff]
    %v634 = vld [vmem:[%s207 + $0x22a] sm:$0xff]
    %v635 = vld [vmem:[%s207 + $0x232] sm:$0xff]
    %v636 = vld [vmem:[%s207 + $0x242] sm:$0xff]
    %v637 = vld [vmem:[%s207 + $0x24a] sm:$0xff]
    %v638 = vld [vmem:[%s207 + $0x25a] sm:$0xff]
    %v639 = vld [vmem:[%s207 + $0x262] sm:$0xff]
    %v640 = vld [vmem:[%s207 + $0x272] sm:$0xff]
    %v641 = vld [vmem:[%s207 + $0x27a] sm:$0xff]
    %v642 = vld [vmem:[%s207 + $0x28a] sm:$0xff]
    %v643 = vld [vmem:[%s207 + $0x292] sm:$0xff]
    %v644 = vld [vmem:[%s207 + $0x2a2] sm:$0xff]
    %v645 = vld [vmem:[%s207 + $0x2aa] sm:$0xff]
    %v646 = vld [vmem:[%s207 + $0x2ba] sm:$0xff]
    %v647 = vld [vmem:[%s207 + $0x2c2] sm:$0xff]
    %v648 = vld [vmem:[%s207 + $0x2d2] sm:$0xff]
    %v649 = vld [vmem:[%s207 + $0x2da] sm:$0xff]
    %v650 = vld [vmem:[%s207 + $0x2ea] sm:$0xff]
    %v651 = vld [vmem:[%s207 + $0x2f2] sm:$0xff]
    %v652 = vld [vmem:[%s207 + $0x302] sm:$0xff]
    %v653 = vld [vmem:[%s207 + $0x30a] sm:$0xff]
    %v654 = vld [vmem:[%s207 + $0x31a] sm:$0xff]
    %v655 = vld [vmem:[%s207 + $0x322] sm:$0xff]
    %s656 = scalar_lea.vmem [#allocation2], 48
    %v657 = vld [vmem:[%s656] sm:$0xff]
    %v658 = vld [vmem:[%s656 + $0x8] sm:$0xff]
    %v659 = vld [vmem:[%s656 + $0x18] sm:$0xff]
    %v660 = vld [vmem:[%s656 + $0x20] sm:$0xff]
    %v661 = vld [vmem:[%s656 + $0x30] sm:$0xff]
    %v662 = vld [vmem:[%s656 + $0x38] sm:$0xff]
    %v663 = vld [vmem:[%s656 + $0x48] sm:$0xff]
    %v664 = vld [vmem:[%s656 + $0x50] sm:$0xff]
    %v665 = vld [vmem:[%s656 + $0x60] sm:$0xff]
    %v666 = vld [vmem:[%s656 + $0x68] sm:$0xff]
    %v667 = vld [vmem:[%s656 + $0x78] sm:$0xff]
    %v668 = vld [vmem:[%s656 + $0x80] sm:$0xff]
    %v669 = vld [vmem:[%s656 + $0x90] sm:$0xff]
    %v670 = vld [vmem:[%s656 + $0x98] sm:$0xff]
    %v671 = vld [vmem:[%s656 + $0xa8] sm:$0xff]
    %v672 = vld [vmem:[%s656 + $0xb0] sm:$0xff]
    %v673 = vld [vmem:[%s656 + $0xc0] sm:$0xff]
    %v674 = vld [vmem:[%s656 + $0xc8] sm:$0xff]
    %v675 = vld [vmem:[%s656 + $0xd8] sm:$0xff]
    %v676 = vld [vmem:[%s656 + $0xe0] sm:$0xff]
    %v677 = vld [vmem:[%s656 + $0xf0] sm:$0xff]
    %v678 = vld [vmem:[%s656 + $0xf8] sm:$0xff]
    %v679 = vld [vmem:[%s656 + $0x108] sm:$0xff]
    %v680 = vld [vmem:[%s656 + $0x110] sm:$0xff]
    %v681 = vld [vmem:[%s656 + $0x120] sm:$0xff]
    %v682 = vld [vmem:[%s656 + $0x128] sm:$0xff]
    %v683 = vld [vmem:[%s656 + $0x138] sm:$0xff]
    %v684 = vld [vmem:[%s656 + $0x140] sm:$0xff]
    %v685 = vld [vmem:[%s656 + $0x150] sm:$0xff]
    %v686 = vld [vmem:[%s656 + $0x158] sm:$0xff]
    %v687 = vld [vmem:[%s656 + $0x168] sm:$0xff]
    %v688 = vld [vmem:[%s656 + $0x170] sm:$0xff]
    %v689 = vld [vmem:[%s656 + $0x1b0] sm:$0xff]
    %v690 = vld [vmem:[%s656 + $0x1b8] sm:$0xff]
    %v691 = vld [vmem:[%s656 + $0x1c8] sm:$0xff]
    %v692 = vld [vmem:[%s656 + $0x1d0] sm:$0xff]
    %v693 = vld [vmem:[%s656 + $0x1e0] sm:$0xff]
    %v694 = vld [vmem:[%s656 + $0x1e8] sm:$0xff]
    %v695 = vld [vmem:[%s656 + $0x1f8] sm:$0xff]
    %v696 = vld [vmem:[%s656 + $0x200] sm:$0xff]
    %v697 = vld [vmem:[%s656 + $0x210] sm:$0xff]
    %v698 = vld [vmem:[%s656 + $0x218] sm:$0xff]
    %v699 = vld [vmem:[%s656 + $0x228] sm:$0xff]
    %v700 = vld [vmem:[%s656 + $0x230] sm:$0xff]
    %v701 = vld [vmem:[%s656 + $0x240] sm:$0xff]
    %v702 = vld [vmem:[%s656 + $0x248] sm:$0xff]
    %v703 = vld [vmem:[%s656 + $0x258] sm:$0xff]
    %v704 = vld [vmem:[%s656 + $0x260] sm:$0xff]
    %v705 = vld [vmem:[%s656 + $0x270] sm:$0xff]
    %v706 = vld [vmem:[%s656 + $0x278] sm:$0xff]
    %v707 = vld [vmem:[%s656 + $0x288] sm:$0xff]
    %v708 = vld [vmem:[%s656 + $0x290] sm:$0xff]
    %v709 = vld [vmem:[%s656 + $0x2a0] sm:$0xff]
    %v710 = vld [vmem:[%s656 + $0x2a8] sm:$0xff]
    %v711 = vld [vmem:[%s656 + $0x2b8] sm:$0xff]
    %v712 = vld [vmem:[%s656 + $0x2c0] sm:$0xff]
    %v713 = vld [vmem:[%s656 + $0x2d0] sm:$0xff]
    %v714 = vld [vmem:[%s656 + $0x2d8] sm:$0xff]
    %v715 = vld [vmem:[%s656 + $0x2e8] sm:$0xff]
    %v716 = vld [vmem:[%s656 + $0x2f0] sm:$0xff]
    %v717 = vld [vmem:[%s656 + $0x300] sm:$0xff]
    %v718 = vld [vmem:[%s656 + $0x308] sm:$0xff]
    %v719 = vld [vmem:[%s656 + $0x318] sm:$0xff]
    %v720 = vld [vmem:[%s656 + $0x320] sm:$0xff]
    %v721 = vld [vmem:[%s656 + $0x1] sm:$0xff]
    %v722 = vld [vmem:[%s656 + $0x9] sm:$0xff]
    %v723 = vld [vmem:[%s656 + $0x19] sm:$0xff]
    %v724 = vld [vmem:[%s656 + $0x21] sm:$0xff]
    %v725 = vld [vmem:[%s656 + $0x31] sm:$0xff]
    %v726 = vld [vmem:[%s656 + $0x39] sm:$0xff]
    %v727 = vld [vmem:[%s656 + $0x49] sm:$0xff]
    %v728 = vld [vmem:[%s656 + $0x51] sm:$0xff]
    %v729 = vld [vmem:[%s656 + $0x61] sm:$0xff]
    %v730 = vld [vmem:[%s656 + $0x69] sm:$0xff]
    %v731 = vld [vmem:[%s656 + $0x79] sm:$0xff]
    %v732 = vld [vmem:[%s656 + $0x81] sm:$0xff]
    %v733 = vld [vmem:[%s656 + $0x91] sm:$0xff]
    %v734 = vld [vmem:[%s656 + $0x99] sm:$0xff]
    %v735 = vld [vmem:[%s656 + $0xa9] sm:$0xff]
    %v736 = vld [vmem:[%s656 + $0xb1] sm:$0xff]
    %v737 = vld [vmem:[%s656 + $0xc1] sm:$0xff]
    %v738 = vld [vmem:[%s656 + $0xc9] sm:$0xff]
    %v739 = vld [vmem:[%s656 + $0xd9] sm:$0xff]
    %v740 = vld [vmem:[%s656 + $0xe1] sm:$0xff]
    %v741 = vld [vmem:[%s656 + $0xf1] sm:$0xff]
    %v742 = vld [vmem:[%s656 + $0xf9] sm:$0xff]
    %v743 = vld [vmem:[%s656 + $0x109] sm:$0xff]
    %v744 = vld [vmem:[%s656 + $0x111] sm:$0xff]
    %v745 = vld [vmem:[%s656 + $0x121] sm:$0xff]
    %v746 = vld [vmem:[%s656 + $0x129] sm:$0xff]
    %v747 = vld [vmem:[%s656 + $0x139] sm:$0xff]
    %v748 = vld [vmem:[%s656 + $0x141] sm:$0xff]
    %v749 = vld [vmem:[%s656 + $0x151] sm:$0xff]
    %v750 = vld [vmem:[%s656 + $0x159] sm:$0xff]
    %v751 = vld [vmem:[%s656 + $0x169] sm:$0xff]
    %v752 = vld [vmem:[%s656 + $0x171] sm:$0xff]
    %v753 = vld [vmem:[%s656 + $0x1b1] sm:$0xff]
    %v754 = vld [vmem:[%s656 + $0x1b9] sm:$0xff]
    %v755 = vld [vmem:[%s656 + $0x1c9] sm:$0xff]
    %v756 = vld [vmem:[%s656 + $0x1d1] sm:$0xff]
    %v757 = vld [vmem:[%s656 + $0x1e1] sm:$0xff]
    %v758 = vld [vmem:[%s656 + $0x1e9] sm:$0xff]
    %v759 = vld [vmem:[%s656 + $0x1f9] sm:$0xff]
    %v760 = vld [vmem:[%s656 + $0x201] sm:$0xff]
    %v761 = vld [vmem:[%s656 + $0x211] sm:$0xff]
    %v762 = vld [vmem:[%s656 + $0x219] sm:$0xff]
    %v763 = vld [vmem:[%s656 + $0x229] sm:$0xff]
    %v764 = vld [vmem:[%s656 + $0x231] sm:$0xff]
    %v765 = vld [vmem:[%s656 + $0x241] sm:$0xff]
    %v766 = vld [vmem:[%s656 + $0x249] sm:$0xff]
    %v767 = vld [vmem:[%s656 + $0x259] sm:$0xff]
    %v768 = vld [vmem:[%s656 + $0x261] sm:$0xff]
    %v769 = vld [vmem:[%s656 + $0x271] sm:$0xff]
    %v770 = vld [vmem:[%s656 + $0x279] sm:$0xff]
    %v771 = vld [vmem:[%s656 + $0x289] sm:$0xff]
    %v772 = vld [vmem:[%s656 + $0x291] sm:$0xff]
    %v773 = vld [vmem:[%s656 + $0x2a1] sm:$0xff]
    %v774 = vld [vmem:[%s656 + $0x2a9] sm:$0xff]
    %v775 = vld [vmem:[%s656 + $0x2b9] sm:$0xff]
    %v776 = vld [vmem:[%s656 + $0x2c1] sm:$0xff]
    %v777 = vld [vmem:[%s656 + $0x2d1] sm:$0xff]
    %v778 = vld [vmem:[%s656 + $0x2d9] sm:$0xff]
    %v779 = vld [vmem:[%s656 + $0x2e9] sm:$0xff]
    %v780 = vld [vmem:[%s656 + $0x2f1] sm:$0xff]
    %v781 = vld [vmem:[%s656 + $0x301] sm:$0xff]
    %v782 = vld [vmem:[%s656 + $0x309] sm:$0xff]
    %v783 = vld [vmem:[%s656 + $0x319] sm:$0xff]
    %v784 = vld [vmem:[%s656 + $0x321] sm:$0xff]
    %v785 = vld [vmem:[%s656 + $0x2] sm:$0xff]
    %v786 = vld [vmem:[%s656 + $0xa] sm:$0xff]
    %v787 = vld [vmem:[%s656 + $0x1a] sm:$0xff]
    %v788 = vld [vmem:[%s656 + $0x22] sm:$0xff]
    %v789 = vld [vmem:[%s656 + $0x32] sm:$0xff]
    %v790 = vld [vmem:[%s656 + $0x3a] sm:$0xff]
    %v791 = vld [vmem:[%s656 + $0x4a] sm:$0xff]
    %v792 = vld [vmem:[%s656 + $0x52] sm:$0xff]
    %v793 = vld [vmem:[%s656 + $0x62] sm:$0xff]
    %v794 = vld [vmem:[%s656 + $0x6a] sm:$0xff]
    %v795 = vld [vmem:[%s656 + $0x7a] sm:$0xff]
    %v796 = vld [vmem:[%s656 + $0x82] sm:$0xff]
    %v797 = vld [vmem:[%s656 + $0x92] sm:$0xff]
    %v798 = vld [vmem:[%s656 + $0x9a] sm:$0xff]
    %v799 = vld [vmem:[%s656 + $0xaa] sm:$0xff]
    %v800 = vld [vmem:[%s656 + $0xb2] sm:$0xff]
    %v801 = vld [vmem:[%s656 + $0xc2] sm:$0xff]
    %v802 = vld [vmem:[%s656 + $0xca] sm:$0xff]
    %v803 = vld [vmem:[%s656 + $0xda] sm:$0xff]
    %v804 = vld [vmem:[%s656 + $0xe2] sm:$0xff]
    %v805 = vld [vmem:[%s656 + $0xf2] sm:$0xff]
    %v806 = vld [vmem:[%s656 + $0xfa] sm:$0xff]
    %v807 = vld [vmem:[%s656 + $0x10a] sm:$0xff]
    %v808 = vld [vmem:[%s656 + $0x112] sm:$0xff]
    %v809 = vld [vmem:[%s656 + $0x122] sm:$0xff]
    %v810 = vld [vmem:[%s656 + $0x12a] sm:$0xff]
    %v811 = vld [vmem:[%s656 + $0x13a] sm:$0xff]
    %v812 = vld [vmem:[%s656 + $0x142] sm:$0xff]
    %v813 = vld [vmem:[%s656 + $0x152] sm:$0xff]
    %v814 = vld [vmem:[%s656 + $0x15a] sm:$0xff]
    %v815 = vld [vmem:[%s656 + $0x16a] sm:$0xff]
    %v816 = vld [vmem:[%s656 + $0x172] sm:$0xff]
    %v817 = vld [vmem:[%s656 + $0x1b2] sm:$0xff]
    %v818 = vld [vmem:[%s656 + $0x1ba] sm:$0xff]
    %v819 = vld [vmem:[%s656 + $0x1ca] sm:$0xff]
    %v820 = vld [vmem:[%s656 + $0x1d2] sm:$0xff]
    %v821 = vld [vmem:[%s656 + $0x1e2] sm:$0xff]
    %v822 = vld [vmem:[%s656 + $0x1ea] sm:$0xff]
    %v823 = vld [vmem:[%s656 + $0x1fa] sm:$0xff]
    %v824 = vld [vmem:[%s656 + $0x202] sm:$0xff]
    %v825 = vld [vmem:[%s656 + $0x212] sm:$0xff]
    %v826 = vld [vmem:[%s656 + $0x21a] sm:$0xff]
    %v827 = vld [vmem:[%s656 + $0x22a] sm:$0xff]
    %v828 = vld [vmem:[%s656 + $0x232] sm:$0xff]
    %v829 = vld [vmem:[%s656 + $0x242] sm:$0xff]
    %v830 = vld [vmem:[%s656 + $0x24a] sm:$0xff]
    %v831 = vld [vmem:[%s656 + $0x25a] sm:$0xff]
    %v832 = vld [vmem:[%s656 + $0x262] sm:$0xff]
    %v833 = vld [vmem:[%s656 + $0x272] sm:$0xff]
    %v834 = vld [vmem:[%s656 + $0x27a] sm:$0xff]
    %v835 = vld [vmem:[%s656 + $0x28a] sm:$0xff]
    %v836 = vld [vmem:[%s656 + $0x292] sm:$0xff]
    %v837 = vld [vmem:[%s656 + $0x2a2] sm:$0xff]
    %v838 = vld [vmem:[%s656 + $0x2aa] sm:$0xff]
    %v839 = vld [vmem:[%s656 + $0x2ba] sm:$0xff]
    %v840 = vld [vmem:[%s656 + $0x2c2] sm:$0xff]
    %v841 = vld [vmem:[%s656 + $0x2d2] sm:$0xff]
    %v842 = vld [vmem:[%s656 + $0x2da] sm:$0xff]
    %v843 = vld [vmem:[%s656 + $0x2ea] sm:$0xff]
    %v844 = vld [vmem:[%s656 + $0x2f2] sm:$0xff]
    %v845 = vld [vmem:[%s656 + $0x302] sm:$0xff]
    %v846 = vld [vmem:[%s656 + $0x30a] sm:$0xff]
    %v847 = vld [vmem:[%s656 + $0x31a] sm:$0xff]
    %v848 = vld [vmem:[%s656 + $0x322] sm:$0xff]
    %913 = vrot.lane.b32.xlu0 %v336, 3
    %v914 = vpop.permute.xlu0 %913
    %915 = vrot.lane.b32.xlu0 %v337, 3
    %v916 = vpop.permute.xlu0 %915
    %917 = vrot.lane.b32.xlu0 %v338, 3
    %v918 = vpop.permute.xlu0 %917
    %919 = vrot.lane.b32.xlu0 %v339, 3
    %v920 = vpop.permute.xlu0 %919
    %921 = vrot.lane.b32.xlu0 %v340, 3
    %v922 = vpop.permute.xlu0 %921
    %923 = vrot.lane.b32.xlu0 %v341, 3
    %v924 = vpop.permute.xlu0 %923
    %925 = vrot.lane.b32.xlu0 %v342, 3
    %v926 = vpop.permute.xlu0 %925
    %927 = vrot.lane.b32.xlu0 %v343, 3
    %v928 = vpop.permute.xlu0 %927
    %929 = vrot.lane.b32.xlu0 %v344, 3
    %v930 = vpop.permute.xlu0 %929
    %931 = vrot.lane.b32.xlu0 %v345, 3
    %v932 = vpop.permute.xlu0 %931
    %933 = vrot.lane.b32.xlu0 %v346, 3
    %v934 = vpop.permute.xlu0 %933
    %935 = vrot.lane.b32.xlu0 %v347, 3
    %v936 = vpop.permute.xlu0 %935
    %937 = vrot.lane.b32.xlu0 %v348, 3
    %v938 = vpop.permute.xlu0 %937
    %939 = vrot.lane.b32.xlu0 %v349, 3
    %v940 = vpop.permute.xlu0 %939
    %941 = vrot.lane.b32.xlu0 %v350, 3
    %v942 = vpop.permute.xlu0 %941
    %943 = vrot.lane.b32.xlu0 %v351, 3
    %v944 = vpop.permute.xlu0 %943
    %945 = vrot.lane.b32.xlu0 %v352, 3
    %v946 = vpop.permute.xlu0 %945
    %947 = vrot.lane.b32.xlu0 %v353, 3
    %v948 = vpop.permute.xlu0 %947
    %949 = vrot.lane.b32.xlu0 %v354, 3
    %v950 = vpop.permute.xlu0 %949
    %951 = vrot.lane.b32.xlu0 %v355, 3
    %v952 = vpop.permute.xlu0 %951
    %953 = vrot.lane.b32.xlu0 %v356, 3
    %v954 = vpop.permute.xlu0 %953
    %955 = vrot.lane.b32.xlu0 %v357, 3
    %v956 = vpop.permute.xlu0 %955
    %957 = vrot.lane.b32.xlu0 %v358, 3
    %v958 = vpop.permute.xlu0 %957
    %959 = vrot.lane.b32.xlu0 %v359, 3
    %v960 = vpop.permute.xlu0 %959
    %961 = vrot.lane.b32.xlu0 %v360, 3
    %v962 = vpop.permute.xlu0 %961
    %963 = vrot.lane.b32.xlu0 %v361, 3
    %v964 = vpop.permute.xlu0 %963
    %965 = vrot.lane.b32.xlu0 %v362, 3
    %v966 = vpop.permute.xlu0 %965
    %967 = vrot.lane.b32.xlu0 %v363, 3
    %v968 = vpop.permute.xlu0 %967
    %969 = vrot.lane.b32.xlu0 %v364, 3
    %v970 = vpop.permute.xlu0 %969
    %971 = vrot.lane.b32.xlu0 %v365, 3
    %v972 = vpop.permute.xlu0 %971
    %973 = vrot.lane.b32.xlu0 %v366, 3
    %v974 = vpop.permute.xlu0 %973
    %975 = vrot.lane.b32.xlu0 %v367, 3
    %v976 = vpop.permute.xlu0 %975
    %977 = vrot.lane.b32.xlu0 %v368, 3
    %v978 = vpop.permute.xlu0 %977
    %979 = vrot.lane.b32.xlu0 %v369, 3
    %v980 = vpop.permute.xlu0 %979
    %981 = vrot.lane.b32.xlu0 %v370, 3
    %v982 = vpop.permute.xlu0 %981
    %983 = vrot.lane.b32.xlu0 %v371, 3
    %v984 = vpop.permute.xlu0 %983
    %985 = vrot.lane.b32.xlu0 %v372, 3
    %v986 = vpop.permute.xlu0 %985
    %987 = vrot.lane.b32.xlu0 %v373, 3
    %v988 = vpop.permute.xlu0 %987
    %989 = vrot.lane.b32.xlu0 %v374, 3
    %v990 = vpop.permute.xlu0 %989
    %991 = vrot.lane.b32.xlu0 %v375, 3
    %v992 = vpop.permute.xlu0 %991
    %993 = vrot.lane.b32.xlu0 %v376, 3
    %v994 = vpop.permute.xlu0 %993
    %995 = vrot.lane.b32.xlu0 %v377, 3
    %v996 = vpop.permute.xlu0 %995
    %997 = vrot.lane.b32.xlu0 %v378, 3
    %v998 = vpop.permute.xlu0 %997
    %999 = vrot.lane.b32.xlu0 %v379, 3
    %v1000 = vpop.permute.xlu0 %999
    %1001 = vrot.lane.b32.xlu0 %v380, 3
    %v1002 = vpop.permute.xlu0 %1001
    %1003 = vrot.lane.b32.xlu0 %v381, 3
    %v1004 = vpop.permute.xlu0 %1003
    %1005 = vrot.lane.b32.xlu0 %v382, 3
    %v1006 = vpop.permute.xlu0 %1005
    %1007 = vrot.lane.b32.xlu0 %v383, 3
    %v1008 = vpop.permute.xlu0 %1007
    %1009 = vrot.lane.b32.xlu0 %v384, 3
    %v1010 = vpop.permute.xlu0 %1009
    %1011 = vrot.lane.b32.xlu0 %v385, 3
    %v1012 = vpop.permute.xlu0 %1011
    %1013 = vrot.lane.b32.xlu0 %v386, 3
    %v1014 = vpop.permute.xlu0 %1013
    %1015 = vrot.lane.b32.xlu0 %v387, 3
    %v1016 = vpop.permute.xlu0 %1015
    %1017 = vrot.lane.b32.xlu0 %v388, 3
    %v1018 = vpop.permute.xlu0 %1017
    %1019 = vrot.lane.b32.xlu0 %v389, 3
    %v1020 = vpop.permute.xlu0 %1019
    %1021 = vrot.lane.b32.xlu0 %v390, 3
    %v1022 = vpop.permute.xlu0 %1021
    %1023 = vrot.lane.b32.xlu0 %v391, 3
    %v1024 = vpop.permute.xlu0 %1023
    %1025 = vrot.lane.b32.xlu0 %v392, 3
    %v1026 = vpop.permute.xlu0 %1025
    %1027 = vrot.lane.b32.xlu0 %v393, 3
    %v1028 = vpop.permute.xlu0 %1027
    %1029 = vrot.lane.b32.xlu0 %v394, 3
    %v1030 = vpop.permute.xlu0 %1029
    %1031 = vrot.lane.b32.xlu0 %v395, 3
    %v1032 = vpop.permute.xlu0 %1031
    %1033 = vrot.lane.b32.xlu0 %v396, 3
    %v1034 = vpop.permute.xlu0 %1033
    %1035 = vrot.lane.b32.xlu0 %v397, 3
    %v1036 = vpop.permute.xlu0 %1035
    %1037 = vrot.lane.b32.xlu0 %v398, 3
    %v1038 = vpop.permute.xlu0 %1037
    %1039 = vrot.lane.b32.xlu0 %v399, 3
    %v1040 = vpop.permute.xlu0 %1039
    %1169 = vrot.lane.b32.xlu0 %v400, 6
    %v1170 = vpop.permute.xlu0 %1169
    %1171 = vrot.lane.b32.xlu0 %v401, 6
    %v1172 = vpop.permute.xlu0 %1171
    %1173 = vrot.lane.b32.xlu0 %v402, 6
    %v1174 = vpop.permute.xlu0 %1173
    %1175 = vrot.lane.b32.xlu0 %v403, 6
    %v1176 = vpop.permute.xlu0 %1175
    %1177 = vrot.lane.b32.xlu0 %v404, 6
    %v1178 = vpop.permute.xlu0 %1177
    %1179 = vrot.lane.b32.xlu0 %v405, 6
    %v1180 = vpop.permute.xlu0 %1179
    %1181 = vrot.lane.b32.xlu0 %v406, 6
    %v1182 = vpop.permute.xlu0 %1181
    %1183 = vrot.lane.b32.xlu0 %v407, 6
    %v1184 = vpop.permute.xlu0 %1183
    %1185 = vrot.lane.b32.xlu0 %v408, 6
    %v1186 = vpop.permute.xlu0 %1185
    %1187 = vrot.lane.b32.xlu0 %v409, 6
    %v1188 = vpop.permute.xlu0 %1187
    %1189 = vrot.lane.b32.xlu0 %v410, 6
    %v1190 = vpop.permute.xlu0 %1189
    %1191 = vrot.lane.b32.xlu0 %v411, 6
    %v1192 = vpop.permute.xlu0 %1191
    %1193 = vrot.lane.b32.xlu0 %v412, 6
    %v1194 = vpop.permute.xlu0 %1193
    %1195 = vrot.lane.b32.xlu0 %v413, 6
    %v1196 = vpop.permute.xlu0 %1195
    %1197 = vrot.lane.b32.xlu0 %v414, 6
    %v1198 = vpop.permute.xlu0 %1197
    %1199 = vrot.lane.b32.xlu0 %v415, 6
    %v1200 = vpop.permute.xlu0 %1199
    %1201 = vrot.lane.b32.xlu0 %v416, 6
    %v1202 = vpop.permute.xlu0 %1201
    %1203 = vrot.lane.b32.xlu0 %v417, 6
    %v1204 = vpop.permute.xlu0 %1203
    %1205 = vrot.lane.b32.xlu0 %v418, 6
    %v1206 = vpop.permute.xlu0 %1205
    %1207 = vrot.lane.b32.xlu0 %v419, 6
    %v1208 = vpop.permute.xlu0 %1207
    %1209 = vrot.lane.b32.xlu0 %v420, 6
    %v1210 = vpop.permute.xlu0 %1209
    %1211 = vrot.lane.b32.xlu0 %v421, 6
    %v1212 = vpop.permute.xlu0 %1211
    %1213 = vrot.lane.b32.xlu0 %v422, 6
    %v1214 = vpop.permute.xlu0 %1213
    %1215 = vrot.lane.b32.xlu0 %v423, 6
    %v1216 = vpop.permute.xlu0 %1215
    %1217 = vrot.lane.b32.xlu0 %v424, 6
    %v1218 = vpop.permute.xlu0 %1217
    %1219 = vrot.lane.b32.xlu0 %v425, 6
    %v1220 = vpop.permute.xlu0 %1219
    %1221 = vrot.lane.b32.xlu0 %v426, 6
    %v1222 = vpop.permute.xlu0 %1221
    %1223 = vrot.lane.b32.xlu0 %v427, 6
    %v1224 = vpop.permute.xlu0 %1223
    %1225 = vrot.lane.b32.xlu0 %v428, 6
    %v1226 = vpop.permute.xlu0 %1225
    %1227 = vrot.lane.b32.xlu0 %v429, 6
    %v1228 = vpop.permute.xlu0 %1227
    %1229 = vrot.lane.b32.xlu0 %v430, 6
    %v1230 = vpop.permute.xlu0 %1229
    %1231 = vrot.lane.b32.xlu0 %v431, 6
    %v1232 = vpop.permute.xlu0 %1231
    %1233 = vrot.lane.b32.xlu0 %v432, 6
    %v1234 = vpop.permute.xlu0 %1233
    %1235 = vrot.lane.b32.xlu0 %v433, 6
    %v1236 = vpop.permute.xlu0 %1235
    %1237 = vrot.lane.b32.xlu0 %v434, 6
    %v1238 = vpop.permute.xlu0 %1237
    %1239 = vrot.lane.b32.xlu0 %v435, 6
    %v1240 = vpop.permute.xlu0 %1239
    %1241 = vrot.lane.b32.xlu0 %v436, 6
    %v1242 = vpop.permute.xlu0 %1241
    %1243 = vrot.lane.b32.xlu0 %v437, 6
    %v1244 = vpop.permute.xlu0 %1243
    %1245 = vrot.lane.b32.xlu0 %v438, 6
    %v1246 = vpop.permute.xlu0 %1245
    %1247 = vrot.lane.b32.xlu0 %v439, 6
    %v1248 = vpop.permute.xlu0 %1247
    %1249 = vrot.lane.b32.xlu0 %v440, 6
    %v1250 = vpop.permute.xlu0 %1249
    %1251 = vrot.lane.b32.xlu0 %v441, 6
    %v1252 = vpop.permute.xlu0 %1251
    %1253 = vrot.lane.b32.xlu0 %v442, 6
    %v1254 = vpop.permute.xlu0 %1253
    %1255 = vrot.lane.b32.xlu0 %v443, 6
    %v1256 = vpop.permute.xlu0 %1255
    %1257 = vrot.lane.b32.xlu0 %v444, 6
    %v1258 = vpop.permute.xlu0 %1257
    %1259 = vrot.lane.b32.xlu0 %v445, 6
    %v1260 = vpop.permute.xlu0 %1259
    %1261 = vrot.lane.b32.xlu0 %v446, 6
    %v1262 = vpop.permute.xlu0 %1261
    %1263 = vrot.lane.b32.xlu0 %v447, 6
    %v1264 = vpop.permute.xlu0 %1263
    %1265 = vrot.lane.b32.xlu0 %v448, 6
    %v1266 = vpop.permute.xlu0 %1265
    %1267 = vrot.lane.b32.xlu0 %v449, 6
    %v1268 = vpop.permute.xlu0 %1267
    %1269 = vrot.lane.b32.xlu0 %v450, 6
    %v1270 = vpop.permute.xlu0 %1269
    %1271 = vrot.lane.b32.xlu0 %v451, 6
    %v1272 = vpop.permute.xlu0 %1271
    %1273 = vrot.lane.b32.xlu0 %v452, 6
    %v1274 = vpop.permute.xlu0 %1273
    %1275 = vrot.lane.b32.xlu0 %v453, 6
    %v1276 = vpop.permute.xlu0 %1275
    %1277 = vrot.lane.b32.xlu0 %v454, 6
    %v1278 = vpop.permute.xlu0 %1277
    %1279 = vrot.lane.b32.xlu0 %v455, 6
    %v1280 = vpop.permute.xlu0 %1279
    %1281 = vrot.lane.b32.xlu0 %v456, 6
    %v1282 = vpop.permute.xlu0 %1281
    %1283 = vrot.lane.b32.xlu0 %v457, 6
    %v1284 = vpop.permute.xlu0 %1283
    %1285 = vrot.lane.b32.xlu0 %v458, 6
    %v1286 = vpop.permute.xlu0 %1285
    %1287 = vrot.lane.b32.xlu0 %v459, 6
    %v1288 = vpop.permute.xlu0 %1287
    %1289 = vrot.lane.b32.xlu0 %v460, 6
    %v1290 = vpop.permute.xlu0 %1289
    %1291 = vrot.lane.b32.xlu0 %v461, 6
    %v1292 = vpop.permute.xlu0 %1291
    %1293 = vrot.lane.b32.xlu0 %v462, 6
    %v1294 = vpop.permute.xlu0 %1293
    %1295 = vrot.lane.b32.xlu0 %v463, 6
    %v1296 = vpop.permute.xlu0 %1295
    %1425 = vrot.lane.b32.xlu0 %v464, 9
    %v1426 = vpop.permute.xlu0 %1425
    %1427 = vrot.lane.b32.xlu0 %v465, 9
    %v1428 = vpop.permute.xlu0 %1427
    %1429 = vrot.lane.b32.xlu0 %v466, 9
    %v1430 = vpop.permute.xlu0 %1429
    %1431 = vrot.lane.b32.xlu0 %v467, 9
    %v1432 = vpop.permute.xlu0 %1431
    %1433 = vrot.lane.b32.xlu0 %v468, 9
    %v1434 = vpop.permute.xlu0 %1433
    %1435 = vrot.lane.b32.xlu0 %v469, 9
    %v1436 = vpop.permute.xlu0 %1435
    %1437 = vrot.lane.b32.xlu0 %v470, 9
    %v1438 = vpop.permute.xlu0 %1437
    %1439 = vrot.lane.b32.xlu0 %v471, 9
    %v1440 = vpop.permute.xlu0 %1439
    %1441 = vrot.lane.b32.xlu0 %v472, 9
    %v1442 = vpop.permute.xlu0 %1441
    %1443 = vrot.lane.b32.xlu0 %v473, 9
    %v1444 = vpop.permute.xlu0 %1443
    %1445 = vrot.lane.b32.xlu0 %v474, 9
    %v1446 = vpop.permute.xlu0 %1445
    %1447 = vrot.lane.b32.xlu0 %v475, 9
    %v1448 = vpop.permute.xlu0 %1447
    %1449 = vrot.lane.b32.xlu0 %v476, 9
    %v1450 = vpop.permute.xlu0 %1449
    %1451 = vrot.lane.b32.xlu0 %v477, 9
    %v1452 = vpop.permute.xlu0 %1451
    %1453 = vrot.lane.b32.xlu0 %v478, 9
    %v1454 = vpop.permute.xlu0 %1453
    %1455 = vrot.lane.b32.xlu0 %v479, 9
    %v1456 = vpop.permute.xlu0 %1455
    %1457 = vrot.lane.b32.xlu0 %v480, 9
    %v1458 = vpop.permute.xlu0 %1457
    %1459 = vrot.lane.b32.xlu0 %v481, 9
    %v1460 = vpop.permute.xlu0 %1459
    %1461 = vrot.lane.b32.xlu0 %v482, 9
    %v1462 = vpop.permute.xlu0 %1461
    %1463 = vrot.lane.b32.xlu0 %v483, 9
    %v1464 = vpop.permute.xlu0 %1463
    %1465 = vrot.lane.b32.xlu0 %v484, 9
    %v1466 = vpop.permute.xlu0 %1465
    %1467 = vrot.lane.b32.xlu0 %v485, 9
    %v1468 = vpop.permute.xlu0 %1467
    %1469 = vrot.lane.b32.xlu0 %v486, 9
    %v1470 = vpop.permute.xlu0 %1469
    %1471 = vrot.lane.b32.xlu0 %v487, 9
    %v1472 = vpop.permute.xlu0 %1471
    %1473 = vrot.lane.b32.xlu0 %v488, 9
    %v1474 = vpop.permute.xlu0 %1473
    %1475 = vrot.lane.b32.xlu0 %v489, 9
    %v1476 = vpop.permute.xlu0 %1475
    %1477 = vrot.lane.b32.xlu0 %v490, 9
    %v1478 = vpop.permute.xlu0 %1477
    %1479 = vrot.lane.b32.xlu0 %v491, 9
    %v1480 = vpop.permute.xlu0 %1479
    %1481 = vrot.lane.b32.xlu0 %v492, 9
    %v1482 = vpop.permute.xlu0 %1481
    %1483 = vrot.lane.b32.xlu0 %v493, 9
    %v1484 = vpop.permute.xlu0 %1483
    %1485 = vrot.lane.b32.xlu0 %v494, 9
    %v1486 = vpop.permute.xlu0 %1485
    %1487 = vrot.lane.b32.xlu0 %v495, 9
    %v1488 = vpop.permute.xlu0 %1487
    %1489 = vrot.lane.b32.xlu0 %v496, 9
    %v1490 = vpop.permute.xlu0 %1489
    %1491 = vrot.lane.b32.xlu0 %v497, 9
    %v1492 = vpop.permute.xlu0 %1491
    %1493 = vrot.lane.b32.xlu0 %v498, 9
    %v1494 = vpop.permute.xlu0 %1493
    %1495 = vrot.lane.b32.xlu0 %v499, 9
    %v1496 = vpop.permute.xlu0 %1495
    %1497 = vrot.lane.b32.xlu0 %v500, 9
    %v1498 = vpop.permute.xlu0 %1497
    %1499 = vrot.lane.b32.xlu0 %v501, 9
    %v1500 = vpop.permute.xlu0 %1499
    %1501 = vrot.lane.b32.xlu0 %v502, 9
    %v1502 = vpop.permute.xlu0 %1501
    %1503 = vrot.lane.b32.xlu0 %v503, 9
    %v1504 = vpop.permute.xlu0 %1503
    %1505 = vrot.lane.b32.xlu0 %v504, 9
    %v1506 = vpop.permute.xlu0 %1505
    %1507 = vrot.lane.b32.xlu0 %v505, 9
    %v1508 = vpop.permute.xlu0 %1507
    %1509 = vrot.lane.b32.xlu0 %v506, 9
    %v1510 = vpop.permute.xlu0 %1509
    %1511 = vrot.lane.b32.xlu0 %v507, 9
    %v1512 = vpop.permute.xlu0 %1511
    %1513 = vrot.lane.b32.xlu0 %v508, 9
    %v1514 = vpop.permute.xlu0 %1513
    %1515 = vrot.lane.b32.xlu0 %v509, 9
    %v1516 = vpop.permute.xlu0 %1515
    %1517 = vrot.lane.b32.xlu0 %v510, 9
    %v1518 = vpop.permute.xlu0 %1517
    %1519 = vrot.lane.b32.xlu0 %v511, 9
    %v1520 = vpop.permute.xlu0 %1519
    %1521 = vrot.lane.b32.xlu0 %v512, 9
    %v1522 = vpop.permute.xlu0 %1521
    %1523 = vrot.lane.b32.xlu0 %v513, 9
    %v1524 = vpop.permute.xlu0 %1523
    %1525 = vrot.lane.b32.xlu0 %v514, 9
    %v1526 = vpop.permute.xlu0 %1525
    %1527 = vrot.lane.b32.xlu0 %v515, 9
    %v1528 = vpop.permute.xlu0 %1527
    %1529 = vrot.lane.b32.xlu0 %v516, 9
    %v1530 = vpop.permute.xlu0 %1529
    %1531 = vrot.lane.b32.xlu0 %v517, 9
    %v1532 = vpop.permute.xlu0 %1531
    %1533 = vrot.lane.b32.xlu0 %v518, 9
    %v1534 = vpop.permute.xlu0 %1533
    %1535 = vrot.lane.b32.xlu0 %v519, 9
    %v1536 = vpop.permute.xlu0 %1535
    %1537 = vrot.lane.b32.xlu0 %v520, 9
    %v1538 = vpop.permute.xlu0 %1537
    %1539 = vrot.lane.b32.xlu0 %v521, 9
    %v1540 = vpop.permute.xlu0 %1539
    %1541 = vrot.lane.b32.xlu0 %v522, 9
    %v1542 = vpop.permute.xlu0 %1541
    %1543 = vrot.lane.b32.xlu0 %v523, 9
    %v1544 = vpop.permute.xlu0 %1543
    %1545 = vrot.lane.b32.xlu0 %v524, 9
    %v1546 = vpop.permute.xlu0 %1545
    %1547 = vrot.lane.b32.xlu0 %v525, 9
    %v1548 = vpop.permute.xlu0 %1547
    %1549 = vrot.lane.b32.xlu0 %v526, 9
    %v1550 = vpop.permute.xlu0 %1549
    %1551 = vrot.lane.b32.xlu0 %v527, 9
    %v1552 = vpop.permute.xlu0 %1551
    %1681 = vrot.lane.b32.xlu0 %v528, 12
    %v1682 = vpop.permute.xlu0 %1681
    %1683 = vrot.lane.b32.xlu0 %v529, 12
    %v1684 = vpop.permute.xlu0 %1683
    %1685 = vrot.lane.b32.xlu0 %v530, 12
    %v1686 = vpop.permute.xlu0 %1685
    %1687 = vrot.lane.b32.xlu0 %v531, 12
    %v1688 = vpop.permute.xlu0 %1687
    %1689 = vrot.lane.b32.xlu0 %v532, 12
    %v1690 = vpop.permute.xlu0 %1689
    %1691 = vrot.lane.b32.xlu0 %v533, 12
    %v1692 = vpop.permute.xlu0 %1691
    %1693 = vrot.lane.b32.xlu0 %v534, 12
    %v1694 = vpop.permute.xlu0 %1693
    %1695 = vrot.lane.b32.xlu0 %v535, 12
    %v1696 = vpop.permute.xlu0 %1695
    %1697 = vrot.lane.b32.xlu0 %v536, 12
    %v1698 = vpop.permute.xlu0 %1697
    %1699 = vrot.lane.b32.xlu0 %v537, 12
    %v1700 = vpop.permute.xlu0 %1699
    %1701 = vrot.lane.b32.xlu0 %v538, 12
    %v1702 = vpop.permute.xlu0 %1701
    %1703 = vrot.lane.b32.xlu0 %v539, 12
    %v1704 = vpop.permute.xlu0 %1703
    %1705 = vrot.lane.b32.xlu0 %v540, 12
    %v1706 = vpop.permute.xlu0 %1705
    %1707 = vrot.lane.b32.xlu0 %v541, 12
    %v1708 = vpop.permute.xlu0 %1707
    %1709 = vrot.lane.b32.xlu0 %v542, 12
    %v1710 = vpop.permute.xlu0 %1709
    %1711 = vrot.lane.b32.xlu0 %v543, 12
    %v1712 = vpop.permute.xlu0 %1711
    %1713 = vrot.lane.b32.xlu0 %v544, 12
    %v1714 = vpop.permute.xlu0 %1713
    %1715 = vrot.lane.b32.xlu0 %v545, 12
    %v1716 = vpop.permute.xlu0 %1715
    %1717 = vrot.lane.b32.xlu0 %v546, 12
    %v1718 = vpop.permute.xlu0 %1717
    %1719 = vrot.lane.b32.xlu0 %v547, 12
    %v1720 = vpop.permute.xlu0 %1719
    %1721 = vrot.lane.b32.xlu0 %v548, 12
    %v1722 = vpop.permute.xlu0 %1721
    %1723 = vrot.lane.b32.xlu0 %v549, 12
    %v1724 = vpop.permute.xlu0 %1723
    %1725 = vrot.lane.b32.xlu0 %v550, 12
    %v1726 = vpop.permute.xlu0 %1725
    %1727 = vrot.lane.b32.xlu0 %v551, 12
    %v1728 = vpop.permute.xlu0 %1727
    %1729 = vrot.lane.b32.xlu0 %v552, 12
    %v1730 = vpop.permute.xlu0 %1729
    %1731 = vrot.lane.b32.xlu0 %v553, 12
    %v1732 = vpop.permute.xlu0 %1731
    %1733 = vrot.lane.b32.xlu0 %v554, 12
    %v1734 = vpop.permute.xlu0 %1733
    %1735 = vrot.lane.b32.xlu0 %v555, 12
    %v1736 = vpop.permute.xlu0 %1735
    %1737 = vrot.lane.b32.xlu0 %v556, 12
    %v1738 = vpop.permute.xlu0 %1737
    %1739 = vrot.lane.b32.xlu0 %v557, 12
    %v1740 = vpop.permute.xlu0 %1739
    %1741 = vrot.lane.b32.xlu0 %v558, 12
    %v1742 = vpop.permute.xlu0 %1741
    %1743 = vrot.lane.b32.xlu0 %v559, 12
    %v1744 = vpop.permute.xlu0 %1743
    %1745 = vrot.lane.b32.xlu0 %v560, 12
    %v1746 = vpop.permute.xlu0 %1745
    %1747 = vrot.lane.b32.xlu0 %v561, 12
    %v1748 = vpop.permute.xlu0 %1747
    %1749 = vrot.lane.b32.xlu0 %v562, 12
    %v1750 = vpop.permute.xlu0 %1749
    %1751 = vrot.lane.b32.xlu0 %v563, 12
    %v1752 = vpop.permute.xlu0 %1751
    %1753 = vrot.lane.b32.xlu0 %v564, 12
    %v1754 = vpop.permute.xlu0 %1753
    %1755 = vrot.lane.b32.xlu0 %v565, 12
    %v1756 = vpop.permute.xlu0 %1755
    %1757 = vrot.lane.b32.xlu0 %v566, 12
    %v1758 = vpop.permute.xlu0 %1757
    %1759 = vrot.lane.b32.xlu0 %v567, 12
    %v1760 = vpop.permute.xlu0 %1759
    %1761 = vrot.lane.b32.xlu0 %v568, 12
    %v1762 = vpop.permute.xlu0 %1761
    %1763 = vrot.lane.b32.xlu0 %v569, 12
    %v1764 = vpop.permute.xlu0 %1763
    %1765 = vrot.lane.b32.xlu0 %v570, 12
    %v1766 = vpop.permute.xlu0 %1765
    %1767 = vrot.lane.b32.xlu0 %v571, 12
    %v1768 = vpop.permute.xlu0 %1767
    %1769 = vrot.lane.b32.xlu0 %v572, 12
    %v1770 = vpop.permute.xlu0 %1769
    %1771 = vrot.lane.b32.xlu0 %v573, 12
    %v1772 = vpop.permute.xlu0 %1771
    %1773 = vrot.lane.b32.xlu0 %v574, 12
    %v1774 = vpop.permute.xlu0 %1773
    %1775 = vrot.lane.b32.xlu0 %v575, 12
    %v1776 = vpop.permute.xlu0 %1775
    %1777 = vrot.lane.b32.xlu0 %v576, 12
    %v1778 = vpop.permute.xlu0 %1777
    %1779 = vrot.lane.b32.xlu0 %v577, 12
    %v1780 = vpop.permute.xlu0 %1779
    %1781 = vrot.lane.b32.xlu0 %v578, 12
    %v1782 = vpop.permute.xlu0 %1781
    %1783 = vrot.lane.b32.xlu0 %v579, 12
    %v1784 = vpop.permute.xlu0 %1783
    %1785 = vrot.lane.b32.xlu0 %v580, 12
    %v1786 = vpop.permute.xlu0 %1785
    %1787 = vrot.lane.b32.xlu0 %v581, 12
    %v1788 = vpop.permute.xlu0 %1787
    %1789 = vrot.lane.b32.xlu0 %v582, 12
    %v1790 = vpop.permute.xlu0 %1789
    %1791 = vrot.lane.b32.xlu0 %v583, 12
    %v1792 = vpop.permute.xlu0 %1791
    %1793 = vrot.lane.b32.xlu0 %v584, 12
    %v1794 = vpop.permute.xlu0 %1793
    %1795 = vrot.lane.b32.xlu0 %v585, 12
    %v1796 = vpop.permute.xlu0 %1795
    %1797 = vrot.lane.b32.xlu0 %v586, 12
    %v1798 = vpop.permute.xlu0 %1797
    %1799 = vrot.lane.b32.xlu0 %v587, 12
    %v1800 = vpop.permute.xlu0 %1799
    %1801 = vrot.lane.b32.xlu0 %v588, 12
    %v1802 = vpop.permute.xlu0 %1801
    %1803 = vrot.lane.b32.xlu0 %v589, 12
    %v1804 = vpop.permute.xlu0 %1803
    %1805 = vrot.lane.b32.xlu0 %v590, 12
    %v1806 = vpop.permute.xlu0 %1805
    %1807 = vrot.lane.b32.xlu0 %v591, 12
    %v1808 = vpop.permute.xlu0 %1807
    %1937 = vrot.lane.b32.xlu0 %v592, 15
    %v1938 = vpop.permute.xlu0 %1937
    %1939 = vrot.lane.b32.xlu0 %v593, 15
    %v1940 = vpop.permute.xlu0 %1939
    %1941 = vrot.lane.b32.xlu0 %v594, 15
    %v1942 = vpop.permute.xlu0 %1941
    %1943 = vrot.lane.b32.xlu0 %v595, 15
    %v1944 = vpop.permute.xlu0 %1943
    %1945 = vrot.lane.b32.xlu0 %v596, 15
    %v1946 = vpop.permute.xlu0 %1945
    %1947 = vrot.lane.b32.xlu0 %v597, 15
    %v1948 = vpop.permute.xlu0 %1947
    %1949 = vrot.lane.b32.xlu0 %v598, 15
    %v1950 = vpop.permute.xlu0 %1949
    %1951 = vrot.lane.b32.xlu0 %v599, 15
    %v1952 = vpop.permute.xlu0 %1951
    %1953 = vrot.lane.b32.xlu0 %v600, 15
    %v1954 = vpop.permute.xlu0 %1953
    %1955 = vrot.lane.b32.xlu0 %v601, 15
    %v1956 = vpop.permute.xlu0 %1955
    %1957 = vrot.lane.b32.xlu0 %v602, 15
    %v1958 = vpop.permute.xlu0 %1957
    %1959 = vrot.lane.b32.xlu0 %v603, 15
    %v1960 = vpop.permute.xlu0 %1959
    %1961 = vrot.lane.b32.xlu0 %v604, 15
    %v1962 = vpop.permute.xlu0 %1961
    %1963 = vrot.lane.b32.xlu0 %v605, 15
    %v1964 = vpop.permute.xlu0 %1963
    %1965 = vrot.lane.b32.xlu0 %v606, 15
    %v1966 = vpop.permute.xlu0 %1965
    %1967 = vrot.lane.b32.xlu0 %v607, 15
    %v1968 = vpop.permute.xlu0 %1967
    %1969 = vrot.lane.b32.xlu0 %v608, 15
    %v1970 = vpop.permute.xlu0 %1969
    %1971 = vrot.lane.b32.xlu0 %v609, 15
    %v1972 = vpop.permute.xlu0 %1971
    %1973 = vrot.lane.b32.xlu0 %v610, 15
    %v1974 = vpop.permute.xlu0 %1973
    %1975 = vrot.lane.b32.xlu0 %v611, 15
    %v1976 = vpop.permute.xlu0 %1975
    %1977 = vrot.lane.b32.xlu0 %v612, 15
    %v1978 = vpop.permute.xlu0 %1977
    %1979 = vrot.lane.b32.xlu0 %v613, 15
    %v1980 = vpop.permute.xlu0 %1979
    %1981 = vrot.lane.b32.xlu0 %v614, 15
    %v1982 = vpop.permute.xlu0 %1981
    %1983 = vrot.lane.b32.xlu0 %v615, 15
    %v1984 = vpop.permute.xlu0 %1983
    %1985 = vrot.lane.b32.xlu0 %v616, 15
    %v1986 = vpop.permute.xlu0 %1985
    %1987 = vrot.lane.b32.xlu0 %v617, 15
    %v1988 = vpop.permute.xlu0 %1987
    %1989 = vrot.lane.b32.xlu0 %v618, 15
    %v1990 = vpop.permute.xlu0 %1989
    %1991 = vrot.lane.b32.xlu0 %v619, 15
    %v1992 = vpop.permute.xlu0 %1991
    %1993 = vrot.lane.b32.xlu0 %v620, 15
    %v1994 = vpop.permute.xlu0 %1993
    %1995 = vrot.lane.b32.xlu0 %v621, 15
    %v1996 = vpop.permute.xlu0 %1995
    %1997 = vrot.lane.b32.xlu0 %v622, 15
    %v1998 = vpop.permute.xlu0 %1997
    %1999 = vrot.lane.b32.xlu0 %v623, 15
    %v2000 = vpop.permute.xlu0 %1999
    %2001 = vrot.lane.b32.xlu0 %v624, 15
    %v2002 = vpop.permute.xlu0 %2001
    %2003 = vrot.lane.b32.xlu0 %v625, 15
    %v2004 = vpop.permute.xlu0 %2003
    %2005 = vrot.lane.b32.xlu0 %v626, 15
    %v2006 = vpop.permute.xlu0 %2005
    %2007 = vrot.lane.b32.xlu0 %v627, 15
    %v2008 = vpop.permute.xlu0 %2007
    %2009 = vrot.lane.b32.xlu0 %v628, 15
    %v2010 = vpop.permute.xlu0 %2009
    %2011 = vrot.lane.b32.xlu0 %v629, 15
    %v2012 = vpop.permute.xlu0 %2011
    %2013 = vrot.lane.b32.xlu0 %v630, 15
    %v2014 = vpop.permute.xlu0 %2013
    %2015 = vrot.lane.b32.xlu0 %v631, 15
    %v2016 = vpop.permute.xlu0 %2015
    %2017 = vrot.lane.b32.xlu0 %v632, 15
    %v2018 = vpop.permute.xlu0 %2017
    %2019 = vrot.lane.b32.xlu0 %v633, 15
    %v2020 = vpop.permute.xlu0 %2019
    %2021 = vrot.lane.b32.xlu0 %v634, 15
    %v2022 = vpop.permute.xlu0 %2021
    %2023 = vrot.lane.b32.xlu0 %v635, 15
    %v2024 = vpop.permute.xlu0 %2023
    %2025 = vrot.lane.b32.xlu0 %v636, 15
    %v2026 = vpop.permute.xlu0 %2025
    %2027 = vrot.lane.b32.xlu0 %v637, 15
    %v2028 = vpop.permute.xlu0 %2027
    %2029 = vrot.lane.b32.xlu0 %v638, 15
    %v2030 = vpop.permute.xlu0 %2029
    %2031 = vrot.lane.b32.xlu0 %v639, 15
    %v2032 = vpop.permute.xlu0 %2031
    %2033 = vrot.lane.b32.xlu0 %v640, 15
    %v2034 = vpop.permute.xlu0 %2033
    %2035 = vrot.lane.b32.xlu0 %v641, 15
    %v2036 = vpop.permute.xlu0 %2035
    %2037 = vrot.lane.b32.xlu0 %v642, 15
    %v2038 = vpop.permute.xlu0 %2037
    %2039 = vrot.lane.b32.xlu0 %v643, 15
    %v2040 = vpop.permute.xlu0 %2039
    %2041 = vrot.lane.b32.xlu0 %v644, 15
    %v2042 = vpop.permute.xlu0 %2041
    %2043 = vrot.lane.b32.xlu0 %v645, 15
    %v2044 = vpop.permute.xlu0 %2043
    %2045 = vrot.lane.b32.xlu0 %v646, 15
    %v2046 = vpop.permute.xlu0 %2045
    %2047 = vrot.lane.b32.xlu0 %v647, 15
    %v2048 = vpop.permute.xlu0 %2047
    %2049 = vrot.lane.b32.xlu0 %v648, 15
    %v2050 = vpop.permute.xlu0 %2049
    %2051 = vrot.lane.b32.xlu0 %v649, 15
    %v2052 = vpop.permute.xlu0 %2051
    %2053 = vrot.lane.b32.xlu0 %v650, 15
    %v2054 = vpop.permute.xlu0 %2053
    %2055 = vrot.lane.b32.xlu0 %v651, 15
    %v2056 = vpop.permute.xlu0 %2055
    %2057 = vrot.lane.b32.xlu0 %v652, 15
    %v2058 = vpop.permute.xlu0 %2057
    %2059 = vrot.lane.b32.xlu0 %v653, 15
    %v2060 = vpop.permute.xlu0 %2059
    %2061 = vrot.lane.b32.xlu0 %v654, 15
    %v2062 = vpop.permute.xlu0 %2061
    %2063 = vrot.lane.b32.xlu0 %v655, 15
    %v2064 = vpop.permute.xlu0 %2063
    %2193 = vrot.lane.b32.xlu0 %v657, 18
    %v2194 = vpop.permute.xlu0 %2193
    %2195 = vrot.lane.b32.xlu0 %v658, 18
    %v2196 = vpop.permute.xlu0 %2195
    %2197 = vrot.lane.b32.xlu0 %v659, 18
    %v2198 = vpop.permute.xlu0 %2197
    %2199 = vrot.lane.b32.xlu0 %v660, 18
    %v2200 = vpop.permute.xlu0 %2199
    %2201 = vrot.lane.b32.xlu0 %v661, 18
    %v2202 = vpop.permute.xlu0 %2201
    %2203 = vrot.lane.b32.xlu0 %v662, 18
    %v2204 = vpop.permute.xlu0 %2203
    %2205 = vrot.lane.b32.xlu0 %v663, 18
    %v2206 = vpop.permute.xlu0 %2205
    %2207 = vrot.lane.b32.xlu0 %v664, 18
    %v2208 = vpop.permute.xlu0 %2207
    %2209 = vrot.lane.b32.xlu0 %v665, 18
    %v2210 = vpop.permute.xlu0 %2209
    %2211 = vrot.lane.b32.xlu0 %v666, 18
    %v2212 = vpop.permute.xlu0 %2211
    %2213 = vrot.lane.b32.xlu0 %v667, 18
    %v2214 = vpop.permute.xlu0 %2213
    %2215 = vrot.lane.b32.xlu0 %v668, 18
    %v2216 = vpop.permute.xlu0 %2215
    %2217 = vrot.lane.b32.xlu0 %v669, 18
    %v2218 = vpop.permute.xlu0 %2217
    %2219 = vrot.lane.b32.xlu0 %v670, 18
    %v2220 = vpop.permute.xlu0 %2219
    %2221 = vrot.lane.b32.xlu0 %v671, 18
    %v2222 = vpop.permute.xlu0 %2221
    %2223 = vrot.lane.b32.xlu0 %v672, 18
    %v2224 = vpop.permute.xlu0 %2223
    %2225 = vrot.lane.b32.xlu0 %v673, 18
    %v2226 = vpop.permute.xlu0 %2225
    %2227 = vrot.lane.b32.xlu0 %v674, 18
    %v2228 = vpop.permute.xlu0 %2227
    %2229 = vrot.lane.b32.xlu0 %v675, 18
    %v2230 = vpop.permute.xlu0 %2229
    %2231 = vrot.lane.b32.xlu0 %v676, 18
    %v2232 = vpop.permute.xlu0 %2231
    %2233 = vrot.lane.b32.xlu0 %v677, 18
    %v2234 = vpop.permute.xlu0 %2233
    %2235 = vrot.lane.b32.xlu0 %v678, 18
    %v2236 = vpop.permute.xlu0 %2235
    %2237 = vrot.lane.b32.xlu0 %v679, 18
    %v2238 = vpop.permute.xlu0 %2237
    %2239 = vrot.lane.b32.xlu0 %v680, 18
    %v2240 = vpop.permute.xlu0 %2239
    %2241 = vrot.lane.b32.xlu0 %v681, 18
    %v2242 = vpop.permute.xlu0 %2241
    %2243 = vrot.lane.b32.xlu0 %v682, 18
    %v2244 = vpop.permute.xlu0 %2243
    %2245 = vrot.lane.b32.xlu0 %v683, 18
    %v2246 = vpop.permute.xlu0 %2245
    %2247 = vrot.lane.b32.xlu0 %v684, 18
    %v2248 = vpop.permute.xlu0 %2247
    %2249 = vrot.lane.b32.xlu0 %v685, 18
    %v2250 = vpop.permute.xlu0 %2249
    %2251 = vrot.lane.b32.xlu0 %v686, 18
    %v2252 = vpop.permute.xlu0 %2251
    %2253 = vrot.lane.b32.xlu0 %v687, 18
    %v2254 = vpop.permute.xlu0 %2253
    %2255 = vrot.lane.b32.xlu0 %v688, 18
    %v2256 = vpop.permute.xlu0 %2255
    %2257 = vrot.lane.b32.xlu0 %v689, 18
    %v2258 = vpop.permute.xlu0 %2257
    %2259 = vrot.lane.b32.xlu0 %v690, 18
    %v2260 = vpop.permute.xlu0 %2259
    %2261 = vrot.lane.b32.xlu0 %v691, 18
    %v2262 = vpop.permute.xlu0 %2261
    %2263 = vrot.lane.b32.xlu0 %v692, 18
    %v2264 = vpop.permute.xlu0 %2263
    %2265 = vrot.lane.b32.xlu0 %v693, 18
    %v2266 = vpop.permute.xlu0 %2265
    %2267 = vrot.lane.b32.xlu0 %v694, 18
    %v2268 = vpop.permute.xlu0 %2267
    %2269 = vrot.lane.b32.xlu0 %v695, 18
    %v2270 = vpop.permute.xlu0 %2269
    %2271 = vrot.lane.b32.xlu0 %v696, 18
    %v2272 = vpop.permute.xlu0 %2271
    %2273 = vrot.lane.b32.xlu0 %v697, 18
    %v2274 = vpop.permute.xlu0 %2273
    %2275 = vrot.lane.b32.xlu0 %v698, 18
    %v2276 = vpop.permute.xlu0 %2275
    %2277 = vrot.lane.b32.xlu0 %v699, 18
    %v2278 = vpop.permute.xlu0 %2277
    %2279 = vrot.lane.b32.xlu0 %v700, 18
    %v2280 = vpop.permute.xlu0 %2279
    %2281 = vrot.lane.b32.xlu0 %v701, 18
    %v2282 = vpop.permute.xlu0 %2281
    %2283 = vrot.lane.b32.xlu0 %v702, 18
    %v2284 = vpop.permute.xlu0 %2283
    %2285 = vrot.lane.b32.xlu0 %v703, 18
    %v2286 = vpop.permute.xlu0 %2285
    %2287 = vrot.lane.b32.xlu0 %v704, 18
    %v2288 = vpop.permute.xlu0 %2287
    %2289 = vrot.lane.b32.xlu0 %v705, 18
    %v2290 = vpop.permute.xlu0 %2289
    %2291 = vrot.lane.b32.xlu0 %v706, 18
    %v2292 = vpop.permute.xlu0 %2291
    %2293 = vrot.lane.b32.xlu0 %v707, 18
    %v2294 = vpop.permute.xlu0 %2293
    %2295 = vrot.lane.b32.xlu0 %v708, 18
    %v2296 = vpop.permute.xlu0 %2295
    %2297 = vrot.lane.b32.xlu0 %v709, 18
    %v2298 = vpop.permute.xlu0 %2297
    %2299 = vrot.lane.b32.xlu0 %v710, 18
    %v2300 = vpop.permute.xlu0 %2299
    %2301 = vrot.lane.b32.xlu0 %v711, 18
    %v2302 = vpop.permute.xlu0 %2301
    %2303 = vrot.lane.b32.xlu0 %v712, 18
    %v2304 = vpop.permute.xlu0 %2303
    %2305 = vrot.lane.b32.xlu0 %v713, 18
    %v2306 = vpop.permute.xlu0 %2305
    %2307 = vrot.lane.b32.xlu0 %v714, 18
    %v2308 = vpop.permute.xlu0 %2307
    %2309 = vrot.lane.b32.xlu0 %v715, 18
    %v2310 = vpop.permute.xlu0 %2309
    %2311 = vrot.lane.b32.xlu0 %v716, 18
    %v2312 = vpop.permute.xlu0 %2311
    %2313 = vrot.lane.b32.xlu0 %v717, 18
    %v2314 = vpop.permute.xlu0 %2313
    %2315 = vrot.lane.b32.xlu0 %v718, 18
    %v2316 = vpop.permute.xlu0 %2315
    %2317 = vrot.lane.b32.xlu0 %v719, 18
    %v2318 = vpop.permute.xlu0 %2317
    %2319 = vrot.lane.b32.xlu0 %v720, 18
    %v2320 = vpop.permute.xlu0 %2319
    %2449 = vrot.lane.b32.xlu0 %v721, 21
    %v2450 = vpop.permute.xlu0 %2449
    %2451 = vrot.lane.b32.xlu0 %v722, 21
    %v2452 = vpop.permute.xlu0 %2451
    %2453 = vrot.lane.b32.xlu0 %v723, 21
    %v2454 = vpop.permute.xlu0 %2453
    %2455 = vrot.lane.b32.xlu0 %v724, 21
    %v2456 = vpop.permute.xlu0 %2455
    %2457 = vrot.lane.b32.xlu0 %v725, 21
    %v2458 = vpop.permute.xlu0 %2457
    %2459 = vrot.lane.b32.xlu0 %v726, 21
    %v2460 = vpop.permute.xlu0 %2459
    %2461 = vrot.lane.b32.xlu0 %v727, 21
    %v2462 = vpop.permute.xlu0 %2461
    %2463 = vrot.lane.b32.xlu0 %v728, 21
    %v2464 = vpop.permute.xlu0 %2463
    %2465 = vrot.lane.b32.xlu0 %v729, 21
    %v2466 = vpop.permute.xlu0 %2465
    %2467 = vrot.lane.b32.xlu0 %v730, 21
    %v2468 = vpop.permute.xlu0 %2467
    %2469 = vrot.lane.b32.xlu0 %v731, 21
    %v2470 = vpop.permute.xlu0 %2469
    %2471 = vrot.lane.b32.xlu0 %v732, 21
    %v2472 = vpop.permute.xlu0 %2471
    %2473 = vrot.lane.b32.xlu0 %v733, 21
    %v2474 = vpop.permute.xlu0 %2473
    %2475 = vrot.lane.b32.xlu0 %v734, 21
    %v2476 = vpop.permute.xlu0 %2475
    %2477 = vrot.lane.b32.xlu0 %v735, 21
    %v2478 = vpop.permute.xlu0 %2477
    %2479 = vrot.lane.b32.xlu0 %v736, 21
    %v2480 = vpop.permute.xlu0 %2479
    %2481 = vrot.lane.b32.xlu0 %v737, 21
    %v2482 = vpop.permute.xlu0 %2481
    %2483 = vrot.lane.b32.xlu0 %v738, 21
    %v2484 = vpop.permute.xlu0 %2483
    %2485 = vrot.lane.b32.xlu0 %v739, 21
    %v2486 = vpop.permute.xlu0 %2485
    %2487 = vrot.lane.b32.xlu0 %v740, 21
    %v2488 = vpop.permute.xlu0 %2487
    %2489 = vrot.lane.b32.xlu0 %v741, 21
    %v2490 = vpop.permute.xlu0 %2489
    %2491 = vrot.lane.b32.xlu0 %v742, 21
    %v2492 = vpop.permute.xlu0 %2491
    %2493 = vrot.lane.b32.xlu0 %v743, 21
    %v2494 = vpop.permute.xlu0 %2493
    %2495 = vrot.lane.b32.xlu0 %v744, 21
    %v2496 = vpop.permute.xlu0 %2495
    %2497 = vrot.lane.b32.xlu0 %v745, 21
    %v2498 = vpop.permute.xlu0 %2497
    %2499 = vrot.lane.b32.xlu0 %v746, 21
    %v2500 = vpop.permute.xlu0 %2499
    %2501 = vrot.lane.b32.xlu0 %v747, 21
    %v2502 = vpop.permute.xlu0 %2501
    %2503 = vrot.lane.b32.xlu0 %v748, 21
    %v2504 = vpop.permute.xlu0 %2503
    %2505 = vrot.lane.b32.xlu0 %v749, 21
    %v2506 = vpop.permute.xlu0 %2505
    %2507 = vrot.lane.b32.xlu0 %v750, 21
    %v2508 = vpop.permute.xlu0 %2507
    %2509 = vrot.lane.b32.xlu0 %v751, 21
    %v2510 = vpop.permute.xlu0 %2509
    %2511 = vrot.lane.b32.xlu0 %v752, 21
    %v2512 = vpop.permute.xlu0 %2511
    %2513 = vrot.lane.b32.xlu0 %v753, 21
    %v2514 = vpop.permute.xlu0 %2513
    %2515 = vrot.lane.b32.xlu0 %v754, 21
    %v2516 = vpop.permute.xlu0 %2515
    %2517 = vrot.lane.b32.xlu0 %v755, 21
    %v2518 = vpop.permute.xlu0 %2517
    %2519 = vrot.lane.b32.xlu0 %v756, 21
    %v2520 = vpop.permute.xlu0 %2519
    %2521 = vrot.lane.b32.xlu0 %v757, 21
    %v2522 = vpop.permute.xlu0 %2521
    %2523 = vrot.lane.b32.xlu0 %v758, 21
    %v2524 = vpop.permute.xlu0 %2523
    %2525 = vrot.lane.b32.xlu0 %v759, 21
    %v2526 = vpop.permute.xlu0 %2525
    %2527 = vrot.lane.b32.xlu0 %v760, 21
    %v2528 = vpop.permute.xlu0 %2527
    %2529 = vrot.lane.b32.xlu0 %v761, 21
    %v2530 = vpop.permute.xlu0 %2529
    %2531 = vrot.lane.b32.xlu0 %v762, 21
    %v2532 = vpop.permute.xlu0 %2531
    %2533 = vrot.lane.b32.xlu0 %v763, 21
    %v2534 = vpop.permute.xlu0 %2533
    %2535 = vrot.lane.b32.xlu0 %v764, 21
    %v2536 = vpop.permute.xlu0 %2535
    %2537 = vrot.lane.b32.xlu0 %v765, 21
    %v2538 = vpop.permute.xlu0 %2537
    %2539 = vrot.lane.b32.xlu0 %v766, 21
    %v2540 = vpop.permute.xlu0 %2539
    %2541 = vrot.lane.b32.xlu0 %v767, 21
    %v2542 = vpop.permute.xlu0 %2541
    %2543 = vrot.lane.b32.xlu0 %v768, 21
    %v2544 = vpop.permute.xlu0 %2543
    %2545 = vrot.lane.b32.xlu0 %v769, 21
    %v2546 = vpop.permute.xlu0 %2545
    %2547 = vrot.lane.b32.xlu0 %v770, 21
    %v2548 = vpop.permute.xlu0 %2547
    %2549 = vrot.lane.b32.xlu0 %v771, 21
    %v2550 = vpop.permute.xlu0 %2549
    %2551 = vrot.lane.b32.xlu0 %v772, 21
    %v2552 = vpop.permute.xlu0 %2551
    %2553 = vrot.lane.b32.xlu0 %v773, 21
    %v2554 = vpop.permute.xlu0 %2553
    %2555 = vrot.lane.b32.xlu0 %v774, 21
    %v2556 = vpop.permute.xlu0 %2555
    %2557 = vrot.lane.b32.xlu0 %v775, 21
    %v2558 = vpop.permute.xlu0 %2557
    %2559 = vrot.lane.b32.xlu0 %v776, 21
    %v2560 = vpop.permute.xlu0 %2559
    %2561 = vrot.lane.b32.xlu0 %v777, 21
    %v2562 = vpop.permute.xlu0 %2561
    %2563 = vrot.lane.b32.xlu0 %v778, 21
    %v2564 = vpop.permute.xlu0 %2563
    %2565 = vrot.lane.b32.xlu0 %v779, 21
    %v2566 = vpop.permute.xlu0 %2565
    %2567 = vrot.lane.b32.xlu0 %v780, 21
    %v2568 = vpop.permute.xlu0 %2567
    %2569 = vrot.lane.b32.xlu0 %v781, 21
    %v2570 = vpop.permute.xlu0 %2569
    %2571 = vrot.lane.b32.xlu0 %v782, 21
    %v2572 = vpop.permute.xlu0 %2571
    %2573 = vrot.lane.b32.xlu0 %v783, 21
    %v2574 = vpop.permute.xlu0 %2573
    %2575 = vrot.lane.b32.xlu0 %v784, 21
    %v2576 = vpop.permute.xlu0 %2575
    %2705 = vrot.lane.b32.xlu0 %v785, 24
    %v2706 = vpop.permute.xlu0 %2705
    %2707 = vrot.lane.b32.xlu0 %v786, 24
    %v2708 = vpop.permute.xlu0 %2707
    %2709 = vrot.lane.b32.xlu0 %v787, 24
    %v2710 = vpop.permute.xlu0 %2709
    %2711 = vrot.lane.b32.xlu0 %v788, 24
    %v2712 = vpop.permute.xlu0 %2711
    %2713 = vrot.lane.b32.xlu0 %v789, 24
    %v2714 = vpop.permute.xlu0 %2713
    %2715 = vrot.lane.b32.xlu0 %v790, 24
    %v2716 = vpop.permute.xlu0 %2715
    %2717 = vrot.lane.b32.xlu0 %v791, 24
    %v2718 = vpop.permute.xlu0 %2717
    %2719 = vrot.lane.b32.xlu0 %v792, 24
    %v2720 = vpop.permute.xlu0 %2719
    %2721 = vrot.lane.b32.xlu0 %v793, 24
    %v2722 = vpop.permute.xlu0 %2721
    %2723 = vrot.lane.b32.xlu0 %v794, 24
    %v2724 = vpop.permute.xlu0 %2723
    %2725 = vrot.lane.b32.xlu0 %v795, 24
    %v2726 = vpop.permute.xlu0 %2725
    %2727 = vrot.lane.b32.xlu0 %v796, 24
    %v2728 = vpop.permute.xlu0 %2727
    %2729 = vrot.lane.b32.xlu0 %v797, 24
    %v2730 = vpop.permute.xlu0 %2729
    %2731 = vrot.lane.b32.xlu0 %v798, 24
    %v2732 = vpop.permute.xlu0 %2731
    %2733 = vrot.lane.b32.xlu0 %v799, 24
    %v2734 = vpop.permute.xlu0 %2733
    %2735 = vrot.lane.b32.xlu0 %v800, 24
    %v2736 = vpop.permute.xlu0 %2735
    %2737 = vrot.lane.b32.xlu0 %v801, 24
    %v2738 = vpop.permute.xlu0 %2737
    %2739 = vrot.lane.b32.xlu0 %v802, 24
    %v2740 = vpop.permute.xlu0 %2739
    %2741 = vrot.lane.b32.xlu0 %v803, 24
    %v2742 = vpop.permute.xlu0 %2741
    %2743 = vrot.lane.b32.xlu0 %v804, 24
    %v2744 = vpop.permute.xlu0 %2743
    %2745 = vrot.lane.b32.xlu0 %v805, 24
    %v2746 = vpop.permute.xlu0 %2745
    %2747 = vrot.lane.b32.xlu0 %v806, 24
    %v2748 = vpop.permute.xlu0 %2747
    %2749 = vrot.lane.b32.xlu0 %v807, 24
    %v2750 = vpop.permute.xlu0 %2749
    %2751 = vrot.lane.b32.xlu0 %v808, 24
    %v2752 = vpop.permute.xlu0 %2751
    %2753 = vrot.lane.b32.xlu0 %v809, 24
    %v2754 = vpop.permute.xlu0 %2753
    %2755 = vrot.lane.b32.xlu0 %v810, 24
    %v2756 = vpop.permute.xlu0 %2755
    %2757 = vrot.lane.b32.xlu0 %v811, 24
    %v2758 = vpop.permute.xlu0 %2757
    %2759 = vrot.lane.b32.xlu0 %v812, 24
    %v2760 = vpop.permute.xlu0 %2759
    %2761 = vrot.lane.b32.xlu0 %v813, 24
    %v2762 = vpop.permute.xlu0 %2761
    %2763 = vrot.lane.b32.xlu0 %v814, 24
    %v2764 = vpop.permute.xlu0 %2763
    %2765 = vrot.lane.b32.xlu0 %v815, 24
    %v2766 = vpop.permute.xlu0 %2765
    %2767 = vrot.lane.b32.xlu0 %v816, 24
    %v2768 = vpop.permute.xlu0 %2767
    %2769 = vrot.lane.b32.xlu0 %v817, 24
    %v2770 = vpop.permute.xlu0 %2769
    %2771 = vrot.lane.b32.xlu0 %v818, 24
    %v2772 = vpop.permute.xlu0 %2771
    %2773 = vrot.lane.b32.xlu0 %v819, 24
    %v2774 = vpop.permute.xlu0 %2773
    %2775 = vrot.lane.b32.xlu0 %v820, 24
    %v2776 = vpop.permute.xlu0 %2775
    %2777 = vrot.lane.b32.xlu0 %v821, 24
    %v2778 = vpop.permute.xlu0 %2777
    %2779 = vrot.lane.b32.xlu0 %v822, 24
    %v2780 = vpop.permute.xlu0 %2779
    %2781 = vrot.lane.b32.xlu0 %v823, 24
    %v2782 = vpop.permute.xlu0 %2781
    %2783 = vrot.lane.b32.xlu0 %v824, 24
    %v2784 = vpop.permute.xlu0 %2783
    %2785 = vrot.lane.b32.xlu0 %v825, 24
    %v2786 = vpop.permute.xlu0 %2785
    %2787 = vrot.lane.b32.xlu0 %v826, 24
    %v2788 = vpop.permute.xlu0 %2787
    %2789 = vrot.lane.b32.xlu0 %v827, 24
    %v2790 = vpop.permute.xlu0 %2789
    %2791 = vrot.lane.b32.xlu0 %v828, 24
    %v2792 = vpop.permute.xlu0 %2791
    %2793 = vrot.lane.b32.xlu0 %v829, 24
    %v2794 = vpop.permute.xlu0 %2793
    %2795 = vrot.lane.b32.xlu0 %v830, 24
    %v2796 = vpop.permute.xlu0 %2795
    %2797 = vrot.lane.b32.xlu0 %v831, 24
    %v2798 = vpop.permute.xlu0 %2797
    %2799 = vrot.lane.b32.xlu0 %v832, 24
    %v2800 = vpop.permute.xlu0 %2799
    %2801 = vrot.lane.b32.xlu0 %v833, 24
    %v2802 = vpop.permute.xlu0 %2801
    %2803 = vrot.lane.b32.xlu0 %v834, 24
    %v2804 = vpop.permute.xlu0 %2803
    %2805 = vrot.lane.b32.xlu0 %v835, 24
    %v2806 = vpop.permute.xlu0 %2805
    %2807 = vrot.lane.b32.xlu0 %v836, 24
    %v2808 = vpop.permute.xlu0 %2807
    %2809 = vrot.lane.b32.xlu0 %v837, 24
    %v2810 = vpop.permute.xlu0 %2809
    %2811 = vrot.lane.b32.xlu0 %v838, 24
    %v2812 = vpop.permute.xlu0 %2811
    %2813 = vrot.lane.b32.xlu0 %v839, 24
    %v2814 = vpop.permute.xlu0 %2813
    %2815 = vrot.lane.b32.xlu0 %v840, 24
    %v2816 = vpop.permute.xlu0 %2815
    %2817 = vrot.lane.b32.xlu0 %v841, 24
    %v2818 = vpop.permute.xlu0 %2817
    %2819 = vrot.lane.b32.xlu0 %v842, 24
    %v2820 = vpop.permute.xlu0 %2819
    %2821 = vrot.lane.b32.xlu0 %v843, 24
    %v2822 = vpop.permute.xlu0 %2821
    %2823 = vrot.lane.b32.xlu0 %v844, 24
    %v2824 = vpop.permute.xlu0 %2823
    %2825 = vrot.lane.b32.xlu0 %v845, 24
    %v2826 = vpop.permute.xlu0 %2825
    %2827 = vrot.lane.b32.xlu0 %v846, 24
    %v2828 = vpop.permute.xlu0 %2827
    %2829 = vrot.lane.b32.xlu0 %v847, 24
    %v2830 = vpop.permute.xlu0 %2829
    %2831 = vrot.lane.b32.xlu0 %v848, 24
    %v2832 = vpop.permute.xlu0 %2831
    %v2897 = vsel %vm33, %v272, %v914
    %v2898 = vsel %vm33, %v273, %v916
    %v2899 = vsel %vm33, %v274, %v918
    %v2900 = vsel %vm33, %v275, %v920
    %v2901 = vsel %vm33, %v276, %v922
    %v2902 = vsel %vm33, %v277, %v924
    %v2903 = vsel %vm33, %v278, %v926
    %v2904 = vsel %vm33, %v279, %v928
    %v2905 = vsel %vm33, %v280, %v930
    %v2906 = vsel %vm33, %v281, %v932
    %v2907 = vsel %vm33, %v282, %v934
    %v2908 = vsel %vm33, %v283, %v936
    %v2909 = vsel %vm33, %v284, %v938
    %v2910 = vsel %vm33, %v285, %v940
    %v2911 = vsel %vm33, %v286, %v942
    %v2912 = vsel %vm33, %v287, %v944
    %v2913 = vsel %vm33, %v288, %v946
    %v2914 = vsel %vm33, %v289, %v948
    %v2915 = vsel %vm33, %v290, %v950
    %v2916 = vsel %vm33, %v291, %v952
    %v2917 = vsel %vm33, %v292, %v954
    %v2918 = vsel %vm33, %v293, %v956
    %v2919 = vsel %vm33, %v294, %v958
    %v2920 = vsel %vm33, %v295, %v960
    %v2921 = vsel %vm33, %v296, %v962
    %v2922 = vsel %vm33, %v297, %v964
    %v2923 = vsel %vm33, %v298, %v966
    %v2924 = vsel %vm33, %v299, %v968
    %v2925 = vsel %vm33, %v300, %v970
    %v2926 = vsel %vm33, %v301, %v972
    %v2927 = vsel %vm33, %v302, %v974
    %v2928 = vsel %vm33, %v303, %v976
    %v2929 = vsel %vm33, %v304, %v978
    %v2930 = vsel %vm33, %v305, %v980
    %v2931 = vsel %vm33, %v306, %v982
    %v2932 = vsel %vm33, %v307, %v984
    %v2933 = vsel %vm33, %v308, %v986
    %v2934 = vsel %vm33, %v309, %v988
    %v2935 = vsel %vm33, %v310, %v990
    %v2936 = vsel %vm33, %v311, %v992
    %v2937 = vsel %vm33, %v312, %v994
    %v2938 = vsel %vm33, %v313, %v996
    %v2939 = vsel %vm33, %v314, %v998
    %v2940 = vsel %vm33, %v315, %v1000
    %v2941 = vsel %vm33, %v316, %v1002
    %v2942 = vsel %vm33, %v317, %v1004
    %v2943 = vsel %vm33, %v318, %v1006
    %v2944 = vsel %vm33, %v319, %v1008
    %v2945 = vsel %vm33, %v320, %v1010
    %v2946 = vsel %vm33, %v321, %v1012
    %v2947 = vsel %vm33, %v322, %v1014
    %v2948 = vsel %vm33, %v323, %v1016
    %v2949 = vsel %vm33, %v324, %v1018
    %v2950 = vsel %vm33, %v325, %v1020
    %v2951 = vsel %vm33, %v326, %v1022
    %v2952 = vsel %vm33, %v327, %v1024
    %v2953 = vsel %vm33, %v328, %v1026
    %v2954 = vsel %vm33, %v329, %v1028
    %v2955 = vsel %vm33, %v330, %v1030
    %v2956 = vsel %vm33, %v331, %v1032
    %v2957 = vsel %vm33, %v332, %v1034
    %v2958 = vsel %vm33, %v333, %v1036
    %v2959 = vsel %vm33, %v334, %v1038
    %v2960 = vsel %vm33, %v335, %v1040
    %vm2961 = vcmask 48128
    %v2962 = vsel %vm2961, %v2897, %v1170
    %v2963 = vsel %vm2961, %v2898, %v1172
    %v2964 = vsel %vm2961, %v2899, %v1174
    %v2965 = vsel %vm2961, %v2900, %v1176
    %v2966 = vsel %vm2961, %v2901, %v1178
    %v2967 = vsel %vm2961, %v2902, %v1180
    %v2968 = vsel %vm2961, %v2903, %v1182
    %v2969 = vsel %vm2961, %v2904, %v1184
    %v2970 = vsel %vm2961, %v2905, %v1186
    %v2971 = vsel %vm2961, %v2906, %v1188
    %v2972 = vsel %vm2961, %v2907, %v1190
    %v2973 = vsel %vm2961, %v2908, %v1192
    %v2974 = vsel %vm2961, %v2909, %v1194
    %v2975 = vsel %vm2961, %v2910, %v1196
    %v2976 = vsel %vm2961, %v2911, %v1198
    %v2977 = vsel %vm2961, %v2912, %v1200
    %v2978 = vsel %vm2961, %v2913, %v1202
    %v2979 = vsel %vm2961, %v2914, %v1204
    %v2980 = vsel %vm2961, %v2915, %v1206
    %v2981 = vsel %vm2961, %v2916, %v1208
    %v2982 = vsel %vm2961, %v2917, %v1210
    %v2983 = vsel %vm2961, %v2918, %v1212
    %v2984 = vsel %vm2961, %v2919, %v1214
    %v2985 = vsel %vm2961, %v2920, %v1216
    %v2986 = vsel %vm2961, %v2921, %v1218
    %v2987 = vsel %vm2961, %v2922, %v1220
    %v2988 = vsel %vm2961, %v2923, %v1222
    %v2989 = vsel %vm2961, %v2924, %v1224
    %v2990 = vsel %vm2961, %v2925, %v1226
    %v2991 = vsel %vm2961, %v2926, %v1228
    %v2992 = vsel %vm2961, %v2927, %v1230
    %v2993 = vsel %vm2961, %v2928, %v1232
    %v2994 = vsel %vm2961, %v2929, %v1234
    %v2995 = vsel %vm2961, %v2930, %v1236
    %v2996 = vsel %vm2961, %v2931, %v1238
    %v2997 = vsel %vm2961, %v2932, %v1240
    %v2998 = vsel %vm2961, %v2933, %v1242
    %v2999 = vsel %vm2961, %v2934, %v1244
    %v3000 = vsel %vm2961, %v2935, %v1246
    %v3001 = vsel %vm2961, %v2936, %v1248
    %v3002 = vsel %vm2961, %v2937, %v1250
    %v3003 = vsel %vm2961, %v2938, %v1252
    %v3004 = vsel %vm2961, %v2939, %v1254
    %v3005 = vsel %vm2961, %v2940, %v1256
    %v3006 = vsel %vm2961, %v2941, %v1258
    %v3007 = vsel %vm2961, %v2942, %v1260
    %v3008 = vsel %vm2961, %v2943, %v1262
    %v3009 = vsel %vm2961, %v2944, %v1264
    %v3010 = vsel %vm2961, %v2945, %v1266
    %v3011 = vsel %vm2961, %v2946, %v1268
    %v3012 = vsel %vm2961, %v2947, %v1270
    %v3013 = vsel %vm2961, %v2948, %v1272
    %v3014 = vsel %vm2961, %v2949, %v1274
    %v3015 = vsel %vm2961, %v2950, %v1276
    %v3016 = vsel %vm2961, %v2951, %v1278
    %v3017 = vsel %vm2961, %v2952, %v1280
    %v3018 = vsel %vm2961, %v2953, %v1282
    %v3019 = vsel %vm2961, %v2954, %v1284
    %v3020 = vsel %vm2961, %v2955, %v1286
    %v3021 = vsel %vm2961, %v2956, %v1288
    %v3022 = vsel %vm2961, %v2957, %v1290
    %v3023 = vsel %vm2961, %v2958, %v1292
    %v3024 = vsel %vm2961, %v2959, %v1294
    %v3025 = vsel %vm2961, %v2960, %v1296
    %vm3026 = vcmask 72704
    %v3027 = vsel %vm3026, %v2962, %v1426
    %v3028 = vsel %vm3026, %v2963, %v1428
    %v3029 = vsel %vm3026, %v2964, %v1430
    %v3030 = vsel %vm3026, %v2965, %v1432
    %v3031 = vsel %vm3026, %v2966, %v1434
    %v3032 = vsel %vm3026, %v2967, %v1436
    %v3033 = vsel %vm3026, %v2968, %v1438
    %v3034 = vsel %vm3026, %v2969, %v1440
    %v3035 = vsel %vm3026, %v2970, %v1442
    %v3036 = vsel %vm3026, %v2971, %v1444
    %v3037 = vsel %vm3026, %v2972, %v1446
    %v3038 = vsel %vm3026, %v2973, %v1448
    %v3039 = vsel %vm3026, %v2974, %v1450
    %v3040 = vsel %vm3026, %v2975, %v1452
    %v3041 = vsel %vm3026, %v2976, %v1454
    %v3042 = vsel %vm3026, %v2977, %v1456
    %v3043 = vsel %vm3026, %v2978, %v1458
    %v3044 = vsel %vm3026, %v2979, %v1460
    %v3045 = vsel %vm3026, %v2980, %v1462
    %v3046 = vsel %vm3026, %v2981, %v1464
    %v3047 = vsel %vm3026, %v2982, %v1466
    %v3048 = vsel %vm3026, %v2983, %v1468
    %v3049 = vsel %vm3026, %v2984, %v1470
    %v3050 = vsel %vm3026, %v2985, %v1472
    %v3051 = vsel %vm3026, %v2986, %v1474
    %v3052 = vsel %vm3026, %v2987, %v1476
    %v3053 = vsel %vm3026, %v2988, %v1478
    %v3054 = vsel %vm3026, %v2989, %v1480
    %v3055 = vsel %vm3026, %v2990, %v1482
    %v3056 = vsel %vm3026, %v2991, %v1484
    %v3057 = vsel %vm3026, %v2992, %v1486
    %v3058 = vsel %vm3026, %v2993, %v1488
    %v3059 = vsel %vm3026, %v2994, %v1490
    %v3060 = vsel %vm3026, %v2995, %v1492
    %v3061 = vsel %vm3026, %v2996, %v1494
    %v3062 = vsel %vm3026, %v2997, %v1496
    %v3063 = vsel %vm3026, %v2998, %v1498
    %v3064 = vsel %vm3026, %v2999, %v1500
    %v3065 = vsel %vm3026, %v3000, %v1502
    %v3066 = vsel %vm3026, %v3001, %v1504
    %v3067 = vsel %vm3026, %v3002, %v1506
    %v3068 = vsel %vm3026, %v3003, %v1508
    %v3069 = vsel %vm3026, %v3004, %v1510
    %v3070 = vsel %vm3026, %v3005, %v1512
    %v3071 = vsel %vm3026, %v3006, %v1514
    %v3072 = vsel %vm3026, %v3007, %v1516
    %v3073 = vsel %vm3026, %v3008, %v1518
    %v3074 = vsel %vm3026, %v3009, %v1520
    %v3075 = vsel %vm3026, %v3010, %v1522
    %v3076 = vsel %vm3026, %v3011, %v1524
    %v3077 = vsel %vm3026, %v3012, %v1526
    %v3078 = vsel %vm3026, %v3013, %v1528
    %v3079 = vsel %vm3026, %v3014, %v1530
    %v3080 = vsel %vm3026, %v3015, %v1532
    %v3081 = vsel %vm3026, %v3016, %v1534
    %v3082 = vsel %vm3026, %v3017, %v1536
    %v3083 = vsel %vm3026, %v3018, %v1538
    %v3084 = vsel %vm3026, %v3019, %v1540
    %v3085 = vsel %vm3026, %v3020, %v1542
    %v3086 = vsel %vm3026, %v3021, %v1544
    %v3087 = vsel %vm3026, %v3022, %v1546
    %v3088 = vsel %vm3026, %v3023, %v1548
    %v3089 = vsel %vm3026, %v3024, %v1550
    %v3090 = vsel %vm3026, %v3025, %v1552
    %vm3091 = vcmask 97280
    %v3092 = vsel %vm3091, %v3027, %v1682
    %v3093 = vsel %vm3091, %v3028, %v1684
    %v3094 = vsel %vm3091, %v3029, %v1686
    %v3095 = vsel %vm3091, %v3030, %v1688
    %v3096 = vsel %vm3091, %v3031, %v1690
    %v3097 = vsel %vm3091, %v3032, %v1692
    %v3098 = vsel %vm3091, %v3033, %v1694
    %v3099 = vsel %vm3091, %v3034, %v1696
    %v3100 = vsel %vm3091, %v3035, %v1698
    %v3101 = vsel %vm3091, %v3036, %v1700
    %v3102 = vsel %vm3091, %v3037, %v1702
    %v3103 = vsel %vm3091, %v3038, %v1704
    %v3104 = vsel %vm3091, %v3039, %v1706
    %v3105 = vsel %vm3091, %v3040, %v1708
    %v3106 = vsel %vm3091, %v3041, %v1710
    %v3107 = vsel %vm3091, %v3042, %v1712
    %v3108 = vsel %vm3091, %v3043, %v1714
    %v3109 = vsel %vm3091, %v3044, %v1716
    %v3110 = vsel %vm3091, %v3045, %v1718
    %v3111 = vsel %vm3091, %v3046, %v1720
    %v3112 = vsel %vm3091, %v3047, %v1722
    %v3113 = vsel %vm3091, %v3048, %v1724
    %v3114 = vsel %vm3091, %v3049, %v1726
    %v3115 = vsel %vm3091, %v3050, %v1728
    %v3116 = vsel %vm3091, %v3051, %v1730
    %v3117 = vsel %vm3091, %v3052, %v1732
    %v3118 = vsel %vm3091, %v3053, %v1734
    %v3119 = vsel %vm3091, %v3054, %v1736
    %v3120 = vsel %vm3091, %v3055, %v1738
    %v3121 = vsel %vm3091, %v3056, %v1740
    %v3122 = vsel %vm3091, %v3057, %v1742
    %v3123 = vsel %vm3091, %v3058, %v1744
    %v3124 = vsel %vm3091, %v3059, %v1746
    %v3125 = vsel %vm3091, %v3060, %v1748
    %v3126 = vsel %vm3091, %v3061, %v1750
    %v3127 = vsel %vm3091, %v3062, %v1752
    %v3128 = vsel %vm3091, %v3063, %v1754
    %v3129 = vsel %vm3091, %v3064, %v1756
    %v3130 = vsel %vm3091, %v3065, %v1758
    %v3131 = vsel %vm3091, %v3066, %v1760
    %v3132 = vsel %vm3091, %v3067, %v1762
    %v3133 = vsel %vm3091, %v3068, %v1764
    %v3134 = vsel %vm3091, %v3069, %v1766
    %v3135 = vsel %vm3091, %v3070, %v1768
    %v3136 = vsel %vm3091, %v3071, %v1770
    %v3137 = vsel %vm3091, %v3072, %v1772
    %v3138 = vsel %vm3091, %v3073, %v1774
    %v3139 = vsel %vm3091, %v3074, %v1776
    %v3140 = vsel %vm3091, %v3075, %v1778
    %v3141 = vsel %vm3091, %v3076, %v1780
    %v3142 = vsel %vm3091, %v3077, %v1782
    %v3143 = vsel %vm3091, %v3078, %v1784
    %v3144 = vsel %vm3091, %v3079, %v1786
    %v3145 = vsel %vm3091, %v3080, %v1788
    %v3146 = vsel %vm3091, %v3081, %v1790
    %v3147 = vsel %vm3091, %v3082, %v1792
    %v3148 = vsel %vm3091, %v3083, %v1794
    %v3149 = vsel %vm3091, %v3084, %v1796
    %v3150 = vsel %vm3091, %v3085, %v1798
    %v3151 = vsel %vm3091, %v3086, %v1800
    %v3152 = vsel %vm3091, %v3087, %v1802
    %v3153 = vsel %vm3091, %v3088, %v1804
    %v3154 = vsel %vm3091, %v3089, %v1806
    %v3155 = vsel %vm3091, %v3090, %v1808
    %vm3156 = vcmask 121856
    %v3157 = vsel %vm3156, %v3092, %v1938
    %v3158 = vsel %vm3156, %v3093, %v1940
    %v3159 = vsel %vm3156, %v3094, %v1942
    %v3160 = vsel %vm3156, %v3095, %v1944
    %v3161 = vsel %vm3156, %v3096, %v1946
    %v3162 = vsel %vm3156, %v3097, %v1948
    %v3163 = vsel %vm3156, %v3098, %v1950
    %v3164 = vsel %vm3156, %v3099, %v1952
    %v3165 = vsel %vm3156, %v3100, %v1954
    %v3166 = vsel %vm3156, %v3101, %v1956
    %v3167 = vsel %vm3156, %v3102, %v1958
    %v3168 = vsel %vm3156, %v3103, %v1960
    %v3169 = vsel %vm3156, %v3104, %v1962
    %v3170 = vsel %vm3156, %v3105, %v1964
    %v3171 = vsel %vm3156, %v3106, %v1966
    %v3172 = vsel %vm3156, %v3107, %v1968
    %v3173 = vsel %vm3156, %v3108, %v1970
    %v3174 = vsel %vm3156, %v3109, %v1972
    %v3175 = vsel %vm3156, %v3110, %v1974
    %v3176 = vsel %vm3156, %v3111, %v1976
    %v3177 = vsel %vm3156, %v3112, %v1978
    %v3178 = vsel %vm3156, %v3113, %v1980
    %v3179 = vsel %vm3156, %v3114, %v1982
    %v3180 = vsel %vm3156, %v3115, %v1984
    %v3181 = vsel %vm3156, %v3116, %v1986
    %v3182 = vsel %vm3156, %v3117, %v1988
    %v3183 = vsel %vm3156, %v3118, %v1990
    %v3184 = vsel %vm3156, %v3119, %v1992
    %v3185 = vsel %vm3156, %v3120, %v1994
    %v3186 = vsel %vm3156, %v3121, %v1996
    %v3187 = vsel %vm3156, %v3122, %v1998
    %v3188 = vsel %vm3156, %v3123, %v2000
    %v3189 = vsel %vm3156, %v3124, %v2002
    %v3190 = vsel %vm3156, %v3125, %v2004
    %v3191 = vsel %vm3156, %v3126, %v2006
    %v3192 = vsel %vm3156, %v3127, %v2008
    %v3193 = vsel %vm3156, %v3128, %v2010
    %v3194 = vsel %vm3156, %v3129, %v2012
    %v3195 = vsel %vm3156, %v3130, %v2014
    %v3196 = vsel %vm3156, %v3131, %v2016
    %v3197 = vsel %vm3156, %v3132, %v2018
    %v3198 = vsel %vm3156, %v3133, %v2020
    %v3199 = vsel %vm3156, %v3134, %v2022
    %v3200 = vsel %vm3156, %v3135, %v2024
    %v3201 = vsel %vm3156, %v3136, %v2026
    %v3202 = vsel %vm3156, %v3137, %v2028
    %v3203 = vsel %vm3156, %v3138, %v2030
    %v3204 = vsel %vm3156, %v3139, %v2032
    %v3205 = vsel %vm3156, %v3140, %v2034
    %v3206 = vsel %vm3156, %v3141, %v2036
    %v3207 = vsel %vm3156, %v3142, %v2038
    %v3208 = vsel %vm3156, %v3143, %v2040
    %v3209 = vsel %vm3156, %v3144, %v2042
    %v3210 = vsel %vm3156, %v3145, %v2044
    %v3211 = vsel %vm3156, %v3146, %v2046
    %v3212 = vsel %vm3156, %v3147, %v2048
    %v3213 = vsel %vm3156, %v3148, %v2050
    %v3214 = vsel %vm3156, %v3149, %v2052
    %v3215 = vsel %vm3156, %v3150, %v2054
    %v3216 = vsel %vm3156, %v3151, %v2056
    %v3217 = vsel %vm3156, %v3152, %v2058
    %v3218 = vsel %vm3156, %v3153, %v2060
    %v3219 = vsel %vm3156, %v3154, %v2062
    %v3220 = vsel %vm3156, %v3155, %v2064
    %vm3221 = vcmask 146432
    %v3222 = vsel %vm3221, %v3157, %v2194
    %v3223 = vsel %vm3221, %v3158, %v2196
    %v3224 = vsel %vm3221, %v3159, %v2198
    %v3225 = vsel %vm3221, %v3160, %v2200
    %v3226 = vsel %vm3221, %v3161, %v2202
    %v3227 = vsel %vm3221, %v3162, %v2204
    %v3228 = vsel %vm3221, %v3163, %v2206
    %v3229 = vsel %vm3221, %v3164, %v2208
    %v3230 = vsel %vm3221, %v3165, %v2210
    %v3231 = vsel %vm3221, %v3166, %v2212
    %v3232 = vsel %vm3221, %v3167, %v2214
    %v3233 = vsel %vm3221, %v3168, %v2216
    %v3234 = vsel %vm3221, %v3169, %v2218
    %v3235 = vsel %vm3221, %v3170, %v2220
    %v3236 = vsel %vm3221, %v3171, %v2222
    %v3237 = vsel %vm3221, %v3172, %v2224
    %v3238 = vsel %vm3221, %v3173, %v2226
    %v3239 = vsel %vm3221, %v3174, %v2228
    %v3240 = vsel %vm3221, %v3175, %v2230
    %v3241 = vsel %vm3221, %v3176, %v2232
    %v3242 = vsel %vm3221, %v3177, %v2234
    %v3243 = vsel %vm3221, %v3178, %v2236
    %v3244 = vsel %vm3221, %v3179, %v2238
    %v3245 = vsel %vm3221, %v3180, %v2240
    %v3246 = vsel %vm3221, %v3181, %v2242
    %v3247 = vsel %vm3221, %v3182, %v2244
    %v3248 = vsel %vm3221, %v3183, %v2246
    %v3249 = vsel %vm3221, %v3184, %v2248
    %v3250 = vsel %vm3221, %v3185, %v2250
    %v3251 = vsel %vm3221, %v3186, %v2252
    %v3252 = vsel %vm3221, %v3187, %v2254
    %v3253 = vsel %vm3221, %v3188, %v2256
    %v3254 = vsel %vm3221, %v3189, %v2258
    %v3255 = vsel %vm3221, %v3190, %v2260
    %v3256 = vsel %vm3221, %v3191, %v2262
    %v3257 = vsel %vm3221, %v3192, %v2264
    %v3258 = vsel %vm3221, %v3193, %v2266
    %v3259 = vsel %vm3221, %v3194, %v2268
    %v3260 = vsel %vm3221, %v3195, %v2270
    %v3261 = vsel %vm3221, %v3196, %v2272
    %v3262 = vsel %vm3221, %v3197, %v2274
    %v3263 = vsel %vm3221, %v3198, %v2276
    %v3264 = vsel %vm3221, %v3199, %v2278
    %v3265 = vsel %vm3221, %v3200, %v2280
    %v3266 = vsel %vm3221, %v3201, %v2282
    %v3267 = vsel %vm3221, %v3202, %v2284
    %v3268 = vsel %vm3221, %v3203, %v2286
    %v3269 = vsel %vm3221, %v3204, %v2288
    %v3270 = vsel %vm3221, %v3205, %v2290
    %v3271 = vsel %vm3221, %v3206, %v2292
    %v3272 = vsel %vm3221, %v3207, %v2294
    %v3273 = vsel %vm3221, %v3208, %v2296
    %v3274 = vsel %vm3221, %v3209, %v2298
    %v3275 = vsel %vm3221, %v3210, %v2300
    %v3276 = vsel %vm3221, %v3211, %v2302
    %v3277 = vsel %vm3221, %v3212, %v2304
    %v3278 = vsel %vm3221, %v3213, %v2306
    %v3279 = vsel %vm3221, %v3214, %v2308
    %v3280 = vsel %vm3221, %v3215, %v2310
    %v3281 = vsel %vm3221, %v3216, %v2312
    %v3282 = vsel %vm3221, %v3217, %v2314
    %v3283 = vsel %vm3221, %v3218, %v2316
    %v3284 = vsel %vm3221, %v3219, %v2318
    %v3285 = vsel %vm3221, %v3220, %v2320
    %vm3286 = vcmask 171008
    %v3287 = vsel %vm3286, %v3222, %v2450
    %v3288 = vsel %vm3286, %v3223, %v2452
    %v3289 = vsel %vm3286, %v3224, %v2454
    %v3290 = vsel %vm3286, %v3225, %v2456
    %v3291 = vsel %vm3286, %v3226, %v2458
    %v3292 = vsel %vm3286, %v3227, %v2460
    %v3293 = vsel %vm3286, %v3228, %v2462
    %v3294 = vsel %vm3286, %v3229, %v2464
    %v3295 = vsel %vm3286, %v3230, %v2466
    %v3296 = vsel %vm3286, %v3231, %v2468
    %v3297 = vsel %vm3286, %v3232, %v2470
    %v3298 = vsel %vm3286, %v3233, %v2472
    %v3299 = vsel %vm3286, %v3234, %v2474
    %v3300 = vsel %vm3286, %v3235, %v2476
    %v3301 = vsel %vm3286, %v3236, %v2478
    %v3302 = vsel %vm3286, %v3237, %v2480
    %v3303 = vsel %vm3286, %v3238, %v2482
    %v3304 = vsel %vm3286, %v3239, %v2484
    %v3305 = vsel %vm3286, %v3240, %v2486
    %v3306 = vsel %vm3286, %v3241, %v2488
    %v3307 = vsel %vm3286, %v3242, %v2490
    %v3308 = vsel %vm3286, %v3243, %v2492
    %v3309 = vsel %vm3286, %v3244, %v2494
    %v3310 = vsel %vm3286, %v3245, %v2496
    %v3311 = vsel %vm3286, %v3246, %v2498
    %v3312 = vsel %vm3286, %v3247, %v2500
    %v3313 = vsel %vm3286, %v3248, %v2502
    %v3314 = vsel %vm3286, %v3249, %v2504
    %v3315 = vsel %vm3286, %v3250, %v2506
    %v3316 = vsel %vm3286, %v3251, %v2508
    %v3317 = vsel %vm3286, %v3252, %v2510
    %v3318 = vsel %vm3286, %v3253, %v2512
    %v3319 = vsel %vm3286, %v3254, %v2514
    %v3320 = vsel %vm3286, %v3255, %v2516
    %v3321 = vsel %vm3286, %v3256, %v2518
    %v3322 = vsel %vm3286, %v3257, %v2520
    %v3323 = vsel %vm3286, %v3258, %v2522
    %v3324 = vsel %vm3286, %v3259, %v2524
    %v3325 = vsel %vm3286, %v3260, %v2526
    %v3326 = vsel %vm3286, %v3261, %v2528
    %v3327 = vsel %vm3286, %v3262, %v2530
    %v3328 = vsel %vm3286, %v3263, %v2532
    %v3329 = vsel %vm3286, %v3264, %v2534
    %v3330 = vsel %vm3286, %v3265, %v2536
    %v3331 = vsel %vm3286, %v3266, %v2538
    %v3332 = vsel %vm3286, %v3267, %v2540
    %v3333 = vsel %vm3286, %v3268, %v2542
    %v3334 = vsel %vm3286, %v3269, %v2544
    %v3335 = vsel %vm3286, %v3270, %v2546
    %v3336 = vsel %vm3286, %v3271, %v2548
    %v3337 = vsel %vm3286, %v3272, %v2550
    %v3338 = vsel %vm3286, %v3273, %v2552
    %v3339 = vsel %vm3286, %v3274, %v2554
    %v3340 = vsel %vm3286, %v3275, %v2556
    %v3341 = vsel %vm3286, %v3276, %v2558
    %v3342 = vsel %vm3286, %v3277, %v2560
    %v3343 = vsel %vm3286, %v3278, %v2562
    %v3344 = vsel %vm3286, %v3279, %v2564
    %v3345 = vsel %vm3286, %v3280, %v2566
    %v3346 = vsel %vm3286, %v3281, %v2568
    %v3347 = vsel %vm3286, %v3282, %v2570
    %v3348 = vsel %vm3286, %v3283, %v2572
    %v3349 = vsel %vm3286, %v3284, %v2574
    %v3350 = vsel %vm3286, %v3285, %v2576
    %vm3351 = vcmask 195584
    %v3352 = vsel %vm3351, %v3287, %v2706
    %v3353 = vsel %vm3351, %v3288, %v2708
    %v3354 = vsel %vm3351, %v3289, %v2710
    %v3355 = vsel %vm3351, %v3290, %v2712
    %v3356 = vsel %vm3351, %v3291, %v2714
    %v3357 = vsel %vm3351, %v3292, %v2716
    %v3358 = vsel %vm3351, %v3293, %v2718
    %v3359 = vsel %vm3351, %v3294, %v2720
    %v3360 = vsel %vm3351, %v3295, %v2722
    %v3361 = vsel %vm3351, %v3296, %v2724
    %v3362 = vsel %vm3351, %v3297, %v2726
    %v3363 = vsel %vm3351, %v3298, %v2728
    %v3364 = vsel %vm3351, %v3299, %v2730
    %v3365 = vsel %vm3351, %v3300, %v2732
    %v3366 = vsel %vm3351, %v3301, %v2734
    %v3367 = vsel %vm3351, %v3302, %v2736
    %v3368 = vsel %vm3351, %v3303, %v2738
    %v3369 = vsel %vm3351, %v3304, %v2740
    %v3370 = vsel %vm3351, %v3305, %v2742
    %v3371 = vsel %vm3351, %v3306, %v2744
    %v3372 = vsel %vm3351, %v3307, %v2746
    %v3373 = vsel %vm3351, %v3308, %v2748
    %v3374 = vsel %vm3351, %v3309, %v2750
    %v3375 = vsel %vm3351, %v3310, %v2752
    %v3376 = vsel %vm3351, %v3311, %v2754
    %v3377 = vsel %vm3351, %v3312, %v2756
    %v3378 = vsel %vm3351, %v3313, %v2758
    %v3379 = vsel %vm3351, %v3314, %v2760
    %v3380 = vsel %vm3351, %v3315, %v2762
    %v3381 = vsel %vm3351, %v3316, %v2764
    %v3382 = vsel %vm3351, %v3317, %v2766
    %v3383 = vsel %vm3351, %v3318, %v2768
    %v3384 = vsel %vm3351, %v3319, %v2770
    %v3385 = vsel %vm3351, %v3320, %v2772
    %v3386 = vsel %vm3351, %v3321, %v2774
    %v3387 = vsel %vm3351, %v3322, %v2776
    %v3388 = vsel %vm3351, %v3323, %v2778
    %v3389 = vsel %vm3351, %v3324, %v2780
    %v3390 = vsel %vm3351, %v3325, %v2782
    %v3391 = vsel %vm3351, %v3326, %v2784
    %v3392 = vsel %vm3351, %v3327, %v2786
    %v3393 = vsel %vm3351, %v3328, %v2788
    %v3394 = vsel %vm3351, %v3329, %v2790
    %v3395 = vsel %vm3351, %v3330, %v2792
    %v3396 = vsel %vm3351, %v3331, %v2794
    %v3397 = vsel %vm3351, %v3332, %v2796
    %v3398 = vsel %vm3351, %v3333, %v2798
    %v3399 = vsel %vm3351, %v3334, %v2800
    %v3400 = vsel %vm3351, %v3335, %v2802
    %v3401 = vsel %vm3351, %v3336, %v2804
    %v3402 = vsel %vm3351, %v3337, %v2806
    %v3403 = vsel %vm3351, %v3338, %v2808
    %v3404 = vsel %vm3351, %v3339, %v2810
    %v3405 = vsel %vm3351, %v3340, %v2812
    %v3406 = vsel %vm3351, %v3341, %v2814
    %v3407 = vsel %vm3351, %v3342, %v2816
    %v3408 = vsel %vm3351, %v3343, %v2818
    %v3409 = vsel %vm3351, %v3344, %v2820
    %v3410 = vsel %vm3351, %v3345, %v2822
    %v3411 = vsel %vm3351, %v3346, %v2824
    %v3412 = vsel %vm3351, %v3347, %v2826
    %v3413 = vsel %vm3351, %v3348, %v2828
    %v3414 = vsel %vm3351, %v3349, %v2830
    %v3415 = vsel %vm3351, %v3350, %v2832
    %v3416 = vld [vmem:[%s1] sm:$0xff]
    %v3417 = vld [vmem:[%s1 + $0x8] sm:$0xff]
    %v3418 = vld [vmem:[%s1 + $0x10] sm:$0xff]
    %v3419 = vld [vmem:[%s1 + $0x18] sm:$0x7]
    %v3420 = vld [vmem:[%s2] sm:$0x1]
    %v3422 = vlaneseq
    %v3423 = vshrl.u32 %v3422, 7
    %v3424 = vsub.s32 0, %v3423
    %v3425 = vrot.slane %v3420, %v3424
    %vm3427 = vcmask 220160
    %v3429 = vsel %vm3427, %v3352, 0
    %v3432 = vsel %vm3427, %v3353, 0
    %v3435 = vsel %vm3427, %v3354, 0
    %v3438 = vsel %vm3427, %v3355, 0
    %v3441 = vsel %vm3427, %v3356, 0
    %v3444 = vsel %vm3427, %v3357, 0
    %v3447 = vsel %vm3427, %v3358, 0
    %v3450 = vsel %vm3427, %v3359, 0
    %v3453 = vsel %vm3427, %v3360, 0
    %v3456 = vsel %vm3427, %v3361, 0
    %v3459 = vsel %vm3427, %v3362, 0
    %v3462 = vsel %vm3427, %v3363, 0
    %v3465 = vsel %vm3427, %v3364, 0
    %v3468 = vsel %vm3427, %v3365, 0
    %v3471 = vsel %vm3427, %v3366, 0
    %v3474 = vsel %vm3427, %v3367, 0
    %v3477 = vsel %vm3427, %v3368, 0
    %v3480 = vsel %vm3427, %v3369, 0
    %v3483 = vsel %vm3427, %v3370, 0
    %v3486 = vsel %vm3427, %v3371, 0
    %v3489 = vsel %vm3427, %v3372, 0
    %v3492 = vsel %vm3427, %v3373, 0
    %v3495 = vsel %vm3427, %v3374, 0
    %v3498 = vsel %vm3427, %v3375, 0
    %v3501 = vsel %vm3427, %v3376, 0
    %v3504 = vsel %vm3427, %v3377, 0
    %v3507 = vsel %vm3427, %v3378, 0
    %v3510 = vsel %vm3427, %v3379, 0
    %v3513 = vsel %vm3427, %v3380, 0
    %v3516 = vsel %vm3427, %v3381, 0
    %v3519 = vsel %vm3427, %v3382, 0
    %v3522 = vsel %vm3427, %v3383, 0
    %v3525 = vsel %vm3427, %v3384, 0
    %v3528 = vsel %vm3427, %v3385, 0
    %v3531 = vsel %vm3427, %v3386, 0
    %v3534 = vsel %vm3427, %v3387, 0
    %v3537 = vsel %vm3427, %v3388, 0
    %v3540 = vsel %vm3427, %v3389, 0
    %v3543 = vsel %vm3427, %v3390, 0
    %v3546 = vsel %vm3427, %v3391, 0
    %v3549 = vsel %vm3427, %v3392, 0
    %v3552 = vsel %vm3427, %v3393, 0
    %v3555 = vsel %vm3427, %v3394, 0
    %v3558 = vsel %vm3427, %v3395, 0
    %v3561 = vsel %vm3427, %v3396, 0
    %v3564 = vsel %vm3427, %v3397, 0
    %v3567 = vsel %vm3427, %v3398, 0
    %v3570 = vsel %vm3427, %v3399, 0
    %v3573 = vsel %vm3427, %v3400, 0
    %v3576 = vsel %vm3427, %v3401, 0
    %v3579 = vsel %vm3427, %v3402, 0
    %v3582 = vsel %vm3427, %v3403, 0
    %v3585 = vsel %vm3427, %v3404, 0
    %v3588 = vsel %vm3427, %v3405, 0
    %v3591 = vsel %vm3427, %v3406, 0
    %v3594 = vsel %vm3427, %v3407, 0
    %v3597 = vsel %vm3427, %v3408, 0
    %v3600 = vsel %vm3427, %v3409, 0
    %v3603 = vsel %vm3427, %v3410, 0
    %v3606 = vsel %vm3427, %v3411, 0
    %v3609 = vsel %vm3427, %v3412, 0
    %v3612 = vsel %vm3427, %v3413, 0
    %v3615 = vsel %vm3427, %v3414, 0
    %v3618 = vsel %vm3427, %v3415, 0
    %vm3620 = vcmask 1042432
    %v3622 = vsel %vm3620, %v3419, 0
    %3624 = vmatprep.subr.mxu0 0.0
    %3625 = vmatpush1.msra.mxu0 0.0
    %3626 = vmatprep.subr.mxu0 0.0
    %3627 = vmatpush1.msra.mxu0 0.0
    %3628 = vmatprep.subr.mxu0 0.0
    %3629 = vmatpush1.msra.mxu0 0.0
    %3630 = vmatprep.subr.mxu0 0.0
    %3631 = vmatpush1.msra.mxu0 0.0
    %3632 = vmatprep.subr.mxu0 0.0
    %3633 = vmatpush1.msra.mxu0 0.0
    %3634 = vmatprep.subr.mxu0 0.0
    %3635 = vmatpush1.msra.mxu0 0.0
    %3636 = vmatprep.subr.mxu0 0.0
    %3637 = vmatpush1.msra.mxu0 0.0
    %3638 = vmatprep.subr.mxu0 0.0
    %3639 = vmatpush1.msra.mxu0 0.0
    %3640 = vmatprep.subr.mxu0 0.0
    %3641 = vmatpush1.msra.mxu0 0.0
    %3642 = vmatprep.subr.mxu0 0.0
    %3643 = vmatpush1.msra.mxu0 0.0
    %3644 = vmatprep.subr.mxu0 0.0
    %3645 = vmatpush1.msra.mxu0 0.0
    %3646 = vmatprep.subr.mxu0 0.0
    %3647 = vmatpush1.msra.mxu0 0.0
    %3648 = vmatprep.subr.mxu0 0.0
    %3649 = vmatpush1.msra.mxu0 %v3622
    %3650 = vmatprep.subr.mxu0 0.0
    %3651 = vmatpush1.msra.mxu0 %v3418
    %3652 = vmatprep.subr.mxu0 0.0
    %3653 = vmatpush1.msra.mxu0 %v3417
    %3654 = vmatprep.subr.mxu0 0.0
    %3655 = vmatpush1.msra.mxu0 %v3416
    %3656 = vmatprep.subr.mxu0 0.0
    %3657 = vmatpush2.msra.mxu0 0.0
    %3658 = vmatprep.subr.mxu0 0.0
    %3659 = vmatpush2.msra.mxu0 0.0
    %3660 = vmatprep.subr.mxu0 0.0
    %3661 = vmatpush2.msra.mxu0 0.0
    %3662 = vmatprep.subr.mxu0 0.0
    %3663 = vmatpush2.msra.mxu0 0.0
    %3664 = vmatprep.subr.mxu0 0.0
    %3665 = vmatpush2.msra.mxu0 0.0
    %3666 = vmatprep.subr.mxu0 0.0
    %3667 = vmatpush2.msra.mxu0 0.0
    %3668 = vmatprep.subr.mxu0 0.0
    %3669 = vmatpush2.msra.mxu0 0.0
    %3670 = vmatprep.subr.mxu0 0.0
    %3671 = vmatpush2.msra.mxu0 0.0
    %3672 = vmatprep.subr.mxu0 0.0
    %3673 = vmatpush2.msra.mxu0 0.0
    %3674 = vmatprep.subr.mxu0 0.0
    %3675 = vmatpush2.msra.mxu0 0.0
    %3676 = vmatprep.subr.mxu0 0.0
    %3677 = vmatpush2.msra.mxu0 0.0
    %3678 = vmatprep.subr.mxu0 0.0
    %3679 = vmatpush2.msra.mxu0 0.0
    %3680 = vmatprep.subr.mxu0 0.0
    %3681 = vmatpush2.msra.mxu0 0.0
    %3682 = vmatprep.subr.mxu0 0.0
    %3683 = vmatpush2.msra.mxu0 0.0
    %3684 = vmatprep.subr.mxu0 0.0
    %3685 = vmatpush2.msra.mxu0 0.0
    %3686 = vmatprep.subr.mxu0 0.0
    %3687 = vmatpush2.msra.mxu0 0.0
    %3688 = vmatprep.mubr.f32.mxu0 0.0
    %3689 = vmatmul.mubr.f32.gmra.mxu0 %v3429
    %v3690 = vpop.f32.mrf.mxu0
    %v3691 = vadd.f32 %v3425, %v3690
    %v3692 = vpop.f32.mrf.mxu0
    %3693 = vmatprep.mubr.f32.mxu0 0.0
    %3694 = vmatmul.mubr.f32.gmra.mxu0 %v3432
    %v3695 = vpop.f32.mrf.mxu0
    %v3696 = vadd.f32 %v3425, %v3695
    %v3697 = vpop.f32.mrf.mxu0
    %3698 = vmatprep.mubr.f32.mxu0 0.0
    %3699 = vmatmul.mubr.f32.gmra.mxu0 %v3435
    %v3700 = vpop.f32.mrf.mxu0
    %v3701 = vadd.f32 %v3425, %v3700
    %v3702 = vpop.f32.mrf.mxu0
    %3703 = vmatprep.mubr.f32.mxu0 0.0
    %3704 = vmatmul.mubr.f32.gmra.mxu0 %v3438
    %v3705 = vpop.f32.mrf.mxu0
    %v3706 = vadd.f32 %v3425, %v3705
    %v3707 = vpop.f32.mrf.mxu0
    %3708 = vmatprep.mubr.f32.mxu0 0.0
    %3709 = vmatmul.mubr.f32.gmra.mxu0 %v3441
    %v3710 = vpop.f32.mrf.mxu0
    %v3711 = vadd.f32 %v3425, %v3710
    %v3712 = vpop.f32.mrf.mxu0
    %3713 = vmatprep.mubr.f32.mxu0 0.0
    %3714 = vmatmul.mubr.f32.gmra.mxu0 %v3444
    %v3715 = vpop.f32.mrf.mxu0
    %v3716 = vadd.f32 %v3425, %v3715
    %v3717 = vpop.f32.mrf.mxu0
    %3718 = vmatprep.mubr.f32.mxu0 0.0
    %3719 = vmatmul.mubr.f32.gmra.mxu0 %v3447
    %v3720 = vpop.f32.mrf.mxu0
    %v3721 = vadd.f32 %v3425, %v3720
    %v3722 = vpop.f32.mrf.mxu0
    %3723 = vmatprep.mubr.f32.mxu0 0.0
    %3724 = vmatmul.mubr.f32.gmra.mxu0 %v3450
    %v3725 = vpop.f32.mrf.mxu0
    %v3726 = vadd.f32 %v3425, %v3725
    %v3727 = vpop.f32.mrf.mxu0
    %3728 = vmatprep.mubr.f32.mxu0 0.0
    %3729 = vmatmul.mubr.f32.gmra.mxu0 %v3453
    %v3730 = vpop.f32.mrf.mxu0
    %v3731 = vadd.f32 %v3425, %v3730
    %v3732 = vpop.f32.mrf.mxu0
    %3733 = vmatprep.mubr.f32.mxu0 0.0
    %3734 = vmatmul.mubr.f32.gmra.mxu0 %v3456
    %v3735 = vpop.f32.mrf.mxu0
    %v3736 = vadd.f32 %v3425, %v3735
    %v3737 = vpop.f32.mrf.mxu0
    %3738 = vmatprep.mubr.f32.mxu0 0.0
    %3739 = vmatmul.mubr.f32.gmra.mxu0 %v3459
    %v3740 = vpop.f32.mrf.mxu0
    %v3741 = vadd.f32 %v3425, %v3740
    %v3742 = vpop.f32.mrf.mxu0
    %3743 = vmatprep.mubr.f32.mxu0 0.0
    %3744 = vmatmul.mubr.f32.gmra.mxu0 %v3462
    %v3745 = vpop.f32.mrf.mxu0
    %v3746 = vadd.f32 %v3425, %v3745
    %v3747 = vpop.f32.mrf.mxu0
    %3748 = vmatprep.mubr.f32.mxu0 0.0
    %3749 = vmatmul.mubr.f32.gmra.mxu0 %v3465
    %v3750 = vpop.f32.mrf.mxu0
    %v3751 = vadd.f32 %v3425, %v3750
    %v3752 = vpop.f32.mrf.mxu0
    %3753 = vmatprep.mubr.f32.mxu0 0.0
    %3754 = vmatmul.mubr.f32.gmra.mxu0 %v3468
    %v3755 = vpop.f32.mrf.mxu0
    %v3756 = vadd.f32 %v3425, %v3755
    %v3757 = vpop.f32.mrf.mxu0
    %3758 = vmatprep.mubr.f32.mxu0 0.0
    %3759 = vmatmul.mubr.f32.gmra.mxu0 %v3471
    %v3760 = vpop.f32.mrf.mxu0
    %v3761 = vadd.f32 %v3425, %v3760
    %v3762 = vpop.f32.mrf.mxu0
    %3763 = vmatprep.mubr.f32.mxu0 0.0
    %3764 = vmatmul.mubr.f32.gmra.mxu0 %v3474
    %v3765 = vpop.f32.mrf.mxu0
    %v3766 = vadd.f32 %v3425, %v3765
    %v3767 = vpop.f32.mrf.mxu0
    %3768 = vmatprep.mubr.f32.mxu0 0.0
    %3769 = vmatmul.mubr.f32.gmra.mxu0 %v3477
    %v3770 = vpop.f32.mrf.mxu0
    %v3771 = vadd.f32 %v3425, %v3770
    %v3772 = vpop.f32.mrf.mxu0
    %3773 = vmatprep.mubr.f32.mxu0 0.0
    %3774 = vmatmul.mubr.f32.gmra.mxu0 %v3480
    %v3775 = vpop.f32.mrf.mxu0
    %v3776 = vadd.f32 %v3425, %v3775
    %v3777 = vpop.f32.mrf.mxu0
    %3778 = vmatprep.mubr.f32.mxu0 0.0
    %3779 = vmatmul.mubr.f32.gmra.mxu0 %v3483
    %v3780 = vpop.f32.mrf.mxu0
    %v3781 = vadd.f32 %v3425, %v3780
    %v3782 = vpop.f32.mrf.mxu0
    %3783 = vmatprep.mubr.f32.mxu0 0.0
    %3784 = vmatmul.mubr.f32.gmra.mxu0 %v3486
    %v3785 = vpop.f32.mrf.mxu0
    %v3786 = vadd.f32 %v3425, %v3785
    %v3787 = vpop.f32.mrf.mxu0
    %3788 = vmatprep.mubr.f32.mxu0 0.0
    %3789 = vmatmul.mubr.f32.gmra.mxu0 %v3489
    %v3790 = vpop.f32.mrf.mxu0
    %v3791 = vadd.f32 %v3425, %v3790
    %v3792 = vpop.f32.mrf.mxu0
    %3793 = vmatprep.mubr.f32.mxu0 0.0
    %3794 = vmatmul.mubr.f32.gmra.mxu0 %v3492
    %v3795 = vpop.f32.mrf.mxu0
    %v3796 = vadd.f32 %v3425, %v3795
    %v3797 = vpop.f32.mrf.mxu0
    %3798 = vmatprep.mubr.f32.mxu0 0.0
    %3799 = vmatmul.mubr.f32.gmra.mxu0 %v3495
    %v3800 = vpop.f32.mrf.mxu0
    %v3801 = vadd.f32 %v3425, %v3800
    %v3802 = vpop.f32.mrf.mxu0
    %3803 = vmatprep.mubr.f32.mxu0 0.0
    %3804 = vmatmul.mubr.f32.gmra.mxu0 %v3498
    %v3805 = vpop.f32.mrf.mxu0
    %v3806 = vadd.f32 %v3425, %v3805
    %v3807 = vpop.f32.mrf.mxu0
    %3808 = vmatprep.mubr.f32.mxu0 0.0
    %3809 = vmatmul.mubr.f32.gmra.mxu0 %v3501
    %v3810 = vpop.f32.mrf.mxu0
    %v3811 = vadd.f32 %v3425, %v3810
    %v3812 = vpop.f32.mrf.mxu0
    %3813 = vmatprep.mubr.f32.mxu0 0.0
    %3814 = vmatmul.mubr.f32.gmra.mxu0 %v3504
    %v3815 = vpop.f32.mrf.mxu0
    %v3816 = vadd.f32 %v3425, %v3815
    %v3817 = vpop.f32.mrf.mxu0
    %3818 = vmatprep.mubr.f32.mxu0 0.0
    %3819 = vmatmul.mubr.f32.gmra.mxu0 %v3507
    %v3820 = vpop.f32.mrf.mxu0
    %v3821 = vadd.f32 %v3425, %v3820
    %v3822 = vpop.f32.mrf.mxu0
    %3823 = vmatprep.mubr.f32.mxu0 0.0
    %3824 = vmatmul.mubr.f32.gmra.mxu0 %v3510
    %v3825 = vpop.f32.mrf.mxu0
    %v3826 = vadd.f32 %v3425, %v3825
    %v3827 = vpop.f32.mrf.mxu0
    %3828 = vmatprep.mubr.f32.mxu0 0.0
    %3829 = vmatmul.mubr.f32.gmra.mxu0 %v3513
    %v3830 = vpop.f32.mrf.mxu0
    %v3831 = vadd.f32 %v3425, %v3830
    %v3832 = vpop.f32.mrf.mxu0
    %3833 = vmatprep.mubr.f32.mxu0 0.0
    %3834 = vmatmul.mubr.f32.gmra.mxu0 %v3516
    %v3835 = vpop.f32.mrf.mxu0
    %v3836 = vadd.f32 %v3425, %v3835
    %v3837 = vpop.f32.mrf.mxu0
    %3838 = vmatprep.mubr.f32.mxu0 0.0
    %3839 = vmatmul.mubr.f32.gmra.mxu0 %v3519
    %v3840 = vpop.f32.mrf.mxu0
    %v3841 = vadd.f32 %v3425, %v3840
    %v3842 = vpop.f32.mrf.mxu0
    %3843 = vmatprep.mubr.f32.mxu0 0.0
    %3844 = vmatmul.mubr.f32.gmra.mxu0 %v3522
    %v3845 = vpop.f32.mrf.mxu0
    %v3846 = vadd.f32 %v3425, %v3845
    %v3847 = vpop.f32.mrf.mxu0
    %3848 = vmatprep.mubr.f32.mxu0 0.0
    %3849 = vmatmul.mubr.f32.gmra.mxu0 %v3525
    %v3850 = vpop.f32.mrf.mxu0
    %v3851 = vadd.f32 %v3425, %v3850
    %v3852 = vpop.f32.mrf.mxu0
    %3853 = vmatprep.mubr.f32.mxu0 0.0
    %3854 = vmatmul.mubr.f32.gmra.mxu0 %v3528
    %v3855 = vpop.f32.mrf.mxu0
    %v3856 = vadd.f32 %v3425, %v3855
    %v3857 = vpop.f32.mrf.mxu0
    %3858 = vmatprep.mubr.f32.mxu0 0.0
    %3859 = vmatmul.mubr.f32.gmra.mxu0 %v3531
    %v3860 = vpop.f32.mrf.mxu0
    %v3861 = vadd.f32 %v3425, %v3860
    %v3862 = vpop.f32.mrf.mxu0
    %3863 = vmatprep.mubr.f32.mxu0 0.0
    %3864 = vmatmul.mubr.f32.gmra.mxu0 %v3534
    %v3865 = vpop.f32.mrf.mxu0
    %v3866 = vadd.f32 %v3425, %v3865
    %v3867 = vpop.f32.mrf.mxu0
    %3868 = vmatprep.mubr.f32.mxu0 0.0
    %3869 = vmatmul.mubr.f32.gmra.mxu0 %v3537
    %v3870 = vpop.f32.mrf.mxu0
    %v3871 = vadd.f32 %v3425, %v3870
    %v3872 = vpop.f32.mrf.mxu0
    %3873 = vmatprep.mubr.f32.mxu0 0.0
    %3874 = vmatmul.mubr.f32.gmra.mxu0 %v3540
    %v3875 = vpop.f32.mrf.mxu0
    %v3876 = vadd.f32 %v3425, %v3875
    %v3877 = vpop.f32.mrf.mxu0
    %3878 = vmatprep.mubr.f32.mxu0 0.0
    %3879 = vmatmul.mubr.f32.gmra.mxu0 %v3543
    %v3880 = vpop.f32.mrf.mxu0
    %v3881 = vadd.f32 %v3425, %v3880
    %v3882 = vpop.f32.mrf.mxu0
    %3883 = vmatprep.mubr.f32.mxu0 0.0
    %3884 = vmatmul.mubr.f32.gmra.mxu0 %v3546
    %v3885 = vpop.f32.mrf.mxu0
    %v3886 = vadd.f32 %v3425, %v3885
    %v3887 = vpop.f32.mrf.mxu0
    %3888 = vmatprep.mubr.f32.mxu0 0.0
    %3889 = vmatmul.mubr.f32.gmra.mxu0 %v3549
    %v3890 = vpop.f32.mrf.mxu0
    %v3891 = vadd.f32 %v3425, %v3890
    %v3892 = vpop.f32.mrf.mxu0
    %3893 = vmatprep.mubr.f32.mxu0 0.0
    %3894 = vmatmul.mubr.f32.gmra.mxu0 %v3552
    %v3895 = vpop.f32.mrf.mxu0
    %v3896 = vadd.f32 %v3425, %v3895
    %v3897 = vpop.f32.mrf.mxu0
    %3898 = vmatprep.mubr.f32.mxu0 0.0
    %3899 = vmatmul.mubr.f32.gmra.mxu0 %v3555
    %v3900 = vpop.f32.mrf.mxu0
    %v3901 = vadd.f32 %v3425, %v3900
    %v3902 = vpop.f32.mrf.mxu0
    %3903 = vmatprep.mubr.f32.mxu0 0.0
    %3904 = vmatmul.mubr.f32.gmra.mxu0 %v3558
    %v3905 = vpop.f32.mrf.mxu0
    %v3906 = vadd.f32 %v3425, %v3905
    %v3907 = vpop.f32.mrf.mxu0
    %3908 = vmatprep.mubr.f32.mxu0 0.0
    %3909 = vmatmul.mubr.f32.gmra.mxu0 %v3561
    %v3910 = vpop.f32.mrf.mxu0
    %v3911 = vadd.f32 %v3425, %v3910
    %v3912 = vpop.f32.mrf.mxu0
    %3913 = vmatprep.mubr.f32.mxu0 0.0
    %3914 = vmatmul.mubr.f32.gmra.mxu0 %v3564
    %v3915 = vpop.f32.mrf.mxu0
    %v3916 = vadd.f32 %v3425, %v3915
    %v3917 = vpop.f32.mrf.mxu0
    %3918 = vmatprep.mubr.f32.mxu0 0.0
    %3919 = vmatmul.mubr.f32.gmra.mxu0 %v3567
    %v3920 = vpop.f32.mrf.mxu0
    %v3921 = vadd.f32 %v3425, %v3920
    %v3922 = vpop.f32.mrf.mxu0
    %3923 = vmatprep.mubr.f32.mxu0 0.0
    %3924 = vmatmul.mubr.f32.gmra.mxu0 %v3570
    %v3925 = vpop.f32.mrf.mxu0
    %v3926 = vadd.f32 %v3425, %v3925
    %v3927 = vpop.f32.mrf.mxu0
    %3928 = vmatprep.mubr.f32.mxu0 0.0
    %3929 = vmatmul.mubr.f32.gmra.mxu0 %v3573
    %v3930 = vpop.f32.mrf.mxu0
    %v3931 = vadd.f32 %v3425, %v3930
    %v3932 = vpop.f32.mrf.mxu0
    %3933 = vmatprep.mubr.f32.mxu0 0.0
    %3934 = vmatmul.mubr.f32.gmra.mxu0 %v3576
    %v3935 = vpop.f32.mrf.mxu0
    %v3936 = vadd.f32 %v3425, %v3935
    %v3937 = vpop.f32.mrf.mxu0
    %3938 = vmatprep.mubr.f32.mxu0 0.0
    %3939 = vmatmul.mubr.f32.gmra.mxu0 %v3579
    %v3940 = vpop.f32.mrf.mxu0
    %v3941 = vadd.f32 %v3425, %v3940
    %v3942 = vpop.f32.mrf.mxu0
    %3943 = vmatprep.mubr.f32.mxu0 0.0
    %3944 = vmatmul.mubr.f32.gmra.mxu0 %v3582
    %v3945 = vpop.f32.mrf.mxu0
    %v3946 = vadd.f32 %v3425, %v3945
    %v3947 = vpop.f32.mrf.mxu0
    %3948 = vmatprep.mubr.f32.mxu0 0.0
    %3949 = vmatmul.mubr.f32.gmra.mxu0 %v3585
    %v3950 = vpop.f32.mrf.mxu0
    %v3951 = vadd.f32 %v3425, %v3950
    %v3952 = vpop.f32.mrf.mxu0
    %3953 = vmatprep.mubr.f32.mxu0 0.0
    %3954 = vmatmul.mubr.f32.gmra.mxu0 %v3588
    %v3955 = vpop.f32.mrf.mxu0
    %v3956 = vadd.f32 %v3425, %v3955
    %v3957 = vpop.f32.mrf.mxu0
    %3958 = vmatprep.mubr.f32.mxu0 0.0
    %3959 = vmatmul.mubr.f32.gmra.mxu0 %v3591
    %v3960 = vpop.f32.mrf.mxu0
    %v3961 = vadd.f32 %v3425, %v3960
    %v3962 = vpop.f32.mrf.mxu0
    %3963 = vmatprep.mubr.f32.mxu0 0.0
    %3964 = vmatmul.mubr.f32.gmra.mxu0 %v3594
    %v3965 = vpop.f32.mrf.mxu0
    %v3966 = vadd.f32 %v3425, %v3965
    %v3967 = vpop.f32.mrf.mxu0
    %3968 = vmatprep.mubr.f32.mxu0 0.0
    %3969 = vmatmul.mubr.f32.gmra.mxu0 %v3597
    %v3970 = vpop.f32.mrf.mxu0
    %v3971 = vadd.f32 %v3425, %v3970
    %v3972 = vpop.f32.mrf.mxu0
    %3973 = vmatprep.mubr.f32.mxu0 0.0
    %3974 = vmatmul.mubr.f32.gmra.mxu0 %v3600
    %v3975 = vpop.f32.mrf.mxu0
    %v3976 = vadd.f32 %v3425, %v3975
    %v3977 = vpop.f32.mrf.mxu0
    %3978 = vmatprep.mubr.f32.mxu0 0.0
    %3979 = vmatmul.mubr.f32.gmra.mxu0 %v3603
    %v3980 = vpop.f32.mrf.mxu0
    %v3981 = vadd.f32 %v3425, %v3980
    %v3982 = vpop.f32.mrf.mxu0
    %3983 = vmatprep.mubr.f32.mxu0 0.0
    %3984 = vmatmul.mubr.f32.gmra.mxu0 %v3606
    %v3985 = vpop.f32.mrf.mxu0
    %v3986 = vadd.f32 %v3425, %v3985
    %v3987 = vpop.f32.mrf.mxu0
    %3988 = vmatprep.mubr.f32.mxu0 0.0
    %3989 = vmatmul.mubr.f32.gmra.mxu0 %v3609
    %v3990 = vpop.f32.mrf.mxu0
    %v3991 = vadd.f32 %v3425, %v3990
    %v3992 = vpop.f32.mrf.mxu0
    %3993 = vmatprep.mubr.f32.mxu0 0.0
    %3994 = vmatmul.mubr.f32.gmra.mxu0 %v3612
    %v3995 = vpop.f32.mrf.mxu0
    %v3996 = vadd.f32 %v3425, %v3995
    %v3997 = vpop.f32.mrf.mxu0
    %3998 = vmatprep.mubr.f32.mxu0 0.0
    %3999 = vmatmul.mubr.f32.gmra.mxu0 %v3615
    %v4000 = vpop.f32.mrf.mxu0
    %v4001 = vadd.f32 %v3425, %v4000
    %v4002 = vpop.f32.mrf.mxu0
    %4003 = vmatprep.mubr.f32.mxu0 0.0
    %4004 = vmatmul.mubr.f32.gmra.mxu0 %v3618
    %v4005 = vpop.f32.mrf.mxu0
    %v4006 = vadd.f32 %v3425, %v4005
    %v4007 = vpop.f32.mrf.mxu0
    %4008 = vdwg.mxu0
    %v4009 = vmax.f32 %v3691, 0.0
    %v4010 = vmax.f32 %v3696, 0.0
    %v4011 = vmax.f32 %v3701, 0.0
    %v4012 = vmax.f32 %v3706, 0.0
    %v4013 = vmax.f32 %v3711, 0.0
    %v4014 = vmax.f32 %v3716, 0.0
    %v4015 = vmax.f32 %v3721, 0.0
    %v4016 = vmax.f32 %v3726, 0.0
    %v4017 = vmax.f32 %v3731, 0.0
    %v4018 = vmax.f32 %v3736, 0.0
    %v4019 = vmax.f32 %v3741, 0.0
    %v4020 = vmax.f32 %v3746, 0.0
    %v4021 = vmax.f32 %v3751, 0.0
    %v4022 = vmax.f32 %v3756, 0.0
    %v4023 = vmax.f32 %v3761, 0.0
    %v4024 = vmax.f32 %v3766, 0.0
    %v4025 = vmax.f32 %v3771, 0.0
    %v4026 = vmax.f32 %v3776, 0.0
    %v4027 = vmax.f32 %v3781, 0.0
    %v4028 = vmax.f32 %v3786, 0.0
    %v4029 = vmax.f32 %v3791, 0.0
    %v4030 = vmax.f32 %v3796, 0.0
    %v4031 = vmax.f32 %v3801, 0.0
    %v4032 = vmax.f32 %v3806, 0.0
    %v4033 = vmax.f32 %v3811, 0.0
    %v4034 = vmax.f32 %v3816, 0.0
    %v4035 = vmax.f32 %v3821, 0.0
    %v4036 = vmax.f32 %v3826, 0.0
    %v4037 = vmax.f32 %v3831, 0.0
    %v4038 = vmax.f32 %v3836, 0.0
    %v4039 = vmax.f32 %v3841, 0.0
    %v4040 = vmax.f32 %v3846, 0.0
    %v4041 = vmax.f32 %v3851, 0.0
    %v4042 = vmax.f32 %v3856, 0.0
    %v4043 = vmax.f32 %v3861, 0.0
    %v4044 = vmax.f32 %v3866, 0.0
    %v4045 = vmax.f32 %v3871, 0.0
    %v4046 = vmax.f32 %v3876, 0.0
    %v4047 = vmax.f32 %v3881, 0.0
    %v4048 = vmax.f32 %v3886, 0.0
    %v4049 = vmax.f32 %v3891, 0.0
    %v4050 = vmax.f32 %v3896, 0.0
    %v4051 = vmax.f32 %v3901, 0.0
    %v4052 = vmax.f32 %v3906, 0.0
    %v4053 = vmax.f32 %v3911, 0.0
    %v4054 = vmax.f32 %v3916, 0.0
    %v4055 = vmax.f32 %v3921, 0.0
    %v4056 = vmax.f32 %v3926, 0.0
    %v4057 = vmax.f32 %v3931, 0.0
    %v4058 = vmax.f32 %v3936, 0.0
    %v4059 = vmax.f32 %v3941, 0.0
    %v4060 = vmax.f32 %v3946, 0.0
    %v4061 = vmax.f32 %v3951, 0.0
    %v4062 = vmax.f32 %v3956, 0.0
    %v4063 = vmax.f32 %v3961, 0.0
    %v4064 = vmax.f32 %v3966, 0.0
    %v4065 = vmax.f32 %v3971, 0.0
    %v4066 = vmax.f32 %v3976, 0.0
    %v4067 = vmax.f32 %v3981, 0.0
    %v4068 = vmax.f32 %v3986, 0.0
    %v4069 = vmax.f32 %v3991, 0.0
    %v4070 = vmax.f32 %v3996, 0.0
    %v4071 = vmax.f32 %v4001, 0.0
    %v4072 = vmax.f32 %v4006, 0.0
    %vm4073 = vcmask 261120
    %v4074 = vsel %vm4073, %v4009, -inf
    %v4075 = vsel %vm4073, %v4011, -inf
    %v4076 = vmax.f32 %v4074, %v4075
    %v4077 = vsel %vm4073, %v4010, -inf
    %v4078 = vsel %vm4073, %v4012, -inf
    %v4079 = vmax.f32 %v4077, %v4078
    %v4080 = vsel %vm4073, %v4013, -inf
    %v4081 = vsel %vm4073, %v4015, -inf
    %v4082 = vmax.f32 %v4080, %v4081
    %v4083 = vsel %vm4073, %v4014, -inf
    %v4084 = vsel %vm4073, %v4016, -inf
    %v4085 = vmax.f32 %v4083, %v4084
    %v4086 = vsel %vm4073, %v4017, -inf
    %v4087 = vsel %vm4073, %v4019, -inf
    %v4088 = vmax.f32 %v4086, %v4087
    %v4089 = vsel %vm4073, %v4018, -inf
    %v4090 = vsel %vm4073, %v4020, -inf
    %v4091 = vmax.f32 %v4089, %v4090
    %v4092 = vsel %vm4073, %v4021, -inf
    %v4093 = vsel %vm4073, %v4023, -inf
    %v4094 = vmax.f32 %v4092, %v4093
    %v4095 = vsel %vm4073, %v4022, -inf
    %v4096 = vsel %vm4073, %v4024, -inf
    %v4097 = vmax.f32 %v4095, %v4096
    %v4098 = vsel %vm4073, %v4025, -inf
    %v4099 = vsel %vm4073, %v4027, -inf
    %v4100 = vmax.f32 %v4098, %v4099
    %v4101 = vsel %vm4073, %v4026, -inf
    %v4102 = vsel %vm4073, %v4028, -inf
    %v4103 = vmax.f32 %v4101, %v4102
    %v4104 = vsel %vm4073, %v4029, -inf
    %v4105 = vsel %vm4073, %v4031, -inf
    %v4106 = vmax.f32 %v4104, %v4105
    %v4107 = vsel %vm4073, %v4030, -inf
    %v4108 = vsel %vm4073, %v4032, -inf
    %v4109 = vmax.f32 %v4107, %v4108
    %v4110 = vsel %vm4073, %v4033, -inf
    %v4111 = vsel %vm4073, %v4035, -inf
    %v4112 = vmax.f32 %v4110, %v4111
    %v4113 = vsel %vm4073, %v4034, -inf
    %v4114 = vsel %vm4073, %v4036, -inf
    %v4115 = vmax.f32 %v4113, %v4114
    %v4116 = vsel %vm4073, %v4037, -inf
    %v4117 = vsel %vm4073, %v4039, -inf
    %v4118 = vmax.f32 %v4116, %v4117
    %v4119 = vsel %vm4073, %v4038, -inf
    %v4120 = vsel %vm4073, %v4040, -inf
    %v4121 = vmax.f32 %v4119, %v4120
    %v4122 = vsel %vm4073, %v4041, -inf
    %v4123 = vsel %vm4073, %v4043, -inf
    %v4124 = vmax.f32 %v4122, %v4123
    %v4125 = vsel %vm4073, %v4042, -inf
    %v4126 = vsel %vm4073, %v4044, -inf
    %v4127 = vmax.f32 %v4125, %v4126
    %v4128 = vsel %vm4073, %v4045, -inf
    %v4129 = vsel %vm4073, %v4047, -inf
    %v4130 = vmax.f32 %v4128, %v4129
    %v4131 = vsel %vm4073, %v4046, -inf
    %v4132 = vsel %vm4073, %v4048, -inf
    %v4133 = vmax.f32 %v4131, %v4132
    %v4134 = vsel %vm4073, %v4049, -inf
    %v4135 = vsel %vm4073, %v4051, -inf
    %v4136 = vmax.f32 %v4134, %v4135
    %v4137 = vsel %vm4073, %v4050, -inf
    %v4138 = vsel %vm4073, %v4052, -inf
    %v4139 = vmax.f32 %v4137, %v4138
    %v4140 = vsel %vm4073, %v4053, -inf
    %v4141 = vsel %vm4073, %v4055, -inf
    %v4142 = vmax.f32 %v4140, %v4141
    %v4143 = vsel %vm4073, %v4054, -inf
    %v4144 = vsel %vm4073, %v4056, -inf
    %v4145 = vmax.f32 %v4143, %v4144
    %v4146 = vsel %vm4073, %v4057, -inf
    %v4147 = vsel %vm4073, %v4059, -inf
    %v4148 = vmax.f32 %v4146, %v4147
    %v4149 = vsel %vm4073, %v4058, -inf
    %v4150 = vsel %vm4073, %v4060, -inf
    %v4151 = vmax.f32 %v4149, %v4150
    %v4152 = vsel %vm4073, %v4061, -inf
    %v4153 = vsel %vm4073, %v4063, -inf
    %v4154 = vmax.f32 %v4152, %v4153
    %v4155 = vsel %vm4073, %v4062, -inf
    %v4156 = vsel %vm4073, %v4064, -inf
    %v4157 = vmax.f32 %v4155, %v4156
    %v4158 = vsel %vm4073, %v4065, -inf
    %v4159 = vsel %vm4073, %v4067, -inf
    %v4160 = vmax.f32 %v4158, %v4159
    %v4161 = vsel %vm4073, %v4066, -inf
    %v4162 = vsel %vm4073, %v4068, -inf
    %v4163 = vmax.f32 %v4161, %v4162
    %v4164 = vsel %vm4073, %v4069, -inf
    %v4165 = vsel %vm4073, %v4071, -inf
    %v4166 = vmax.f32 %v4164, %v4165
    %v4167 = vsel %vm4073, %v4070, -inf
    %v4168 = vsel %vm4073, %v4072, -inf
    %v4169 = vmax.f32 %v4167, %v4168
    %v4202 = vcombine.high %v4076, %v4076
    %v4204 = vunpack.c.l.s4 1983009808
    %v4205 = vunpack.c.0.s8 %v4204
    %v4206 = vlaneseq
    %v4207 = vshrl.u32 %v4206, 7
    %v4208 = vsub.s32 %v4205, %v4207
    %v4209 = vrot.slane %v4076, %v4208
    %v4211 = vunpack.c.l.s4 1983009808
    %v4212 = vunpack.c.0.s8 %v4211
    %v4213 = vlaneseq
    %v4214 = vshrl.u32 %v4213, 7
    %v4215 = vsub.s32 %v4212, %v4214
    %v4216 = vrot.slane %v4202, %v4215
    %v4217 = vcombine.high %v4209, %v4209
    %v4218 = vcombine.high %v4216, %v4216
    %v4219 = vcombine.high %v4079, %v4079
    %v4221 = vunpack.c.l.s4 1983009808
    %v4222 = vunpack.c.0.s8 %v4221
    %v4223 = vlaneseq
    %v4224 = vshrl.u32 %v4223, 7
    %v4225 = vsub.s32 %v4222, %v4224
    %v4226 = vrot.slane %v4079, %v4225
    %v4228 = vunpack.c.l.s4 1983009808
    %v4229 = vunpack.c.0.s8 %v4228
    %v4230 = vlaneseq
    %v4231 = vshrl.u32 %v4230, 7
    %v4232 = vsub.s32 %v4229, %v4231
    %v4233 = vrot.slane %v4219, %v4232
    %v4234 = vcombine.high %v4226, %v4226
    %v4235 = vcombine.high %v4233, %v4233
    %v4236 = vcombine.high %v4082, %v4082
    %v4238 = vunpack.c.l.s4 1983009808
    %v4239 = vunpack.c.0.s8 %v4238
    %v4240 = vlaneseq
    %v4241 = vshrl.u32 %v4240, 7
    %v4242 = vsub.s32 %v4239, %v4241
    %v4243 = vrot.slane %v4082, %v4242
    %v4245 = vunpack.c.l.s4 1983009808
    %v4246 = vunpack.c.0.s8 %v4245
    %v4247 = vlaneseq
    %v4248 = vshrl.u32 %v4247, 7
    %v4249 = vsub.s32 %v4246, %v4248
    %v4250 = vrot.slane %v4236, %v4249
    %v4251 = vcombine.high %v4243, %v4243
    %v4252 = vcombine.high %v4250, %v4250
    %v4253 = vcombine.high %v4085, %v4085
    %v4255 = vunpack.c.l.s4 1983009808
    %v4256 = vunpack.c.0.s8 %v4255
    %v4257 = vlaneseq
    %v4258 = vshrl.u32 %v4257, 7
    %v4259 = vsub.s32 %v4256, %v4258
    %v4260 = vrot.slane %v4085, %v4259
    %v4262 = vunpack.c.l.s4 1983009808
    %v4263 = vunpack.c.0.s8 %v4262
    %v4264 = vlaneseq
    %v4265 = vshrl.u32 %v4264, 7
    %v4266 = vsub.s32 %v4263, %v4265
    %v4267 = vrot.slane %v4253, %v4266
    %v4268 = vcombine.high %v4260, %v4260
    %v4269 = vcombine.high %v4267, %v4267
    %v4270 = vcombine.high %v4088, %v4088
    %v4272 = vunpack.c.l.s4 1983009808
    %v4273 = vunpack.c.0.s8 %v4272
    %v4274 = vlaneseq
    %v4275 = vshrl.u32 %v4274, 7
    %v4276 = vsub.s32 %v4273, %v4275
    %v4277 = vrot.slane %v4088, %v4276
    %v4279 = vunpack.c.l.s4 1983009808
    %v4280 = vunpack.c.0.s8 %v4279
    %v4281 = vlaneseq
    %v4282 = vshrl.u32 %v4281, 7
    %v4283 = vsub.s32 %v4280, %v4282
    %v4284 = vrot.slane %v4270, %v4283
    %v4285 = vcombine.high %v4277, %v4277
    %v4286 = vcombine.high %v4284, %v4284
    %v4287 = vcombine.high %v4091, %v4091
    %v4289 = vunpack.c.l.s4 1983009808
    %v4290 = vunpack.c.0.s8 %v4289
    %v4291 = vlaneseq
    %v4292 = vshrl.u32 %v4291, 7
    %v4293 = vsub.s32 %v4290, %v4292
    %v4294 = vrot.slane %v4091, %v4293
    %v4296 = vunpack.c.l.s4 1983009808
    %v4297 = vunpack.c.0.s8 %v4296
    %v4298 = vlaneseq
    %v4299 = vshrl.u32 %v4298, 7
    %v4300 = vsub.s32 %v4297, %v4299
    %v4301 = vrot.slane %v4287, %v4300
    %v4302 = vcombine.high %v4294, %v4294
    %v4303 = vcombine.high %v4301, %v4301
    %v4304 = vcombine.high %v4094, %v4094
    %v4306 = vunpack.c.l.s4 1983009808
    %v4307 = vunpack.c.0.s8 %v4306
    %v4308 = vlaneseq
    %v4309 = vshrl.u32 %v4308, 7
    %v4310 = vsub.s32 %v4307, %v4309
    %v4311 = vrot.slane %v4094, %v4310
    %v4313 = vunpack.c.l.s4 1983009808
    %v4314 = vunpack.c.0.s8 %v4313
    %v4315 = vlaneseq
    %v4316 = vshrl.u32 %v4315, 7
    %v4317 = vsub.s32 %v4314, %v4316
    %v4318 = vrot.slane %v4304, %v4317
    %v4319 = vcombine.high %v4311, %v4311
    %v4320 = vcombine.high %v4318, %v4318
    %v4321 = vcombine.high %v4097, %v4097
    %v4323 = vunpack.c.l.s4 1983009808
    %v4324 = vunpack.c.0.s8 %v4323
    %v4325 = vlaneseq
    %v4326 = vshrl.u32 %v4325, 7
    %v4327 = vsub.s32 %v4324, %v4326
    %v4328 = vrot.slane %v4097, %v4327
    %v4330 = vunpack.c.l.s4 1983009808
    %v4331 = vunpack.c.0.s8 %v4330
    %v4332 = vlaneseq
    %v4333 = vshrl.u32 %v4332, 7
    %v4334 = vsub.s32 %v4331, %v4333
    %v4335 = vrot.slane %v4321, %v4334
    %v4336 = vcombine.high %v4328, %v4328
    %v4337 = vcombine.high %v4335, %v4335
    %v4338 = vcombine.high %v4100, %v4100
    %v4340 = vunpack.c.l.s4 1983009808
    %v4341 = vunpack.c.0.s8 %v4340
    %v4342 = vlaneseq
    %v4343 = vshrl.u32 %v4342, 7
    %v4344 = vsub.s32 %v4341, %v4343
    %v4345 = vrot.slane %v4100, %v4344
    %v4347 = vunpack.c.l.s4 1983009808
    %v4348 = vunpack.c.0.s8 %v4347
    %v4349 = vlaneseq
    %v4350 = vshrl.u32 %v4349, 7
    %v4351 = vsub.s32 %v4348, %v4350
    %v4352 = vrot.slane %v4338, %v4351
    %v4353 = vcombine.high %v4345, %v4345
    %v4354 = vcombine.high %v4352, %v4352
    %v4355 = vcombine.high %v4103, %v4103
    %v4357 = vunpack.c.l.s4 1983009808
    %v4358 = vunpack.c.0.s8 %v4357
    %v4359 = vlaneseq
    %v4360 = vshrl.u32 %v4359, 7
    %v4361 = vsub.s32 %v4358, %v4360
    %v4362 = vrot.slane %v4103, %v4361
    %v4364 = vunpack.c.l.s4 1983009808
    %v4365 = vunpack.c.0.s8 %v4364
    %v4366 = vlaneseq
    %v4367 = vshrl.u32 %v4366, 7
    %v4368 = vsub.s32 %v4365, %v4367
    %v4369 = vrot.slane %v4355, %v4368
    %v4370 = vcombine.high %v4362, %v4362
    %v4371 = vcombine.high %v4369, %v4369
    %v4372 = vcombine.high %v4106, %v4106
    %v4374 = vunpack.c.l.s4 1983009808
    %v4375 = vunpack.c.0.s8 %v4374
    %v4376 = vlaneseq
    %v4377 = vshrl.u32 %v4376, 7
    %v4378 = vsub.s32 %v4375, %v4377
    %v4379 = vrot.slane %v4106, %v4378
    %v4381 = vunpack.c.l.s4 1983009808
    %v4382 = vunpack.c.0.s8 %v4381
    %v4383 = vlaneseq
    %v4384 = vshrl.u32 %v4383, 7
    %v4385 = vsub.s32 %v4382, %v4384
    %v4386 = vrot.slane %v4372, %v4385
    %v4387 = vcombine.high %v4379, %v4379
    %v4388 = vcombine.high %v4386, %v4386
    %v4389 = vcombine.high %v4109, %v4109
    %v4391 = vunpack.c.l.s4 1983009808
    %v4392 = vunpack.c.0.s8 %v4391
    %v4393 = vlaneseq
    %v4394 = vshrl.u32 %v4393, 7
    %v4395 = vsub.s32 %v4392, %v4394
    %v4396 = vrot.slane %v4109, %v4395
    %v4398 = vunpack.c.l.s4 1983009808
    %v4399 = vunpack.c.0.s8 %v4398
    %v4400 = vlaneseq
    %v4401 = vshrl.u32 %v4400, 7
    %v4402 = vsub.s32 %v4399, %v4401
    %v4403 = vrot.slane %v4389, %v4402
    %v4404 = vcombine.high %v4396, %v4396
    %v4405 = vcombine.high %v4403, %v4403
    %v4406 = vcombine.high %v4112, %v4112
    %v4408 = vunpack.c.l.s4 1983009808
    %v4409 = vunpack.c.0.s8 %v4408
    %v4410 = vlaneseq
    %v4411 = vshrl.u32 %v4410, 7
    %v4412 = vsub.s32 %v4409, %v4411
    %v4413 = vrot.slane %v4112, %v4412
    %v4415 = vunpack.c.l.s4 1983009808
    %v4416 = vunpack.c.0.s8 %v4415
    %v4417 = vlaneseq
    %v4418 = vshrl.u32 %v4417, 7
    %v4419 = vsub.s32 %v4416, %v4418
    %v4420 = vrot.slane %v4406, %v4419
    %v4421 = vcombine.high %v4413, %v4413
    %v4422 = vcombine.high %v4420, %v4420
    %v4423 = vcombine.high %v4115, %v4115
    %v4425 = vunpack.c.l.s4 1983009808
    %v4426 = vunpack.c.0.s8 %v4425
    %v4427 = vlaneseq
    %v4428 = vshrl.u32 %v4427, 7
    %v4429 = vsub.s32 %v4426, %v4428
    %v4430 = vrot.slane %v4115, %v4429
    %v4432 = vunpack.c.l.s4 1983009808
    %v4433 = vunpack.c.0.s8 %v4432
    %v4434 = vlaneseq
    %v4435 = vshrl.u32 %v4434, 7
    %v4436 = vsub.s32 %v4433, %v4435
    %v4437 = vrot.slane %v4423, %v4436
    %v4438 = vcombine.high %v4430, %v4430
    %v4439 = vcombine.high %v4437, %v4437
    %v4440 = vcombine.high %v4118, %v4118
    %v4442 = vunpack.c.l.s4 1983009808
    %v4443 = vunpack.c.0.s8 %v4442
    %v4444 = vlaneseq
    %v4445 = vshrl.u32 %v4444, 7
    %v4446 = vsub.s32 %v4443, %v4445
    %v4447 = vrot.slane %v4118, %v4446
    %v4449 = vunpack.c.l.s4 1983009808
    %v4450 = vunpack.c.0.s8 %v4449
    %v4451 = vlaneseq
    %v4452 = vshrl.u32 %v4451, 7
    %v4453 = vsub.s32 %v4450, %v4452
    %v4454 = vrot.slane %v4440, %v4453
    %v4455 = vcombine.high %v4447, %v4447
    %v4456 = vcombine.high %v4454, %v4454
    %v4457 = vcombine.high %v4121, %v4121
    %v4459 = vunpack.c.l.s4 1983009808
    %v4460 = vunpack.c.0.s8 %v4459
    %v4461 = vlaneseq
    %v4462 = vshrl.u32 %v4461, 7
    %v4463 = vsub.s32 %v4460, %v4462
    %v4464 = vrot.slane %v4121, %v4463
    %v4466 = vunpack.c.l.s4 1983009808
    %v4467 = vunpack.c.0.s8 %v4466
    %v4468 = vlaneseq
    %v4469 = vshrl.u32 %v4468, 7
    %v4470 = vsub.s32 %v4467, %v4469
    %v4471 = vrot.slane %v4457, %v4470
    %v4472 = vcombine.high %v4464, %v4464
    %v4473 = vcombine.high %v4471, %v4471
    %v4474 = vcombine.high %v4124, %v4124
    %v4476 = vunpack.c.l.s4 1983009808
    %v4477 = vunpack.c.0.s8 %v4476
    %v4478 = vlaneseq
    %v4479 = vshrl.u32 %v4478, 7
    %v4480 = vsub.s32 %v4477, %v4479
    %v4481 = vrot.slane %v4124, %v4480
    %v4483 = vunpack.c.l.s4 1983009808
    %v4484 = vunpack.c.0.s8 %v4483
    %v4485 = vlaneseq
    %v4486 = vshrl.u32 %v4485, 7
    %v4487 = vsub.s32 %v4484, %v4486
    %v4488 = vrot.slane %v4474, %v4487
    %v4489 = vcombine.high %v4481, %v4481
    %v4490 = vcombine.high %v4488, %v4488
    %v4491 = vcombine.high %v4127, %v4127
    %v4493 = vunpack.c.l.s4 1983009808
    %v4494 = vunpack.c.0.s8 %v4493
    %v4495 = vlaneseq
    %v4496 = vshrl.u32 %v4495, 7
    %v4497 = vsub.s32 %v4494, %v4496
    %v4498 = vrot.slane %v4127, %v4497
    %v4500 = vunpack.c.l.s4 1983009808
    %v4501 = vunpack.c.0.s8 %v4500
    %v4502 = vlaneseq
    %v4503 = vshrl.u32 %v4502, 7
    %v4504 = vsub.s32 %v4501, %v4503
    %v4505 = vrot.slane %v4491, %v4504
    %v4506 = vcombine.high %v4498, %v4498
    %v4507 = vcombine.high %v4505, %v4505
    %v4508 = vcombine.high %v4130, %v4130
    %v4510 = vunpack.c.l.s4 1983009808
    %v4511 = vunpack.c.0.s8 %v4510
    %v4512 = vlaneseq
    %v4513 = vshrl.u32 %v4512, 7
    %v4514 = vsub.s32 %v4511, %v4513
    %v4515 = vrot.slane %v4130, %v4514
    %v4517 = vunpack.c.l.s4 1983009808
    %v4518 = vunpack.c.0.s8 %v4517
    %v4519 = vlaneseq
    %v4520 = vshrl.u32 %v4519, 7
    %v4521 = vsub.s32 %v4518, %v4520
    %v4522 = vrot.slane %v4508, %v4521
    %v4523 = vcombine.high %v4515, %v4515
    %v4524 = vcombine.high %v4522, %v4522
    %v4525 = vcombine.high %v4133, %v4133
    %v4527 = vunpack.c.l.s4 1983009808
    %v4528 = vunpack.c.0.s8 %v4527
    %v4529 = vlaneseq
    %v4530 = vshrl.u32 %v4529, 7
    %v4531 = vsub.s32 %v4528, %v4530
    %v4532 = vrot.slane %v4133, %v4531
    %v4534 = vunpack.c.l.s4 1983009808
    %v4535 = vunpack.c.0.s8 %v4534
    %v4536 = vlaneseq
    %v4537 = vshrl.u32 %v4536, 7
    %v4538 = vsub.s32 %v4535, %v4537
    %v4539 = vrot.slane %v4525, %v4538
    %v4540 = vcombine.high %v4532, %v4532
    %v4541 = vcombine.high %v4539, %v4539
    %v4542 = vcombine.high %v4136, %v4136
    %v4544 = vunpack.c.l.s4 1983009808
    %v4545 = vunpack.c.0.s8 %v4544
    %v4546 = vlaneseq
    %v4547 = vshrl.u32 %v4546, 7
    %v4548 = vsub.s32 %v4545, %v4547
    %v4549 = vrot.slane %v4136, %v4548
    %v4551 = vunpack.c.l.s4 1983009808
    %v4552 = vunpack.c.0.s8 %v4551
    %v4553 = vlaneseq
    %v4554 = vshrl.u32 %v4553, 7
    %v4555 = vsub.s32 %v4552, %v4554
    %v4556 = vrot.slane %v4542, %v4555
    %v4557 = vcombine.high %v4549, %v4549
    %v4558 = vcombine.high %v4556, %v4556
    %v4559 = vcombine.high %v4139, %v4139
    %v4561 = vunpack.c.l.s4 1983009808
    %v4562 = vunpack.c.0.s8 %v4561
    %v4563 = vlaneseq
    %v4564 = vshrl.u32 %v4563, 7
    %v4565 = vsub.s32 %v4562, %v4564
    %v4566 = vrot.slane %v4139, %v4565
    %v4568 = vunpack.c.l.s4 1983009808
    %v4569 = vunpack.c.0.s8 %v4568
    %v4570 = vlaneseq
    %v4571 = vshrl.u32 %v4570, 7
    %v4572 = vsub.s32 %v4569, %v4571
    %v4573 = vrot.slane %v4559, %v4572
    %v4574 = vcombine.high %v4566, %v4566
    %v4575 = vcombine.high %v4573, %v4573
    %v4576 = vcombine.high %v4142, %v4142
    %v4578 = vunpack.c.l.s4 1983009808
    %v4579 = vunpack.c.0.s8 %v4578
    %v4580 = vlaneseq
    %v4581 = vshrl.u32 %v4580, 7
    %v4582 = vsub.s32 %v4579, %v4581
    %v4583 = vrot.slane %v4142, %v4582
    %v4585 = vunpack.c.l.s4 1983009808
    %v4586 = vunpack.c.0.s8 %v4585
    %v4587 = vlaneseq
    %v4588 = vshrl.u32 %v4587, 7
    %v4589 = vsub.s32 %v4586, %v4588
    %v4590 = vrot.slane %v4576, %v4589
    %v4591 = vcombine.high %v4583, %v4583
    %v4592 = vcombine.high %v4590, %v4590
    %v4593 = vcombine.high %v4145, %v4145
    %v4595 = vunpack.c.l.s4 1983009808
    %v4596 = vunpack.c.0.s8 %v4595
    %v4597 = vlaneseq
    %v4598 = vshrl.u32 %v4597, 7
    %v4599 = vsub.s32 %v4596, %v4598
    %v4600 = vrot.slane %v4145, %v4599
    %v4602 = vunpack.c.l.s4 1983009808
    %v4603 = vunpack.c.0.s8 %v4602
    %v4604 = vlaneseq
    %v4605 = vshrl.u32 %v4604, 7
    %v4606 = vsub.s32 %v4603, %v4605
    %v4607 = vrot.slane %v4593, %v4606
    %v4608 = vcombine.high %v4600, %v4600
    %v4609 = vcombine.high %v4607, %v4607
    %v4610 = vcombine.high %v4148, %v4148
    %v4612 = vunpack.c.l.s4 1983009808
    %v4613 = vunpack.c.0.s8 %v4612
    %v4614 = vlaneseq
    %v4615 = vshrl.u32 %v4614, 7
    %v4616 = vsub.s32 %v4613, %v4615
    %v4617 = vrot.slane %v4148, %v4616
    %v4619 = vunpack.c.l.s4 1983009808
    %v4620 = vunpack.c.0.s8 %v4619
    %v4621 = vlaneseq
    %v4622 = vshrl.u32 %v4621, 7
    %v4623 = vsub.s32 %v4620, %v4622
    %v4624 = vrot.slane %v4610, %v4623
    %v4625 = vcombine.high %v4617, %v4617
    %v4626 = vcombine.high %v4624, %v4624
    %v4627 = vcombine.high %v4151, %v4151
    %v4629 = vunpack.c.l.s4 1983009808
    %v4630 = vunpack.c.0.s8 %v4629
    %v4631 = vlaneseq
    %v4632 = vshrl.u32 %v4631, 7
    %v4633 = vsub.s32 %v4630, %v4632
    %v4634 = vrot.slane %v4151, %v4633
    %v4636 = vunpack.c.l.s4 1983009808
    %v4637 = vunpack.c.0.s8 %v4636
    %v4638 = vlaneseq
    %v4639 = vshrl.u32 %v4638, 7
    %v4640 = vsub.s32 %v4637, %v4639
    %v4641 = vrot.slane %v4627, %v4640
    %v4642 = vcombine.high %v4634, %v4634
    %v4643 = vcombine.high %v4641, %v4641
    %v4644 = vcombine.high %v4154, %v4154
    %v4646 = vunpack.c.l.s4 1983009808
    %v4647 = vunpack.c.0.s8 %v4646
    %v4648 = vlaneseq
    %v4649 = vshrl.u32 %v4648, 7
    %v4650 = vsub.s32 %v4647, %v4649
    %v4651 = vrot.slane %v4154, %v4650
    %v4653 = vunpack.c.l.s4 1983009808
    %v4654 = vunpack.c.0.s8 %v4653
    %v4655 = vlaneseq
    %v4656 = vshrl.u32 %v4655, 7
    %v4657 = vsub.s32 %v4654, %v4656
    %v4658 = vrot.slane %v4644, %v4657
    %v4659 = vcombine.high %v4651, %v4651
    %v4660 = vcombine.high %v4658, %v4658
    %v4661 = vcombine.high %v4157, %v4157
    %v4663 = vunpack.c.l.s4 1983009808
    %v4664 = vunpack.c.0.s8 %v4663
    %v4665 = vlaneseq
    %v4666 = vshrl.u32 %v4665, 7
    %v4667 = vsub.s32 %v4664, %v4666
    %v4668 = vrot.slane %v4157, %v4667
    %v4670 = vunpack.c.l.s4 1983009808
    %v4671 = vunpack.c.0.s8 %v4670
    %v4672 = vlaneseq
    %v4673 = vshrl.u32 %v4672, 7
    %v4674 = vsub.s32 %v4671, %v4673
    %v4675 = vrot.slane %v4661, %v4674
    %v4676 = vcombine.high %v4668, %v4668
    %v4677 = vcombine.high %v4675, %v4675
    %v4678 = vcombine.high %v4160, %v4160
    %v4680 = vunpack.c.l.s4 1983009808
    %v4681 = vunpack.c.0.s8 %v4680
    %v4682 = vlaneseq
    %v4683 = vshrl.u32 %v4682, 7
    %v4684 = vsub.s32 %v4681, %v4683
    %v4685 = vrot.slane %v4160, %v4684
    %v4687 = vunpack.c.l.s4 1983009808
    %v4688 = vunpack.c.0.s8 %v4687
    %v4689 = vlaneseq
    %v4690 = vshrl.u32 %v4689, 7
    %v4691 = vsub.s32 %v4688, %v4690
    %v4692 = vrot.slane %v4678, %v4691
    %v4693 = vcombine.high %v4685, %v4685
    %v4694 = vcombine.high %v4692, %v4692
    %v4695 = vcombine.high %v4163, %v4163
    %v4697 = vunpack.c.l.s4 1983009808
    %v4698 = vunpack.c.0.s8 %v4697
    %v4699 = vlaneseq
    %v4700 = vshrl.u32 %v4699, 7
    %v4701 = vsub.s32 %v4698, %v4700
    %v4702 = vrot.slane %v4163, %v4701
    %v4704 = vunpack.c.l.s4 1983009808
    %v4705 = vunpack.c.0.s8 %v4704
    %v4706 = vlaneseq
    %v4707 = vshrl.u32 %v4706, 7
    %v4708 = vsub.s32 %v4705, %v4707
    %v4709 = vrot.slane %v4695, %v4708
    %v4710 = vcombine.high %v4702, %v4702
    %v4711 = vcombine.high %v4709, %v4709
    %v4712 = vcombine.high %v4166, %v4166
    %v4714 = vunpack.c.l.s4 1983009808
    %v4715 = vunpack.c.0.s8 %v4714
    %v4716 = vlaneseq
    %v4717 = vshrl.u32 %v4716, 7
    %v4718 = vsub.s32 %v4715, %v4717
    %v4719 = vrot.slane %v4166, %v4718
    %v4721 = vunpack.c.l.s4 1983009808
    %v4722 = vunpack.c.0.s8 %v4721
    %v4723 = vlaneseq
    %v4724 = vshrl.u32 %v4723, 7
    %v4725 = vsub.s32 %v4722, %v4724
    %v4726 = vrot.slane %v4712, %v4725
    %v4727 = vcombine.high %v4719, %v4719
    %v4728 = vcombine.high %v4726, %v4726
    %v4729 = vcombine.high %v4169, %v4169
    %v4731 = vunpack.c.l.s4 1983009808
    %v4732 = vunpack.c.0.s8 %v4731
    %v4733 = vlaneseq
    %v4734 = vshrl.u32 %v4733, 7
    %v4735 = vsub.s32 %v4732, %v4734
    %v4736 = vrot.slane %v4169, %v4735
    %v4738 = vunpack.c.l.s4 1983009808
    %v4739 = vunpack.c.0.s8 %v4738
    %v4740 = vlaneseq
    %v4741 = vshrl.u32 %v4740, 7
    %v4742 = vsub.s32 %v4739, %v4741
    %v4743 = vrot.slane %v4729, %v4742
    %v4744 = vcombine.high %v4736, %v4736
    %v4745 = vcombine.high %v4743, %v4743
    %vm4874 = vcmask 254976
    %v4875 = vsel %vm4874, %v4209, -inf
    %v4876 = vrot.slane %v4875, 4
    %v4877 = vmax.f32 %v4875, %v4876
    %v4878 = vrot.slane %v4877, 2
    %v4879 = vmax.f32 %v4877, %v4878
    %v4880 = vrot.slane %v4879, 1
    %v4881 = vmax.f32 %v4879, %v4880
    %v4882 = vsel %vm4874, %v4217, -inf
    %v4883 = vrot.slane %v4882, 4
    %v4884 = vmax.f32 %v4882, %v4883
    %v4885 = vrot.slane %v4884, 2
    %v4886 = vmax.f32 %v4884, %v4885
    %v4887 = vrot.slane %v4886, 1
    %v4888 = vmax.f32 %v4886, %v4887
    %v4889 = vsel %vm4874, %v4216, -inf
    %v4890 = vrot.slane %v4889, 4
    %v4891 = vmax.f32 %v4889, %v4890
    %v4892 = vrot.slane %v4891, 2
    %v4893 = vmax.f32 %v4891, %v4892
    %v4894 = vrot.slane %v4893, 1
    %v4895 = vmax.f32 %v4893, %v4894
    %v4896 = vsel %vm4874, %v4218, -inf
    %v4897 = vrot.slane %v4896, 4
    %v4898 = vmax.f32 %v4896, %v4897
    %v4899 = vrot.slane %v4898, 2
    %v4900 = vmax.f32 %v4898, %v4899
    %v4901 = vrot.slane %v4900, 1
    %v4902 = vmax.f32 %v4900, %v4901
    %v4903 = vsel %vm4874, %v4226, -inf
    %v4904 = vrot.slane %v4903, 4
    %v4905 = vmax.f32 %v4903, %v4904
    %v4906 = vrot.slane %v4905, 2
    %v4907 = vmax.f32 %v4905, %v4906
    %v4908 = vrot.slane %v4907, 1
    %v4909 = vmax.f32 %v4907, %v4908
    %v4910 = vsel %vm4874, %v4234, -inf
    %v4911 = vrot.slane %v4910, 4
    %v4912 = vmax.f32 %v4910, %v4911
    %v4913 = vrot.slane %v4912, 2
    %v4914 = vmax.f32 %v4912, %v4913
    %v4915 = vrot.slane %v4914, 1
    %v4916 = vmax.f32 %v4914, %v4915
    %v4917 = vsel %vm4874, %v4233, -inf
    %v4918 = vrot.slane %v4917, 4
    %v4919 = vmax.f32 %v4917, %v4918
    %v4920 = vrot.slane %v4919, 2
    %v4921 = vmax.f32 %v4919, %v4920
    %v4922 = vrot.slane %v4921, 1
    %v4923 = vmax.f32 %v4921, %v4922
    %v4924 = vsel %vm4874, %v4235, -inf
    %v4925 = vrot.slane %v4924, 4
    %v4926 = vmax.f32 %v4924, %v4925
    %v4927 = vrot.slane %v4926, 2
    %v4928 = vmax.f32 %v4926, %v4927
    %v4929 = vrot.slane %v4928, 1
    %v4930 = vmax.f32 %v4928, %v4929
    %v4931 = vsel %vm4874, %v4243, -inf
    %v4932 = vrot.slane %v4931, 4
    %v4933 = vmax.f32 %v4931, %v4932
    %v4934 = vrot.slane %v4933, 2
    %v4935 = vmax.f32 %v4933, %v4934
    %v4936 = vrot.slane %v4935, 1
    %v4937 = vmax.f32 %v4935, %v4936
    %v4938 = vsel %vm4874, %v4251, -inf
    %v4939 = vrot.slane %v4938, 4
    %v4940 = vmax.f32 %v4938, %v4939
    %v4941 = vrot.slane %v4940, 2
    %v4942 = vmax.f32 %v4940, %v4941
    %v4943 = vrot.slane %v4942, 1
    %v4944 = vmax.f32 %v4942, %v4943
    %v4945 = vsel %vm4874, %v4250, -inf
    %v4946 = vrot.slane %v4945, 4
    %v4947 = vmax.f32 %v4945, %v4946
    %v4948 = vrot.slane %v4947, 2
    %v4949 = vmax.f32 %v4947, %v4948
    %v4950 = vrot.slane %v4949, 1
    %v4951 = vmax.f32 %v4949, %v4950
    %v4952 = vsel %vm4874, %v4252, -inf
    %v4953 = vrot.slane %v4952, 4
    %v4954 = vmax.f32 %v4952, %v4953
    %v4955 = vrot.slane %v4954, 2
    %v4956 = vmax.f32 %v4954, %v4955
    %v4957 = vrot.slane %v4956, 1
    %v4958 = vmax.f32 %v4956, %v4957
    %v4959 = vsel %vm4874, %v4260, -inf
    %v4960 = vrot.slane %v4959, 4
    %v4961 = vmax.f32 %v4959, %v4960
    %v4962 = vrot.slane %v4961, 2
    %v4963 = vmax.f32 %v4961, %v4962
    %v4964 = vrot.slane %v4963, 1
    %v4965 = vmax.f32 %v4963, %v4964
    %v4966 = vsel %vm4874, %v4268, -inf
    %v4967 = vrot.slane %v4966, 4
    %v4968 = vmax.f32 %v4966, %v4967
    %v4969 = vrot.slane %v4968, 2
    %v4970 = vmax.f32 %v4968, %v4969
    %v4971 = vrot.slane %v4970, 1
    %v4972 = vmax.f32 %v4970, %v4971
    %v4973 = vsel %vm4874, %v4267, -inf
    %v4974 = vrot.slane %v4973, 4
    %v4975 = vmax.f32 %v4973, %v4974
    %v4976 = vrot.slane %v4975, 2
    %v4977 = vmax.f32 %v4975, %v4976
    %v4978 = vrot.slane %v4977, 1
    %v4979 = vmax.f32 %v4977, %v4978
    %v4980 = vsel %vm4874, %v4269, -inf
    %v4981 = vrot.slane %v4980, 4
    %v4982 = vmax.f32 %v4980, %v4981
    %v4983 = vrot.slane %v4982, 2
    %v4984 = vmax.f32 %v4982, %v4983
    %v4985 = vrot.slane %v4984, 1
    %v4986 = vmax.f32 %v4984, %v4985
    %v4987 = vsel %vm4874, %v4277, -inf
    %v4988 = vrot.slane %v4987, 4
    %v4989 = vmax.f32 %v4987, %v4988
    %v4990 = vrot.slane %v4989, 2
    %v4991 = vmax.f32 %v4989, %v4990
    %v4992 = vrot.slane %v4991, 1
    %v4993 = vmax.f32 %v4991, %v4992
    %v4994 = vsel %vm4874, %v4285, -inf
    %v4995 = vrot.slane %v4994, 4
    %v4996 = vmax.f32 %v4994, %v4995
    %v4997 = vrot.slane %v4996, 2
    %v4998 = vmax.f32 %v4996, %v4997
    %v4999 = vrot.slane %v4998, 1
    %v5000 = vmax.f32 %v4998, %v4999
    %v5001 = vsel %vm4874, %v4284, -inf
    %v5002 = vrot.slane %v5001, 4
    %v5003 = vmax.f32 %v5001, %v5002
    %v5004 = vrot.slane %v5003, 2
    %v5005 = vmax.f32 %v5003, %v5004
    %v5006 = vrot.slane %v5005, 1
    %v5007 = vmax.f32 %v5005, %v5006
    %v5008 = vsel %vm4874, %v4286, -inf
    %v5009 = vrot.slane %v5008, 4
    %v5010 = vmax.f32 %v5008, %v5009
    %v5011 = vrot.slane %v5010, 2
    %v5012 = vmax.f32 %v5010, %v5011
    %v5013 = vrot.slane %v5012, 1
    %v5014 = vmax.f32 %v5012, %v5013
    %v5015 = vsel %vm4874, %v4294, -inf
    %v5016 = vrot.slane %v5015, 4
    %v5017 = vmax.f32 %v5015, %v5016
    %v5018 = vrot.slane %v5017, 2
    %v5019 = vmax.f32 %v5017, %v5018
    %v5020 = vrot.slane %v5019, 1
    %v5021 = vmax.f32 %v5019, %v5020
    %v5022 = vsel %vm4874, %v4302, -inf
    %v5023 = vrot.slane %v5022, 4
    %v5024 = vmax.f32 %v5022, %v5023
    %v5025 = vrot.slane %v5024, 2
    %v5026 = vmax.f32 %v5024, %v5025
    %v5027 = vrot.slane %v5026, 1
    %v5028 = vmax.f32 %v5026, %v5027
    %v5029 = vsel %vm4874, %v4301, -inf
    %v5030 = vrot.slane %v5029, 4
    %v5031 = vmax.f32 %v5029, %v5030
    %v5032 = vrot.slane %v5031, 2
    %v5033 = vmax.f32 %v5031, %v5032
    %v5034 = vrot.slane %v5033, 1
    %v5035 = vmax.f32 %v5033, %v5034
    %v5036 = vsel %vm4874, %v4303, -inf
    %v5037 = vrot.slane %v5036, 4
    %v5038 = vmax.f32 %v5036, %v5037
    %v5039 = vrot.slane %v5038, 2
    %v5040 = vmax.f32 %v5038, %v5039
    %v5041 = vrot.slane %v5040, 1
    %v5042 = vmax.f32 %v5040, %v5041
    %v5043 = vsel %vm4874, %v4311, -inf
    %v5044 = vrot.slane %v5043, 4
    %v5045 = vmax.f32 %v5043, %v5044
    %v5046 = vrot.slane %v5045, 2
    %v5047 = vmax.f32 %v5045, %v5046
    %v5048 = vrot.slane %v5047, 1
    %v5049 = vmax.f32 %v5047, %v5048
    %v5050 = vsel %vm4874, %v4319, -inf
    %v5051 = vrot.slane %v5050, 4
    %v5052 = vmax.f32 %v5050, %v5051
    %v5053 = vrot.slane %v5052, 2
    %v5054 = vmax.f32 %v5052, %v5053
    %v5055 = vrot.slane %v5054, 1
    %v5056 = vmax.f32 %v5054, %v5055
    %v5057 = vsel %vm4874, %v4318, -inf
    %v5058 = vrot.slane %v5057, 4
    %v5059 = vmax.f32 %v5057, %v5058
    %v5060 = vrot.slane %v5059, 2
    %v5061 = vmax.f32 %v5059, %v5060
    %v5062 = vrot.slane %v5061, 1
    %v5063 = vmax.f32 %v5061, %v5062
    %v5064 = vsel %vm4874, %v4320, -inf
    %v5065 = vrot.slane %v5064, 4
    %v5066 = vmax.f32 %v5064, %v5065
    %v5067 = vrot.slane %v5066, 2
    %v5068 = vmax.f32 %v5066, %v5067
    %v5069 = vrot.slane %v5068, 1
    %v5070 = vmax.f32 %v5068, %v5069
    %v5071 = vsel %vm4874, %v4328, -inf
    %v5072 = vrot.slane %v5071, 4
    %v5073 = vmax.f32 %v5071, %v5072
    %v5074 = vrot.slane %v5073, 2
    %v5075 = vmax.f32 %v5073, %v5074
    %v5076 = vrot.slane %v5075, 1
    %v5077 = vmax.f32 %v5075, %v5076
    %v5078 = vsel %vm4874, %v4336, -inf
    %v5079 = vrot.slane %v5078, 4
    %v5080 = vmax.f32 %v5078, %v5079
    %v5081 = vrot.slane %v5080, 2
    %v5082 = vmax.f32 %v5080, %v5081
    %v5083 = vrot.slane %v5082, 1
    %v5084 = vmax.f32 %v5082, %v5083
    %v5085 = vsel %vm4874, %v4335, -inf
    %v5086 = vrot.slane %v5085, 4
    %v5087 = vmax.f32 %v5085, %v5086
    %v5088 = vrot.slane %v5087, 2
    %v5089 = vmax.f32 %v5087, %v5088
    %v5090 = vrot.slane %v5089, 1
    %v5091 = vmax.f32 %v5089, %v5090
    %v5092 = vsel %vm4874, %v4337, -inf
    %v5093 = vrot.slane %v5092, 4
    %v5094 = vmax.f32 %v5092, %v5093
    %v5095 = vrot.slane %v5094, 2
    %v5096 = vmax.f32 %v5094, %v5095
    %v5097 = vrot.slane %v5096, 1
    %v5098 = vmax.f32 %v5096, %v5097
    %v5099 = vsel %vm4874, %v4345, -inf
    %v5100 = vrot.slane %v5099, 4
    %v5101 = vmax.f32 %v5099, %v5100
    %v5102 = vrot.slane %v5101, 2
    %v5103 = vmax.f32 %v5101, %v5102
    %v5104 = vrot.slane %v5103, 1
    %v5105 = vmax.f32 %v5103, %v5104
    %v5106 = vsel %vm4874, %v4353, -inf
    %v5107 = vrot.slane %v5106, 4
    %v5108 = vmax.f32 %v5106, %v5107
    %v5109 = vrot.slane %v5108, 2
    %v5110 = vmax.f32 %v5108, %v5109
    %v5111 = vrot.slane %v5110, 1
    %v5112 = vmax.f32 %v5110, %v5111
    %v5113 = vsel %vm4874, %v4352, -inf
    %v5114 = vrot.slane %v5113, 4
    %v5115 = vmax.f32 %v5113, %v5114
    %v5116 = vrot.slane %v5115, 2
    %v5117 = vmax.f32 %v5115, %v5116
    %v5118 = vrot.slane %v5117, 1
    %v5119 = vmax.f32 %v5117, %v5118
    %v5120 = vsel %vm4874, %v4354, -inf
    %v5121 = vrot.slane %v5120, 4
    %v5122 = vmax.f32 %v5120, %v5121
    %v5123 = vrot.slane %v5122, 2
    %v5124 = vmax.f32 %v5122, %v5123
    %v5125 = vrot.slane %v5124, 1
    %v5126 = vmax.f32 %v5124, %v5125
    %v5127 = vsel %vm4874, %v4362, -inf
    %v5128 = vrot.slane %v5127, 4
    %v5129 = vmax.f32 %v5127, %v5128
    %v5130 = vrot.slane %v5129, 2
    %v5131 = vmax.f32 %v5129, %v5130
    %v5132 = vrot.slane %v5131, 1
    %v5133 = vmax.f32 %v5131, %v5132
    %v5134 = vsel %vm4874, %v4370, -inf
    %v5135 = vrot.slane %v5134, 4
    %v5136 = vmax.f32 %v5134, %v5135
    %v5137 = vrot.slane %v5136, 2
    %v5138 = vmax.f32 %v5136, %v5137
    %v5139 = vrot.slane %v5138, 1
    %v5140 = vmax.f32 %v5138, %v5139
    %v5141 = vsel %vm4874, %v4369, -inf
    %v5142 = vrot.slane %v5141, 4
    %v5143 = vmax.f32 %v5141, %v5142
    %v5144 = vrot.slane %v5143, 2
    %v5145 = vmax.f32 %v5143, %v5144
    %v5146 = vrot.slane %v5145, 1
    %v5147 = vmax.f32 %v5145, %v5146
    %v5148 = vsel %vm4874, %v4371, -inf
    %v5149 = vrot.slane %v5148, 4
    %v5150 = vmax.f32 %v5148, %v5149
    %v5151 = vrot.slane %v5150, 2
    %v5152 = vmax.f32 %v5150, %v5151
    %v5153 = vrot.slane %v5152, 1
    %v5154 = vmax.f32 %v5152, %v5153
    %v5155 = vsel %vm4874, %v4379, -inf
    %v5156 = vrot.slane %v5155, 4
    %v5157 = vmax.f32 %v5155, %v5156
    %v5158 = vrot.slane %v5157, 2
    %v5159 = vmax.f32 %v5157, %v5158
    %v5160 = vrot.slane %v5159, 1
    %v5161 = vmax.f32 %v5159, %v5160
    %v5162 = vsel %vm4874, %v4387, -inf
    %v5163 = vrot.slane %v5162, 4
    %v5164 = vmax.f32 %v5162, %v5163
    %v5165 = vrot.slane %v5164, 2
    %v5166 = vmax.f32 %v5164, %v5165
    %v5167 = vrot.slane %v5166, 1
    %v5168 = vmax.f32 %v5166, %v5167
    %v5169 = vsel %vm4874, %v4386, -inf
    %v5170 = vrot.slane %v5169, 4
    %v5171 = vmax.f32 %v5169, %v5170
    %v5172 = vrot.slane %v5171, 2
    %v5173 = vmax.f32 %v5171, %v5172
    %v5174 = vrot.slane %v5173, 1
    %v5175 = vmax.f32 %v5173, %v5174
    %v5176 = vsel %vm4874, %v4388, -inf
    %v5177 = vrot.slane %v5176, 4
    %v5178 = vmax.f32 %v5176, %v5177
    %v5179 = vrot.slane %v5178, 2
    %v5180 = vmax.f32 %v5178, %v5179
    %v5181 = vrot.slane %v5180, 1
    %v5182 = vmax.f32 %v5180, %v5181
    %v5183 = vsel %vm4874, %v4396, -inf
    %v5184 = vrot.slane %v5183, 4
    %v5185 = vmax.f32 %v5183, %v5184
    %v5186 = vrot.slane %v5185, 2
    %v5187 = vmax.f32 %v5185, %v5186
    %v5188 = vrot.slane %v5187, 1
    %v5189 = vmax.f32 %v5187, %v5188
    %v5190 = vsel %vm4874, %v4404, -inf
    %v5191 = vrot.slane %v5190, 4
    %v5192 = vmax.f32 %v5190, %v5191
    %v5193 = vrot.slane %v5192, 2
    %v5194 = vmax.f32 %v5192, %v5193
    %v5195 = vrot.slane %v5194, 1
    %v5196 = vmax.f32 %v5194, %v5195
    %v5197 = vsel %vm4874, %v4403, -inf
    %v5198 = vrot.slane %v5197, 4
    %v5199 = vmax.f32 %v5197, %v5198
    %v5200 = vrot.slane %v5199, 2
    %v5201 = vmax.f32 %v5199, %v5200
    %v5202 = vrot.slane %v5201, 1
    %v5203 = vmax.f32 %v5201, %v5202
    %v5204 = vsel %vm4874, %v4405, -inf
    %v5205 = vrot.slane %v5204, 4
    %v5206 = vmax.f32 %v5204, %v5205
    %v5207 = vrot.slane %v5206, 2
    %v5208 = vmax.f32 %v5206, %v5207
    %v5209 = vrot.slane %v5208, 1
    %v5210 = vmax.f32 %v5208, %v5209
    %v5211 = vsel %vm4874, %v4413, -inf
    %v5212 = vrot.slane %v5211, 4
    %v5213 = vmax.f32 %v5211, %v5212
    %v5214 = vrot.slane %v5213, 2
    %v5215 = vmax.f32 %v5213, %v5214
    %v5216 = vrot.slane %v5215, 1
    %v5217 = vmax.f32 %v5215, %v5216
    %v5218 = vsel %vm4874, %v4421, -inf
    %v5219 = vrot.slane %v5218, 4
    %v5220 = vmax.f32 %v5218, %v5219
    %v5221 = vrot.slane %v5220, 2
    %v5222 = vmax.f32 %v5220, %v5221
    %v5223 = vrot.slane %v5222, 1
    %v5224 = vmax.f32 %v5222, %v5223
    %v5225 = vsel %vm4874, %v4420, -inf
    %v5226 = vrot.slane %v5225, 4
    %v5227 = vmax.f32 %v5225, %v5226
    %v5228 = vrot.slane %v5227, 2
    %v5229 = vmax.f32 %v5227, %v5228
    %v5230 = vrot.slane %v5229, 1
    %v5231 = vmax.f32 %v5229, %v5230
    %v5232 = vsel %vm4874, %v4422, -inf
    %v5233 = vrot.slane %v5232, 4
    %v5234 = vmax.f32 %v5232, %v5233
    %v5235 = vrot.slane %v5234, 2
    %v5236 = vmax.f32 %v5234, %v5235
    %v5237 = vrot.slane %v5236, 1
    %v5238 = vmax.f32 %v5236, %v5237
    %v5239 = vsel %vm4874, %v4430, -inf
    %v5240 = vrot.slane %v5239, 4
    %v5241 = vmax.f32 %v5239, %v5240
    %v5242 = vrot.slane %v5241, 2
    %v5243 = vmax.f32 %v5241, %v5242
    %v5244 = vrot.slane %v5243, 1
    %v5245 = vmax.f32 %v5243, %v5244
    %v5246 = vsel %vm4874, %v4438, -inf
    %v5247 = vrot.slane %v5246, 4
    %v5248 = vmax.f32 %v5246, %v5247
    %v5249 = vrot.slane %v5248, 2
    %v5250 = vmax.f32 %v5248, %v5249
    %v5251 = vrot.slane %v5250, 1
    %v5252 = vmax.f32 %v5250, %v5251
    %v5253 = vsel %vm4874, %v4437, -inf
    %v5254 = vrot.slane %v5253, 4
    %v5255 = vmax.f32 %v5253, %v5254
    %v5256 = vrot.slane %v5255, 2
    %v5257 = vmax.f32 %v5255, %v5256
    %v5258 = vrot.slane %v5257, 1
    %v5259 = vmax.f32 %v5257, %v5258
    %v5260 = vsel %vm4874, %v4439, -inf
    %v5261 = vrot.slane %v5260, 4
    %v5262 = vmax.f32 %v5260, %v5261
    %v5263 = vrot.slane %v5262, 2
    %v5264 = vmax.f32 %v5262, %v5263
    %v5265 = vrot.slane %v5264, 1
    %v5266 = vmax.f32 %v5264, %v5265
    %v5267 = vsel %vm4874, %v4447, -inf
    %v5268 = vrot.slane %v5267, 4
    %v5269 = vmax.f32 %v5267, %v5268
    %v5270 = vrot.slane %v5269, 2
    %v5271 = vmax.f32 %v5269, %v5270
    %v5272 = vrot.slane %v5271, 1
    %v5273 = vmax.f32 %v5271, %v5272
    %v5274 = vsel %vm4874, %v4455, -inf
    %v5275 = vrot.slane %v5274, 4
    %v5276 = vmax.f32 %v5274, %v5275
    %v5277 = vrot.slane %v5276, 2
    %v5278 = vmax.f32 %v5276, %v5277
    %v5279 = vrot.slane %v5278, 1
    %v5280 = vmax.f32 %v5278, %v5279
    %v5281 = vsel %vm4874, %v4454, -inf
    %v5282 = vrot.slane %v5281, 4
    %v5283 = vmax.f32 %v5281, %v5282
    %v5284 = vrot.slane %v5283, 2
    %v5285 = vmax.f32 %v5283, %v5284
    %v5286 = vrot.slane %v5285, 1
    %v5287 = vmax.f32 %v5285, %v5286
    %v5288 = vsel %vm4874, %v4456, -inf
    %v5289 = vrot.slane %v5288, 4
    %v5290 = vmax.f32 %v5288, %v5289
    %v5291 = vrot.slane %v5290, 2
    %v5292 = vmax.f32 %v5290, %v5291
    %v5293 = vrot.slane %v5292, 1
    %v5294 = vmax.f32 %v5292, %v5293
    %v5295 = vsel %vm4874, %v4464, -inf
    %v5296 = vrot.slane %v5295, 4
    %v5297 = vmax.f32 %v5295, %v5296
    %v5298 = vrot.slane %v5297, 2
    %v5299 = vmax.f32 %v5297, %v5298
    %v5300 = vrot.slane %v5299, 1
    %v5301 = vmax.f32 %v5299, %v5300
    %v5302 = vsel %vm4874, %v4472, -inf
    %v5303 = vrot.slane %v5302, 4
    %v5304 = vmax.f32 %v5302, %v5303
    %v5305 = vrot.slane %v5304, 2
    %v5306 = vmax.f32 %v5304, %v5305
    %v5307 = vrot.slane %v5306, 1
    %v5308 = vmax.f32 %v5306, %v5307
    %v5309 = vsel %vm4874, %v4471, -inf
    %v5310 = vrot.slane %v5309, 4
    %v5311 = vmax.f32 %v5309, %v5310
    %v5312 = vrot.slane %v5311, 2
    %v5313 = vmax.f32 %v5311, %v5312
    %v5314 = vrot.slane %v5313, 1
    %v5315 = vmax.f32 %v5313, %v5314
    %v5316 = vsel %vm4874, %v4473, -inf
    %v5317 = vrot.slane %v5316, 4
    %v5318 = vmax.f32 %v5316, %v5317
    %v5319 = vrot.slane %v5318, 2
    %v5320 = vmax.f32 %v5318, %v5319
    %v5321 = vrot.slane %v5320, 1
    %v5322 = vmax.f32 %v5320, %v5321
    %v5323 = vsel %vm4874, %v4481, -inf
    %v5324 = vrot.slane %v5323, 4
    %v5325 = vmax.f32 %v5323, %v5324
    %v5326 = vrot.slane %v5325, 2
    %v5327 = vmax.f32 %v5325, %v5326
    %v5328 = vrot.slane %v5327, 1
    %v5329 = vmax.f32 %v5327, %v5328
    %v5330 = vsel %vm4874, %v4489, -inf
    %v5331 = vrot.slane %v5330, 4
    %v5332 = vmax.f32 %v5330, %v5331
    %v5333 = vrot.slane %v5332, 2
    %v5334 = vmax.f32 %v5332, %v5333
    %v5335 = vrot.slane %v5334, 1
    %v5336 = vmax.f32 %v5334, %v5335
    %v5337 = vsel %vm4874, %v4488, -inf
    %v5338 = vrot.slane %v5337, 4
    %v5339 = vmax.f32 %v5337, %v5338
    %v5340 = vrot.slane %v5339, 2
    %v5341 = vmax.f32 %v5339, %v5340
    %v5342 = vrot.slane %v5341, 1
    %v5343 = vmax.f32 %v5341, %v5342
    %v5344 = vsel %vm4874, %v4490, -inf
    %v5345 = vrot.slane %v5344, 4
    %v5346 = vmax.f32 %v5344, %v5345
    %v5347 = vrot.slane %v5346, 2
    %v5348 = vmax.f32 %v5346, %v5347
    %v5349 = vrot.slane %v5348, 1
    %v5350 = vmax.f32 %v5348, %v5349
    %v5351 = vsel %vm4874, %v4498, -inf
    %v5352 = vrot.slane %v5351, 4
    %v5353 = vmax.f32 %v5351, %v5352
    %v5354 = vrot.slane %v5353, 2
    %v5355 = vmax.f32 %v5353, %v5354
    %v5356 = vrot.slane %v5355, 1
    %v5357 = vmax.f32 %v5355, %v5356
    %v5358 = vsel %vm4874, %v4506, -inf
    %v5359 = vrot.slane %v5358, 4
    %v5360 = vmax.f32 %v5358, %v5359
    %v5361 = vrot.slane %v5360, 2
    %v5362 = vmax.f32 %v5360, %v5361
    %v5363 = vrot.slane %v5362, 1
    %v5364 = vmax.f32 %v5362, %v5363
    %v5365 = vsel %vm4874, %v4505, -inf
    %v5366 = vrot.slane %v5365, 4
    %v5367 = vmax.f32 %v5365, %v5366
    %v5368 = vrot.slane %v5367, 2
    %v5369 = vmax.f32 %v5367, %v5368
    %v5370 = vrot.slane %v5369, 1
    %v5371 = vmax.f32 %v5369, %v5370
    %v5372 = vsel %vm4874, %v4507, -inf
    %v5373 = vrot.slane %v5372, 4
    %v5374 = vmax.f32 %v5372, %v5373
    %v5375 = vrot.slane %v5374, 2
    %v5376 = vmax.f32 %v5374, %v5375
    %v5377 = vrot.slane %v5376, 1
    %v5378 = vmax.f32 %v5376, %v5377
    %v5379 = vsel %vm4874, %v4515, -inf
    %v5380 = vrot.slane %v5379, 4
    %v5381 = vmax.f32 %v5379, %v5380
    %v5382 = vrot.slane %v5381, 2
    %v5383 = vmax.f32 %v5381, %v5382
    %v5384 = vrot.slane %v5383, 1
    %v5385 = vmax.f32 %v5383, %v5384
    %v5386 = vsel %vm4874, %v4523, -inf
    %v5387 = vrot.slane %v5386, 4
    %v5388 = vmax.f32 %v5386, %v5387
    %v5389 = vrot.slane %v5388, 2
    %v5390 = vmax.f32 %v5388, %v5389
    %v5391 = vrot.slane %v5390, 1
    %v5392 = vmax.f32 %v5390, %v5391
    %v5393 = vsel %vm4874, %v4522, -inf
    %v5394 = vrot.slane %v5393, 4
    %v5395 = vmax.f32 %v5393, %v5394
    %v5396 = vrot.slane %v5395, 2
    %v5397 = vmax.f32 %v5395, %v5396
    %v5398 = vrot.slane %v5397, 1
    %v5399 = vmax.f32 %v5397, %v5398
    %v5400 = vsel %vm4874, %v4524, -inf
    %v5401 = vrot.slane %v5400, 4
    %v5402 = vmax.f32 %v5400, %v5401
    %v5403 = vrot.slane %v5402, 2
    %v5404 = vmax.f32 %v5402, %v5403
    %v5405 = vrot.slane %v5404, 1
    %v5406 = vmax.f32 %v5404, %v5405
    %v5407 = vsel %vm4874, %v4532, -inf
    %v5408 = vrot.slane %v5407, 4
    %v5409 = vmax.f32 %v5407, %v5408
    %v5410 = vrot.slane %v5409, 2
    %v5411 = vmax.f32 %v5409, %v5410
    %v5412 = vrot.slane %v5411, 1
    %v5413 = vmax.f32 %v5411, %v5412
    %v5414 = vsel %vm4874, %v4540, -inf
    %v5415 = vrot.slane %v5414, 4
    %v5416 = vmax.f32 %v5414, %v5415
    %v5417 = vrot.slane %v5416, 2
    %v5418 = vmax.f32 %v5416, %v5417
    %v5419 = vrot.slane %v5418, 1
    %v5420 = vmax.f32 %v5418, %v5419
    %v5421 = vsel %vm4874, %v4539, -inf
    %v5422 = vrot.slane %v5421, 4
    %v5423 = vmax.f32 %v5421, %v5422
    %v5424 = vrot.slane %v5423, 2
    %v5425 = vmax.f32 %v5423, %v5424
    %v5426 = vrot.slane %v5425, 1
    %v5427 = vmax.f32 %v5425, %v5426
    %v5428 = vsel %vm4874, %v4541, -inf
    %v5429 = vrot.slane %v5428, 4
    %v5430 = vmax.f32 %v5428, %v5429
    %v5431 = vrot.slane %v5430, 2
    %v5432 = vmax.f32 %v5430, %v5431
    %v5433 = vrot.slane %v5432, 1
    %v5434 = vmax.f32 %v5432, %v5433
    %v5435 = vsel %vm4874, %v4549, -inf
    %v5436 = vrot.slane %v5435, 4
    %v5437 = vmax.f32 %v5435, %v5436
    %v5438 = vrot.slane %v5437, 2
    %v5439 = vmax.f32 %v5437, %v5438
    %v5440 = vrot.slane %v5439, 1
    %v5441 = vmax.f32 %v5439, %v5440
    %v5442 = vsel %vm4874, %v4557, -inf
    %v5443 = vrot.slane %v5442, 4
    %v5444 = vmax.f32 %v5442, %v5443
    %v5445 = vrot.slane %v5444, 2
    %v5446 = vmax.f32 %v5444, %v5445
    %v5447 = vrot.slane %v5446, 1
    %v5448 = vmax.f32 %v5446, %v5447
    %v5449 = vsel %vm4874, %v4556, -inf
    %v5450 = vrot.slane %v5449, 4
    %v5451 = vmax.f32 %v5449, %v5450
    %v5452 = vrot.slane %v5451, 2
    %v5453 = vmax.f32 %v5451, %v5452
    %v5454 = vrot.slane %v5453, 1
    %v5455 = vmax.f32 %v5453, %v5454
    %v5456 = vsel %vm4874, %v4558, -inf
    %v5457 = vrot.slane %v5456, 4
    %v5458 = vmax.f32 %v5456, %v5457
    %v5459 = vrot.slane %v5458, 2
    %v5460 = vmax.f32 %v5458, %v5459
    %v5461 = vrot.slane %v5460, 1
    %v5462 = vmax.f32 %v5460, %v5461
    %v5463 = vsel %vm4874, %v4566, -inf
    %v5464 = vrot.slane %v5463, 4
    %v5465 = vmax.f32 %v5463, %v5464
    %v5466 = vrot.slane %v5465, 2
    %v5467 = vmax.f32 %v5465, %v5466
    %v5468 = vrot.slane %v5467, 1
    %v5469 = vmax.f32 %v5467, %v5468
    %v5470 = vsel %vm4874, %v4574, -inf
    %v5471 = vrot.slane %v5470, 4
    %v5472 = vmax.f32 %v5470, %v5471
    %v5473 = vrot.slane %v5472, 2
    %v5474 = vmax.f32 %v5472, %v5473
    %v5475 = vrot.slane %v5474, 1
    %v5476 = vmax.f32 %v5474, %v5475
    %v5477 = vsel %vm4874, %v4573, -inf
    %v5478 = vrot.slane %v5477, 4
    %v5479 = vmax.f32 %v5477, %v5478
    %v5480 = vrot.slane %v5479, 2
    %v5481 = vmax.f32 %v5479, %v5480
    %v5482 = vrot.slane %v5481, 1
    %v5483 = vmax.f32 %v5481, %v5482
    %v5484 = vsel %vm4874, %v4575, -inf
    %v5485 = vrot.slane %v5484, 4
    %v5486 = vmax.f32 %v5484, %v5485
    %v5487 = vrot.slane %v5486, 2
    %v5488 = vmax.f32 %v5486, %v5487
    %v5489 = vrot.slane %v5488, 1
    %v5490 = vmax.f32 %v5488, %v5489
    %v5491 = vsel %vm4874, %v4583, -inf
    %v5492 = vrot.slane %v5491, 4
    %v5493 = vmax.f32 %v5491, %v5492
    %v5494 = vrot.slane %v5493, 2
    %v5495 = vmax.f32 %v5493, %v5494
    %v5496 = vrot.slane %v5495, 1
    %v5497 = vmax.f32 %v5495, %v5496
    %v5498 = vsel %vm4874, %v4591, -inf
    %v5499 = vrot.slane %v5498, 4
    %v5500 = vmax.f32 %v5498, %v5499
    %v5501 = vrot.slane %v5500, 2
    %v5502 = vmax.f32 %v5500, %v5501
    %v5503 = vrot.slane %v5502, 1
    %v5504 = vmax.f32 %v5502, %v5503
    %v5505 = vsel %vm4874, %v4590, -inf
    %v5506 = vrot.slane %v5505, 4
    %v5507 = vmax.f32 %v5505, %v5506
    %v5508 = vrot.slane %v5507, 2
    %v5509 = vmax.f32 %v5507, %v5508
    %v5510 = vrot.slane %v5509, 1
    %v5511 = vmax.f32 %v5509, %v5510
    %v5512 = vsel %vm4874, %v4592, -inf
    %v5513 = vrot.slane %v5512, 4
    %v5514 = vmax.f32 %v5512, %v5513
    %v5515 = vrot.slane %v5514, 2
    %v5516 = vmax.f32 %v5514, %v5515
    %v5517 = vrot.slane %v5516, 1
    %v5518 = vmax.f32 %v5516, %v5517
    %v5519 = vsel %vm4874, %v4600, -inf
    %v5520 = vrot.slane %v5519, 4
    %v5521 = vmax.f32 %v5519, %v5520
    %v5522 = vrot.slane %v5521, 2
    %v5523 = vmax.f32 %v5521, %v5522
    %v5524 = vrot.slane %v5523, 1
    %v5525 = vmax.f32 %v5523, %v5524
    %v5526 = vsel %vm4874, %v4608, -inf
    %v5527 = vrot.slane %v5526, 4
    %v5528 = vmax.f32 %v5526, %v5527
    %v5529 = vrot.slane %v5528, 2
    %v5530 = vmax.f32 %v5528, %v5529
    %v5531 = vrot.slane %v5530, 1
    %v5532 = vmax.f32 %v5530, %v5531
    %v5533 = vsel %vm4874, %v4607, -inf
    %v5534 = vrot.slane %v5533, 4
    %v5535 = vmax.f32 %v5533, %v5534
    %v5536 = vrot.slane %v5535, 2
    %v5537 = vmax.f32 %v5535, %v5536
    %v5538 = vrot.slane %v5537, 1
    %v5539 = vmax.f32 %v5537, %v5538
    %v5540 = vsel %vm4874, %v4609, -inf
    %v5541 = vrot.slane %v5540, 4
    %v5542 = vmax.f32 %v5540, %v5541
    %v5543 = vrot.slane %v5542, 2
    %v5544 = vmax.f32 %v5542, %v5543
    %v5545 = vrot.slane %v5544, 1
    %v5546 = vmax.f32 %v5544, %v5545
    %v5547 = vsel %vm4874, %v4617, -inf
    %v5548 = vrot.slane %v5547, 4
    %v5549 = vmax.f32 %v5547, %v5548
    %v5550 = vrot.slane %v5549, 2
    %v5551 = vmax.f32 %v5549, %v5550
    %v5552 = vrot.slane %v5551, 1
    %v5553 = vmax.f32 %v5551, %v5552
    %v5554 = vsel %vm4874, %v4625, -inf
    %v5555 = vrot.slane %v5554, 4
    %v5556 = vmax.f32 %v5554, %v5555
    %v5557 = vrot.slane %v5556, 2
    %v5558 = vmax.f32 %v5556, %v5557
    %v5559 = vrot.slane %v5558, 1
    %v5560 = vmax.f32 %v5558, %v5559
    %v5561 = vsel %vm4874, %v4624, -inf
    %v5562 = vrot.slane %v5561, 4
    %v5563 = vmax.f32 %v5561, %v5562
    %v5564 = vrot.slane %v5563, 2
    %v5565 = vmax.f32 %v5563, %v5564
    %v5566 = vrot.slane %v5565, 1
    %v5567 = vmax.f32 %v5565, %v5566
    %v5568 = vsel %vm4874, %v4626, -inf
    %v5569 = vrot.slane %v5568, 4
    %v5570 = vmax.f32 %v5568, %v5569
    %v5571 = vrot.slane %v5570, 2
    %v5572 = vmax.f32 %v5570, %v5571
    %v5573 = vrot.slane %v5572, 1
    %v5574 = vmax.f32 %v5572, %v5573
    %v5575 = vsel %vm4874, %v4634, -inf
    %v5576 = vrot.slane %v5575, 4
    %v5577 = vmax.f32 %v5575, %v5576
    %v5578 = vrot.slane %v5577, 2
    %v5579 = vmax.f32 %v5577, %v5578
    %v5580 = vrot.slane %v5579, 1
    %v5581 = vmax.f32 %v5579, %v5580
    %v5582 = vsel %vm4874, %v4642, -inf
    %v5583 = vrot.slane %v5582, 4
    %v5584 = vmax.f32 %v5582, %v5583
    %v5585 = vrot.slane %v5584, 2
    %v5586 = vmax.f32 %v5584, %v5585
    %v5587 = vrot.slane %v5586, 1
    %v5588 = vmax.f32 %v5586, %v5587
    %v5589 = vsel %vm4874, %v4641, -inf
    %v5590 = vrot.slane %v5589, 4
    %v5591 = vmax.f32 %v5589, %v5590
    %v5592 = vrot.slane %v5591, 2
    %v5593 = vmax.f32 %v5591, %v5592
    %v5594 = vrot.slane %v5593, 1
    %v5595 = vmax.f32 %v5593, %v5594
    %v5596 = vsel %vm4874, %v4643, -inf
    %v5597 = vrot.slane %v5596, 4
    %v5598 = vmax.f32 %v5596, %v5597
    %v5599 = vrot.slane %v5598, 2
    %v5600 = vmax.f32 %v5598, %v5599
    %v5601 = vrot.slane %v5600, 1
    %v5602 = vmax.f32 %v5600, %v5601
    %v5603 = vsel %vm4874, %v4651, -inf
    %v5604 = vrot.slane %v5603, 4
    %v5605 = vmax.f32 %v5603, %v5604
    %v5606 = vrot.slane %v5605, 2
    %v5607 = vmax.f32 %v5605, %v5606
    %v5608 = vrot.slane %v5607, 1
    %v5609 = vmax.f32 %v5607, %v5608
    %v5610 = vsel %vm4874, %v4659, -inf
    %v5611 = vrot.slane %v5610, 4
    %v5612 = vmax.f32 %v5610, %v5611
    %v5613 = vrot.slane %v5612, 2
    %v5614 = vmax.f32 %v5612, %v5613
    %v5615 = vrot.slane %v5614, 1
    %v5616 = vmax.f32 %v5614, %v5615
    %v5617 = vsel %vm4874, %v4658, -inf
    %v5618 = vrot.slane %v5617, 4
    %v5619 = vmax.f32 %v5617, %v5618
    %v5620 = vrot.slane %v5619, 2
    %v5621 = vmax.f32 %v5619, %v5620
    %v5622 = vrot.slane %v5621, 1
    %v5623 = vmax.f32 %v5621, %v5622
    %v5624 = vsel %vm4874, %v4660, -inf
    %v5625 = vrot.slane %v5624, 4
    %v5626 = vmax.f32 %v5624, %v5625
    %v5627 = vrot.slane %v5626, 2
    %v5628 = vmax.f32 %v5626, %v5627
    %v5629 = vrot.slane %v5628, 1
    %v5630 = vmax.f32 %v5628, %v5629
    %v5631 = vsel %vm4874, %v4668, -inf
    %v5632 = vrot.slane %v5631, 4
    %v5633 = vmax.f32 %v5631, %v5632
    %v5634 = vrot.slane %v5633, 2
    %v5635 = vmax.f32 %v5633, %v5634
    %v5636 = vrot.slane %v5635, 1
    %v5637 = vmax.f32 %v5635, %v5636
    %v5638 = vsel %vm4874, %v4676, -inf
    %v5639 = vrot.slane %v5638, 4
    %v5640 = vmax.f32 %v5638, %v5639
    %v5641 = vrot.slane %v5640, 2
    %v5642 = vmax.f32 %v5640, %v5641
    %v5643 = vrot.slane %v5642, 1
    %v5644 = vmax.f32 %v5642, %v5643
    %v5645 = vsel %vm4874, %v4675, -inf
    %v5646 = vrot.slane %v5645, 4
    %v5647 = vmax.f32 %v5645, %v5646
    %v5648 = vrot.slane %v5647, 2
    %v5649 = vmax.f32 %v5647, %v5648
    %v5650 = vrot.slane %v5649, 1
    %v5651 = vmax.f32 %v5649, %v5650
    %v5652 = vsel %vm4874, %v4677, -inf
    %v5653 = vrot.slane %v5652, 4
    %v5654 = vmax.f32 %v5652, %v5653
    %v5655 = vrot.slane %v5654, 2
    %v5656 = vmax.f32 %v5654, %v5655
    %v5657 = vrot.slane %v5656, 1
    %v5658 = vmax.f32 %v5656, %v5657
    %v5659 = vsel %vm4874, %v4685, -inf
    %v5660 = vrot.slane %v5659, 4
    %v5661 = vmax.f32 %v5659, %v5660
    %v5662 = vrot.slane %v5661, 2
    %v5663 = vmax.f32 %v5661, %v5662
    %v5664 = vrot.slane %v5663, 1
    %v5665 = vmax.f32 %v5663, %v5664
    %v5666 = vsel %vm4874, %v4693, -inf
    %v5667 = vrot.slane %v5666, 4
    %v5668 = vmax.f32 %v5666, %v5667
    %v5669 = vrot.slane %v5668, 2
    %v5670 = vmax.f32 %v5668, %v5669
    %v5671 = vrot.slane %v5670, 1
    %v5672 = vmax.f32 %v5670, %v5671
    %v5673 = vsel %vm4874, %v4692, -inf
    %v5674 = vrot.slane %v5673, 4
    %v5675 = vmax.f32 %v5673, %v5674
    %v5676 = vrot.slane %v5675, 2
    %v5677 = vmax.f32 %v5675, %v5676
    %v5678 = vrot.slane %v5677, 1
    %v5679 = vmax.f32 %v5677, %v5678
    %v5680 = vsel %vm4874, %v4694, -inf
    %v5681 = vrot.slane %v5680, 4
    %v5682 = vmax.f32 %v5680, %v5681
    %v5683 = vrot.slane %v5682, 2
    %v5684 = vmax.f32 %v5682, %v5683
    %v5685 = vrot.slane %v5684, 1
    %v5686 = vmax.f32 %v5684, %v5685
    %v5687 = vsel %vm4874, %v4702, -inf
    %v5688 = vrot.slane %v5687, 4
    %v5689 = vmax.f32 %v5687, %v5688
    %v5690 = vrot.slane %v5689, 2
    %v5691 = vmax.f32 %v5689, %v5690
    %v5692 = vrot.slane %v5691, 1
    %v5693 = vmax.f32 %v5691, %v5692
    %v5694 = vsel %vm4874, %v4710, -inf
    %v5695 = vrot.slane %v5694, 4
    %v5696 = vmax.f32 %v5694, %v5695
    %v5697 = vrot.slane %v5696, 2
    %v5698 = vmax.f32 %v5696, %v5697
    %v5699 = vrot.slane %v5698, 1
    %v5700 = vmax.f32 %v5698, %v5699
    %v5701 = vsel %vm4874, %v4709, -inf
    %v5702 = vrot.slane %v5701, 4
    %v5703 = vmax.f32 %v5701, %v5702
    %v5704 = vrot.slane %v5703, 2
    %v5705 = vmax.f32 %v5703, %v5704
    %v5706 = vrot.slane %v5705, 1
    %v5707 = vmax.f32 %v5705, %v5706
    %v5708 = vsel %vm4874, %v4711, -inf
    %v5709 = vrot.slane %v5708, 4
    %v5710 = vmax.f32 %v5708, %v5709
    %v5711 = vrot.slane %v5710, 2
    %v5712 = vmax.f32 %v5710, %v5711
    %v5713 = vrot.slane %v5712, 1
    %v5714 = vmax.f32 %v5712, %v5713
    %v5715 = vsel %vm4874, %v4719, -inf
    %v5716 = vrot.slane %v5715, 4
    %v5717 = vmax.f32 %v5715, %v5716
    %v5718 = vrot.slane %v5717, 2
    %v5719 = vmax.f32 %v5717, %v5718
    %v5720 = vrot.slane %v5719, 1
    %v5721 = vmax.f32 %v5719, %v5720
    %v5722 = vsel %vm4874, %v4727, -inf
    %v5723 = vrot.slane %v5722, 4
    %v5724 = vmax.f32 %v5722, %v5723
    %v5725 = vrot.slane %v5724, 2
    %v5726 = vmax.f32 %v5724, %v5725
    %v5727 = vrot.slane %v5726, 1
    %v5728 = vmax.f32 %v5726, %v5727
    %v5729 = vsel %vm4874, %v4726, -inf
    %v5730 = vrot.slane %v5729, 4
    %v5731 = vmax.f32 %v5729, %v5730
    %v5732 = vrot.slane %v5731, 2
    %v5733 = vmax.f32 %v5731, %v5732
    %v5734 = vrot.slane %v5733, 1
    %v5735 = vmax.f32 %v5733, %v5734
    %v5736 = vsel %vm4874, %v4728, -inf
    %v5737 = vrot.slane %v5736, 4
    %v5738 = vmax.f32 %v5736, %v5737
    %v5739 = vrot.slane %v5738, 2
    %v5740 = vmax.f32 %v5738, %v5739
    %v5741 = vrot.slane %v5740, 1
    %v5742 = vmax.f32 %v5740, %v5741
    %v5743 = vsel %vm4874, %v4736, -inf
    %v5744 = vrot.slane %v5743, 4
    %v5745 = vmax.f32 %v5743, %v5744
    %v5746 = vrot.slane %v5745, 2
    %v5747 = vmax.f32 %v5745, %v5746
    %v5748 = vrot.slane %v5747, 1
    %v5749 = vmax.f32 %v5747, %v5748
    %v5750 = vsel %vm4874, %v4744, -inf
    %v5751 = vrot.slane %v5750, 4
    %v5752 = vmax.f32 %v5750, %v5751
    %v5753 = vrot.slane %v5752, 2
    %v5754 = vmax.f32 %v5752, %v5753
    %v5755 = vrot.slane %v5754, 1
    %v5756 = vmax.f32 %v5754, %v5755
    %v5757 = vsel %vm4874, %v4743, -inf
    %v5758 = vrot.slane %v5757, 4
    %v5759 = vmax.f32 %v5757, %v5758
    %v5760 = vrot.slane %v5759, 2
    %v5761 = vmax.f32 %v5759, %v5760
    %v5762 = vrot.slane %v5761, 1
    %v5763 = vmax.f32 %v5761, %v5762
    %v5764 = vsel %vm4874, %v4745, -inf
    %v5765 = vrot.slane %v5764, 4
    %v5766 = vmax.f32 %v5764, %v5765
    %v5767 = vrot.slane %v5766, 2
    %v5768 = vmax.f32 %v5766, %v5767
    %v5769 = vrot.slane %v5768, 1
    %v5770 = vmax.f32 %v5768, %v5769
    %5771 = vst.msk [vmem:[#allocation3] sm:$0xff] %vm4073, 0.0
    %5772 = vst.msk [vmem:[#allocation3 + $0x8] sm:$0x3] %vm4874, 0.0
    %5773 = vst.msk [vmem:[#allocation3 + $0x10] sm:$0xff] %vm4073, 0.0
    %5774 = vst.msk [vmem:[#allocation3 + $0x18] sm:$0x3] %vm4874, 0.0
    %5775 = vst.msk [vmem:[#allocation3 + $0x20] sm:$0xff] %vm4073, 0.0
    %5776 = vst.msk [vmem:[#allocation3 + $0x28] sm:$0x3] %vm4874, 0.0
    %5777 = vst.msk [vmem:[#allocation3 + $0x30] sm:$0xff] %vm4073, 0.0
    %5778 = vst.msk [vmem:[#allocation3 + $0x38] sm:$0x3] %vm4874, 0.0
    %5779 = vst.msk [vmem:[#allocation3 + $0x40] sm:$0xff] %vm4073, 0.0
    %5780 = vst.msk [vmem:[#allocation3 + $0x48] sm:$0x3] %vm4874, 0.0
    %5781 = vst.msk [vmem:[#allocation3 + $0x50] sm:$0xff] %vm4073, 0.0
    %5782 = vst.msk [vmem:[#allocation3 + $0x58] sm:$0x3] %vm4874, 0.0
    %5783 = vst.msk [vmem:[#allocation3 + $0x60] sm:$0xff] %vm4073, 0.0
    %5784 = vst.msk [vmem:[#allocation3 + $0x68] sm:$0x3] %vm4874, 0.0
    %5785 = vst.msk [vmem:[#allocation3 + $0x70] sm:$0xff] %vm4073, 0.0
    %5786 = vst.msk [vmem:[#allocation3 + $0x78] sm:$0x3] %vm4874, 0.0
    %5787 = vst.msk [vmem:[#allocation3 + $0x80] sm:$0xff] %vm4073, 0.0
    %5788 = vst.msk [vmem:[#allocation3 + $0x88] sm:$0x3] %vm4874, 0.0
    %5789 = vst.msk [vmem:[#allocation3 + $0x90] sm:$0xff] %vm4073, 0.0
    %5790 = vst.msk [vmem:[#allocation3 + $0x98] sm:$0x3] %vm4874, 0.0
    %5791 = vst.msk [vmem:[#allocation3 + $0xa0] sm:$0xff] %vm4073, 0.0
    %5792 = vst.msk [vmem:[#allocation3 + $0xa8] sm:$0x3] %vm4874, 0.0
    %5793 = vst.msk [vmem:[#allocation3 + $0xb0] sm:$0xff] %vm4073, 0.0
    %5794 = vst.msk [vmem:[#allocation3 + $0xb8] sm:$0x3] %vm4874, 0.0
    %5795 = vst.msk [vmem:[#allocation3 + $0xc0] sm:$0xff] %vm4073, 0.0
    %5796 = vst.msk [vmem:[#allocation3 + $0xc8] sm:$0x3] %vm4874, 0.0
    %5797 = vst.msk [vmem:[#allocation3 + $0xd0] sm:$0xff] %vm4073, 0.0
    %5798 = vst.msk [vmem:[#allocation3 + $0xd8] sm:$0x3] %vm4874, 0.0
    %5799 = vst.msk [vmem:[#allocation3 + $0xe0] sm:$0xff] %vm4073, 0.0
    %5800 = vst.msk [vmem:[#allocation3 + $0xe8] sm:$0x3] %vm4874, 0.0
    %5801 = vst.msk [vmem:[#allocation3 + $0xf0] sm:$0xff] %vm4073, 0.0
    %5802 = vst.msk [vmem:[#allocation3 + $0xf8] sm:$0x3] %vm4874, 0.0
    %5803 = vst.msk [vmem:[#allocation3 + $0x100] sm:$0xff] %vm4073, 0.0
    %5804 = vst.msk [vmem:[#allocation3 + $0x108] sm:$0x3] %vm4874, 0.0
    %5805 = vst.msk [vmem:[#allocation3 + $0x110] sm:$0xff] %vm4073, 0.0
    %5806 = vst.msk [vmem:[#allocation3 + $0x118] sm:$0x3] %vm4874, 0.0
    %5807 = vst.msk [vmem:[#allocation3 + $0x120] sm:$0xff] %vm4073, 0.0
    %5808 = vst.msk [vmem:[#allocation3 + $0x128] sm:$0x3] %vm4874, 0.0
    %5809 = vst.msk [vmem:[#allocation3 + $0x130] sm:$0xff] %vm4073, 0.0
    %5810 = vst.msk [vmem:[#allocation3 + $0x138] sm:$0x3] %vm4874, 0.0
    %vm5939 = vcmask 1041409
    %v5940 = vsel %vm5939, %v4888, %v4881
    %vm5941 = vcmask 1042434
    %v5942 = vsel %vm5941, %v4895, %v5940
    %vm5943 = vcmask 1043459
    %v5944 = vsel %vm5943, %v4902, %v5942
    %vm5945 = vcmask 1044484
    %v5946 = vsel %vm5945, %v4909, %v5944
    %vm5947 = vcmask 1045509
    %v5948 = vsel %vm5947, %v4916, %v5946
    %vm5949 = vcmask 1046534
    %v5950 = vsel %vm5949, %v4923, %v5948
    %vm5951 = vcmask 1047559
    %v5952 = vsel %vm5951, %v4930, %v5950
    %v5953 = vsel %vm5939, %v4944, %v4937
    %v5954 = vsel %vm5941, %v4951, %v5953
    %v5955 = vsel %vm5943, %v4958, %v5954
    %v5956 = vsel %vm5945, %v4965, %v5955
    %v5957 = vsel %vm5947, %v4972, %v5956
    %v5958 = vsel %vm5949, %v4979, %v5957
    %v5959 = vsel %vm5951, %v4986, %v5958
    %v5960 = vsel %vm5939, %v5000, %v4993
    %v5961 = vsel %vm5941, %v5007, %v5960
    %v5962 = vsel %vm5943, %v5014, %v5961
    %v5963 = vsel %vm5945, %v5021, %v5962
    %v5964 = vsel %vm5947, %v5028, %v5963
    %v5965 = vsel %vm5949, %v5035, %v5964
    %v5966 = vsel %vm5951, %v5042, %v5965
    %v5967 = vsel %vm5939, %v5056, %v5049
    %v5968 = vsel %vm5941, %v5063, %v5967
    %v5969 = vsel %vm5943, %v5070, %v5968
    %v5970 = vsel %vm5945, %v5077, %v5969
    %v5971 = vsel %vm5947, %v5084, %v5970
    %v5972 = vsel %vm5949, %v5091, %v5971
    %v5973 = vsel %vm5951, %v5098, %v5972
    %v5974 = vsel %vm5939, %v5112, %v5105
    %v5975 = vsel %vm5941, %v5119, %v5974
    %v5976 = vsel %vm5943, %v5126, %v5975
    %v5977 = vsel %vm5945, %v5133, %v5976
    %v5978 = vsel %vm5947, %v5140, %v5977
    %v5979 = vsel %vm5949, %v5147, %v5978
    %v5980 = vsel %vm5951, %v5154, %v5979
    %v5981 = vsel %vm5939, %v5168, %v5161
    %v5982 = vsel %vm5941, %v5175, %v5981
    %v5983 = vsel %vm5943, %v5182, %v5982
    %v5984 = vsel %vm5945, %v5189, %v5983
    %v5985 = vsel %vm5947, %v5196, %v5984
    %v5986 = vsel %vm5949, %v5203, %v5985
    %v5987 = vsel %vm5951, %v5210, %v5986
    %v5988 = vsel %vm5939, %v5224, %v5217
    %v5989 = vsel %vm5941, %v5231, %v5988
    %v5990 = vsel %vm5943, %v5238, %v5989
    %v5991 = vsel %vm5945, %v5245, %v5990
    %v5992 = vsel %vm5947, %v5252, %v5991
    %v5993 = vsel %vm5949, %v5259, %v5992
    %v5994 = vsel %vm5951, %v5266, %v5993
    %v5995 = vsel %vm5939, %v5280, %v5273
    %v5996 = vsel %vm5941, %v5287, %v5995
    %v5997 = vsel %vm5943, %v5294, %v5996
    %v5998 = vsel %vm5945, %v5301, %v5997
    %v5999 = vsel %vm5947, %v5308, %v5998
    %v6000 = vsel %vm5949, %v5315, %v5999
    %v6001 = vsel %vm5951, %v5322, %v6000
    %v6002 = vsel %vm5939, %v5336, %v5329
    %v6003 = vsel %vm5941, %v5343, %v6002
    %v6004 = vsel %vm5943, %v5350, %v6003
    %v6005 = vsel %vm5945, %v5357, %v6004
    %v6006 = vsel %vm5947, %v5364, %v6005
    %v6007 = vsel %vm5949, %v5371, %v6006
    %v6008 = vsel %vm5951, %v5378, %v6007
    %v6009 = vsel %vm5939, %v5392, %v5385
    %v6010 = vsel %vm5941, %v5399, %v6009
    %v6011 = vsel %vm5943, %v5406, %v6010
    %v6012 = vsel %vm5945, %v5413, %v6011
    %v6013 = vsel %vm5947, %v5420, %v6012
    %v6014 = vsel %vm5949, %v5427, %v6013
    %v6015 = vsel %vm5951, %v5434, %v6014
    %v6016 = vsel %vm5939, %v5448, %v5441
    %v6017 = vsel %vm5941, %v5455, %v6016
    %v6018 = vsel %vm5943, %v5462, %v6017
    %v6019 = vsel %vm5945, %v5469, %v6018
    %v6020 = vsel %vm5947, %v5476, %v6019
    %v6021 = vsel %vm5949, %v5483, %v6020
    %v6022 = vsel %vm5951, %v5490, %v6021
    %v6023 = vsel %vm5939, %v5504, %v5497
    %v6024 = vsel %vm5941, %v5511, %v6023
    %v6025 = vsel %vm5943, %v5518, %v6024
    %v6026 = vsel %vm5945, %v5525, %v6025
    %v6027 = vsel %vm5947, %v5532, %v6026
    %v6028 = vsel %vm5949, %v5539, %v6027
    %v6029 = vsel %vm5951, %v5546, %v6028
    %v6030 = vsel %vm5939, %v5560, %v5553
    %v6031 = vsel %vm5941, %v5567, %v6030
    %v6032 = vsel %vm5943, %v5574, %v6031
    %v6033 = vsel %vm5945, %v5581, %v6032
    %v6034 = vsel %vm5947, %v5588, %v6033
    %v6035 = vsel %vm5949, %v5595, %v6034
    %v6036 = vsel %vm5951, %v5602, %v6035
    %v6037 = vsel %vm5939, %v5616, %v5609
    %v6038 = vsel %vm5941, %v5623, %v6037
    %v6039 = vsel %vm5943, %v5630, %v6038
    %v6040 = vsel %vm5945, %v5637, %v6039
    %v6041 = vsel %vm5947, %v5644, %v6040
    %v6042 = vsel %vm5949, %v5651, %v6041
    %v6043 = vsel %vm5951, %v5658, %v6042
    %v6044 = vsel %vm5939, %v5672, %v5665
    %v6045 = vsel %vm5941, %v5679, %v6044
    %v6046 = vsel %vm5943, %v5686, %v6045
    %v6047 = vsel %vm5945, %v5693, %v6046
    %v6048 = vsel %vm5947, %v5700, %v6047
    %v6049 = vsel %vm5949, %v5707, %v6048
    %v6050 = vsel %vm5951, %v5714, %v6049
    %v6051 = vsel %vm5939, %v5728, %v5721
    %v6052 = vsel %vm5941, %v5735, %v6051
    %v6053 = vsel %vm5943, %v5742, %v6052
    %v6054 = vsel %vm5945, %v5749, %v6053
    %v6055 = vsel %vm5947, %v5756, %v6054
    %v6056 = vsel %vm5949, %v5763, %v6055
    %v6057 = vsel %vm5951, %v5770, %v6056
    %s6074 = scalar_lea.vmem [#allocation3], 16
    %6075 = vst.msk [vmem:[%s6074 + $0x1] sm:$0xff] %vm4073, %v5952
    %6076 = vst.msk [vmem:[%s6074 + $0x11] sm:$0xff] %vm4073, %v5959
    %6077 = vst.msk [vmem:[%s6074 + $0x21] sm:$0xff] %vm4073, %v5966
    %6078 = vst.msk [vmem:[%s6074 + $0x31] sm:$0xff] %vm4073, %v5973
    %6079 = vst.msk [vmem:[%s6074 + $0x41] sm:$0xff] %vm4073, %v5980
    %6080 = vst.msk [vmem:[%s6074 + $0x51] sm:$0xff] %vm4073, %v5987
    %6081 = vst.msk [vmem:[%s6074 + $0x61] sm:$0xff] %vm4073, %v5994
    %6082 = vst.msk [vmem:[%s6074 + $0x71] sm:$0xff] %vm4073, %v6001
    %6083 = vst.msk [vmem:[%s6074 + $0xa1] sm:$0xff] %vm4073, %v6008
    %6084 = vst.msk [vmem:[%s6074 + $0xb1] sm:$0xff] %vm4073, %v6015
    %6085 = vst.msk [vmem:[%s6074 + $0xc1] sm:$0xff] %vm4073, %v6022
    %6086 = vst.msk [vmem:[%s6074 + $0xd1] sm:$0xff] %vm4073, %v6029
    %6087 = vst.msk [vmem:[%s6074 + $0xe1] sm:$0xff] %vm4073, %v6036
    %6088 = vst.msk [vmem:[%s6074 + $0xf1] sm:$0xff] %vm4073, %v6043
    %6089 = vst.msk [vmem:[%s6074 + $0x101] sm:$0xff] %vm4073, %v6050
    %6090 = vst.msk [vmem:[%s6074 + $0x111] sm:$0xff] %vm4073, %v6057
    %v6091 = vld [vmem:[#allocation3] sm:$0xff]
    %v6092 = vld [vmem:[#allocation3 + $0x10] sm:$0xff]
    %v6093 = vld [vmem:[#allocation3 + $0x20] sm:$0xff]
    %v6094 = vld [vmem:[#allocation3 + $0x30] sm:$0xff]
    %v6095 = vld [vmem:[#allocation3 + $0x40] sm:$0xff]
    %v6096 = vld [vmem:[#allocation3 + $0x50] sm:$0xff]
    %v6097 = vld [vmem:[#allocation3 + $0x60] sm:$0xff]
    %v6098 = vld [vmem:[#allocation3 + $0x70] sm:$0xff]
    %v6099 = vld [vmem:[#allocation3 + $0xa0] sm:$0xff]
    %v6100 = vld [vmem:[#allocation3 + $0xb0] sm:$0xff]
    %v6101 = vld [vmem:[#allocation3 + $0xc0] sm:$0xff]
    %v6102 = vld [vmem:[#allocation3 + $0xd0] sm:$0xff]
    %v6103 = vld [vmem:[#allocation3 + $0xe0] sm:$0xff]
    %v6104 = vld [vmem:[#allocation3 + $0xf0] sm:$0xff]
    %v6105 = vld [vmem:[#allocation3 + $0x100] sm:$0xff]
    %v6106 = vld [vmem:[#allocation3 + $0x110] sm:$0xff]
    %v6107 = vld [vmem:[#allocation3 + $0x1] sm:$0xff]
    %v6108 = vld [vmem:[#allocation3 + $0x11] sm:$0xff]
    %v6109 = vld [vmem:[#allocation3 + $0x21] sm:$0xff]
    %v6110 = vld [vmem:[#allocation3 + $0x31] sm:$0xff]
    %v6111 = vld [vmem:[#allocation3 + $0x41] sm:$0xff]
    %v6112 = vld [vmem:[#allocation3 + $0x51] sm:$0xff]
    %v6113 = vld [vmem:[#allocation3 + $0x61] sm:$0xff]
    %v6114 = vld [vmem:[#allocation3 + $0x71] sm:$0xff]
    %v6115 = vld [vmem:[#allocation3 + $0xa1] sm:$0xff]
    %v6116 = vld [vmem:[#allocation3 + $0xb1] sm:$0xff]
    %v6117 = vld [vmem:[#allocation3 + $0xc1] sm:$0xff]
    %v6118 = vld [vmem:[#allocation3 + $0xd1] sm:$0xff]
    %v6119 = vld [vmem:[#allocation3 + $0xe1] sm:$0xff]
    %v6120 = vld [vmem:[#allocation3 + $0xf1] sm:$0xff]
    %v6121 = vld [vmem:[#allocation3 + $0x101] sm:$0xff]
    %v6122 = vld [vmem:[#allocation3 + $0x111] sm:$0xff]
    %v6123 = vld [vmem:[#allocation3 + $0x2] sm:$0xff]
    %v6124 = vld [vmem:[#allocation3 + $0x12] sm:$0xff]
    %v6125 = vld [vmem:[#allocation3 + $0x22] sm:$0xff]
    %v6126 = vld [vmem:[#allocation3 + $0x32] sm:$0xff]
    %v6127 = vld [vmem:[#allocation3 + $0x42] sm:$0xff]
    %v6128 = vld [vmem:[#allocation3 + $0x52] sm:$0xff]
    %v6129 = vld [vmem:[#allocation3 + $0x62] sm:$0xff]
    %v6130 = vld [vmem:[#allocation3 + $0x72] sm:$0xff]
    %v6131 = vld [vmem:[#allocation3 + $0xa2] sm:$0xff]
    %v6132 = vld [vmem:[#allocation3 + $0xb2] sm:$0xff]
    %v6133 = vld [vmem:[#allocation3 + $0xc2] sm:$0xff]
    %v6134 = vld [vmem:[#allocation3 + $0xd2] sm:$0xff]
    %v6135 = vld [vmem:[#allocation3 + $0xe2] sm:$0xff]
    %v6136 = vld [vmem:[#allocation3 + $0xf2] sm:$0xff]
    %v6137 = vld [vmem:[#allocation3 + $0x102] sm:$0xff]
    %v6138 = vld [vmem:[#allocation3 + $0x112] sm:$0xff]
    %v6139 = vld [vmem:[%s6074] sm:$0xff]
    %v6140 = vld [vmem:[%s6074 + $0x10] sm:$0xff]
    %v6141 = vld [vmem:[%s6074 + $0x20] sm:$0xff]
    %v6142 = vld [vmem:[%s6074 + $0x30] sm:$0xff]
    %v6143 = vld [vmem:[%s6074 + $0x40] sm:$0xff]
    %v6144 = vld [vmem:[%s6074 + $0x50] sm:$0xff]
    %v6145 = vld [vmem:[%s6074 + $0x60] sm:$0xff]
    %v6146 = vld [vmem:[%s6074 + $0x70] sm:$0xff]
    %v6147 = vld [vmem:[%s6074 + $0xa0] sm:$0xff]
    %v6148 = vld [vmem:[%s6074 + $0xb0] sm:$0xff]
    %v6149 = vld [vmem:[%s6074 + $0xc0] sm:$0xff]
    %v6150 = vld [vmem:[%s6074 + $0xd0] sm:$0xff]
    %v6151 = vld [vmem:[%s6074 + $0xe0] sm:$0xff]
    %v6152 = vld [vmem:[%s6074 + $0xf0] sm:$0xff]
    %v6153 = vld [vmem:[%s6074 + $0x100] sm:$0xff]
    %v6154 = vld [vmem:[%s6074 + $0x110] sm:$0xff]
    %v6155 = vld [vmem:[%s6074 + $0x1] sm:$0xff]
    %v6156 = vld [vmem:[%s6074 + $0x11] sm:$0xff]
    %v6157 = vld [vmem:[%s6074 + $0x21] sm:$0xff]
    %v6158 = vld [vmem:[%s6074 + $0x31] sm:$0xff]
    %v6159 = vld [vmem:[%s6074 + $0x41] sm:$0xff]
    %v6160 = vld [vmem:[%s6074 + $0x51] sm:$0xff]
    %v6161 = vld [vmem:[%s6074 + $0x61] sm:$0xff]
    %v6162 = vld [vmem:[%s6074 + $0x71] sm:$0xff]
    %v6163 = vld [vmem:[%s6074 + $0xa1] sm:$0xff]
    %v6164 = vld [vmem:[%s6074 + $0xb1] sm:$0xff]
    %v6165 = vld [vmem:[%s6074 + $0xc1] sm:$0xff]
    %v6166 = vld [vmem:[%s6074 + $0xd1] sm:$0xff]
    %v6167 = vld [vmem:[%s6074 + $0xe1] sm:$0xff]
    %v6168 = vld [vmem:[%s6074 + $0xf1] sm:$0xff]
    %v6169 = vld [vmem:[%s6074 + $0x101] sm:$0xff]
    %v6170 = vld [vmem:[%s6074 + $0x111] sm:$0xff]
    %v6171 = vld [vmem:[%s6074 + $0x2] sm:$0xff]
    %v6172 = vld [vmem:[%s6074 + $0x12] sm:$0xff]
    %v6173 = vld [vmem:[%s6074 + $0x22] sm:$0xff]
    %v6174 = vld [vmem:[%s6074 + $0x32] sm:$0xff]
    %v6175 = vld [vmem:[%s6074 + $0x42] sm:$0xff]
    %v6176 = vld [vmem:[%s6074 + $0x52] sm:$0xff]
    %v6177 = vld [vmem:[%s6074 + $0x62] sm:$0xff]
    %v6178 = vld [vmem:[%s6074 + $0x72] sm:$0xff]
    %v6179 = vld [vmem:[%s6074 + $0xa2] sm:$0xff]
    %v6180 = vld [vmem:[%s6074 + $0xb2] sm:$0xff]
    %v6181 = vld [vmem:[%s6074 + $0xc2] sm:$0xff]
    %v6182 = vld [vmem:[%s6074 + $0xd2] sm:$0xff]
    %v6183 = vld [vmem:[%s6074 + $0xe2] sm:$0xff]
    %v6184 = vld [vmem:[%s6074 + $0xf2] sm:$0xff]
    %v6185 = vld [vmem:[%s6074 + $0x102] sm:$0xff]
    %v6186 = vld [vmem:[%s6074 + $0x112] sm:$0xff]
    %s6187 = scalar_lea.vmem [#allocation3], 32
    %v6188 = vld [vmem:[%s6187] sm:$0xff]
    %v6189 = vld [vmem:[%s6187 + $0x10] sm:$0xff]
    %v6190 = vld [vmem:[%s6187 + $0x20] sm:$0xff]
    %v6191 = vld [vmem:[%s6187 + $0x30] sm:$0xff]
    %v6192 = vld [vmem:[%s6187 + $0x40] sm:$0xff]
    %v6193 = vld [vmem:[%s6187 + $0x50] sm:$0xff]
    %v6194 = vld [vmem:[%s6187 + $0x60] sm:$0xff]
    %v6195 = vld [vmem:[%s6187 + $0x70] sm:$0xff]
    %v6196 = vld [vmem:[%s6187 + $0xa0] sm:$0xff]
    %v6197 = vld [vmem:[%s6187 + $0xb0] sm:$0xff]
    %v6198 = vld [vmem:[%s6187 + $0xc0] sm:$0xff]
    %v6199 = vld [vmem:[%s6187 + $0xd0] sm:$0xff]
    %v6200 = vld [vmem:[%s6187 + $0xe0] sm:$0xff]
    %v6201 = vld [vmem:[%s6187 + $0xf0] sm:$0xff]
    %v6202 = vld [vmem:[%s6187 + $0x100] sm:$0xff]
    %v6203 = vld [vmem:[%s6187 + $0x110] sm:$0xff]
    %v6204 = vld [vmem:[%s6187 + $0x1] sm:$0xff]
    %v6205 = vld [vmem:[%s6187 + $0x11] sm:$0xff]
    %v6206 = vld [vmem:[%s6187 + $0x21] sm:$0xff]
    %v6207 = vld [vmem:[%s6187 + $0x31] sm:$0xff]
    %v6208 = vld [vmem:[%s6187 + $0x41] sm:$0xff]
    %v6209 = vld [vmem:[%s6187 + $0x51] sm:$0xff]
    %v6210 = vld [vmem:[%s6187 + $0x61] sm:$0xff]
    %v6211 = vld [vmem:[%s6187 + $0x71] sm:$0xff]
    %v6212 = vld [vmem:[%s6187 + $0xa1] sm:$0xff]
    %v6213 = vld [vmem:[%s6187 + $0xb1] sm:$0xff]
    %v6214 = vld [vmem:[%s6187 + $0xc1] sm:$0xff]
    %v6215 = vld [vmem:[%s6187 + $0xd1] sm:$0xff]
    %v6216 = vld [vmem:[%s6187 + $0xe1] sm:$0xff]
    %v6217 = vld [vmem:[%s6187 + $0xf1] sm:$0xff]
    %v6218 = vld [vmem:[%s6187 + $0x101] sm:$0xff]
    %v6219 = vld [vmem:[%s6187 + $0x111] sm:$0xff]
    %v6220 = vld [vmem:[%s6187 + $0x2] sm:$0xff]
    %v6221 = vld [vmem:[%s6187 + $0x12] sm:$0xff]
    %v6222 = vld [vmem:[%s6187 + $0x22] sm:$0xff]
    %v6223 = vld [vmem:[%s6187 + $0x32] sm:$0xff]
    %v6224 = vld [vmem:[%s6187 + $0x42] sm:$0xff]
    %v6225 = vld [vmem:[%s6187 + $0x52] sm:$0xff]
    %v6226 = vld [vmem:[%s6187 + $0x62] sm:$0xff]
    %v6227 = vld [vmem:[%s6187 + $0x72] sm:$0xff]
    %v6228 = vld [vmem:[%s6187 + $0xa2] sm:$0xff]
    %v6229 = vld [vmem:[%s6187 + $0xb2] sm:$0xff]
    %v6230 = vld [vmem:[%s6187 + $0xc2] sm:$0xff]
    %v6231 = vld [vmem:[%s6187 + $0xd2] sm:$0xff]
    %v6232 = vld [vmem:[%s6187 + $0xe2] sm:$0xff]
    %v6233 = vld [vmem:[%s6187 + $0xf2] sm:$0xff]
    %v6234 = vld [vmem:[%s6187 + $0x102] sm:$0xff]
    %v6235 = vld [vmem:[%s6187 + $0x112] sm:$0xff]
    %6252 = vrot.lane.b32.xlu0 %v6107, 32
    %v6253 = vpop.permute.xlu0 %6252
    %6254 = vrot.lane.b32.xlu0 %v6108, 32
    %v6255 = vpop.permute.xlu0 %6254
    %6256 = vrot.lane.b32.xlu0 %v6109, 32
    %v6257 = vpop.permute.xlu0 %6256
    %6258 = vrot.lane.b32.xlu0 %v6110, 32
    %v6259 = vpop.permute.xlu0 %6258
    %6260 = vrot.lane.b32.xlu0 %v6111, 32
    %v6261 = vpop.permute.xlu0 %6260
    %6262 = vrot.lane.b32.xlu0 %v6112, 32
    %v6263 = vpop.permute.xlu0 %6262
    %6264 = vrot.lane.b32.xlu0 %v6113, 32
    %v6265 = vpop.permute.xlu0 %6264
    %6266 = vrot.lane.b32.xlu0 %v6114, 32
    %v6267 = vpop.permute.xlu0 %6266
    %6268 = vrot.lane.b32.xlu0 %v6115, 32
    %v6269 = vpop.permute.xlu0 %6268
    %6270 = vrot.lane.b32.xlu0 %v6116, 32
    %v6271 = vpop.permute.xlu0 %6270
    %6272 = vrot.lane.b32.xlu0 %v6117, 32
    %v6273 = vpop.permute.xlu0 %6272
    %6274 = vrot.lane.b32.xlu0 %v6118, 32
    %v6275 = vpop.permute.xlu0 %6274
    %6276 = vrot.lane.b32.xlu0 %v6119, 32
    %v6277 = vpop.permute.xlu0 %6276
    %6278 = vrot.lane.b32.xlu0 %v6120, 32
    %v6279 = vpop.permute.xlu0 %6278
    %6280 = vrot.lane.b32.xlu0 %v6121, 32
    %v6281 = vpop.permute.xlu0 %6280
    %6282 = vrot.lane.b32.xlu0 %v6122, 32
    %v6283 = vpop.permute.xlu0 %6282
    %6316 = vrot.lane.b32.xlu0 %v6123, 64
    %v6317 = vpop.permute.xlu0 %6316
    %6318 = vrot.lane.b32.xlu0 %v6124, 64
    %v6319 = vpop.permute.xlu0 %6318
    %6320 = vrot.lane.b32.xlu0 %v6125, 64
    %v6321 = vpop.permute.xlu0 %6320
    %6322 = vrot.lane.b32.xlu0 %v6126, 64
    %v6323 = vpop.permute.xlu0 %6322
    %6324 = vrot.lane.b32.xlu0 %v6127, 64
    %v6325 = vpop.permute.xlu0 %6324
    %6326 = vrot.lane.b32.xlu0 %v6128, 64
    %v6327 = vpop.permute.xlu0 %6326
    %6328 = vrot.lane.b32.xlu0 %v6129, 64
    %v6329 = vpop.permute.xlu0 %6328
    %6330 = vrot.lane.b32.xlu0 %v6130, 64
    %v6331 = vpop.permute.xlu0 %6330
    %6332 = vrot.lane.b32.xlu0 %v6131, 64
    %v6333 = vpop.permute.xlu0 %6332
    %6334 = vrot.lane.b32.xlu0 %v6132, 64
    %v6335 = vpop.permute.xlu0 %6334
    %6336 = vrot.lane.b32.xlu0 %v6133, 64
    %v6337 = vpop.permute.xlu0 %6336
    %6338 = vrot.lane.b32.xlu0 %v6134, 64
    %v6339 = vpop.permute.xlu0 %6338
    %6340 = vrot.lane.b32.xlu0 %v6135, 64
    %v6341 = vpop.permute.xlu0 %6340
    %6342 = vrot.lane.b32.xlu0 %v6136, 64
    %v6343 = vpop.permute.xlu0 %6342
    %6344 = vrot.lane.b32.xlu0 %v6137, 64
    %v6345 = vpop.permute.xlu0 %6344
    %6346 = vrot.lane.b32.xlu0 %v6138, 64
    %v6347 = vpop.permute.xlu0 %6346
    %6380 = vrot.lane.b32.xlu0 %v6139, 96
    %v6381 = vpop.permute.xlu0 %6380
    %6382 = vrot.lane.b32.xlu0 %v6140, 96
    %v6383 = vpop.permute.xlu0 %6382
    %6384 = vrot.lane.b32.xlu0 %v6141, 96
    %v6385 = vpop.permute.xlu0 %6384
    %6386 = vrot.lane.b32.xlu0 %v6142, 96
    %v6387 = vpop.permute.xlu0 %6386
    %6388 = vrot.lane.b32.xlu0 %v6143, 96
    %v6389 = vpop.permute.xlu0 %6388
    %6390 = vrot.lane.b32.xlu0 %v6144, 96
    %v6391 = vpop.permute.xlu0 %6390
    %6392 = vrot.lane.b32.xlu0 %v6145, 96
    %v6393 = vpop.permute.xlu0 %6392
    %6394 = vrot.lane.b32.xlu0 %v6146, 96
    %v6395 = vpop.permute.xlu0 %6394
    %6396 = vrot.lane.b32.xlu0 %v6147, 96
    %v6397 = vpop.permute.xlu0 %6396
    %6398 = vrot.lane.b32.xlu0 %v6148, 96
    %v6399 = vpop.permute.xlu0 %6398
    %6400 = vrot.lane.b32.xlu0 %v6149, 96
    %v6401 = vpop.permute.xlu0 %6400
    %6402 = vrot.lane.b32.xlu0 %v6150, 96
    %v6403 = vpop.permute.xlu0 %6402
    %6404 = vrot.lane.b32.xlu0 %v6151, 96
    %v6405 = vpop.permute.xlu0 %6404
    %6406 = vrot.lane.b32.xlu0 %v6152, 96
    %v6407 = vpop.permute.xlu0 %6406
    %6408 = vrot.lane.b32.xlu0 %v6153, 96
    %v6409 = vpop.permute.xlu0 %6408
    %6410 = vrot.lane.b32.xlu0 %v6154, 96
    %v6411 = vpop.permute.xlu0 %6410
    %6444 = vrot.lane.b32.xlu0 %v6171, 32
    %v6445 = vpop.permute.xlu0 %6444
    %6446 = vrot.lane.b32.xlu0 %v6172, 32
    %v6447 = vpop.permute.xlu0 %6446
    %6448 = vrot.lane.b32.xlu0 %v6173, 32
    %v6449 = vpop.permute.xlu0 %6448
    %6450 = vrot.lane.b32.xlu0 %v6174, 32
    %v6451 = vpop.permute.xlu0 %6450
    %6452 = vrot.lane.b32.xlu0 %v6175, 32
    %v6453 = vpop.permute.xlu0 %6452
    %6454 = vrot.lane.b32.xlu0 %v6176, 32
    %v6455 = vpop.permute.xlu0 %6454
    %6456 = vrot.lane.b32.xlu0 %v6177, 32
    %v6457 = vpop.permute.xlu0 %6456
    %6458 = vrot.lane.b32.xlu0 %v6178, 32
    %v6459 = vpop.permute.xlu0 %6458
    %6460 = vrot.lane.b32.xlu0 %v6179, 32
    %v6461 = vpop.permute.xlu0 %6460
    %6462 = vrot.lane.b32.xlu0 %v6180, 32
    %v6463 = vpop.permute.xlu0 %6462
    %6464 = vrot.lane.b32.xlu0 %v6181, 32
    %v6465 = vpop.permute.xlu0 %6464
    %6466 = vrot.lane.b32.xlu0 %v6182, 32
    %v6467 = vpop.permute.xlu0 %6466
    %6468 = vrot.lane.b32.xlu0 %v6183, 32
    %v6469 = vpop.permute.xlu0 %6468
    %6470 = vrot.lane.b32.xlu0 %v6184, 32
    %v6471 = vpop.permute.xlu0 %6470
    %6472 = vrot.lane.b32.xlu0 %v6185, 32
    %v6473 = vpop.permute.xlu0 %6472
    %6474 = vrot.lane.b32.xlu0 %v6186, 32
    %v6475 = vpop.permute.xlu0 %6474
    %6508 = vrot.lane.b32.xlu0 %v6188, 64
    %v6509 = vpop.permute.xlu0 %6508
    %6510 = vrot.lane.b32.xlu0 %v6189, 64
    %v6511 = vpop.permute.xlu0 %6510
    %6512 = vrot.lane.b32.xlu0 %v6190, 64
    %v6513 = vpop.permute.xlu0 %6512
    %6514 = vrot.lane.b32.xlu0 %v6191, 64
    %v6515 = vpop.permute.xlu0 %6514
    %6516 = vrot.lane.b32.xlu0 %v6192, 64
    %v6517 = vpop.permute.xlu0 %6516
    %6518 = vrot.lane.b32.xlu0 %v6193, 64
    %v6519 = vpop.permute.xlu0 %6518
    %6520 = vrot.lane.b32.xlu0 %v6194, 64
    %v6521 = vpop.permute.xlu0 %6520
    %6522 = vrot.lane.b32.xlu0 %v6195, 64
    %v6523 = vpop.permute.xlu0 %6522
    %6524 = vrot.lane.b32.xlu0 %v6196, 64
    %v6525 = vpop.permute.xlu0 %6524
    %6526 = vrot.lane.b32.xlu0 %v6197, 64
    %v6527 = vpop.permute.xlu0 %6526
    %6528 = vrot.lane.b32.xlu0 %v6198, 64
    %v6529 = vpop.permute.xlu0 %6528
    %6530 = vrot.lane.b32.xlu0 %v6199, 64
    %v6531 = vpop.permute.xlu0 %6530
    %6532 = vrot.lane.b32.xlu0 %v6200, 64
    %v6533 = vpop.permute.xlu0 %6532
    %6534 = vrot.lane.b32.xlu0 %v6201, 64
    %v6535 = vpop.permute.xlu0 %6534
    %6536 = vrot.lane.b32.xlu0 %v6202, 64
    %v6537 = vpop.permute.xlu0 %6536
    %6538 = vrot.lane.b32.xlu0 %v6203, 64
    %v6539 = vpop.permute.xlu0 %6538
    %6572 = vrot.lane.b32.xlu0 %v6204, 96
    %v6573 = vpop.permute.xlu0 %6572
    %6574 = vrot.lane.b32.xlu0 %v6205, 96
    %v6575 = vpop.permute.xlu0 %6574
    %6576 = vrot.lane.b32.xlu0 %v6206, 96
    %v6577 = vpop.permute.xlu0 %6576
    %6578 = vrot.lane.b32.xlu0 %v6207, 96
    %v6579 = vpop.permute.xlu0 %6578
    %6580 = vrot.lane.b32.xlu0 %v6208, 96
    %v6581 = vpop.permute.xlu0 %6580
    %6582 = vrot.lane.b32.xlu0 %v6209, 96
    %v6583 = vpop.permute.xlu0 %6582
    %6584 = vrot.lane.b32.xlu0 %v6210, 96
    %v6585 = vpop.permute.xlu0 %6584
    %6586 = vrot.lane.b32.xlu0 %v6211, 96
    %v6587 = vpop.permute.xlu0 %6586
    %6588 = vrot.lane.b32.xlu0 %v6212, 96
    %v6589 = vpop.permute.xlu0 %6588
    %6590 = vrot.lane.b32.xlu0 %v6213, 96
    %v6591 = vpop.permute.xlu0 %6590
    %6592 = vrot.lane.b32.xlu0 %v6214, 96
    %v6593 = vpop.permute.xlu0 %6592
    %6594 = vrot.lane.b32.xlu0 %v6215, 96
    %v6595 = vpop.permute.xlu0 %6594
    %6596 = vrot.lane.b32.xlu0 %v6216, 96
    %v6597 = vpop.permute.xlu0 %6596
    %6598 = vrot.lane.b32.xlu0 %v6217, 96
    %v6599 = vpop.permute.xlu0 %6598
    %6600 = vrot.lane.b32.xlu0 %v6218, 96
    %v6601 = vpop.permute.xlu0 %6600
    %6602 = vrot.lane.b32.xlu0 %v6219, 96
    %v6603 = vpop.permute.xlu0 %6602
    %v6620 = vsel %vm4073, %v6091, %v6253
    %v6621 = vsel %vm4073, %v6092, %v6255
    %v6622 = vsel %vm4073, %v6093, %v6257
    %v6623 = vsel %vm4073, %v6094, %v6259
    %v6624 = vsel %vm4073, %v6095, %v6261
    %v6625 = vsel %vm4073, %v6096, %v6263
    %v6626 = vsel %vm4073, %v6097, %v6265
    %v6627 = vsel %vm4073, %v6098, %v6267
    %v6628 = vsel %vm4073, %v6099, %v6269
    %v6629 = vsel %vm4073, %v6100, %v6271
    %v6630 = vsel %vm4073, %v6101, %v6273
    %v6631 = vsel %vm4073, %v6102, %v6275
    %v6632 = vsel %vm4073, %v6103, %v6277
    %v6633 = vsel %vm4073, %v6104, %v6279
    %v6634 = vsel %vm4073, %v6105, %v6281
    %v6635 = vsel %vm4073, %v6106, %v6283
    %vm6636 = vcmask 523264
    %v6637 = vsel %vm6636, %v6620, %v6317
    %v6638 = vsel %vm6636, %v6621, %v6319
    %v6639 = vsel %vm6636, %v6622, %v6321
    %v6640 = vsel %vm6636, %v6623, %v6323
    %v6641 = vsel %vm6636, %v6624, %v6325
    %v6642 = vsel %vm6636, %v6625, %v6327
    %v6643 = vsel %vm6636, %v6626, %v6329
    %v6644 = vsel %vm6636, %v6627, %v6331
    %v6645 = vsel %vm6636, %v6628, %v6333
    %v6646 = vsel %vm6636, %v6629, %v6335
    %v6647 = vsel %vm6636, %v6630, %v6337
    %v6648 = vsel %vm6636, %v6631, %v6339
    %v6649 = vsel %vm6636, %v6632, %v6341
    %v6650 = vsel %vm6636, %v6633, %v6343
    %v6651 = vsel %vm6636, %v6634, %v6345
    %v6652 = vsel %vm6636, %v6635, %v6347
    %vm6653 = vcmask 785408
    %v6654 = vsel %vm6653, %v6637, %v6381
    %v6655 = vsel %vm6653, %v6638, %v6383
    %v6656 = vsel %vm6653, %v6639, %v6385
    %v6657 = vsel %vm6653, %v6640, %v6387
    %v6658 = vsel %vm6653, %v6641, %v6389
    %v6659 = vsel %vm6653, %v6642, %v6391
    %v6660 = vsel %vm6653, %v6643, %v6393
    %v6661 = vsel %vm6653, %v6644, %v6395
    %v6662 = vsel %vm6653, %v6645, %v6397
    %v6663 = vsel %vm6653, %v6646, %v6399
    %v6664 = vsel %vm6653, %v6647, %v6401
    %v6665 = vsel %vm6653, %v6648, %v6403
    %v6666 = vsel %vm6653, %v6649, %v6405
    %v6667 = vsel %vm6653, %v6650, %v6407
    %v6668 = vsel %vm6653, %v6651, %v6409
    %v6669 = vsel %vm6653, %v6652, %v6411
    %v6670 = vsel %vm4073, %v6155, %v6445
    %v6671 = vsel %vm4073, %v6156, %v6447
    %v6672 = vsel %vm4073, %v6157, %v6449
    %v6673 = vsel %vm4073, %v6158, %v6451
    %v6674 = vsel %vm4073, %v6159, %v6453
    %v6675 = vsel %vm4073, %v6160, %v6455
    %v6676 = vsel %vm4073, %v6161, %v6457
    %v6677 = vsel %vm4073, %v6162, %v6459
    %v6678 = vsel %vm4073, %v6163, %v6461
    %v6679 = vsel %vm4073, %v6164, %v6463
    %v6680 = vsel %vm4073, %v6165, %v6465
    %v6681 = vsel %vm4073, %v6166, %v6467
    %v6682 = vsel %vm4073, %v6167, %v6469
    %v6683 = vsel %vm4073, %v6168, %v6471
    %v6684 = vsel %vm4073, %v6169, %v6473
    %v6685 = vsel %vm4073, %v6170, %v6475
    %v6686 = vsel %vm6636, %v6670, %v6509
    %v6687 = vsel %vm6636, %v6671, %v6511
    %v6688 = vsel %vm6636, %v6672, %v6513
    %v6689 = vsel %vm6636, %v6673, %v6515
    %v6690 = vsel %vm6636, %v6674, %v6517
    %v6691 = vsel %vm6636, %v6675, %v6519
    %v6692 = vsel %vm6636, %v6676, %v6521
    %v6693 = vsel %vm6636, %v6677, %v6523
    %v6694 = vsel %vm6636, %v6678, %v6525
    %v6695 = vsel %vm6636, %v6679, %v6527
    %v6696 = vsel %vm6636, %v6680, %v6529
    %v6697 = vsel %vm6636, %v6681, %v6531
    %v6698 = vsel %vm6636, %v6682, %v6533
    %v6699 = vsel %vm6636, %v6683, %v6535
    %v6700 = vsel %vm6636, %v6684, %v6537
    %v6701 = vsel %vm6636, %v6685, %v6539
    %v6702 = vsel %vm6653, %v6686, %v6573
    %v6703 = vsel %vm6653, %v6687, %v6575
    %v6704 = vsel %vm6653, %v6688, %v6577
    %v6705 = vsel %vm6653, %v6689, %v6579
    %v6706 = vsel %vm6653, %v6690, %v6581
    %v6707 = vsel %vm6653, %v6691, %v6583
    %v6708 = vsel %vm6653, %v6692, %v6585
    %v6709 = vsel %vm6653, %v6693, %v6587
    %v6710 = vsel %vm6653, %v6694, %v6589
    %v6711 = vsel %vm6653, %v6695, %v6591
    %v6712 = vsel %vm6653, %v6696, %v6593
    %v6713 = vsel %vm6653, %v6697, %v6595
    %v6714 = vsel %vm6653, %v6698, %v6597
    %v6715 = vsel %vm6653, %v6699, %v6599
    %v6716 = vsel %vm6653, %v6700, %v6601
    %v6717 = vsel %vm6653, %v6701, %v6603
    %v6718 = vld [vmem:[%s3] sm:$0xff]
    %v6719 = vld [vmem:[%s3 + $0x8] sm:$0xff]
    %v6720 = vld [vmem:[%s3 + $0x10] sm:$0xff]
    %v6721 = vld [vmem:[%s3 + $0x18] sm:$0xff]
    %v6722 = vld [vmem:[%s3 + $0x20] sm:$0xff]
    %v6723 = vld [vmem:[%s3 + $0x28] sm:$0xff]
    %v6724 = vld [vmem:[%s3 + $0x30] sm:$0xff]
    %v6725 = vld [vmem:[%s3 + $0x38] sm:$0xff]
    %v6726 = vld [vmem:[%s3 + $0x40] sm:$0xff]
    %v6727 = vld [vmem:[%s3 + $0x48] sm:$0xff]
    %v6728 = vld [vmem:[%s3 + $0x50] sm:$0xff]
    %v6729 = vld [vmem:[%s3 + $0x58] sm:$0xff]
    %v6730 = vld [vmem:[%s3 + $0x60] sm:$0xff]
    %v6731 = vld [vmem:[%s3 + $0x68] sm:$0xff]
    %v6732 = vld [vmem:[%s3 + $0x70] sm:$0xff]
    %v6733 = vld [vmem:[%s3 + $0x78] sm:$0xff]
    %v6734 = vld [vmem:[%s3 + $0x80] sm:$0xff]
    %v6735 = vld [vmem:[%s3 + $0x88] sm:$0xff]
    %v6736 = vld [vmem:[%s3 + $0x90] sm:$0xff]
    %v6737 = vld [vmem:[%s3 + $0x98] sm:$0xff]
    %v6738 = vld [vmem:[%s3 + $0xa0] sm:$0xff]
    %v6739 = vld [vmem:[%s3 + $0xa8] sm:$0xff]
    %v6740 = vld [vmem:[%s3 + $0xb0] sm:$0xff]
    %v6741 = vld [vmem:[%s3 + $0xb8] sm:$0xff]
    %v6742 = vld [vmem:[%s3 + $0xc0] sm:$0xff]
    %v6743 = vld [vmem:[%s3 + $0xc8] sm:$0xff]
    %v6744 = vld [vmem:[%s3 + $0xd0] sm:$0xff]
    %v6745 = vld [vmem:[%s3 + $0xd8] sm:$0xff]
    %v6746 = vld [vmem:[%s3 + $0xe0] sm:$0xff]
    %v6747 = vld [vmem:[%s3 + $0xe8] sm:$0xff]
    %v6748 = vld [vmem:[%s3 + $0xf0] sm:$0xff]
    %v6749 = vld [vmem:[%s3 + $0xf8] sm:$0xff]
    %v6750 = vld [vmem:[%s3 + $0x100] sm:$0xff]
    %v6751 = vld [vmem:[%s3 + $0x108] sm:$0xff]
    %v6752 = vld [vmem:[%s3 + $0x110] sm:$0xff]
    %v6753 = vld [vmem:[%s3 + $0x118] sm:$0xff]
    %v6754 = vld [vmem:[%s4] sm:$0x1]
    %v6756 = vlaneseq
    %v6757 = vshrl.u32 %v6756, 7
    %v6758 = vsub.s32 0, %v6757
    %v6759 = vrot.slane %v6754, %v6758
    %v6762 = vsel %vm4073, %v6220, 0
    %v6765 = vsel %vm4073, %v6221, 0
    %v6768 = vsel %vm4073, %v6222, 0
    %v6771 = vsel %vm4073, %v6223, 0
    %v6774 = vsel %vm4073, %v6224, 0
    %v6777 = vsel %vm4073, %v6225, 0
    %v6780 = vsel %vm4073, %v6226, 0
    %v6783 = vsel %vm4073, %v6227, 0
    %v6786 = vsel %vm4073, %v6228, 0
    %v6789 = vsel %vm4073, %v6229, 0
    %v6792 = vsel %vm4073, %v6230, 0
    %v6795 = vsel %vm4073, %v6231, 0
    %v6798 = vsel %vm4073, %v6232, 0
    %v6801 = vsel %vm4073, %v6233, 0
    %v6804 = vsel %vm4073, %v6234, 0
    %v6807 = vsel %vm4073, %v6235, 0
    %6809 = vmatprep.subr.mxu0 0.0
    %6810 = vmatpush1.msra.mxu0 %v6733
    %6811 = vmatprep.subr.mxu0 0.0
    %6812 = vmatpush1.msra.mxu0 %v6732
    %6813 = vmatprep.subr.mxu0 0.0
    %6814 = vmatpush1.msra.mxu0 %v6731
    %6815 = vmatprep.subr.mxu0 0.0
    %6816 = vmatpush1.msra.mxu0 %v6730
    %6817 = vmatprep.subr.mxu0 0.0
    %6818 = vmatpush1.msra.mxu0 %v6729
    %6819 = vmatprep.subr.mxu0 0.0
    %6820 = vmatpush1.msra.mxu0 %v6728
    %6821 = vmatprep.subr.mxu0 0.0
    %6822 = vmatpush1.msra.mxu0 %v6727
    %6823 = vmatprep.subr.mxu0 0.0
    %6824 = vmatpush1.msra.mxu0 %v6726
    %6825 = vmatprep.subr.mxu0 0.0
    %6826 = vmatpush1.msra.mxu0 %v6725
    %6827 = vmatprep.subr.mxu0 0.0
    %6828 = vmatpush1.msra.mxu0 %v6724
    %6829 = vmatprep.subr.mxu0 0.0
    %6830 = vmatpush1.msra.mxu0 %v6723
    %6831 = vmatprep.subr.mxu0 0.0
    %6832 = vmatpush1.msra.mxu0 %v6722
    %6833 = vmatprep.subr.mxu0 0.0
    %6834 = vmatpush1.msra.mxu0 %v6721
    %6835 = vmatprep.subr.mxu0 0.0
    %6836 = vmatpush1.msra.mxu0 %v6720
    %6837 = vmatprep.subr.mxu0 0.0
    %6838 = vmatpush1.msra.mxu0 %v6719
    %6839 = vmatprep.subr.mxu0 0.0
    %6840 = vmatpush1.msra.mxu0 %v6718
    %6841 = vmatprep.subr.mxu0 0.0
    %6842 = vmatpush2.msra.mxu0 %v6749
    %6843 = vmatprep.subr.mxu0 0.0
    %6844 = vmatpush2.msra.mxu0 %v6748
    %6845 = vmatprep.subr.mxu0 0.0
    %6846 = vmatpush2.msra.mxu0 %v6747
    %6847 = vmatprep.subr.mxu0 0.0
    %6848 = vmatpush2.msra.mxu0 %v6746
    %6849 = vmatprep.subr.mxu0 0.0
    %6850 = vmatpush2.msra.mxu0 %v6745
    %6851 = vmatprep.subr.mxu0 0.0
    %6852 = vmatpush2.msra.mxu0 %v6744
    %6853 = vmatprep.subr.mxu0 0.0
    %6854 = vmatpush2.msra.mxu0 %v6743
    %6855 = vmatprep.subr.mxu0 0.0
    %6856 = vmatpush2.msra.mxu0 %v6742
    %6857 = vmatprep.subr.mxu0 0.0
    %6858 = vmatpush2.msra.mxu0 %v6741
    %6859 = vmatprep.subr.mxu0 0.0
    %6860 = vmatpush2.msra.mxu0 %v6740
    %6861 = vmatprep.subr.mxu0 0.0
    %6862 = vmatpush2.msra.mxu0 %v6739
    %6863 = vmatprep.subr.mxu0 0.0
    %6864 = vmatpush2.msra.mxu0 %v6738
    %6865 = vmatprep.subr.mxu0 0.0
    %6866 = vmatpush2.msra.mxu0 %v6737
    %6867 = vmatprep.subr.mxu0 0.0
    %6868 = vmatpush2.msra.mxu0 %v6736
    %6869 = vmatprep.subr.mxu0 0.0
    %6870 = vmatpush2.msra.mxu0 %v6735
    %6871 = vmatprep.subr.mxu0 0.0
    %6872 = vmatpush2.msra.mxu0 %v6734
    %6873 = vmatprep.mubr.f32.mxu0 %v6702
    %6874 = vmatmul.mubr.f32.gmra.mxu0 %v6654
    %v6875 = vpop.f32.mrf.mxu0
    %v6876 = vadd.f32 %v6759, %v6875
    %v6877 = vpop.f32.mrf.mxu0
    %6878 = vmatprep.mubr.f32.mxu0 %v6703
    %6879 = vmatmul.mubr.f32.gmra.mxu0 %v6655
    %v6880 = vpop.f32.mrf.mxu0
    %v6881 = vadd.f32 %v6759, %v6880
    %v6882 = vpop.f32.mrf.mxu0
    %6883 = vmatprep.mubr.f32.mxu0 %v6704
    %6884 = vmatmul.mubr.f32.gmra.mxu0 %v6656
    %v6885 = vpop.f32.mrf.mxu0
    %v6886 = vadd.f32 %v6759, %v6885
    %v6887 = vpop.f32.mrf.mxu0
    %6888 = vmatprep.mubr.f32.mxu0 %v6705
    %6889 = vmatmul.mubr.f32.gmra.mxu0 %v6657
    %v6890 = vpop.f32.mrf.mxu0
    %v6891 = vadd.f32 %v6759, %v6890
    %v6892 = vpop.f32.mrf.mxu0
    %6893 = vmatprep.mubr.f32.mxu0 %v6706
    %6894 = vmatmul.mubr.f32.gmra.mxu0 %v6658
    %v6895 = vpop.f32.mrf.mxu0
    %v6896 = vadd.f32 %v6759, %v6895
    %v6897 = vpop.f32.mrf.mxu0
    %6898 = vmatprep.mubr.f32.mxu0 %v6707
    %6899 = vmatmul.mubr.f32.gmra.mxu0 %v6659
    %v6900 = vpop.f32.mrf.mxu0
    %v6901 = vadd.f32 %v6759, %v6900
    %v6902 = vpop.f32.mrf.mxu0
    %6903 = vmatprep.mubr.f32.mxu0 %v6708
    %6904 = vmatmul.mubr.f32.gmra.mxu0 %v6660
    %v6905 = vpop.f32.mrf.mxu0
    %v6906 = vadd.f32 %v6759, %v6905
    %v6907 = vpop.f32.mrf.mxu0
    %6908 = vmatprep.mubr.f32.mxu0 %v6709
    %6909 = vmatmul.mubr.f32.gmra.mxu0 %v6661
    %v6910 = vpop.f32.mrf.mxu0
    %v6911 = vadd.f32 %v6759, %v6910
    %v6912 = vpop.f32.mrf.mxu0
    %6913 = vmatprep.mubr.f32.mxu0 %v6710
    %6914 = vmatmul.mubr.f32.gmra.mxu0 %v6662
    %v6915 = vpop.f32.mrf.mxu0
    %v6916 = vadd.f32 %v6759, %v6915
    %v6917 = vpop.f32.mrf.mxu0
    %6918 = vmatprep.mubr.f32.mxu0 %v6711
    %6919 = vmatmul.mubr.f32.gmra.mxu0 %v6663
    %v6920 = vpop.f32.mrf.mxu0
    %v6921 = vadd.f32 %v6759, %v6920
    %v6922 = vpop.f32.mrf.mxu0
    %6923 = vmatprep.mubr.f32.mxu0 %v6712
    %6924 = vmatmul.mubr.f32.gmra.mxu0 %v6664
    %v6925 = vpop.f32.mrf.mxu0
    %v6926 = vadd.f32 %v6759, %v6925
    %v6927 = vpop.f32.mrf.mxu0
    %6928 = vmatprep.mubr.f32.mxu0 %v6713
    %6929 = vmatmul.mubr.f32.gmra.mxu0 %v6665
    %v6930 = vpop.f32.mrf.mxu0
    %v6931 = vadd.f32 %v6759, %v6930
    %v6932 = vpop.f32.mrf.mxu0
    %6933 = vmatprep.mubr.f32.mxu0 %v6714
    %6934 = vmatmul.mubr.f32.gmra.mxu0 %v6666
    %v6935 = vpop.f32.mrf.mxu0
    %v6936 = vadd.f32 %v6759, %v6935
    %v6937 = vpop.f32.mrf.mxu0
    %6938 = vmatprep.mubr.f32.mxu0 %v6715
    %6939 = vmatmul.mubr.f32.gmra.mxu0 %v6667
    %v6940 = vpop.f32.mrf.mxu0
    %v6941 = vadd.f32 %v6759, %v6940
    %v6942 = vpop.f32.mrf.mxu0
    %6943 = vmatprep.mubr.f32.mxu0 %v6716
    %6944 = vmatmul.mubr.f32.gmra.mxu0 %v6668
    %v6945 = vpop.f32.mrf.mxu0
    %v6946 = vadd.f32 %v6759, %v6945
    %v6947 = vpop.f32.mrf.mxu0
    %6948 = vmatprep.mubr.f32.mxu0 %v6717
    %6949 = vmatmul.mubr.f32.gmra.mxu0 %v6669
    %v6950 = vpop.f32.mrf.mxu0
    %v6951 = vadd.f32 %v6759, %v6950
    %v6952 = vpop.f32.mrf.mxu0
    %6953 = vdwg.mxu0
    %6954 = vmatprep.subr.mxu0 0.0
    %6955 = vmatpush1.msra.mxu0 0.0
    %6956 = vmatprep.subr.mxu0 0.0
    %6957 = vmatpush1.msra.mxu0 0.0
    %6958 = vmatprep.subr.mxu0 0.0
    %6959 = vmatpush1.msra.mxu0 0.0
    %6960 = vmatprep.subr.mxu0 0.0
    %6961 = vmatpush1.msra.mxu0 0.0
    %6962 = vmatprep.subr.mxu0 0.0
    %6963 = vmatpush1.msra.mxu0 0.0
    %6964 = vmatprep.subr.mxu0 0.0
    %6965 = vmatpush1.msra.mxu0 0.0
    %6966 = vmatprep.subr.mxu0 0.0
    %6967 = vmatpush1.msra.mxu0 0.0
    %6968 = vmatprep.subr.mxu0 0.0
    %6969 = vmatpush1.msra.mxu0 0.0
    %6970 = vmatprep.subr.mxu0 0.0
    %6971 = vmatpush1.msra.mxu0 0.0
    %6972 = vmatprep.subr.mxu0 0.0
    %6973 = vmatpush1.msra.mxu0 0.0
    %6974 = vmatprep.subr.mxu0 0.0
    %6975 = vmatpush1.msra.mxu0 0.0
    %6976 = vmatprep.subr.mxu0 0.0
    %6977 = vmatpush1.msra.mxu0 0.0
    %6978 = vmatprep.subr.mxu0 0.0
    %6979 = vmatpush1.msra.mxu0 %v6753
    %6980 = vmatprep.subr.mxu0 0.0
    %6981 = vmatpush1.msra.mxu0 %v6752
    %6982 = vmatprep.subr.mxu0 0.0
    %6983 = vmatpush1.msra.mxu0 %v6751
    %6984 = vmatprep.subr.mxu0 0.0
    %6985 = vmatpush1.msra.mxu0 %v6750
    %6986 = vmatprep.subr.mxu0 0.0
    %6987 = vmatpush2.msra.mxu0 0.0
    %6988 = vmatprep.subr.mxu0 0.0
    %6989 = vmatpush2.msra.mxu0 0.0
    %6990 = vmatprep.subr.mxu0 0.0
    %6991 = vmatpush2.msra.mxu0 0.0
    %6992 = vmatprep.subr.mxu0 0.0
    %6993 = vmatpush2.msra.mxu0 0.0
    %6994 = vmatprep.subr.mxu0 0.0
    %6995 = vmatpush2.msra.mxu0 0.0
    %6996 = vmatprep.subr.mxu0 0.0
    %6997 = vmatpush2.msra.mxu0 0.0
    %6998 = vmatprep.subr.mxu0 0.0
    %6999 = vmatpush2.msra.mxu0 0.0
    %7000 = vmatprep.subr.mxu0 0.0
    %7001 = vmatpush2.msra.mxu0 0.0
    %7002 = vmatprep.subr.mxu0 0.0
    %7003 = vmatpush2.msra.mxu0 0.0
    %7004 = vmatprep.subr.mxu0 0.0
    %7005 = vmatpush2.msra.mxu0 0.0
    %7006 = vmatprep.subr.mxu0 0.0
    %7007 = vmatpush2.msra.mxu0 0.0
    %7008 = vmatprep.subr.mxu0 0.0
    %7009 = vmatpush2.msra.mxu0 0.0
    %7010 = vmatprep.subr.mxu0 0.0
    %7011 = vmatpush2.msra.mxu0 0.0
    %7012 = vmatprep.subr.mxu0 0.0
    %7013 = vmatpush2.msra.mxu0 0.0
    %7014 = vmatprep.subr.mxu0 0.0
    %7015 = vmatpush2.msra.mxu0 0.0
    %7016 = vmatprep.subr.mxu0 0.0
    %7017 = vmatpush2.msra.mxu0 0.0
    %7018 = vmatprep.mubr.f32.mxu0 0.0
    %7019 = vmatmul.mubr.f32.gmra.mxu0 %v6762
    %v7020 = vpop.f32.mrf.mxu0
    %v7021 = vadd.f32 %v6876, %v7020
    %v7022 = vpop.f32.mrf.mxu0
    %7023 = vmatprep.mubr.f32.mxu0 0.0
    %7024 = vmatmul.mubr.f32.gmra.mxu0 %v6765
    %v7025 = vpop.f32.mrf.mxu0
    %v7026 = vadd.f32 %v6881, %v7025
    %v7027 = vpop.f32.mrf.mxu0
    %7028 = vmatprep.mubr.f32.mxu0 0.0
    %7029 = vmatmul.mubr.f32.gmra.mxu0 %v6768
    %v7030 = vpop.f32.mrf.mxu0
    %v7031 = vadd.f32 %v6886, %v7030
    %v7032 = vpop.f32.mrf.mxu0
    %7033 = vmatprep.mubr.f32.mxu0 0.0
    %7034 = vmatmul.mubr.f32.gmra.mxu0 %v6771
    %v7035 = vpop.f32.mrf.mxu0
    %v7036 = vadd.f32 %v6891, %v7035
    %v7037 = vpop.f32.mrf.mxu0
    %7038 = vmatprep.mubr.f32.mxu0 0.0
    %7039 = vmatmul.mubr.f32.gmra.mxu0 %v6774
    %v7040 = vpop.f32.mrf.mxu0
    %v7041 = vadd.f32 %v6896, %v7040
    %v7042 = vpop.f32.mrf.mxu0
    %7043 = vmatprep.mubr.f32.mxu0 0.0
    %7044 = vmatmul.mubr.f32.gmra.mxu0 %v6777
    %v7045 = vpop.f32.mrf.mxu0
    %v7046 = vadd.f32 %v6901, %v7045
    %v7047 = vpop.f32.mrf.mxu0
    %7048 = vmatprep.mubr.f32.mxu0 0.0
    %7049 = vmatmul.mubr.f32.gmra.mxu0 %v6780
    %v7050 = vpop.f32.mrf.mxu0
    %v7051 = vadd.f32 %v6906, %v7050
    %v7052 = vpop.f32.mrf.mxu0
    %7053 = vmatprep.mubr.f32.mxu0 0.0
    %7054 = vmatmul.mubr.f32.gmra.mxu0 %v6783
    %v7055 = vpop.f32.mrf.mxu0
    %v7056 = vadd.f32 %v6911, %v7055
    %v7057 = vpop.f32.mrf.mxu0
    %7058 = vmatprep.mubr.f32.mxu0 0.0
    %7059 = vmatmul.mubr.f32.gmra.mxu0 %v6786
    %v7060 = vpop.f32.mrf.mxu0
    %v7061 = vadd.f32 %v6916, %v7060
    %v7062 = vpop.f32.mrf.mxu0
    %7063 = vmatprep.mubr.f32.mxu0 0.0
    %7064 = vmatmul.mubr.f32.gmra.mxu0 %v6789
    %v7065 = vpop.f32.mrf.mxu0
    %v7066 = vadd.f32 %v6921, %v7065
    %v7067 = vpop.f32.mrf.mxu0
    %7068 = vmatprep.mubr.f32.mxu0 0.0
    %7069 = vmatmul.mubr.f32.gmra.mxu0 %v6792
    %v7070 = vpop.f32.mrf.mxu0
    %v7071 = vadd.f32 %v6926, %v7070
    %v7072 = vpop.f32.mrf.mxu0
    %7073 = vmatprep.mubr.f32.mxu0 0.0
    %7074 = vmatmul.mubr.f32.gmra.mxu0 %v6795
    %v7075 = vpop.f32.mrf.mxu0
    %v7076 = vadd.f32 %v6931, %v7075
    %v7077 = vpop.f32.mrf.mxu0
    %7078 = vmatprep.mubr.f32.mxu0 0.0
    %7079 = vmatmul.mubr.f32.gmra.mxu0 %v6798
    %v7080 = vpop.f32.mrf.mxu0
    %v7081 = vadd.f32 %v6936, %v7080
    %v7082 = vpop.f32.mrf.mxu0
    %7083 = vmatprep.mubr.f32.mxu0 0.0
    %7084 = vmatmul.mubr.f32.gmra.mxu0 %v6801
    %v7085 = vpop.f32.mrf.mxu0
    %v7086 = vadd.f32 %v6941, %v7085
    %v7087 = vpop.f32.mrf.mxu0
    %7088 = vmatprep.mubr.f32.mxu0 0.0
    %7089 = vmatmul.mubr.f32.gmra.mxu0 %v6804
    %v7090 = vpop.f32.mrf.mxu0
    %v7091 = vadd.f32 %v6946, %v7090
    %v7092 = vpop.f32.mrf.mxu0
    %7093 = vmatprep.mubr.f32.mxu0 0.0
    %7094 = vmatmul.mubr.f32.gmra.mxu0 %v6807
    %v7095 = vpop.f32.mrf.mxu0
    %v7096 = vadd.f32 %v6951, %v7095
    %v7097 = vpop.f32.mrf.mxu0
    %7098 = vdwg.mxu0
    %v7099 = vmax.f32 %v7021, 0.0
    %v7100 = vmax.f32 %v7026, 0.0
    %v7101 = vmax.f32 %v7031, 0.0
    %v7102 = vmax.f32 %v7036, 0.0
    %v7103 = vmax.f32 %v7041, 0.0
    %v7104 = vmax.f32 %v7046, 0.0
    %v7105 = vmax.f32 %v7051, 0.0
    %v7106 = vmax.f32 %v7056, 0.0
    %v7107 = vmax.f32 %v7061, 0.0
    %v7108 = vmax.f32 %v7066, 0.0
    %v7109 = vmax.f32 %v7071, 0.0
    %v7110 = vmax.f32 %v7076, 0.0
    %v7111 = vmax.f32 %v7081, 0.0
    %v7112 = vmax.f32 %v7086, 0.0
    %v7113 = vmax.f32 %v7091, 0.0
    %v7114 = vmax.f32 %v7096, 0.0
    %v7115 = vsel %vm6636, %v7099, -inf
    %v7116 = vsel %vm6636, %v7100, -inf
    %v7117 = vmax.f32 %v7115, %v7116
    %v7118 = vsel %vm6636, %v7101, -inf
    %v7119 = vsel %vm6636, %v7102, -inf
    %v7120 = vmax.f32 %v7118, %v7119
    %v7121 = vsel %vm6636, %v7103, -inf
    %v7122 = vsel %vm6636, %v7104, -inf
    %v7123 = vmax.f32 %v7121, %v7122
    %v7124 = vsel %vm6636, %v7105, -inf
    %v7125 = vsel %vm6636, %v7106, -inf
    %v7126 = vmax.f32 %v7124, %v7125
    %v7127 = vsel %vm6636, %v7107, -inf
    %v7128 = vsel %vm6636, %v7108, -inf
    %v7129 = vmax.f32 %v7127, %v7128
    %v7130 = vsel %vm6636, %v7109, -inf
    %v7131 = vsel %vm6636, %v7110, -inf
    %v7132 = vmax.f32 %v7130, %v7131
    %v7133 = vsel %vm6636, %v7111, -inf
    %v7134 = vsel %vm6636, %v7112, -inf
    %v7135 = vmax.f32 %v7133, %v7134
    %v7136 = vsel %vm6636, %v7113, -inf
    %v7137 = vsel %vm6636, %v7114, -inf
    %v7138 = vmax.f32 %v7136, %v7137
    %v7147 = vcombine.high %v7117, %v7117
    %v7149 = vunpack.c.l.s4 1983009808
    %v7150 = vunpack.c.0.s8 %v7149
    %v7151 = vlaneseq
    %v7152 = vshrl.u32 %v7151, 7
    %v7153 = vsub.s32 %v7150, %v7152
    %v7154 = vrot.slane %v7117, %v7153
    %v7156 = vunpack.c.l.s4 1983009808
    %v7157 = vunpack.c.0.s8 %v7156
    %v7158 = vlaneseq
    %v7159 = vshrl.u32 %v7158, 7
    %v7160 = vsub.s32 %v7157, %v7159
    %v7161 = vrot.slane %v7147, %v7160
    %v7162 = vcombine.high %v7154, %v7154
    %v7163 = vcombine.high %v7161, %v7161
    %v7164 = vcombine.high %v7120, %v7120
    %v7166 = vunpack.c.l.s4 1983009808
    %v7167 = vunpack.c.0.s8 %v7166
    %v7168 = vlaneseq
    %v7169 = vshrl.u32 %v7168, 7
    %v7170 = vsub.s32 %v7167, %v7169
    %v7171 = vrot.slane %v7120, %v7170
    %v7173 = vunpack.c.l.s4 1983009808
    %v7174 = vunpack.c.0.s8 %v7173
    %v7175 = vlaneseq
    %v7176 = vshrl.u32 %v7175, 7
    %v7177 = vsub.s32 %v7174, %v7176
    %v7178 = vrot.slane %v7164, %v7177
    %v7179 = vcombine.high %v7171, %v7171
    %v7180 = vcombine.high %v7178, %v7178
    %v7181 = vcombine.high %v7123, %v7123
    %v7183 = vunpack.c.l.s4 1983009808
    %v7184 = vunpack.c.0.s8 %v7183
    %v7185 = vlaneseq
    %v7186 = vshrl.u32 %v7185, 7
    %v7187 = vsub.s32 %v7184, %v7186
    %v7188 = vrot.slane %v7123, %v7187
    %v7190 = vunpack.c.l.s4 1983009808
    %v7191 = vunpack.c.0.s8 %v7190
    %v7192 = vlaneseq
    %v7193 = vshrl.u32 %v7192, 7
    %v7194 = vsub.s32 %v7191, %v7193
    %v7195 = vrot.slane %v7181, %v7194
    %v7196 = vcombine.high %v7188, %v7188
    %v7197 = vcombine.high %v7195, %v7195
    %v7198 = vcombine.high %v7126, %v7126
    %v7200 = vunpack.c.l.s4 1983009808
    %v7201 = vunpack.c.0.s8 %v7200
    %v7202 = vlaneseq
    %v7203 = vshrl.u32 %v7202, 7
    %v7204 = vsub.s32 %v7201, %v7203
    %v7205 = vrot.slane %v7126, %v7204
    %v7207 = vunpack.c.l.s4 1983009808
    %v7208 = vunpack.c.0.s8 %v7207
    %v7209 = vlaneseq
    %v7210 = vshrl.u32 %v7209, 7
    %v7211 = vsub.s32 %v7208, %v7210
    %v7212 = vrot.slane %v7198, %v7211
    %v7213 = vcombine.high %v7205, %v7205
    %v7214 = vcombine.high %v7212, %v7212
    %v7215 = vcombine.high %v7129, %v7129
    %v7217 = vunpack.c.l.s4 1983009808
    %v7218 = vunpack.c.0.s8 %v7217
    %v7219 = vlaneseq
    %v7220 = vshrl.u32 %v7219, 7
    %v7221 = vsub.s32 %v7218, %v7220
    %v7222 = vrot.slane %v7129, %v7221
    %v7224 = vunpack.c.l.s4 1983009808
    %v7225 = vunpack.c.0.s8 %v7224
    %v7226 = vlaneseq
    %v7227 = vshrl.u32 %v7226, 7
    %v7228 = vsub.s32 %v7225, %v7227
    %v7229 = vrot.slane %v7215, %v7228
    %v7230 = vcombine.high %v7222, %v7222
    %v7231 = vcombine.high %v7229, %v7229
    %v7232 = vcombine.high %v7132, %v7132
    %v7234 = vunpack.c.l.s4 1983009808
    %v7235 = vunpack.c.0.s8 %v7234
    %v7236 = vlaneseq
    %v7237 = vshrl.u32 %v7236, 7
    %v7238 = vsub.s32 %v7235, %v7237
    %v7239 = vrot.slane %v7132, %v7238
    %v7241 = vunpack.c.l.s4 1983009808
    %v7242 = vunpack.c.0.s8 %v7241
    %v7243 = vlaneseq
    %v7244 = vshrl.u32 %v7243, 7
    %v7245 = vsub.s32 %v7242, %v7244
    %v7246 = vrot.slane %v7232, %v7245
    %v7247 = vcombine.high %v7239, %v7239
    %v7248 = vcombine.high %v7246, %v7246
    %v7249 = vcombine.high %v7135, %v7135
    %v7251 = vunpack.c.l.s4 1983009808
    %v7252 = vunpack.c.0.s8 %v7251
    %v7253 = vlaneseq
    %v7254 = vshrl.u32 %v7253, 7
    %v7255 = vsub.s32 %v7252, %v7254
    %v7256 = vrot.slane %v7135, %v7255
    %v7258 = vunpack.c.l.s4 1983009808
    %v7259 = vunpack.c.0.s8 %v7258
    %v7260 = vlaneseq
    %v7261 = vshrl.u32 %v7260, 7
    %v7262 = vsub.s32 %v7259, %v7261
    %v7263 = vrot.slane %v7249, %v7262
    %v7264 = vcombine.high %v7256, %v7256
    %v7265 = vcombine.high %v7263, %v7263
    %v7266 = vcombine.high %v7138, %v7138
    %v7268 = vunpack.c.l.s4 1983009808
    %v7269 = vunpack.c.0.s8 %v7268
    %v7270 = vlaneseq
    %v7271 = vshrl.u32 %v7270, 7
    %v7272 = vsub.s32 %v7269, %v7271
    %v7273 = vrot.slane %v7138, %v7272
    %v7275 = vunpack.c.l.s4 1983009808
    %v7276 = vunpack.c.0.s8 %v7275
    %v7277 = vlaneseq
    %v7278 = vshrl.u32 %v7277, 7
    %v7279 = vsub.s32 %v7276, %v7278
    %v7280 = vrot.slane %v7266, %v7279
    %v7281 = vcombine.high %v7273, %v7273
    %v7282 = vcombine.high %v7280, %v7280
    %vm7315 = vcmask 517120
    %v7316 = vsel %vm7315, %v7154, -inf
    %v7317 = vrot.slane %v7316, 4
    %v7318 = vmax.f32 %v7316, %v7317
    %v7319 = vrot.slane %v7318, 2
    %v7320 = vmax.f32 %v7318, %v7319
    %v7321 = vrot.slane %v7320, 1
    %v7322 = vmax.f32 %v7320, %v7321
    %v7323 = vsel %vm7315, %v7162, -inf
    %v7324 = vrot.slane %v7323, 4
    %v7325 = vmax.f32 %v7323, %v7324
    %v7326 = vrot.slane %v7325, 2
    %v7327 = vmax.f32 %v7325, %v7326
    %v7328 = vrot.slane %v7327, 1
    %v7329 = vmax.f32 %v7327, %v7328
    %v7330 = vsel %vm7315, %v7161, -inf
    %v7331 = vrot.slane %v7330, 4
    %v7332 = vmax.f32 %v7330, %v7331
    %v7333 = vrot.slane %v7332, 2
    %v7334 = vmax.f32 %v7332, %v7333
    %v7335 = vrot.slane %v7334, 1
    %v7336 = vmax.f32 %v7334, %v7335
    %v7337 = vsel %vm7315, %v7163, -inf
    %v7338 = vrot.slane %v7337, 4
    %v7339 = vmax.f32 %v7337, %v7338
    %v7340 = vrot.slane %v7339, 2
    %v7341 = vmax.f32 %v7339, %v7340
    %v7342 = vrot.slane %v7341, 1
    %v7343 = vmax.f32 %v7341, %v7342
    %v7344 = vsel %vm7315, %v7171, -inf
    %v7345 = vrot.slane %v7344, 4
    %v7346 = vmax.f32 %v7344, %v7345
    %v7347 = vrot.slane %v7346, 2
    %v7348 = vmax.f32 %v7346, %v7347
    %v7349 = vrot.slane %v7348, 1
    %v7350 = vmax.f32 %v7348, %v7349
    %v7351 = vsel %vm7315, %v7179, -inf
    %v7352 = vrot.slane %v7351, 4
    %v7353 = vmax.f32 %v7351, %v7352
    %v7354 = vrot.slane %v7353, 2
    %v7355 = vmax.f32 %v7353, %v7354
    %v7356 = vrot.slane %v7355, 1
    %v7357 = vmax.f32 %v7355, %v7356
    %v7358 = vsel %vm7315, %v7178, -inf
    %v7359 = vrot.slane %v7358, 4
    %v7360 = vmax.f32 %v7358, %v7359
    %v7361 = vrot.slane %v7360, 2
    %v7362 = vmax.f32 %v7360, %v7361
    %v7363 = vrot.slane %v7362, 1
    %v7364 = vmax.f32 %v7362, %v7363
    %v7365 = vsel %vm7315, %v7180, -inf
    %v7366 = vrot.slane %v7365, 4
    %v7367 = vmax.f32 %v7365, %v7366
    %v7368 = vrot.slane %v7367, 2
    %v7369 = vmax.f32 %v7367, %v7368
    %v7370 = vrot.slane %v7369, 1
    %v7371 = vmax.f32 %v7369, %v7370
    %v7372 = vsel %vm7315, %v7188, -inf
    %v7373 = vrot.slane %v7372, 4
    %v7374 = vmax.f32 %v7372, %v7373
    %v7375 = vrot.slane %v7374, 2
    %v7376 = vmax.f32 %v7374, %v7375
    %v7377 = vrot.slane %v7376, 1
    %v7378 = vmax.f32 %v7376, %v7377
    %v7379 = vsel %vm7315, %v7196, -inf
    %v7380 = vrot.slane %v7379, 4
    %v7381 = vmax.f32 %v7379, %v7380
    %v7382 = vrot.slane %v7381, 2
    %v7383 = vmax.f32 %v7381, %v7382
    %v7384 = vrot.slane %v7383, 1
    %v7385 = vmax.f32 %v7383, %v7384
    %v7386 = vsel %vm7315, %v7195, -inf
    %v7387 = vrot.slane %v7386, 4
    %v7388 = vmax.f32 %v7386, %v7387
    %v7389 = vrot.slane %v7388, 2
    %v7390 = vmax.f32 %v7388, %v7389
    %v7391 = vrot.slane %v7390, 1
    %v7392 = vmax.f32 %v7390, %v7391
    %v7393 = vsel %vm7315, %v7197, -inf
    %v7394 = vrot.slane %v7393, 4
    %v7395 = vmax.f32 %v7393, %v7394
    %v7396 = vrot.slane %v7395, 2
    %v7397 = vmax.f32 %v7395, %v7396
    %v7398 = vrot.slane %v7397, 1
    %v7399 = vmax.f32 %v7397, %v7398
    %v7400 = vsel %vm7315, %v7205, -inf
    %v7401 = vrot.slane %v7400, 4
    %v7402 = vmax.f32 %v7400, %v7401
    %v7403 = vrot.slane %v7402, 2
    %v7404 = vmax.f32 %v7402, %v7403
    %v7405 = vrot.slane %v7404, 1
    %v7406 = vmax.f32 %v7404, %v7405
    %v7407 = vsel %vm7315, %v7213, -inf
    %v7408 = vrot.slane %v7407, 4
    %v7409 = vmax.f32 %v7407, %v7408
    %v7410 = vrot.slane %v7409, 2
    %v7411 = vmax.f32 %v7409, %v7410
    %v7412 = vrot.slane %v7411, 1
    %v7413 = vmax.f32 %v7411, %v7412
    %v7414 = vsel %vm7315, %v7212, -inf
    %v7415 = vrot.slane %v7414, 4
    %v7416 = vmax.f32 %v7414, %v7415
    %v7417 = vrot.slane %v7416, 2
    %v7418 = vmax.f32 %v7416, %v7417
    %v7419 = vrot.slane %v7418, 1
    %v7420 = vmax.f32 %v7418, %v7419
    %v7421 = vsel %vm7315, %v7214, -inf
    %v7422 = vrot.slane %v7421, 4
    %v7423 = vmax.f32 %v7421, %v7422
    %v7424 = vrot.slane %v7423, 2
    %v7425 = vmax.f32 %v7423, %v7424
    %v7426 = vrot.slane %v7425, 1
    %v7427 = vmax.f32 %v7425, %v7426
    %v7428 = vsel %vm7315, %v7222, -inf
    %v7429 = vrot.slane %v7428, 4
    %v7430 = vmax.f32 %v7428, %v7429
    %v7431 = vrot.slane %v7430, 2
    %v7432 = vmax.f32 %v7430, %v7431
    %v7433 = vrot.slane %v7432, 1
    %v7434 = vmax.f32 %v7432, %v7433
    %v7435 = vsel %vm7315, %v7230, -inf
    %v7436 = vrot.slane %v7435, 4
    %v7437 = vmax.f32 %v7435, %v7436
    %v7438 = vrot.slane %v7437, 2
    %v7439 = vmax.f32 %v7437, %v7438
    %v7440 = vrot.slane %v7439, 1
    %v7441 = vmax.f32 %v7439, %v7440
    %v7442 = vsel %vm7315, %v7229, -inf
    %v7443 = vrot.slane %v7442, 4
    %v7444 = vmax.f32 %v7442, %v7443
    %v7445 = vrot.slane %v7444, 2
    %v7446 = vmax.f32 %v7444, %v7445
    %v7447 = vrot.slane %v7446, 1
    %v7448 = vmax.f32 %v7446, %v7447
    %v7449 = vsel %vm7315, %v7231, -inf
    %v7450 = vrot.slane %v7449, 4
    %v7451 = vmax.f32 %v7449, %v7450
    %v7452 = vrot.slane %v7451, 2
    %v7453 = vmax.f32 %v7451, %v7452
    %v7454 = vrot.slane %v7453, 1
    %v7455 = vmax.f32 %v7453, %v7454
    %v7456 = vsel %vm7315, %v7239, -inf
    %v7457 = vrot.slane %v7456, 4
    %v7458 = vmax.f32 %v7456, %v7457
    %v7459 = vrot.slane %v7458, 2
    %v7460 = vmax.f32 %v7458, %v7459
    %v7461 = vrot.slane %v7460, 1
    %v7462 = vmax.f32 %v7460, %v7461
    %v7463 = vsel %vm7315, %v7247, -inf
    %v7464 = vrot.slane %v7463, 4
    %v7465 = vmax.f32 %v7463, %v7464
    %v7466 = vrot.slane %v7465, 2
    %v7467 = vmax.f32 %v7465, %v7466
    %v7468 = vrot.slane %v7467, 1
    %v7469 = vmax.f32 %v7467, %v7468
    %v7470 = vsel %vm7315, %v7246, -inf
    %v7471 = vrot.slane %v7470, 4
    %v7472 = vmax.f32 %v7470, %v7471
    %v7473 = vrot.slane %v7472, 2
    %v7474 = vmax.f32 %v7472, %v7473
    %v7475 = vrot.slane %v7474, 1
    %v7476 = vmax.f32 %v7474, %v7475
    %v7477 = vsel %vm7315, %v7248, -inf
    %v7478 = vrot.slane %v7477, 4
    %v7479 = vmax.f32 %v7477, %v7478
    %v7480 = vrot.slane %v7479, 2
    %v7481 = vmax.f32 %v7479, %v7480
    %v7482 = vrot.slane %v7481, 1
    %v7483 = vmax.f32 %v7481, %v7482
    %v7484 = vsel %vm7315, %v7256, -inf
    %v7485 = vrot.slane %v7484, 4
    %v7486 = vmax.f32 %v7484, %v7485
    %v7487 = vrot.slane %v7486, 2
    %v7488 = vmax.f32 %v7486, %v7487
    %v7489 = vrot.slane %v7488, 1
    %v7490 = vmax.f32 %v7488, %v7489
    %v7491 = vsel %vm7315, %v7264, -inf
    %v7492 = vrot.slane %v7491, 4
    %v7493 = vmax.f32 %v7491, %v7492
    %v7494 = vrot.slane %v7493, 2
    %v7495 = vmax.f32 %v7493, %v7494
    %v7496 = vrot.slane %v7495, 1
    %v7497 = vmax.f32 %v7495, %v7496
    %v7498 = vsel %vm7315, %v7263, -inf
    %v7499 = vrot.slane %v7498, 4
    %v7500 = vmax.f32 %v7498, %v7499
    %v7501 = vrot.slane %v7500, 2
    %v7502 = vmax.f32 %v7500, %v7501
    %v7503 = vrot.slane %v7502, 1
    %v7504 = vmax.f32 %v7502, %v7503
    %v7505 = vsel %vm7315, %v7265, -inf
    %v7506 = vrot.slane %v7505, 4
    %v7507 = vmax.f32 %v7505, %v7506
    %v7508 = vrot.slane %v7507, 2
    %v7509 = vmax.f32 %v7507, %v7508
    %v7510 = vrot.slane %v7509, 1
    %v7511 = vmax.f32 %v7509, %v7510
    %v7512 = vsel %vm7315, %v7273, -inf
    %v7513 = vrot.slane %v7512, 4
    %v7514 = vmax.f32 %v7512, %v7513
    %v7515 = vrot.slane %v7514, 2
    %v7516 = vmax.f32 %v7514, %v7515
    %v7517 = vrot.slane %v7516, 1
    %v7518 = vmax.f32 %v7516, %v7517
    %v7519 = vsel %vm7315, %v7281, -inf
    %v7520 = vrot.slane %v7519, 4
    %v7521 = vmax.f32 %v7519, %v7520
    %v7522 = vrot.slane %v7521, 2
    %v7523 = vmax.f32 %v7521, %v7522
    %v7524 = vrot.slane %v7523, 1
    %v7525 = vmax.f32 %v7523, %v7524
    %v7526 = vsel %vm7315, %v7280, -inf
    %v7527 = vrot.slane %v7526, 4
    %v7528 = vmax.f32 %v7526, %v7527
    %v7529 = vrot.slane %v7528, 2
    %v7530 = vmax.f32 %v7528, %v7529
    %v7531 = vrot.slane %v7530, 1
    %v7532 = vmax.f32 %v7530, %v7531
    %v7533 = vsel %vm7315, %v7282, -inf
    %v7534 = vrot.slane %v7533, 4
    %v7535 = vmax.f32 %v7533, %v7534
    %v7536 = vrot.slane %v7535, 2
    %v7537 = vmax.f32 %v7535, %v7536
    %v7538 = vrot.slane %v7537, 1
    %v7539 = vmax.f32 %v7537, %v7538
    %v7542 = vsel %vm5939, %v7434, %v7322
    %v7546 = vsel %vm5939, %v7441, %v7329
    %7547 = vrot.lane.b32.xlu0 %v7546, 64
    %v7548 = vpop.permute.xlu0 %7547
    %v7552 = vsel %vm5939, %v7448, %v7336
    %v7556 = vsel %vm5939, %v7455, %v7343
    %7557 = vrot.lane.b32.xlu0 %v7556, 64
    %v7558 = vpop.permute.xlu0 %7557
    %v7562 = vsel %vm5939, %v7462, %v7350
    %v7566 = vsel %vm5939, %v7469, %v7357
    %7567 = vrot.lane.b32.xlu0 %v7566, 64
    %v7568 = vpop.permute.xlu0 %7567
    %v7572 = vsel %vm5939, %v7476, %v7364
    %v7576 = vsel %vm5939, %v7483, %v7371
    %7577 = vrot.lane.b32.xlu0 %v7576, 64
    %v7578 = vpop.permute.xlu0 %7577
    %v7582 = vsel %vm5939, %v7490, %v7378
    %v7586 = vsel %vm5939, %v7497, %v7385
    %7587 = vrot.lane.b32.xlu0 %v7586, 64
    %v7588 = vpop.permute.xlu0 %7587
    %v7592 = vsel %vm5939, %v7504, %v7392
    %v7596 = vsel %vm5939, %v7511, %v7399
    %7597 = vrot.lane.b32.xlu0 %v7596, 64
    %v7598 = vpop.permute.xlu0 %7597
    %v7602 = vsel %vm5939, %v7518, %v7406
    %v7606 = vsel %vm5939, %v7525, %v7413
    %7607 = vrot.lane.b32.xlu0 %v7606, 64
    %v7608 = vpop.permute.xlu0 %7607
    %v7612 = vsel %vm5939, %v7532, %v7420
    %v7616 = vsel %vm5939, %v7539, %v7427
    %7617 = vrot.lane.b32.xlu0 %v7616, 64
    %v7618 = vpop.permute.xlu0 %7617
    %v7620 = vsel %vm6636, %v7542, %v7548
    %v7621 = vsel %vm6636, %v7552, %v7558
    %v7622 = vsel %vm6636, %v7562, %v7568
    %v7623 = vsel %vm6636, %v7572, %v7578
    %v7624 = vsel %vm6636, %v7582, %v7588
    %v7625 = vsel %vm6636, %v7592, %v7598
    %v7626 = vsel %vm6636, %v7602, %v7608
    %v7627 = vsel %vm6636, %v7612, %v7618
    %v7628 = vld [vmem:[%s5] sm:$0xff]
    %v7629 = vld [vmem:[%s5 + $0x8] sm:$0xff]
    %v7630 = vld [vmem:[%s5 + $0x10] sm:$0xff]
    %v7631 = vld [vmem:[%s5 + $0x18] sm:$0xff]
    %v7632 = vld [vmem:[%s5 + $0x20] sm:$0xff]
    %v7633 = vld [vmem:[%s5 + $0x28] sm:$0xff]
    %v7634 = vld [vmem:[%s5 + $0x30] sm:$0xff]
    %v7635 = vld [vmem:[%s5 + $0x38] sm:$0xff]
    %v7636 = vld [vmem:[%s5 + $0x40] sm:$0xff]
    %v7637 = vld [vmem:[%s5 + $0x48] sm:$0xff]
    %v7638 = vld [vmem:[%s5 + $0x50] sm:$0xff]
    %v7639 = vld [vmem:[%s5 + $0x58] sm:$0xff]
    %v7640 = vld [vmem:[%s5 + $0x60] sm:$0xff]
    %v7641 = vld [vmem:[%s5 + $0x68] sm:$0xff]
    %v7642 = vld [vmem:[%s5 + $0x70] sm:$0xff]
    %v7643 = vld [vmem:[%s5 + $0x78] sm:$0xff]
    %v7644 = vld [vmem:[%s5 + $0x80] sm:$0xff]
    %v7645 = vld [vmem:[%s5 + $0x88] sm:$0xff]
    %v7646 = vld [vmem:[%s5 + $0x90] sm:$0xff]
    %v7647 = vld [vmem:[%s5 + $0x98] sm:$0xff]
    %v7648 = vld [vmem:[%s5 + $0xa0] sm:$0xff]
    %v7649 = vld [vmem:[%s5 + $0xa8] sm:$0xff]
    %v7650 = vld [vmem:[%s5 + $0xb0] sm:$0xff]
    %v7651 = vld [vmem:[%s5 + $0xb8] sm:$0xff]
    %v7652 = vld [vmem:[%s5 + $0xc0] sm:$0xff]
    %v7653 = vld [vmem:[%s5 + $0xc8] sm:$0xff]
    %v7654 = vld [vmem:[%s5 + $0xd0] sm:$0xff]
    %v7655 = vld [vmem:[%s5 + $0xd8] sm:$0xff]
    %v7656 = vld [vmem:[%s5 + $0xe0] sm:$0xff]
    %v7657 = vld [vmem:[%s5 + $0xe8] sm:$0xff]
    %v7658 = vld [vmem:[%s5 + $0xf0] sm:$0xff]
    %v7659 = vld [vmem:[%s5 + $0xf8] sm:$0xff]
    %v7660 = vld [vmem:[%s5 + $0x100] sm:$0xff]
    %v7661 = vld [vmem:[%s5 + $0x108] sm:$0xff]
    %v7662 = vld [vmem:[%s5 + $0x110] sm:$0xff]
    %v7663 = vld [vmem:[%s5 + $0x118] sm:$0xff]
    %v7664 = vld [vmem:[%s5 + $0x120] sm:$0xff]
    %v7665 = vld [vmem:[%s5 + $0x128] sm:$0xff]
    %v7666 = vld [vmem:[%s5 + $0x130] sm:$0xff]
    %v7667 = vld [vmem:[%s5 + $0x138] sm:$0xff]
    %v7668 = vld [vmem:[%s5 + $0x140] sm:$0xff]
    %v7669 = vld [vmem:[%s5 + $0x148] sm:$0xff]
    %v7670 = vld [vmem:[%s5 + $0x150] sm:$0xff]
    %v7671 = vld [vmem:[%s5 + $0x158] sm:$0xff]
    %v7672 = vld [vmem:[%s5 + $0x160] sm:$0xff]
    %v7673 = vld [vmem:[%s5 + $0x168] sm:$0xff]
    %v7674 = vld [vmem:[%s5 + $0x170] sm:$0xff]
    %v7675 = vld [vmem:[%s5 + $0x178] sm:$0xff]
    %v7676 = vld [vmem:[%s5 + $0x180] sm:$0xff]
    %v7677 = vld [vmem:[%s5 + $0x188] sm:$0xff]
    %v7678 = vld [vmem:[%s5 + $0x190] sm:$0xff]
    %v7679 = vld [vmem:[%s5 + $0x198] sm:$0xff]
    %v7680 = vld [vmem:[%s5 + $0x1a0] sm:$0xff]
    %v7681 = vld [vmem:[%s5 + $0x1a8] sm:$0xff]
    %v7682 = vld [vmem:[%s5 + $0x1b0] sm:$0xff]
    %v7683 = vld [vmem:[%s5 + $0x1b8] sm:$0xff]
    %v7684 = vld [vmem:[%s5 + $0x1c0] sm:$0xff]
    %v7685 = vld [vmem:[%s5 + $0x1c8] sm:$0xff]
    %v7686 = vld [vmem:[%s5 + $0x1d0] sm:$0xff]
    %v7687 = vld [vmem:[%s5 + $0x1d8] sm:$0xff]
    %v7688 = vld [vmem:[%s5 + $0x1e0] sm:$0xff]
    %v7689 = vld [vmem:[%s5 + $0x1e8] sm:$0xff]
    %v7690 = vld [vmem:[%s5 + $0x1f0] sm:$0xff]
    %v7691 = vld [vmem:[%s5 + $0x1f8] sm:$0xff]
    %v7692 = vld [vmem:[%s5 + $0x200] sm:$0xff]
    %v7693 = vld [vmem:[%s5 + $0x208] sm:$0xff]
    %v7694 = vld [vmem:[%s5 + $0x210] sm:$0xff]
    %v7695 = vld [vmem:[%s5 + $0x218] sm:$0xff]
    %v7696 = vld [vmem:[%s5 + $0x220] sm:$0xff]
    %v7697 = vld [vmem:[%s5 + $0x228] sm:$0xff]
    %v7698 = vld [vmem:[%s5 + $0x230] sm:$0xff]
    %v7699 = vld [vmem:[%s5 + $0x238] sm:$0xff]
    %v7700 = vld [vmem:[%s5 + $0x240] sm:$0xff]
    %v7701 = vld [vmem:[%s5 + $0x248] sm:$0xff]
    %v7702 = vld [vmem:[%s5 + $0x250] sm:$0xff]
    %v7703 = vld [vmem:[%s5 + $0x258] sm:$0xff]
    %v7704 = vld [vmem:[%s5 + $0x260] sm:$0xff]
    %v7705 = vld [vmem:[%s5 + $0x268] sm:$0xff]
    %v7706 = vld [vmem:[%s5 + $0x270] sm:$0xff]
    %v7707 = vld [vmem:[%s5 + $0x278] sm:$0xff]
    %v7708 = vld [vmem:[%s5 + $0x280] sm:$0xff]
    %v7709 = vld [vmem:[%s5 + $0x288] sm:$0xff]
    %v7710 = vld [vmem:[%s5 + $0x290] sm:$0xff]
    %v7711 = vld [vmem:[%s5 + $0x298] sm:$0xff]
    %v7712 = vld [vmem:[%s5 + $0x2a0] sm:$0xff]
    %v7713 = vld [vmem:[%s5 + $0x2a8] sm:$0xff]
    %v7714 = vld [vmem:[%s5 + $0x2b0] sm:$0xff]
    %v7715 = vld [vmem:[%s5 + $0x2b8] sm:$0xff]
    %v7716 = vld [vmem:[%s5 + $0x2c0] sm:$0xff]
    %v7717 = vld [vmem:[%s5 + $0x2c8] sm:$0xff]
    %v7718 = vld [vmem:[%s5 + $0x2d0] sm:$0xff]
    %v7719 = vld [vmem:[%s5 + $0x2d8] sm:$0xff]
    %v7720 = vld [vmem:[%s5 + $0x2e0] sm:$0xff]
    %v7721 = vld [vmem:[%s5 + $0x2e8] sm:$0xff]
    %v7722 = vld [vmem:[%s5 + $0x2f0] sm:$0xff]
    %v7723 = vld [vmem:[%s5 + $0x2f8] sm:$0xff]
    %v7724 = vld [vmem:[%s5 + $0x300] sm:$0xff]
    %v7725 = vld [vmem:[%s5 + $0x308] sm:$0xff]
    %v7726 = vld [vmem:[%s5 + $0x310] sm:$0xff]
    %v7727 = vld [vmem:[%s5 + $0x318] sm:$0xff]
    %v7728 = vld [vmem:[%s5 + $0x320] sm:$0xff]
    %v7729 = vld [vmem:[%s5 + $0x328] sm:$0xff]
    %v7730 = vld [vmem:[%s5 + $0x330] sm:$0xff]
    %v7731 = vld [vmem:[%s5 + $0x338] sm:$0xff]
    %v7732 = vld [vmem:[%s5 + $0x340] sm:$0xff]
    %v7733 = vld [vmem:[%s5 + $0x348] sm:$0xff]
    %v7734 = vld [vmem:[%s5 + $0x350] sm:$0xff]
    %v7735 = vld [vmem:[%s5 + $0x358] sm:$0xff]
    %v7736 = vld [vmem:[%s5 + $0x360] sm:$0xff]
    %v7737 = vld [vmem:[%s5 + $0x368] sm:$0xff]
    %v7738 = vld [vmem:[%s5 + $0x370] sm:$0xff]
    %v7739 = vld [vmem:[%s5 + $0x378] sm:$0xff]
    %v7740 = vld [vmem:[%s5 + $0x380] sm:$0xff]
    %v7741 = vld [vmem:[%s5 + $0x388] sm:$0xff]
    %v7742 = vld [vmem:[%s5 + $0x390] sm:$0xff]
    %v7743 = vld [vmem:[%s5 + $0x398] sm:$0xff]
    %v7744 = vld [vmem:[%s5 + $0x3a0] sm:$0xff]
    %v7745 = vld [vmem:[%s5 + $0x3a8] sm:$0xff]
    %v7746 = vld [vmem:[%s5 + $0x3b0] sm:$0xff]
    %v7747 = vld [vmem:[%s5 + $0x3b8] sm:$0xff]
    %v7748 = vld [vmem:[%s5 + $0x3c0] sm:$0xff]
    %v7749 = vld [vmem:[%s5 + $0x3c8] sm:$0xff]
    %v7750 = vld [vmem:[%s5 + $0x3d0] sm:$0xff]
    %v7751 = vld [vmem:[%s5 + $0x3d8] sm:$0xff]
    %v7752 = vld [vmem:[%s5 + $0x3e0] sm:$0xff]
    %v7753 = vld [vmem:[%s5 + $0x3e8] sm:$0xff]
    %v7754 = vld [vmem:[%s5 + $0x3f0] sm:$0xff]
    %v7755 = vld [vmem:[%s5 + $0x3f8] sm:$0xff]
    %v7756 = vld [vmem:[%s6] sm:$0x1]
    %v7758 = vlaneseq
    %v7759 = vshrl.u32 %v7758, 7
    %v7760 = vsub.s32 0, %v7759
    %v7761 = vrot.slane %v7756, %v7760
    %7763 = vmatprep.subr.mxu0 0.0
    %7764 = vmatpush1.msra.mxu0 %v7643
    %7765 = vmatprep.subr.mxu0 0.0
    %7766 = vmatpush1.msra.mxu0 %v7642
    %7767 = vmatprep.subr.mxu0 0.0
    %7768 = vmatpush1.msra.mxu0 %v7641
    %7769 = vmatprep.subr.mxu0 0.0
    %7770 = vmatpush1.msra.mxu0 %v7640
    %7771 = vmatprep.subr.mxu0 0.0
    %7772 = vmatpush1.msra.mxu0 %v7639
    %7773 = vmatprep.subr.mxu0 0.0
    %7774 = vmatpush1.msra.mxu0 %v7638
    %7775 = vmatprep.subr.mxu0 0.0
    %7776 = vmatpush1.msra.mxu0 %v7637
    %7777 = vmatprep.subr.mxu0 0.0
    %7778 = vmatpush1.msra.mxu0 %v7636
    %7779 = vmatprep.subr.mxu0 0.0
    %7780 = vmatpush1.msra.mxu0 %v7635
    %7781 = vmatprep.subr.mxu0 0.0
    %7782 = vmatpush1.msra.mxu0 %v7634
    %7783 = vmatprep.subr.mxu0 0.0
    %7784 = vmatpush1.msra.mxu0 %v7633
    %7785 = vmatprep.subr.mxu0 0.0
    %7786 = vmatpush1.msra.mxu0 %v7632
    %7787 = vmatprep.subr.mxu0 0.0
    %7788 = vmatpush1.msra.mxu0 %v7631
    %7789 = vmatprep.subr.mxu0 0.0
    %7790 = vmatpush1.msra.mxu0 %v7630
    %7791 = vmatprep.subr.mxu0 0.0
    %7792 = vmatpush1.msra.mxu0 %v7629
    %7793 = vmatprep.subr.mxu0 0.0
    %7794 = vmatpush1.msra.mxu0 %v7628
    %7795 = vmatprep.subr.mxu0 0.0
    %7796 = vmatpush2.msra.mxu0 %v7659
    %7797 = vmatprep.subr.mxu0 0.0
    %7798 = vmatpush2.msra.mxu0 %v7658
    %7799 = vmatprep.subr.mxu0 0.0
    %7800 = vmatpush2.msra.mxu0 %v7657
    %7801 = vmatprep.subr.mxu0 0.0
    %7802 = vmatpush2.msra.mxu0 %v7656
    %7803 = vmatprep.subr.mxu0 0.0
    %7804 = vmatpush2.msra.mxu0 %v7655
    %7805 = vmatprep.subr.mxu0 0.0
    %7806 = vmatpush2.msra.mxu0 %v7654
    %7807 = vmatprep.subr.mxu0 0.0
    %7808 = vmatpush2.msra.mxu0 %v7653
    %7809 = vmatprep.subr.mxu0 0.0
    %7810 = vmatpush2.msra.mxu0 %v7652
    %7811 = vmatprep.subr.mxu0 0.0
    %7812 = vmatpush2.msra.mxu0 %v7651
    %7813 = vmatprep.subr.mxu0 0.0
    %7814 = vmatpush2.msra.mxu0 %v7650
    %7815 = vmatprep.subr.mxu0 0.0
    %7816 = vmatpush2.msra.mxu0 %v7649
    %7817 = vmatprep.subr.mxu0 0.0
    %7818 = vmatpush2.msra.mxu0 %v7648
    %7819 = vmatprep.subr.mxu0 0.0
    %7820 = vmatpush2.msra.mxu0 %v7647
    %7821 = vmatprep.subr.mxu0 0.0
    %7822 = vmatpush2.msra.mxu0 %v7646
    %7823 = vmatprep.subr.mxu0 0.0
    %7824 = vmatpush2.msra.mxu0 %v7645
    %7825 = vmatprep.subr.mxu0 0.0
    %7826 = vmatpush2.msra.mxu0 %v7644
    %7827 = vmatprep.mubr.f32.mxu0 %v7621
    %7828 = vmatmul.mubr.f32.gmra.mxu0 %v7620
    %v7829 = vpop.f32.mrf.mxu0
    %v7830 = vadd.f32 %v7761, %v7829
    %v7831 = vpop.f32.mrf.mxu0
    %7832 = vdwg.mxu0
    %7833 = vmatprep.subr.mxu0 0.0
    %7834 = vmatpush1.msra.mxu0 %v7675
    %7835 = vmatprep.subr.mxu0 0.0
    %7836 = vmatpush1.msra.mxu0 %v7674
    %7837 = vmatprep.subr.mxu0 0.0
    %7838 = vmatpush1.msra.mxu0 %v7673
    %7839 = vmatprep.subr.mxu0 0.0
    %7840 = vmatpush1.msra.mxu0 %v7672
    %7841 = vmatprep.subr.mxu0 0.0
    %7842 = vmatpush1.msra.mxu0 %v7671
    %7843 = vmatprep.subr.mxu0 0.0
    %7844 = vmatpush1.msra.mxu0 %v7670
    %7845 = vmatprep.subr.mxu0 0.0
    %7846 = vmatpush1.msra.mxu0 %v7669
    %7847 = vmatprep.subr.mxu0 0.0
    %7848 = vmatpush1.msra.mxu0 %v7668
    %7849 = vmatprep.subr.mxu0 0.0
    %7850 = vmatpush1.msra.mxu0 %v7667
    %7851 = vmatprep.subr.mxu0 0.0
    %7852 = vmatpush1.msra.mxu0 %v7666
    %7853 = vmatprep.subr.mxu0 0.0
    %7854 = vmatpush1.msra.mxu0 %v7665
    %7855 = vmatprep.subr.mxu0 0.0
    %7856 = vmatpush1.msra.mxu0 %v7664
    %7857 = vmatprep.subr.mxu0 0.0
    %7858 = vmatpush1.msra.mxu0 %v7663
    %7859 = vmatprep.subr.mxu0 0.0
    %7860 = vmatpush1.msra.mxu0 %v7662
    %7861 = vmatprep.subr.mxu0 0.0
    %7862 = vmatpush1.msra.mxu0 %v7661
    %7863 = vmatprep.subr.mxu0 0.0
    %7864 = vmatpush1.msra.mxu0 %v7660
    %7865 = vmatprep.subr.mxu0 0.0
    %7866 = vmatpush2.msra.mxu0 %v7691
    %7867 = vmatprep.subr.mxu0 0.0
    %7868 = vmatpush2.msra.mxu0 %v7690
    %7869 = vmatprep.subr.mxu0 0.0
    %7870 = vmatpush2.msra.mxu0 %v7689
    %7871 = vmatprep.subr.mxu0 0.0
    %7872 = vmatpush2.msra.mxu0 %v7688
    %7873 = vmatprep.subr.mxu0 0.0
    %7874 = vmatpush2.msra.mxu0 %v7687
    %7875 = vmatprep.subr.mxu0 0.0
    %7876 = vmatpush2.msra.mxu0 %v7686
    %7877 = vmatprep.subr.mxu0 0.0
    %7878 = vmatpush2.msra.mxu0 %v7685
    %7879 = vmatprep.subr.mxu0 0.0
    %7880 = vmatpush2.msra.mxu0 %v7684
    %7881 = vmatprep.subr.mxu0 0.0
    %7882 = vmatpush2.msra.mxu0 %v7683
    %7883 = vmatprep.subr.mxu0 0.0
    %7884 = vmatpush2.msra.mxu0 %v7682
    %7885 = vmatprep.subr.mxu0 0.0
    %7886 = vmatpush2.msra.mxu0 %v7681
    %7887 = vmatprep.subr.mxu0 0.0
    %7888 = vmatpush2.msra.mxu0 %v7680
    %7889 = vmatprep.subr.mxu0 0.0
    %7890 = vmatpush2.msra.mxu0 %v7679
    %7891 = vmatprep.subr.mxu0 0.0
    %7892 = vmatpush2.msra.mxu0 %v7678
    %7893 = vmatprep.subr.mxu0 0.0
    %7894 = vmatpush2.msra.mxu0 %v7677
    %7895 = vmatprep.subr.mxu0 0.0
    %7896 = vmatpush2.msra.mxu0 %v7676
    %7897 = vmatprep.mubr.f32.mxu0 %v7623
    %7898 = vmatmul.mubr.f32.gmra.mxu0 %v7622
    %v7899 = vpop.f32.mrf.mxu0
    %v7900 = vadd.f32 %v7830, %v7899
    %v7901 = vpop.f32.mrf.mxu0
    %7902 = vdwg.mxu0
    %7903 = vmatprep.subr.mxu0 0.0
    %7904 = vmatpush1.msra.mxu0 %v7707
    %7905 = vmatprep.subr.mxu0 0.0
    %7906 = vmatpush1.msra.mxu0 %v7706
    %7907 = vmatprep.subr.mxu0 0.0
    %7908 = vmatpush1.msra.mxu0 %v7705
    %7909 = vmatprep.subr.mxu0 0.0
    %7910 = vmatpush1.msra.mxu0 %v7704
    %7911 = vmatprep.subr.mxu0 0.0
    %7912 = vmatpush1.msra.mxu0 %v7703
    %7913 = vmatprep.subr.mxu0 0.0
    %7914 = vmatpush1.msra.mxu0 %v7702
    %7915 = vmatprep.subr.mxu0 0.0
    %7916 = vmatpush1.msra.mxu0 %v7701
    %7917 = vmatprep.subr.mxu0 0.0
    %7918 = vmatpush1.msra.mxu0 %v7700
    %7919 = vmatprep.subr.mxu0 0.0
    %7920 = vmatpush1.msra.mxu0 %v7699
    %7921 = vmatprep.subr.mxu0 0.0
    %7922 = vmatpush1.msra.mxu0 %v7698
    %7923 = vmatprep.subr.mxu0 0.0
    %7924 = vmatpush1.msra.mxu0 %v7697
    %7925 = vmatprep.subr.mxu0 0.0
    %7926 = vmatpush1.msra.mxu0 %v7696
    %7927 = vmatprep.subr.mxu0 0.0
    %7928 = vmatpush1.msra.mxu0 %v7695
    %7929 = vmatprep.subr.mxu0 0.0
    %7930 = vmatpush1.msra.mxu0 %v7694
    %7931 = vmatprep.subr.mxu0 0.0
    %7932 = vmatpush1.msra.mxu0 %v7693
    %7933 = vmatprep.subr.mxu0 0.0
    %7934 = vmatpush1.msra.mxu0 %v7692
    %7935 = vmatprep.subr.mxu0 0.0
    %7936 = vmatpush2.msra.mxu0 %v7723
    %7937 = vmatprep.subr.mxu0 0.0
    %7938 = vmatpush2.msra.mxu0 %v7722
    %7939 = vmatprep.subr.mxu0 0.0
    %7940 = vmatpush2.msra.mxu0 %v7721
    %7941 = vmatprep.subr.mxu0 0.0
    %7942 = vmatpush2.msra.mxu0 %v7720
    %7943 = vmatprep.subr.mxu0 0.0
    %7944 = vmatpush2.msra.mxu0 %v7719
    %7945 = vmatprep.subr.mxu0 0.0
    %7946 = vmatpush2.msra.mxu0 %v7718
    %7947 = vmatprep.subr.mxu0 0.0
    %7948 = vmatpush2.msra.mxu0 %v7717
    %7949 = vmatprep.subr.mxu0 0.0
    %7950 = vmatpush2.msra.mxu0 %v7716
    %7951 = vmatprep.subr.mxu0 0.0
    %7952 = vmatpush2.msra.mxu0 %v7715
    %7953 = vmatprep.subr.mxu0 0.0
    %7954 = vmatpush2.msra.mxu0 %v7714
    %7955 = vmatprep.subr.mxu0 0.0
    %7956 = vmatpush2.msra.mxu0 %v7713
    %7957 = vmatprep.subr.mxu0 0.0
    %7958 = vmatpush2.msra.mxu0 %v7712
    %7959 = vmatprep.subr.mxu0 0.0
    %7960 = vmatpush2.msra.mxu0 %v7711
    %7961 = vmatprep.subr.mxu0 0.0
    %7962 = vmatpush2.msra.mxu0 %v7710
    %7963 = vmatprep.subr.mxu0 0.0
    %7964 = vmatpush2.msra.mxu0 %v7709
    %7965 = vmatprep.subr.mxu0 0.0
    %7966 = vmatpush2.msra.mxu0 %v7708
    %7967 = vmatprep.mubr.f32.mxu0 %v7625
    %7968 = vmatmul.mubr.f32.gmra.mxu0 %v7624
    %v7969 = vpop.f32.mrf.mxu0
    %v7970 = vadd.f32 %v7900, %v7969
    %v7971 = vpop.f32.mrf.mxu0
    %7972 = vdwg.mxu0
    %7973 = vmatprep.subr.mxu0 0.0
    %7974 = vmatpush1.msra.mxu0 %v7739
    %7975 = vmatprep.subr.mxu0 0.0
    %7976 = vmatpush1.msra.mxu0 %v7738
    %7977 = vmatprep.subr.mxu0 0.0
    %7978 = vmatpush1.msra.mxu0 %v7737
    %7979 = vmatprep.subr.mxu0 0.0
    %7980 = vmatpush1.msra.mxu0 %v7736
    %7981 = vmatprep.subr.mxu0 0.0
    %7982 = vmatpush1.msra.mxu0 %v7735
    %7983 = vmatprep.subr.mxu0 0.0
    %7984 = vmatpush1.msra.mxu0 %v7734
    %7985 = vmatprep.subr.mxu0 0.0
    %7986 = vmatpush1.msra.mxu0 %v7733
    %7987 = vmatprep.subr.mxu0 0.0
    %7988 = vmatpush1.msra.mxu0 %v7732
    %7989 = vmatprep.subr.mxu0 0.0
    %7990 = vmatpush1.msra.mxu0 %v7731
    %7991 = vmatprep.subr.mxu0 0.0
    %7992 = vmatpush1.msra.mxu0 %v7730
    %7993 = vmatprep.subr.mxu0 0.0
    %7994 = vmatpush1.msra.mxu0 %v7729
    %7995 = vmatprep.subr.mxu0 0.0
    %7996 = vmatpush1.msra.mxu0 %v7728
    %7997 = vmatprep.subr.mxu0 0.0
    %7998 = vmatpush1.msra.mxu0 %v7727
    %7999 = vmatprep.subr.mxu0 0.0
    %8000 = vmatpush1.msra.mxu0 %v7726
    %8001 = vmatprep.subr.mxu0 0.0
    %8002 = vmatpush1.msra.mxu0 %v7725
    %8003 = vmatprep.subr.mxu0 0.0
    %8004 = vmatpush1.msra.mxu0 %v7724
    %8005 = vmatprep.subr.mxu0 0.0
    %8006 = vmatpush2.msra.mxu0 %v7755
    %8007 = vmatprep.subr.mxu0 0.0
    %8008 = vmatpush2.msra.mxu0 %v7754
    %8009 = vmatprep.subr.mxu0 0.0
    %8010 = vmatpush2.msra.mxu0 %v7753
    %8011 = vmatprep.subr.mxu0 0.0
    %8012 = vmatpush2.msra.mxu0 %v7752
    %8013 = vmatprep.subr.mxu0 0.0
    %8014 = vmatpush2.msra.mxu0 %v7751
    %8015 = vmatprep.subr.mxu0 0.0
    %8016 = vmatpush2.msra.mxu0 %v7750
    %8017 = vmatprep.subr.mxu0 0.0
    %8018 = vmatpush2.msra.mxu0 %v7749
    %8019 = vmatprep.subr.mxu0 0.0
    %8020 = vmatpush2.msra.mxu0 %v7748
    %8021 = vmatprep.subr.mxu0 0.0
    %8022 = vmatpush2.msra.mxu0 %v7747
    %8023 = vmatprep.subr.mxu0 0.0
    %8024 = vmatpush2.msra.mxu0 %v7746
    %8025 = vmatprep.subr.mxu0 0.0
    %8026 = vmatpush2.msra.mxu0 %v7745
    %8027 = vmatprep.subr.mxu0 0.0
    %8028 = vmatpush2.msra.mxu0 %v7744
    %8029 = vmatprep.subr.mxu0 0.0
    %8030 = vmatpush2.msra.mxu0 %v7743
    %8031 = vmatprep.subr.mxu0 0.0
    %8032 = vmatpush2.msra.mxu0 %v7742
    %8033 = vmatprep.subr.mxu0 0.0
    %8034 = vmatpush2.msra.mxu0 %v7741
    %8035 = vmatprep.subr.mxu0 0.0
    %8036 = vmatpush2.msra.mxu0 %v7740
    %8037 = vmatprep.mubr.f32.mxu0 %v7627
    %8038 = vmatmul.mubr.f32.gmra.mxu0 %v7626
    %v8039 = vpop.f32.mrf.mxu0
    %v8040 = vadd.f32 %v7970, %v8039
    %v8041 = vpop.f32.mrf.mxu0
    %8042 = vdwg.mxu0
    %v8043 = vmax.f32 %v8040, 0.0
    %v8044 = vld [vmem:[%s7] sm:$0xff]
    %v8045 = vld [vmem:[%s7 + $0x8] sm:$0xff]
    %v8046 = vld [vmem:[%s7 + $0x10] sm:$0xff]
    %v8047 = vld [vmem:[%s7 + $0x18] sm:$0xff]
    %v8048 = vld [vmem:[%s7 + $0x20] sm:$0xff]
    %v8049 = vld [vmem:[%s7 + $0x28] sm:$0xff]
    %v8050 = vld [vmem:[%s7 + $0x30] sm:$0xff]
    %v8051 = vld [vmem:[%s7 + $0x38] sm:$0xff]
    %v8052 = vld [vmem:[%s7 + $0x40] sm:$0xff]
    %v8053 = vld [vmem:[%s7 + $0x48] sm:$0xff]
    %v8054 = vld [vmem:[%s7 + $0x50] sm:$0xff]
    %v8055 = vld [vmem:[%s7 + $0x58] sm:$0xff]
    %v8056 = vld [vmem:[%s7 + $0x60] sm:$0xff]
    %v8057 = vld [vmem:[%s7 + $0x68] sm:$0xff]
    %v8058 = vld [vmem:[%s7 + $0x70] sm:$0xff]
    %v8059 = vld [vmem:[%s7 + $0x78] sm:$0xff]
    %v8060 = vld [vmem:[%s8] sm:$0x1]
    %v8062 = vlaneseq
    %v8063 = vshrl.u32 %v8062, 7
    %v8064 = vsub.s32 0, %v8063
    %v8065 = vrot.slane %v8060, %v8064
    %8067 = vmatprep.subr.mxu0 0.0
    %8068 = vmatpush1.msra.mxu0 %v8059
    %8069 = vmatprep.subr.mxu0 0.0
    %8070 = vmatpush1.msra.mxu0 %v8058
    %8071 = vmatprep.subr.mxu0 0.0
    %8072 = vmatpush1.msra.mxu0 %v8057
    %8073 = vmatprep.subr.mxu0 0.0
    %8074 = vmatpush1.msra.mxu0 %v8056
    %8075 = vmatprep.subr.mxu0 0.0
    %8076 = vmatpush1.msra.mxu0 %v8055
    %8077 = vmatprep.subr.mxu0 0.0
    %8078 = vmatpush1.msra.mxu0 %v8054
    %8079 = vmatprep.subr.mxu0 0.0
    %8080 = vmatpush1.msra.mxu0 %v8053
    %8081 = vmatprep.subr.mxu0 0.0
    %8082 = vmatpush1.msra.mxu0 %v8052
    %8083 = vmatprep.subr.mxu0 0.0
    %8084 = vmatpush1.msra.mxu0 %v8051
    %8085 = vmatprep.subr.mxu0 0.0
    %8086 = vmatpush1.msra.mxu0 %v8050
    %8087 = vmatprep.subr.mxu0 0.0
    %8088 = vmatpush1.msra.mxu0 %v8049
    %8089 = vmatprep.subr.mxu0 0.0
    %8090 = vmatpush1.msra.mxu0 %v8048
    %8091 = vmatprep.subr.mxu0 0.0
    %8092 = vmatpush1.msra.mxu0 %v8047
    %8093 = vmatprep.subr.mxu0 0.0
    %8094 = vmatpush1.msra.mxu0 %v8046
    %8095 = vmatprep.subr.mxu0 0.0
    %8096 = vmatpush1.msra.mxu0 %v8045
    %8097 = vmatprep.subr.mxu0 0.0
    %8098 = vmatpush1.msra.mxu0 %v8044
    %8099 = vmatprep.subr.mxu0 0.0
    %8100 = vmatpush2.msra.mxu0 0.0
    %8101 = vmatprep.subr.mxu0 0.0
    %8102 = vmatpush2.msra.mxu0 0.0
    %8103 = vmatprep.subr.mxu0 0.0
    %8104 = vmatpush2.msra.mxu0 0.0
    %8105 = vmatprep.subr.mxu0 0.0
    %8106 = vmatpush2.msra.mxu0 0.0
    %8107 = vmatprep.subr.mxu0 0.0
    %8108 = vmatpush2.msra.mxu0 0.0
    %8109 = vmatprep.subr.mxu0 0.0
    %8110 = vmatpush2.msra.mxu0 0.0
    %8111 = vmatprep.subr.mxu0 0.0
    %8112 = vmatpush2.msra.mxu0 0.0
    %8113 = vmatprep.subr.mxu0 0.0
    %8114 = vmatpush2.msra.mxu0 0.0
    %8115 = vmatprep.subr.mxu0 0.0
    %8116 = vmatpush2.msra.mxu0 0.0
    %8117 = vmatprep.subr.mxu0 0.0
    %8118 = vmatpush2.msra.mxu0 0.0
    %8119 = vmatprep.subr.mxu0 0.0
    %8120 = vmatpush2.msra.mxu0 0.0
    %8121 = vmatprep.subr.mxu0 0.0
    %8122 = vmatpush2.msra.mxu0 0.0
    %8123 = vmatprep.subr.mxu0 0.0
    %8124 = vmatpush2.msra.mxu0 0.0
    %8125 = vmatprep.subr.mxu0 0.0
    %8126 = vmatpush2.msra.mxu0 0.0
    %8127 = vmatprep.subr.mxu0 0.0
    %8128 = vmatpush2.msra.mxu0 0.0
    %8129 = vmatprep.subr.mxu0 0.0
    %8130 = vmatpush2.msra.mxu0 0.0
    %8131 = vmatprep.mubr.f32.mxu0 0.0
    %8132 = vmatmul.mubr.f32.gmra.mxu0 %v8043
    %v8133 = vpop.f32.mrf.mxu0
    %v8134 = vadd.f32 %v8065, %v8133
    %v8135 = vpop.f32.mrf.mxu0
    %8136 = vdwg.mxu0
    %vm8137 = vcmask 9216
    %8138 = vst.msk [vmem:[#allocation4] sm:$0x3] %vm8137, %v8134
    // Predicated region
    $region38: #{initial_cnn_forward.1} parent=1 // pred_check
      _
    $region39: #{initial_cnn_forward.1} parent=1 // pred_check_branch
      %8140 = sbr.rel (0) target = $region41
    $region40: #{initial_cnn_forward.1} parent=1 // pred_region
      %s8142 = ssub.s32 32, 32
      %8143 = vsyncadd [#allocation5], %s8142
      %s8145 = sshll.u32 [#allocation4], 4
      %s8146 = int_to_ptr.vmem [resolvable:$true] %s8145
      %8148 = dma.vmem_to_hbm [thread:$0]  %s8146, 32, %s9, [#allocation5]
    $region41: #{initial_cnn_forward.1} parent=1 // pred_fallthru
      _
    // Predicated region
    $region42: #{initial_cnn_forward.1} parent=1 // pred_check
      _
    $region43: #{initial_cnn_forward.1} parent=1 // pred_check_branch
      %8150 = sbr.rel (0) target = $region45
    $region44: #{initial_cnn_forward.1} parent=1 // pred_region
      %8151 = dma.done [#allocation5], 32
    $region45: #{initial_cnn_forward.1} parent=1 // pred_fallthru
      _
    %8152 = vsyncpa [#allocation5], 1

</llo_original>
